<compile_context>
chip_gen: v7x
topology: tpu7x:2x2x1
jax: 0.10.0
libtpu: 0.0.40
codegen_flags: <defaults>
</compile_context>

<pallas_src>
import functools
import math

import jax
import jax.numpy as jnp
from jax.experimental import pallas as pl
from jax.experimental.pallas import tpu as pltpu


# Parameter ordering shared by the wrapper (flat arg list) and the kernel (unpack).
_ENC_NAMES = ('wqkv', 'bqkv', 'wo', 'bo',
              'w1', 'b1', 'w2', 'b2',
              'g1', 'be1', 'g2', 'be2')
_DEC_NAMES = ('swqkv', 'sbqkv', 'swo', 'sbo',
              'cwq', 'cbq', 'cwkv', 'cbkv', 'cwo', 'cbo',
              'w1', 'b1', 'w2', 'b2',
              'g1', 'be1', 'g2', 'be2', 'g3', 'be3')


# ----------------------------------------------------------------------------
# Fused whole-model kernel (one batch item per grid step)
# ----------------------------------------------------------------------------

def _transformer_kernel(cfg, src_ref, trg_ref, kpad_ref, pe_ref, *rest):
    S_src, S_trg, D, H, L = cfg
    dh = D // H
    scale = 1.0 / math.sqrt(dh)
    f32 = jnp.float32
    bf16 = jnp.bfloat16

    n_e, n_d = len(_ENC_NAMES), len(_DEC_NAMES)
    enc = dict(zip(_ENC_NAMES, rest[:n_e]))
    dec = dict(zip(_DEC_NAMES, rest[n_e:n_e + n_d]))
    cls_w_ref, cls_b_ref, out_ref = rest[n_e + n_d:]

    pe = pe_ref[...]                                         # (max_len, D) f32

    # Source key-padding bias (1 = attend, 0 = masked), broadcast over queries+heads.
    pad_bias = ((kpad_ref[...] - 1.0) * 1e9).reshape(1, 1, S_src)   # (1,1,Ssrc)

    # Causal bias for decoder self-attention, built in-kernel (static structure).
    rows = jax.lax.broadcasted_iota(jnp.int32, (S_trg, S_trg), 0)
    cols = jax.lax.broadcasted_iota(jnp.int32, (S_trg, S_trg), 1)
    causal_bias = jnp.where(rows >= cols, 0.0, -1e9).astype(f32)    # (St, St)

    # ----------------------------- helpers -----------------------------

    def layer_norm(z, g, b):
        mu = jnp.mean(z, axis=-1, keepdims=True)
        var = jnp.mean(z * z, axis=-1, keepdims=True) - mu * mu
        return (z - mu) * jax.lax.rsqrt(var + 1e-5) * g + b

    def split_q(q2d, s_len):
        # (s, D) -> (H, s, dh): 2-D minor transpose + sublane-aligned leading
        # split + batched minor transpose (all layout-friendly on TPU).
        return jnp.swapaxes(q2d.T.reshape(H, dh, s_len), 1, 2)

    def attention_core(q_heads, kT, v_heads, bias, sq):
        # q_heads: (H, sq, dh)   kT: (H, dh, sk)   v_heads: (H, sk, dh)
        s = jax.lax.dot_general(
            q_heads.astype(bf16), kT.astype(bf16),
            (((2,), (1,)), ((0,), (0,))),
            preferred_element_type=f32)                       # (H, sq, sk)
        s = s * scale + bias
        s = s - jnp.max(s, axis=-1, keepdims=True)
        e = jnp.exp(s)
        p = e * pl.reciprocal(jnp.sum(e, axis=-1, keepdims=True), approx=True)
        ctx = jax.lax.dot_general(
            p.astype(bf16), v_heads.astype(bf16),
            (((2,), (1,)), ((0,), (0,))),
            preferred_element_type=f32)                       # (H, sq, dh)
        # Merge heads back to (sq, D) with head h in lanes [h*dh:(h+1)*dh].
        return jnp.swapaxes(ctx, 1, 2).reshape(D, sq).T       # (sq, D)

    def self_mha(x, bias, wqkv, bqkv, wo, bo, s_len):
        qkv = jnp.dot(x.astype(bf16), wqkv,
                      preferred_element_type=f32) + bqkv       # (s, 3D) f32
        t = qkv.T.reshape(3 * H, dh, s_len)                    # (3H, dh, s)
        q_heads = jnp.swapaxes(t[:H], 1, 2)                    # (H, s, dh)
        kT = t[H:2 * H]                                        # (H, dh, s)
        v_heads = jnp.swapaxes(t[2 * H:], 1, 2)                # (H, s, dh)
        ctx = attention_core(q_heads, kT, v_heads, bias, s_len)
        return jnp.dot(ctx.astype(bf16), wo,
                       preferred_element_type=f32) + bo

    def cross_mha(xq, xkv, bias, wq, bq, wkv, bkv, wo, bo, sq, sk):
        q = jnp.dot(xq.astype(bf16), wq, preferred_element_type=f32) + bq
        kv = jnp.dot(xkv.astype(bf16), wkv,
                     preferred_element_type=f32) + bkv         # (sk, 2D)
        t = kv.T.reshape(2 * H, dh, sk)                        # (2H, dh, sk)
        kT = t[:H]                                             # (H, dh, sk)
        v_heads = jnp.swapaxes(t[H:], 1, 2)                    # (H, sk, dh)
        ctx = attention_core(split_q(q, sq), kT, v_heads, bias, sq)
        return jnp.dot(ctx.astype(bf16), wo,
                       preferred_element_type=f32) + bo

    def ffn(x, w1, b1, w2, b2):
        h = jnp.maximum(
            jnp.dot(x.astype(bf16), w1, preferred_element_type=f32) + b1, 0.0)
        return jnp.dot(h.astype(bf16), w2, preferred_element_type=f32) + b2

    # ----------------------------- encoder -----------------------------
    x = src_ref[...] + pe[:S_src]                              # (S_src, D) f32
    for l in range(L):
        a = self_mha(x, pad_bias, enc['wqkv'][l], enc['bqkv'][l],
                     enc['wo'][l], enc['bo'][l], S_src)
        x = layer_norm(x + a, enc['g1'][l], enc['be1'][l])
        ff = ffn(x, enc['w1'][l], enc['b1'][l], enc['w2'][l], enc['b2'][l])
        x = layer_norm(x + ff, enc['g2'][l], enc['be2'][l])
    enc_out = x                                                # (S_src, D)

    # ----------------------------- decoder -----------------------------
    y = trg_ref[...] + pe[:S_trg]                              # (S_trg, D)
    for l in range(L):
        a = self_mha(y, causal_bias, dec['swqkv'][l], dec['sbqkv'][l],
                     dec['swo'][l], dec['sbo'][l], S_trg)
        y = layer_norm(y + a, dec['g1'][l], dec['be1'][l])
        c = cross_mha(y, enc_out, pad_bias,
                      dec['cwq'][l], dec['cbq'][l], dec['cwkv'][l], dec['cbkv'][l],
                      dec['cwo'][l], dec['cbo'][l], S_trg, S_src)
        y = layer_norm(y + c, dec['g2'][l], dec['be2'][l])
        ff = ffn(y, dec['w1'][l], dec['b1'][l], dec['w2'][l], dec['b2'][l])
        y = layer_norm(y + ff, dec['g3'][l], dec['be3'][l])

    # ------------------ classifier (lane-dense padded output) ------------------
    out_ref[...] = (jnp.dot(y.astype(bf16), cls_w_ref[...],
                            preferred_element_type=f32) + cls_b_ref[...])


# ----------------------------------------------------------------------------
# Wrapper
# ----------------------------------------------------------------------------

def transformer_forward(params, src, trg, src_kpad, *, nhead):
    """src/trg: (B, S, D) f32.  src_kpad: (B, S_src) with 1=attend, 0=masked."""
    B, S_src, D = src.shape
    S_trg = trg.shape[1]
    L = params['enc']['wqkv'].shape[0]
    C = params['num_class']
    C_pad = params['cls_w'].shape[-1]
    cfg = (S_src, S_trg, D, nhead, L)

    kpad3 = src_kpad.reshape(B, 1, S_src).astype(jnp.float32)

    flat = ([params['enc'][n] for n in _ENC_NAMES]
            + [params['dec'][n] for n in _DEC_NAMES]
            + [params['cls_w'], params['cls_b']])

    def _fixed(a):
        # Full-array block, same block for every grid point (fetched once).
        return pl.BlockSpec(a.shape, lambda b, n=a.ndim: (0,) * n)

    in_specs = ([
        pl.BlockSpec((None, S_src, D), lambda b: (b, 0, 0)),    # src (per batch)
        pl.BlockSpec((None, S_trg, D), lambda b: (b, 0, 0)),    # trg (per batch)
        pl.BlockSpec((None, 1, S_src), lambda b: (b, 0, 0)),    # key-padding mask
        _fixed(params['pe']),                                   # positional encoding
    ] + [_fixed(a) for a in flat])

    out_spec = pl.BlockSpec((None, S_trg, C_pad), lambda b: (b, 0, 0))

    # Size scoped VMEM to the actual resident footprint (x2 for double buffering
    # + activation headroom), instead of the 16/32 MiB defaults.
    param_bytes = sum(int(a.size) * a.dtype.itemsize for a in flat)
    param_bytes += int(params['pe'].size) * params['pe'].dtype.itemsize
    vmem_limit = int(min(64 * 2 ** 20, max(16 * 2 ** 20, 2 * param_bytes + 8 * 2 ** 20)))

    out = pl.pallas_call(
        functools.partial(_transformer_kernel, cfg),
        grid=(B,),
        in_specs=in_specs,
        out_specs=out_spec,
        out_shape=jax.ShapeDtypeStruct((B, S_trg, C_pad), jnp.float32),
        compiler_params=pltpu.CompilerParams(
            dimension_semantics=("parallel",),     # second TC on v7x; loop on v5e/v6e
            vmem_limit_bytes=vmem_limit),
    )(src, trg, kpad3, params['pe'], *flat)

    return out[:, :, :C]


# ----------------------------------------------------------------------------
# Parameter construction (plain JAX, deterministic)
# ----------------------------------------------------------------------------

def sinusoidal_pe(max_len, d_model):
    pos = jnp.arange(max_len, dtype=jnp.float32)[:, None]
    i = jnp.arange(0, d_model, 2, dtype=jnp.float32)
    div = jnp.exp(-math.log(10000.0) * i / d_model)
    pe = jnp.zeros((max_len, d_model), jnp.float32)
    pe = pe.at[:, 0::2].set(jnp.sin(pos * div))
    pe = pe.at[:, 1::2].set(jnp.cos(pos * div))
    return pe


def _init_linear(key, fan_in, fan_out):
    k1, k2 = jax.random.split(key)
    w = jax.random.normal(k1, (fan_in, fan_out), jnp.float32) * (1.0 / math.sqrt(fan_in))
    b = jax.random.normal(k2, (1, fan_out), jnp.float32) * 0.01
    return w, b


def _init_mha_fused(key, d_model):
    ks = jax.random.split(key, 4)
    wq, bq = _init_linear(ks[0], d_model, d_model)
    wk, bk = _init_linear(ks[1], d_model, d_model)
    wv, bv = _init_linear(ks[2], d_model, d_model)
    wo, bo = _init_linear(ks[3], d_model, d_model)
    wqkv = jnp.concatenate([wq, wk, wv], axis=-1)       # (D, 3D)
    bqkv = jnp.concatenate([bq, bk, bv], axis=-1)       # (1, 3D)
    return wqkv, bqkv, wo, bo


def init_transformer_params(key, d_model, dim_ff, nhead, n_layers, max_len, num_class):
    k_enc, k_dec, k_cls = jax.random.split(key, 3)
    ln_g = jnp.ones((1, d_model), jnp.float32)
    ln_b = jnp.zeros((1, d_model), jnp.float32)

    enc_layers = []
    for k in jax.random.split(k_enc, n_layers):
        k1, k2, k3 = jax.random.split(k, 3)
        wqkv, bqkv, wo, bo = _init_mha_fused(k1, d_model)
        w1, b1 = _init_linear(k2, d_model, dim_ff)
        w2, b2 = _init_linear(k3, dim_ff, d_model)
        enc_layers.append(dict(wqkv=wqkv, bqkv=bqkv, wo=wo, bo=bo,
                               w1=w1, b1=b1, w2=w2, b2=b2,
                               g1=ln_g, be1=ln_b, g2=ln_g, be2=ln_b))
    enc = {n: jnp.stack([lyr[n] for lyr in enc_layers]) for n in _ENC_NAMES}

    dec_layers = []
    for k in jax.random.split(k_dec, n_layers):
        k1, k2, k3, k4 = jax.random.split(k, 4)
        swqkv, sbqkv, swo, sbo = _init_mha_fused(k1, d_model)
        kq, kk, kvv, ko = jax.random.split(k2, 4)
        cwq, cbq = _init_linear(kq, d_model, d_model)
        wk, bk = _init_linear(kk, d_model, d_model)
        wv, bv = _init_linear(kvv, d_model, d_model)
        cwkv = jnp.concatenate([wk, wv], axis=-1)       # (D, 2D)
        cbkv = jnp.concatenate([bk, bv], axis=-1)       # (1, 2D)
        cwo, cbo = _init_linear(ko, d_model, d_model)
        w1, b1 = _init_linear(k3, d_model, dim_ff)
        w2, b2 = _init_linear(k4, dim_ff, d_model)
        dec_layers.append(dict(swqkv=swqkv, sbqkv=sbqkv, swo=swo, sbo=sbo,
                               cwq=cwq, cbq=cbq, cwkv=cwkv, cbkv=cbkv,
                               cwo=cwo, cbo=cbo,
                               w1=w1, b1=b1, w2=w2, b2=b2,
                               g1=ln_g, be1=ln_b, g2=ln_g, be2=ln_b,
                               g3=ln_g, be3=ln_b))
    dec = {n: jnp.stack([lyr[n] for lyr in dec_layers]) for n in _DEC_NAMES}

    # Matmul weights stored in bf16 (MXU-native); biases / LN params / PE stay f32.
    for n in ('wqkv', 'wo', 'w1', 'w2'):
        enc[n] = enc[n].astype(jnp.bfloat16)
    for n in ('swqkv', 'swo', 'cwq', 'cwkv', 'cwo', 'w1', 'w2'):
        dec[n] = dec[n].astype(jnp.bfloat16)

    # Classifier padded to a lane-dense (multiple of 128) output width.
    cw, cb = _init_linear(k_cls, d_model, num_class)
    c_pad = ((num_class + 127) // 128) * 128
    cls_w = (jnp.zeros((d_model, c_pad), jnp.float32)
             .at[:, :num_class].set(cw).astype(jnp.bfloat16))
    cls_b = jnp.zeros((1, c_pad), jnp.float32).at[:, :num_class].set(cb)

    return dict(pe=sinusoidal_pe(max_len, d_model), enc=enc, dec=dec,
                cls_w=cls_w, cls_b=cls_b, num_class=num_class)


# ----------------------------------------------------------------------------
# Main
# ----------------------------------------------------------------------------

if __name__ == "__main__":
    d_model = 32
    dim_feedforward = 64
    nhead = 4
    n_layers = 2
    max_len = 16
    num_class = 10
    B, S_src, S_trg = 2, 8, 8

    root = jax.random.PRNGKey(0)
    k_par, k_src, k_trg = jax.random.split(root, 3)

    params = init_transformer_params(k_par, d_model, dim_feedforward, nhead,
                                     n_layers, max_len, num_class)

    src = jax.random.normal(k_src, (B, S_src, d_model), jnp.float32)
    trg = jax.random.normal(k_trg, (B, S_trg, d_model), jnp.float32)

    # Source key-padding mask: 1 = attend, 0 = masked (used by encoder self-attn
    # and decoder cross-attn).  Decoder self-attn mask is causal, built in-kernel.
    src_kpad = jnp.ones((B, S_src), jnp.float32)

    out = transformer_forward(params, src, trg, src_kpad, nhead=nhead)
    out = jax.block_until_ready(out)

    assert out.shape == (B, S_trg, num_class), out.shape
    assert bool(jnp.all(jnp.isfinite(out)))
    print("KERNEL_OK")
</pallas_src>

<mosaic_0001>
module attributes {stable_mosaic.version = 11 : i64} {
  func.func @_transformer_kernel(%arg0: i32, %arg1: memref<1x8x32xf32, #tpu.memory_space<vmem>>, %arg2: memref<1x8x32xf32, #tpu.memory_space<vmem>>, %arg3: memref<1x1x8xf32, #tpu.memory_space<vmem>>, %arg4: memref<16x32xf32, #tpu.memory_space<vmem>>, %arg5: memref<2x32x96xbf16, #tpu.memory_space<vmem>>, %arg6: memref<2x1x96xf32, #tpu.memory_space<vmem>>, %arg7: memref<2x32x32xbf16, #tpu.memory_space<vmem>>, %arg8: memref<2x1x32xf32, #tpu.memory_space<vmem>>, %arg9: memref<2x32x64xbf16, #tpu.memory_space<vmem>>, %arg10: memref<2x1x64xf32, #tpu.memory_space<vmem>>, %arg11: memref<2x64x32xbf16, #tpu.memory_space<vmem>>, %arg12: memref<2x1x32xf32, #tpu.memory_space<vmem>>, %arg13: memref<2x1x32xf32, #tpu.memory_space<vmem>>, %arg14: memref<2x1x32xf32, #tpu.memory_space<vmem>>, %arg15: memref<2x1x32xf32, #tpu.memory_space<vmem>>, %arg16: memref<2x1x32xf32, #tpu.memory_space<vmem>>, %arg17: memref<2x32x96xbf16, #tpu.memory_space<vmem>>, %arg18: memref<2x1x96xf32, #tpu.memory_space<vmem>>, %arg19: memref<2x32x32xbf16, #tpu.memory_space<vmem>>, %arg20: memref<2x1x32xf32, #tpu.memory_space<vmem>>, %arg21: memref<2x32x32xbf16, #tpu.memory_space<vmem>>, %arg22: memref<2x1x32xf32, #tpu.memory_space<vmem>>, %arg23: memref<2x32x64xbf16, #tpu.memory_space<vmem>>, %arg24: memref<2x1x64xf32, #tpu.memory_space<vmem>>, %arg25: memref<2x32x32xbf16, #tpu.memory_space<vmem>>, %arg26: memref<2x1x32xf32, #tpu.memory_space<vmem>>, %arg27: memref<2x32x64xbf16, #tpu.memory_space<vmem>>, %arg28: memref<2x1x64xf32, #tpu.memory_space<vmem>>, %arg29: memref<2x64x32xbf16, #tpu.memory_space<vmem>>, %arg30: memref<2x1x32xf32, #tpu.memory_space<vmem>>, %arg31: memref<2x1x32xf32, #tpu.memory_space<vmem>>, %arg32: memref<2x1x32xf32, #tpu.memory_space<vmem>>, %arg33: memref<2x1x32xf32, #tpu.memory_space<vmem>>, %arg34: memref<2x1x32xf32, #tpu.memory_space<vmem>>, %arg35: memref<2x1x32xf32, #tpu.memory_space<vmem>>, %arg36: memref<2x1x32xf32, #tpu.memory_space<vmem>>, %arg37: memref<32x128xbf16, #tpu.memory_space<vmem>>, %arg38: memref<1x128xf32, #tpu.memory_space<vmem>>, %arg39: memref<1x8x128xf32, #tpu.memory_space<vmem>>) attributes {dimension_semantics = [#tpu.dimension_semantics<parallel>], iteration_bounds = array<i64: 2>, scalar_prefetch = 0 : i64, scratch_operands = 0 : i64, tpu.core_type = #tpu.core_type<tc>, window_params = [{transform_indices = @transform_0, window_bounds = array<i64: 1, 8, 32>}, {transform_indices = @transform_1, window_bounds = array<i64: 1, 8, 32>}, {transform_indices = @transform_2, window_bounds = array<i64: 1, 1, 8>}, {pipeline_mode = #tpu.pipeline_mode<synchronous>, transform_indices = @transform_3, window_bounds = array<i64: 16, 32>}, {pipeline_mode = #tpu.pipeline_mode<synchronous>, transform_indices = @transform_4, window_bounds = array<i64: 2, 32, 96>}, {pipeline_mode = #tpu.pipeline_mode<synchronous>, transform_indices = @transform_5, window_bounds = array<i64: 2, 1, 96>}, {pipeline_mode = #tpu.pipeline_mode<synchronous>, transform_indices = @transform_6, window_bounds = array<i64: 2, 32, 32>}, {pipeline_mode = #tpu.pipeline_mode<synchronous>, transform_indices = @transform_7, window_bounds = array<i64: 2, 1, 32>}, {pipeline_mode = #tpu.pipeline_mode<synchronous>, transform_indices = @transform_8, window_bounds = array<i64: 2, 32, 64>}, {pipeline_mode = #tpu.pipeline_mode<synchronous>, transform_indices = @transform_9, window_bounds = array<i64: 2, 1, 64>}, {pipeline_mode = #tpu.pipeline_mode<synchronous>, transform_indices = @transform_10, window_bounds = array<i64: 2, 64, 32>}, {pipeline_mode = #tpu.pipeline_mode<synchronous>, transform_indices = @transform_11, window_bounds = array<i64: 2, 1, 32>}, {pipeline_mode = #tpu.pipeline_mode<synchronous>, transform_indices = @transform_12, window_bounds = array<i64: 2, 1, 32>}, {pipeline_mode = #tpu.pipeline_mode<synchronous>, transform_indices = @transform_13, window_bounds = array<i64: 2, 1, 32>}, {pipeline_mode = #tpu.pipeline_mode<synchronous>, transform_indices = @transform_14, window_bounds = array<i64: 2, 1, 32>}, {pipeline_mode = #tpu.pipeline_mode<synchronous>, transform_indices = @transform_15, window_bounds = array<i64: 2, 1, 32>}, {pipeline_mode = #tpu.pipeline_mode<synchronous>, transform_indices = @transform_16, window_bounds = array<i64: 2, 32, 96>}, {pipeline_mode = #tpu.pipeline_mode<synchronous>, transform_indices = @transform_17, window_bounds = array<i64: 2, 1, 96>}, {pipeline_mode = #tpu.pipeline_mode<synchronous>, transform_indices = @transform_18, window_bounds = array<i64: 2, 32, 32>}, {pipeline_mode = #tpu.pipeline_mode<synchronous>, transform_indices = @transform_19, window_bounds = array<i64: 2, 1, 32>}, {pipeline_mode = #tpu.pipeline_mode<synchronous>, transform_indices = @transform_20, window_bounds = array<i64: 2, 32, 32>}, {pipeline_mode = #tpu.pipeline_mode<synchronous>, transform_indices = @transform_21, window_bounds = array<i64: 2, 1, 32>}, {pipeline_mode = #tpu.pipeline_mode<synchronous>, transform_indices = @transform_22, window_bounds = array<i64: 2, 32, 64>}, {pipeline_mode = #tpu.pipeline_mode<synchronous>, transform_indices = @transform_23, window_bounds = array<i64: 2, 1, 64>}, {pipeline_mode = #tpu.pipeline_mode<synchronous>, transform_indices = @transform_24, window_bounds = array<i64: 2, 32, 32>}, {pipeline_mode = #tpu.pipeline_mode<synchronous>, transform_indices = @transform_25, window_bounds = array<i64: 2, 1, 32>}, {pipeline_mode = #tpu.pipeline_mode<synchronous>, transform_indices = @transform_26, window_bounds = array<i64: 2, 32, 64>}, {pipeline_mode = #tpu.pipeline_mode<synchronous>, transform_indices = @transform_27, window_bounds = array<i64: 2, 1, 64>}, {pipeline_mode = #tpu.pipeline_mode<synchronous>, transform_indices = @transform_28, window_bounds = array<i64: 2, 64, 32>}, {pipeline_mode = #tpu.pipeline_mode<synchronous>, transform_indices = @transform_29, window_bounds = array<i64: 2, 1, 32>}, {pipeline_mode = #tpu.pipeline_mode<synchronous>, transform_indices = @transform_30, window_bounds = array<i64: 2, 1, 32>}, {pipeline_mode = #tpu.pipeline_mode<synchronous>, transform_indices = @transform_31, window_bounds = array<i64: 2, 1, 32>}, {pipeline_mode = #tpu.pipeline_mode<synchronous>, transform_indices = @transform_32, window_bounds = array<i64: 2, 1, 32>}, {pipeline_mode = #tpu.pipeline_mode<synchronous>, transform_indices = @transform_33, window_bounds = array<i64: 2, 1, 32>}, {pipeline_mode = #tpu.pipeline_mode<synchronous>, transform_indices = @transform_34, window_bounds = array<i64: 2, 1, 32>}, {pipeline_mode = #tpu.pipeline_mode<synchronous>, transform_indices = @transform_35, window_bounds = array<i64: 2, 1, 32>}, {pipeline_mode = #tpu.pipeline_mode<synchronous>, transform_indices = @transform_36, window_bounds = array<i64: 32, 128>}, {pipeline_mode = #tpu.pipeline_mode<synchronous>, transform_indices = @transform_37, window_bounds = array<i64: 1, 128>}, {transform_indices = @transform_38, window_bounds = array<i64: 1, 8, 128>}]} {
    %c0 = arith.constant 0 : index
    %c0_0 = arith.constant 0 : index
    %0 = vector.load %arg4[%c0, %c0_0] : memref<16x32xf32, #tpu.memory_space<vmem>>, vector<16x32xf32>
    %c0_1 = arith.constant 0 : index
    %c0_2 = arith.constant 0 : index
    %c0_3 = arith.constant 0 : index
    %1 = vector.load %arg3[%c0_1, %c0_2, %c0_3] : memref<1x1x8xf32, #tpu.memory_space<vmem>>, vector<1x1x8xf32>
    %2 = vector.shape_cast %1 : vector<1x1x8xf32> to vector<1x8xf32>
    %cst = arith.constant 1.000000e+00 : f32
    %3 = vector.broadcast %cst : f32 to vector<1x8xf32>
    %4 = arith.subf %2, %3 : vector<1x8xf32>
    %cst_4 = arith.constant 1.000000e+09 : f32
    %5 = vector.broadcast %cst_4 : f32 to vector<1x8xf32>
    %6 = arith.mulf %4, %5 : vector<1x8xf32>
    %7 = vector.shape_cast %6 : vector<1x8xf32> to vector<1x1x8xf32>
    %8 = tpu.iota {dimensions = array<i32: 0>} : vector<8x8xi32>
    %9 = tpu.iota {dimensions = array<i32: 1>} : vector<8x8xi32>
    %10 = arith.cmpi sge, %8, %9 : vector<8x8xi32>
    %cst_5 = arith.constant 0.000000e+00 : f32
    %cst_6 = arith.constant -1.000000e+09 : f32
    %11 = vector.broadcast %cst_5 : f32 to vector<8x8xf32>
    %12 = vector.broadcast %cst_6 : f32 to vector<8x8xf32>
    %13 = arith.select %10, %11, %12 : vector<8x8xi1>, vector<8x8xf32>
    %c0_7 = arith.constant 0 : index
    %c0_8 = arith.constant 0 : index
    %c0_9 = arith.constant 0 : index
    %14 = vector.load %arg1[%c0_7, %c0_8, %c0_9] : memref<1x8x32xf32, #tpu.memory_space<vmem>>, vector<1x8x32xf32>
    %15 = vector.shape_cast %14 : vector<1x8x32xf32> to vector<8x32xf32>
    %16 = vector.extract_strided_slice %0 {offsets = [0, 0], sizes = [8, 32], strides = [1, 1]} : vector<16x32xf32> to vector<8x32xf32>
    %17 = arith.addf %15, %16 : vector<8x32xf32>
    %c0_10 = arith.constant 0 : index
    %c0_11 = arith.constant 0 : index
    %c0_12 = arith.constant 0 : index
    %18 = vector.load %arg5[%c0_10, %c0_11, %c0_12] : memref<2x32x96xbf16, #tpu.memory_space<vmem>>, vector<1x32x96xbf16>
    %19 = vector.shape_cast %18 : vector<1x32x96xbf16> to vector<32x96xbf16>
    %c0_13 = arith.constant 0 : index
    %c0_14 = arith.constant 0 : index
    %c0_15 = arith.constant 0 : index
    %20 = vector.load %arg6[%c0_13, %c0_14, %c0_15] : memref<2x1x96xf32, #tpu.memory_space<vmem>>, vector<1x1x96xf32>
    %21 = vector.shape_cast %20 : vector<1x1x96xf32> to vector<1x96xf32>
    %c0_16 = arith.constant 0 : index
    %c0_17 = arith.constant 0 : index
    %c0_18 = arith.constant 0 : index
    %22 = vector.load %arg7[%c0_16, %c0_17, %c0_18] : memref<2x32x32xbf16, #tpu.memory_space<vmem>>, vector<1x32x32xbf16>
    %23 = vector.shape_cast %22 : vector<1x32x32xbf16> to vector<32x32xbf16>
    %c0_19 = arith.constant 0 : index
    %c0_20 = arith.constant 0 : index
    %c0_21 = arith.constant 0 : index
    %24 = vector.load %arg8[%c0_19, %c0_20, %c0_21] : memref<2x1x32xf32, #tpu.memory_space<vmem>>, vector<1x1x32xf32>
    %25 = vector.shape_cast %24 : vector<1x1x32xf32> to vector<1x32xf32>
    %26 = arith.truncf %17 : vector<8x32xf32> to vector<8x32xbf16>
    %cst_22 = arith.constant dense<0.000000e+00> : vector<8x96xf32>
    %27 = tpu.matmul %26, %19, %cst_22 {dimension_numbers = #tpu.dot_dimension_numbers<[1], [0], [0], [1], [0, 0, 1, 1], [], []>} : vector<8x32xbf16>, vector<32x96xbf16>, vector<8x96xf32> -> vector<8x96xf32>
    %28 = vector.broadcast %21 : vector<1x96xf32> to vector<8x96xf32>
    %29 = arith.addf %27, %28 : vector<8x96xf32>
    %30 = tpu.transpose %29, [1, 0] : vector<8x96xf32> -> vector<96x8xf32>
    %31 = vector.shape_cast %30 : vector<96x8xf32> to vector<12x8x8xf32>
    %32 = vector.extract_strided_slice %31 {offsets = [0, 0, 0], sizes = [4, 8, 8], strides = [1, 1, 1]} : vector<12x8x8xf32> to vector<4x8x8xf32>
    %33 = tpu.transpose %32, [0, 2, 1] : vector<4x8x8xf32> -> vector<4x8x8xf32>
    %34 = vector.extract_strided_slice %31 {offsets = [4, 0, 0], sizes = [4, 8, 8], strides = [1, 1, 1]} : vector<12x8x8xf32> to vector<4x8x8xf32>
    %35 = vector.extract_strided_slice %31 {offsets = [8, 0, 0], sizes = [4, 8, 8], strides = [1, 1, 1]} : vector<12x8x8xf32> to vector<4x8x8xf32>
    %36 = tpu.transpose %35, [0, 2, 1] : vector<4x8x8xf32> -> vector<4x8x8xf32>
    %37 = arith.truncf %33 : vector<4x8x8xf32> to vector<4x8x8xbf16>
    %38 = arith.truncf %34 : vector<4x8x8xf32> to vector<4x8x8xbf16>
    %cst_23 = arith.constant dense<0.000000e+00> : vector<4x8x8xf32>
    %39 = tpu.matmul %37, %38, %cst_23 {dimension_numbers = #tpu.dot_dimension_numbers<[2], [1], [1], [2], [0, 0, 0, 1, 1, 2], [0], [0]>} : vector<4x8x8xbf16>, vector<4x8x8xbf16>, vector<4x8x8xf32> -> vector<4x8x8xf32>
    %cst_24 = arith.constant 0.353553385 : f32
    %40 = vector.broadcast %cst_24 : f32 to vector<4x8x8xf32>
    %41 = arith.mulf %39, %40 : vector<4x8x8xf32>
    %42 = vector.broadcast %7 : vector<1x1x8xf32> to vector<4x8x8xf32>
    %43 = arith.addf %41, %42 : vector<4x8x8xf32>
    %cst_25 = arith.constant dense<0xFF800000> : vector<4x8xf32>
    %44 = vector.multi_reduction <maximumf>, %43, %cst_25 [2] : vector<4x8x8xf32> to vector<4x8xf32>
    %45 = vector.shape_cast %44 : vector<4x8xf32> to vector<4x8x1xf32>
    %46 = vector.broadcast %45 : vector<4x8x1xf32> to vector<4x8x8xf32>
    %47 = arith.subf %43, %46 : vector<4x8x8xf32>
    %48 = math.exp %47 : vector<4x8x8xf32>
    %cst_26 = arith.constant dense<0.000000e+00> : vector<4x8xf32>
    %49 = vector.multi_reduction <add>, %48, %cst_26 [2] : vector<4x8x8xf32> to vector<4x8xf32>
    %50 = vector.shape_cast %49 : vector<4x8xf32> to vector<4x8x1xf32>
    %51 = tpu.reciprocal %50 {approx = true} : vector<4x8x1xf32> -> vector<4x8x1xf32>
    %52 = vector.broadcast %51 : vector<4x8x1xf32> to vector<4x8x8xf32>
    %53 = arith.mulf %48, %52 : vector<4x8x8xf32>
    %54 = arith.truncf %53 : vector<4x8x8xf32> to vector<4x8x8xbf16>
    %55 = arith.truncf %36 : vector<4x8x8xf32> to vector<4x8x8xbf16>
    %cst_27 = arith.constant dense<0.000000e+00> : vector<4x8x8xf32>
    %56 = tpu.matmul %54, %55, %cst_27 {dimension_numbers = #tpu.dot_dimension_numbers<[2], [1], [1], [2], [0, 0, 0, 1, 1, 2], [0], [0]>} : vector<4x8x8xbf16>, vector<4x8x8xbf16>, vector<4x8x8xf32> -> vector<4x8x8xf32>
    %57 = tpu.transpose %56, [0, 2, 1] : vector<4x8x8xf32> -> vector<4x8x8xf32>
    %58 = vector.shape_cast %57 : vector<4x8x8xf32> to vector<32x8xf32>
    %59 = tpu.transpose %58, [1, 0] : vector<32x8xf32> -> vector<8x32xf32>
    %60 = arith.truncf %59 : vector<8x32xf32> to vector<8x32xbf16>
    %cst_28 = arith.constant dense<0.000000e+00> : vector<8x32xf32>
    %61 = tpu.matmul %60, %23, %cst_28 {dimension_numbers = #tpu.dot_dimension_numbers<[1], [0], [0], [1], [0, 0, 1, 1], [], []>} : vector<8x32xbf16>, vector<32x32xbf16>, vector<8x32xf32> -> vector<8x32xf32>
    %62 = vector.broadcast %25 : vector<1x32xf32> to vector<8x32xf32>
    %63 = arith.addf %61, %62 : vector<8x32xf32>
    %64 = arith.addf %17, %63 : vector<8x32xf32>
    %c0_29 = arith.constant 0 : index
    %c0_30 = arith.constant 0 : index
    %c0_31 = arith.constant 0 : index
    %65 = vector.load %arg13[%c0_29, %c0_30, %c0_31] : memref<2x1x32xf32, #tpu.memory_space<vmem>>, vector<1x1x32xf32>
    %66 = vector.shape_cast %65 : vector<1x1x32xf32> to vector<1x32xf32>
    %c0_32 = arith.constant 0 : index
    %c0_33 = arith.constant 0 : index
    %c0_34 = arith.constant 0 : index
    %67 = vector.load %arg14[%c0_32, %c0_33, %c0_34] : memref<2x1x32xf32, #tpu.memory_space<vmem>>, vector<1x1x32xf32>
    %68 = vector.shape_cast %67 : vector<1x1x32xf32> to vector<1x32xf32>
    %cst_35 = arith.constant dense<0.000000e+00> : vector<8xf32>
    %69 = vector.multi_reduction <add>, %64, %cst_35 [1] : vector<8x32xf32> to vector<8xf32>
    %70 = vector.shape_cast %69 : vector<8xf32> to vector<8x1xf32>
    %cst_36 = arith.constant 3.200000e+01 : f32
    %71 = vector.broadcast %cst_36 : f32 to vector<8x1xf32>
    %72 = arith.divf %70, %71 : vector<8x1xf32>
    %73 = arith.mulf %64, %64 : vector<8x32xf32>
    %cst_37 = arith.constant dense<0.000000e+00> : vector<8xf32>
    %74 = vector.multi_reduction <add>, %73, %cst_37 [1] : vector<8x32xf32> to vector<8xf32>
    %75 = vector.shape_cast %74 : vector<8xf32> to vector<8x1xf32>
    %cst_38 = arith.constant 3.200000e+01 : f32
    %76 = vector.broadcast %cst_38 : f32 to vector<8x1xf32>
    %77 = arith.divf %75, %76 : vector<8x1xf32>
    %78 = arith.mulf %72, %72 : vector<8x1xf32>
    %79 = arith.subf %77, %78 : vector<8x1xf32>
    %80 = vector.broadcast %72 : vector<8x1xf32> to vector<8x32xf32>
    %81 = arith.subf %64, %80 : vector<8x32xf32>
    %cst_39 = arith.constant 9.99999974E-6 : f32
    %82 = vector.broadcast %cst_39 : f32 to vector<8x1xf32>
    %83 = arith.addf %79, %82 : vector<8x1xf32>
    %84 = math.rsqrt %83 : vector<8x1xf32>
    %85 = vector.broadcast %84 : vector<8x1xf32> to vector<8x32xf32>
    %86 = arith.mulf %81, %85 : vector<8x32xf32>
    %87 = vector.broadcast %66 : vector<1x32xf32> to vector<8x32xf32>
    %88 = arith.mulf %86, %87 : vector<8x32xf32>
    %89 = vector.broadcast %68 : vector<1x32xf32> to vector<8x32xf32>
    %90 = arith.addf %88, %89 : vector<8x32xf32>
    %c0_40 = arith.constant 0 : index
    %c0_41 = arith.constant 0 : index
    %c0_42 = arith.constant 0 : index
    %91 = vector.load %arg9[%c0_40, %c0_41, %c0_42] : memref<2x32x64xbf16, #tpu.memory_space<vmem>>, vector<1x32x64xbf16>
    %92 = vector.shape_cast %91 : vector<1x32x64xbf16> to vector<32x64xbf16>
    %c0_43 = arith.constant 0 : index
    %c0_44 = arith.constant 0 : index
    %c0_45 = arith.constant 0 : index
    %93 = vector.load %arg10[%c0_43, %c0_44, %c0_45] : memref<2x1x64xf32, #tpu.memory_space<vmem>>, vector<1x1x64xf32>
    %94 = vector.shape_cast %93 : vector<1x1x64xf32> to vector<1x64xf32>
    %c0_46 = arith.constant 0 : index
    %c0_47 = arith.constant 0 : index
    %c0_48 = arith.constant 0 : index
    %95 = vector.load %arg11[%c0_46, %c0_47, %c0_48] : memref<2x64x32xbf16, #tpu.memory_space<vmem>>, vector<1x64x32xbf16>
    %96 = vector.shape_cast %95 : vector<1x64x32xbf16> to vector<64x32xbf16>
    %c0_49 = arith.constant 0 : index
    %c0_50 = arith.constant 0 : index
    %c0_51 = arith.constant 0 : index
    %97 = vector.load %arg12[%c0_49, %c0_50, %c0_51] : memref<2x1x32xf32, #tpu.memory_space<vmem>>, vector<1x1x32xf32>
    %98 = vector.shape_cast %97 : vector<1x1x32xf32> to vector<1x32xf32>
    %99 = arith.truncf %90 : vector<8x32xf32> to vector<8x32xbf16>
    %cst_52 = arith.constant dense<0.000000e+00> : vector<8x64xf32>
    %100 = tpu.matmul %99, %92, %cst_52 {dimension_numbers = #tpu.dot_dimension_numbers<[1], [0], [0], [1], [0, 0, 1, 1], [], []>} : vector<8x32xbf16>, vector<32x64xbf16>, vector<8x64xf32> -> vector<8x64xf32>
    %101 = vector.broadcast %94 : vector<1x64xf32> to vector<8x64xf32>
    %102 = arith.addf %100, %101 : vector<8x64xf32>
    %cst_53 = arith.constant 0.000000e+00 : f32
    %103 = vector.broadcast %cst_53 : f32 to vector<8x64xf32>
    %104 = arith.maximumf %102, %103 : vector<8x64xf32>
    %105 = arith.truncf %104 : vector<8x64xf32> to vector<8x64xbf16>
    %cst_54 = arith.constant dense<0.000000e+00> : vector<8x32xf32>
    %106 = tpu.matmul %105, %96, %cst_54 {dimension_numbers = #tpu.dot_dimension_numbers<[1], [0], [0], [1], [0, 0, 1, 1], [], []>} : vector<8x64xbf16>, vector<64x32xbf16>, vector<8x32xf32> -> vector<8x32xf32>
    %107 = vector.broadcast %98 : vector<1x32xf32> to vector<8x32xf32>
    %108 = arith.addf %106, %107 : vector<8x32xf32>
    %109 = arith.addf %90, %108 : vector<8x32xf32>
    %c0_55 = arith.constant 0 : index
    %c0_56 = arith.constant 0 : index
    %c0_57 = arith.constant 0 : index
    %110 = vector.load %arg15[%c0_55, %c0_56, %c0_57] : memref<2x1x32xf32, #tpu.memory_space<vmem>>, vector<1x1x32xf32>
    %111 = vector.shape_cast %110 : vector<1x1x32xf32> to vector<1x32xf32>
    %c0_58 = arith.constant 0 : index
    %c0_59 = arith.constant 0 : index
    %c0_60 = arith.constant 0 : index
    %112 = vector.load %arg16[%c0_58, %c0_59, %c0_60] : memref<2x1x32xf32, #tpu.memory_space<vmem>>, vector<1x1x32xf32>
    %113 = vector.shape_cast %112 : vector<1x1x32xf32> to vector<1x32xf32>
    %cst_61 = arith.constant dense<0.000000e+00> : vector<8xf32>
    %114 = vector.multi_reduction <add>, %109, %cst_61 [1] : vector<8x32xf32> to vector<8xf32>
    %115 = vector.shape_cast %114 : vector<8xf32> to vector<8x1xf32>
    %cst_62 = arith.constant 3.200000e+01 : f32
    %116 = vector.broadcast %cst_62 : f32 to vector<8x1xf32>
    %117 = arith.divf %115, %116 : vector<8x1xf32>
    %118 = arith.mulf %109, %109 : vector<8x32xf32>
    %cst_63 = arith.constant dense<0.000000e+00> : vector<8xf32>
    %119 = vector.multi_reduction <add>, %118, %cst_63 [1] : vector<8x32xf32> to vector<8xf32>
    %120 = vector.shape_cast %119 : vector<8xf32> to vector<8x1xf32>
    %cst_64 = arith.constant 3.200000e+01 : f32
    %121 = vector.broadcast %cst_64 : f32 to vector<8x1xf32>
    %122 = arith.divf %120, %121 : vector<8x1xf32>
    %123 = arith.mulf %117, %117 : vector<8x1xf32>
    %124 = arith.subf %122, %123 : vector<8x1xf32>
    %125 = vector.broadcast %117 : vector<8x1xf32> to vector<8x32xf32>
    %126 = arith.subf %109, %125 : vector<8x32xf32>
    %cst_65 = arith.constant 9.99999974E-6 : f32
    %127 = vector.broadcast %cst_65 : f32 to vector<8x1xf32>
    %128 = arith.addf %124, %127 : vector<8x1xf32>
    %129 = math.rsqrt %128 : vector<8x1xf32>
    %130 = vector.broadcast %129 : vector<8x1xf32> to vector<8x32xf32>
    %131 = arith.mulf %126, %130 : vector<8x32xf32>
    %132 = vector.broadcast %111 : vector<1x32xf32> to vector<8x32xf32>
    %133 = arith.mulf %131, %132 : vector<8x32xf32>
    %134 = vector.broadcast %113 : vector<1x32xf32> to vector<8x32xf32>
    %135 = arith.addf %133, %134 : vector<8x32xf32>
    %c1 = arith.constant 1 : index
    %c0_66 = arith.constant 0 : index
    %c0_67 = arith.constant 0 : index
    %136 = vector.load %arg5[%c1, %c0_66, %c0_67] : memref<2x32x96xbf16, #tpu.memory_space<vmem>>, vector<1x32x96xbf16>
    %137 = vector.shape_cast %136 : vector<1x32x96xbf16> to vector<32x96xbf16>
    %c1_68 = arith.constant 1 : index
    %c0_69 = arith.constant 0 : index
    %c0_70 = arith.constant 0 : index
    %138 = vector.load %arg6[%c1_68, %c0_69, %c0_70] : memref<2x1x96xf32, #tpu.memory_space<vmem>>, vector<1x1x96xf32>
    %139 = vector.shape_cast %138 : vector<1x1x96xf32> to vector<1x96xf32>
    %c1_71 = arith.constant 1 : index
    %c0_72 = arith.constant 0 : index
    %c0_73 = arith.constant 0 : index
    %140 = vector.load %arg7[%c1_71, %c0_72, %c0_73] : memref<2x32x32xbf16, #tpu.memory_space<vmem>>, vector<1x32x32xbf16>
    %141 = vector.shape_cast %140 : vector<1x32x32xbf16> to vector<32x32xbf16>
    %c1_74 = arith.constant 1 : index
    %c0_75 = arith.constant 0 : index
    %c0_76 = arith.constant 0 : index
    %142 = vector.load %arg8[%c1_74, %c0_75, %c0_76] : memref<2x1x32xf32, #tpu.memory_space<vmem>>, vector<1x1x32xf32>
    %143 = vector.shape_cast %142 : vector<1x1x32xf32> to vector<1x32xf32>
    %144 = arith.truncf %135 : vector<8x32xf32> to vector<8x32xbf16>
    %cst_77 = arith.constant dense<0.000000e+00> : vector<8x96xf32>
    %145 = tpu.matmul %144, %137, %cst_77 {dimension_numbers = #tpu.dot_dimension_numbers<[1], [0], [0], [1], [0, 0, 1, 1], [], []>} : vector<8x32xbf16>, vector<32x96xbf16>, vector<8x96xf32> -> vector<8x96xf32>
    %146 = vector.broadcast %139 : vector<1x96xf32> to vector<8x96xf32>
    %147 = arith.addf %145, %146 : vector<8x96xf32>
    %148 = tpu.transpose %147, [1, 0] : vector<8x96xf32> -> vector<96x8xf32>
    %149 = vector.shape_cast %148 : vector<96x8xf32> to vector<12x8x8xf32>
    %150 = vector.extract_strided_slice %149 {offsets = [0, 0, 0], sizes = [4, 8, 8], strides = [1, 1, 1]} : vector<12x8x8xf32> to vector<4x8x8xf32>
    %151 = tpu.transpose %150, [0, 2, 1] : vector<4x8x8xf32> -> vector<4x8x8xf32>
    %152 = vector.extract_strided_slice %149 {offsets = [4, 0, 0], sizes = [4, 8, 8], strides = [1, 1, 1]} : vector<12x8x8xf32> to vector<4x8x8xf32>
    %153 = vector.extract_strided_slice %149 {offsets = [8, 0, 0], sizes = [4, 8, 8], strides = [1, 1, 1]} : vector<12x8x8xf32> to vector<4x8x8xf32>
    %154 = tpu.transpose %153, [0, 2, 1] : vector<4x8x8xf32> -> vector<4x8x8xf32>
    %155 = arith.truncf %151 : vector<4x8x8xf32> to vector<4x8x8xbf16>
    %156 = arith.truncf %152 : vector<4x8x8xf32> to vector<4x8x8xbf16>
    %cst_78 = arith.constant dense<0.000000e+00> : vector<4x8x8xf32>
    %157 = tpu.matmul %155, %156, %cst_78 {dimension_numbers = #tpu.dot_dimension_numbers<[2], [1], [1], [2], [0, 0, 0, 1, 1, 2], [0], [0]>} : vector<4x8x8xbf16>, vector<4x8x8xbf16>, vector<4x8x8xf32> -> vector<4x8x8xf32>
    %cst_79 = arith.constant 0.353553385 : f32
    %158 = vector.broadcast %cst_79 : f32 to vector<4x8x8xf32>
    %159 = arith.mulf %157, %158 : vector<4x8x8xf32>
    %160 = vector.broadcast %7 : vector<1x1x8xf32> to vector<4x8x8xf32>
    %161 = arith.addf %159, %160 : vector<4x8x8xf32>
    %cst_80 = arith.constant dense<0xFF800000> : vector<4x8xf32>
    %162 = vector.multi_reduction <maximumf>, %161, %cst_80 [2] : vector<4x8x8xf32> to vector<4x8xf32>
    %163 = vector.shape_cast %162 : vector<4x8xf32> to vector<4x8x1xf32>
    %164 = vector.broadcast %163 : vector<4x8x1xf32> to vector<4x8x8xf32>
    %165 = arith.subf %161, %164 : vector<4x8x8xf32>
    %166 = math.exp %165 : vector<4x8x8xf32>
    %cst_81 = arith.constant dense<0.000000e+00> : vector<4x8xf32>
    %167 = vector.multi_reduction <add>, %166, %cst_81 [2] : vector<4x8x8xf32> to vector<4x8xf32>
    %168 = vector.shape_cast %167 : vector<4x8xf32> to vector<4x8x1xf32>
    %169 = tpu.reciprocal %168 {approx = true} : vector<4x8x1xf32> -> vector<4x8x1xf32>
    %170 = vector.broadcast %169 : vector<4x8x1xf32> to vector<4x8x8xf32>
    %171 = arith.mulf %166, %170 : vector<4x8x8xf32>
    %172 = arith.truncf %171 : vector<4x8x8xf32> to vector<4x8x8xbf16>
    %173 = arith.truncf %154 : vector<4x8x8xf32> to vector<4x8x8xbf16>
    %cst_82 = arith.constant dense<0.000000e+00> : vector<4x8x8xf32>
    %174 = tpu.matmul %172, %173, %cst_82 {dimension_numbers = #tpu.dot_dimension_numbers<[2], [1], [1], [2], [0, 0, 0, 1, 1, 2], [0], [0]>} : vector<4x8x8xbf16>, vector<4x8x8xbf16>, vector<4x8x8xf32> -> vector<4x8x8xf32>
    %175 = tpu.transpose %174, [0, 2, 1] : vector<4x8x8xf32> -> vector<4x8x8xf32>
    %176 = vector.shape_cast %175 : vector<4x8x8xf32> to vector<32x8xf32>
    %177 = tpu.transpose %176, [1, 0] : vector<32x8xf32> -> vector<8x32xf32>
    %178 = arith.truncf %177 : vector<8x32xf32> to vector<8x32xbf16>
    %cst_83 = arith.constant dense<0.000000e+00> : vector<8x32xf32>
    %179 = tpu.matmul %178, %141, %cst_83 {dimension_numbers = #tpu.dot_dimension_numbers<[1], [0], [0], [1], [0, 0, 1, 1], [], []>} : vector<8x32xbf16>, vector<32x32xbf16>, vector<8x32xf32> -> vector<8x32xf32>
    %180 = vector.broadcast %143 : vector<1x32xf32> to vector<8x32xf32>
    %181 = arith.addf %179, %180 : vector<8x32xf32>
    %182 = arith.addf %135, %181 : vector<8x32xf32>
    %c1_84 = arith.constant 1 : index
    %c0_85 = arith.constant 0 : index
    %c0_86 = arith.constant 0 : index
    %183 = vector.load %arg13[%c1_84, %c0_85, %c0_86] : memref<2x1x32xf32, #tpu.memory_space<vmem>>, vector<1x1x32xf32>
    %184 = vector.shape_cast %183 : vector<1x1x32xf32> to vector<1x32xf32>
    %c1_87 = arith.constant 1 : index
    %c0_88 = arith.constant 0 : index
    %c0_89 = arith.constant 0 : index
    %185 = vector.load %arg14[%c1_87, %c0_88, %c0_89] : memref<2x1x32xf32, #tpu.memory_space<vmem>>, vector<1x1x32xf32>
    %186 = vector.shape_cast %185 : vector<1x1x32xf32> to vector<1x32xf32>
    %cst_90 = arith.constant dense<0.000000e+00> : vector<8xf32>
    %187 = vector.multi_reduction <add>, %182, %cst_90 [1] : vector<8x32xf32> to vector<8xf32>
    %188 = vector.shape_cast %187 : vector<8xf32> to vector<8x1xf32>
    %cst_91 = arith.constant 3.200000e+01 : f32
    %189 = vector.broadcast %cst_91 : f32 to vector<8x1xf32>
    %190 = arith.divf %188, %189 : vector<8x1xf32>
    %191 = arith.mulf %182, %182 : vector<8x32xf32>
    %cst_92 = arith.constant dense<0.000000e+00> : vector<8xf32>
    %192 = vector.multi_reduction <add>, %191, %cst_92 [1] : vector<8x32xf32> to vector<8xf32>
    %193 = vector.shape_cast %192 : vector<8xf32> to vector<8x1xf32>
    %cst_93 = arith.constant 3.200000e+01 : f32
    %194 = vector.broadcast %cst_93 : f32 to vector<8x1xf32>
    %195 = arith.divf %193, %194 : vector<8x1xf32>
    %196 = arith.mulf %190, %190 : vector<8x1xf32>
    %197 = arith.subf %195, %196 : vector<8x1xf32>
    %198 = vector.broadcast %190 : vector<8x1xf32> to vector<8x32xf32>
    %199 = arith.subf %182, %198 : vector<8x32xf32>
    %cst_94 = arith.constant 9.99999974E-6 : f32
    %200 = vector.broadcast %cst_94 : f32 to vector<8x1xf32>
    %201 = arith.addf %197, %200 : vector<8x1xf32>
    %202 = math.rsqrt %201 : vector<8x1xf32>
    %203 = vector.broadcast %202 : vector<8x1xf32> to vector<8x32xf32>
    %204 = arith.mulf %199, %203 : vector<8x32xf32>
    %205 = vector.broadcast %184 : vector<1x32xf32> to vector<8x32xf32>
    %206 = arith.mulf %204, %205 : vector<8x32xf32>
    %207 = vector.broadcast %186 : vector<1x32xf32> to vector<8x32xf32>
    %208 = arith.addf %206, %207 : vector<8x32xf32>
    %c1_95 = arith.constant 1 : index
    %c0_96 = arith.constant 0 : index
    %c0_97 = arith.constant 0 : index
    %209 = vector.load %arg9[%c1_95, %c0_96, %c0_97] : memref<2x32x64xbf16, #tpu.memory_space<vmem>>, vector<1x32x64xbf16>
    %210 = vector.shape_cast %209 : vector<1x32x64xbf16> to vector<32x64xbf16>
    %c1_98 = arith.constant 1 : index
    %c0_99 = arith.constant 0 : index
    %c0_100 = arith.constant 0 : index
    %211 = vector.load %arg10[%c1_98, %c0_99, %c0_100] : memref<2x1x64xf32, #tpu.memory_space<vmem>>, vector<1x1x64xf32>
    %212 = vector.shape_cast %211 : vector<1x1x64xf32> to vector<1x64xf32>
    %c1_101 = arith.constant 1 : index
    %c0_102 = arith.constant 0 : index
    %c0_103 = arith.constant 0 : index
    %213 = vector.load %arg11[%c1_101, %c0_102, %c0_103] : memref<2x64x32xbf16, #tpu.memory_space<vmem>>, vector<1x64x32xbf16>
    %214 = vector.shape_cast %213 : vector<1x64x32xbf16> to vector<64x32xbf16>
    %c1_104 = arith.constant 1 : index
    %c0_105 = arith.constant 0 : index
    %c0_106 = arith.constant 0 : index
    %215 = vector.load %arg12[%c1_104, %c0_105, %c0_106] : memref<2x1x32xf32, #tpu.memory_space<vmem>>, vector<1x1x32xf32>
    %216 = vector.shape_cast %215 : vector<1x1x32xf32> to vector<1x32xf32>
    %217 = arith.truncf %208 : vector<8x32xf32> to vector<8x32xbf16>
    %cst_107 = arith.constant dense<0.000000e+00> : vector<8x64xf32>
    %218 = tpu.matmul %217, %210, %cst_107 {dimension_numbers = #tpu.dot_dimension_numbers<[1], [0], [0], [1], [0, 0, 1, 1], [], []>} : vector<8x32xbf16>, vector<32x64xbf16>, vector<8x64xf32> -> vector<8x64xf32>
    %219 = vector.broadcast %212 : vector<1x64xf32> to vector<8x64xf32>
    %220 = arith.addf %218, %219 : vector<8x64xf32>
    %cst_108 = arith.constant 0.000000e+00 : f32
    %221 = vector.broadcast %cst_108 : f32 to vector<8x64xf32>
    %222 = arith.maximumf %220, %221 : vector<8x64xf32>
    %223 = arith.truncf %222 : vector<8x64xf32> to vector<8x64xbf16>
    %cst_109 = arith.constant dense<0.000000e+00> : vector<8x32xf32>
    %224 = tpu.matmul %223, %214, %cst_109 {dimension_numbers = #tpu.dot_dimension_numbers<[1], [0], [0], [1], [0, 0, 1, 1], [], []>} : vector<8x64xbf16>, vector<64x32xbf16>, vector<8x32xf32> -> vector<8x32xf32>
    %225 = vector.broadcast %216 : vector<1x32xf32> to vector<8x32xf32>
    %226 = arith.addf %224, %225 : vector<8x32xf32>
    %227 = arith.addf %208, %226 : vector<8x32xf32>
    %c1_110 = arith.constant 1 : index
    %c0_111 = arith.constant 0 : index
    %c0_112 = arith.constant 0 : index
    %228 = vector.load %arg15[%c1_110, %c0_111, %c0_112] : memref<2x1x32xf32, #tpu.memory_space<vmem>>, vector<1x1x32xf32>
    %229 = vector.shape_cast %228 : vector<1x1x32xf32> to vector<1x32xf32>
    %c1_113 = arith.constant 1 : index
    %c0_114 = arith.constant 0 : index
    %c0_115 = arith.constant 0 : index
    %230 = vector.load %arg16[%c1_113, %c0_114, %c0_115] : memref<2x1x32xf32, #tpu.memory_space<vmem>>, vector<1x1x32xf32>
    %231 = vector.shape_cast %230 : vector<1x1x32xf32> to vector<1x32xf32>
    %cst_116 = arith.constant dense<0.000000e+00> : vector<8xf32>
    %232 = vector.multi_reduction <add>, %227, %cst_116 [1] : vector<8x32xf32> to vector<8xf32>
    %233 = vector.shape_cast %232 : vector<8xf32> to vector<8x1xf32>
    %cst_117 = arith.constant 3.200000e+01 : f32
    %234 = vector.broadcast %cst_117 : f32 to vector<8x1xf32>
    %235 = arith.divf %233, %234 : vector<8x1xf32>
    %236 = arith.mulf %227, %227 : vector<8x32xf32>
    %cst_118 = arith.constant dense<0.000000e+00> : vector<8xf32>
    %237 = vector.multi_reduction <add>, %236, %cst_118 [1] : vector<8x32xf32> to vector<8xf32>
    %238 = vector.shape_cast %237 : vector<8xf32> to vector<8x1xf32>
    %cst_119 = arith.constant 3.200000e+01 : f32
    %239 = vector.broadcast %cst_119 : f32 to vector<8x1xf32>
    %240 = arith.divf %238, %239 : vector<8x1xf32>
    %241 = arith.mulf %235, %235 : vector<8x1xf32>
    %242 = arith.subf %240, %241 : vector<8x1xf32>
    %243 = vector.broadcast %235 : vector<8x1xf32> to vector<8x32xf32>
    %244 = arith.subf %227, %243 : vector<8x32xf32>
    %cst_120 = arith.constant 9.99999974E-6 : f32
    %245 = vector.broadcast %cst_120 : f32 to vector<8x1xf32>
    %246 = arith.addf %242, %245 : vector<8x1xf32>
    %247 = math.rsqrt %246 : vector<8x1xf32>
    %248 = vector.broadcast %247 : vector<8x1xf32> to vector<8x32xf32>
    %249 = arith.mulf %244, %248 : vector<8x32xf32>
    %250 = vector.broadcast %229 : vector<1x32xf32> to vector<8x32xf32>
    %251 = arith.mulf %249, %250 : vector<8x32xf32>
    %252 = vector.broadcast %231 : vector<1x32xf32> to vector<8x32xf32>
    %253 = arith.addf %251, %252 : vector<8x32xf32>
    %c0_121 = arith.constant 0 : index
    %c0_122 = arith.constant 0 : index
    %c0_123 = arith.constant 0 : index
    %254 = vector.load %arg2[%c0_121, %c0_122, %c0_123] : memref<1x8x32xf32, #tpu.memory_space<vmem>>, vector<1x8x32xf32>
    %255 = vector.shape_cast %254 : vector<1x8x32xf32> to vector<8x32xf32>
    %256 = vector.extract_strided_slice %0 {offsets = [0, 0], sizes = [8, 32], strides = [1, 1]} : vector<16x32xf32> to vector<8x32xf32>
    %257 = arith.addf %255, %256 : vector<8x32xf32>
    %c0_124 = arith.constant 0 : index
    %c0_125 = arith.constant 0 : index
    %c0_126 = arith.constant 0 : index
    %258 = vector.load %arg17[%c0_124, %c0_125, %c0_126] : memref<2x32x96xbf16, #tpu.memory_space<vmem>>, vector<1x32x96xbf16>
    %259 = vector.shape_cast %258 : vector<1x32x96xbf16> to vector<32x96xbf16>
    %c0_127 = arith.constant 0 : index
    %c0_128 = arith.constant 0 : index
    %c0_129 = arith.constant 0 : index
    %260 = vector.load %arg18[%c0_127, %c0_128, %c0_129] : memref<2x1x96xf32, #tpu.memory_space<vmem>>, vector<1x1x96xf32>
    %261 = vector.shape_cast %260 : vector<1x1x96xf32> to vector<1x96xf32>
    %c0_130 = arith.constant 0 : index
    %c0_131 = arith.constant 0 : index
    %c0_132 = arith.constant 0 : index
    %262 = vector.load %arg19[%c0_130, %c0_131, %c0_132] : memref<2x32x32xbf16, #tpu.memory_space<vmem>>, vector<1x32x32xbf16>
    %263 = vector.shape_cast %262 : vector<1x32x32xbf16> to vector<32x32xbf16>
    %c0_133 = arith.constant 0 : index
    %c0_134 = arith.constant 0 : index
    %c0_135 = arith.constant 0 : index
    %264 = vector.load %arg20[%c0_133, %c0_134, %c0_135] : memref<2x1x32xf32, #tpu.memory_space<vmem>>, vector<1x1x32xf32>
    %265 = vector.shape_cast %264 : vector<1x1x32xf32> to vector<1x32xf32>
    %266 = arith.truncf %257 : vector<8x32xf32> to vector<8x32xbf16>
    %cst_136 = arith.constant dense<0.000000e+00> : vector<8x96xf32>
    %267 = tpu.matmul %266, %259, %cst_136 {dimension_numbers = #tpu.dot_dimension_numbers<[1], [0], [0], [1], [0, 0, 1, 1], [], []>} : vector<8x32xbf16>, vector<32x96xbf16>, vector<8x96xf32> -> vector<8x96xf32>
    %268 = vector.broadcast %261 : vector<1x96xf32> to vector<8x96xf32>
    %269 = arith.addf %267, %268 : vector<8x96xf32>
    %270 = tpu.transpose %269, [1, 0] : vector<8x96xf32> -> vector<96x8xf32>
    %271 = vector.shape_cast %270 : vector<96x8xf32> to vector<12x8x8xf32>
    %272 = vector.extract_strided_slice %271 {offsets = [0, 0, 0], sizes = [4, 8, 8], strides = [1, 1, 1]} : vector<12x8x8xf32> to vector<4x8x8xf32>
    %273 = tpu.transpose %272, [0, 2, 1] : vector<4x8x8xf32> -> vector<4x8x8xf32>
    %274 = vector.extract_strided_slice %271 {offsets = [4, 0, 0], sizes = [4, 8, 8], strides = [1, 1, 1]} : vector<12x8x8xf32> to vector<4x8x8xf32>
    %275 = vector.extract_strided_slice %271 {offsets = [8, 0, 0], sizes = [4, 8, 8], strides = [1, 1, 1]} : vector<12x8x8xf32> to vector<4x8x8xf32>
    %276 = tpu.transpose %275, [0, 2, 1] : vector<4x8x8xf32> -> vector<4x8x8xf32>
    %277 = arith.truncf %273 : vector<4x8x8xf32> to vector<4x8x8xbf16>
    %278 = arith.truncf %274 : vector<4x8x8xf32> to vector<4x8x8xbf16>
    %cst_137 = arith.constant dense<0.000000e+00> : vector<4x8x8xf32>
    %279 = tpu.matmul %277, %278, %cst_137 {dimension_numbers = #tpu.dot_dimension_numbers<[2], [1], [1], [2], [0, 0, 0, 1, 1, 2], [0], [0]>} : vector<4x8x8xbf16>, vector<4x8x8xbf16>, vector<4x8x8xf32> -> vector<4x8x8xf32>
    %cst_138 = arith.constant 0.353553385 : f32
    %280 = vector.broadcast %cst_138 : f32 to vector<4x8x8xf32>
    %281 = arith.mulf %279, %280 : vector<4x8x8xf32>
    %282 = vector.shape_cast %13 : vector<8x8xf32> to vector<1x8x8xf32>
    %283 = vector.broadcast %282 : vector<1x8x8xf32> to vector<4x8x8xf32>
    %284 = arith.addf %281, %283 : vector<4x8x8xf32>
    %cst_139 = arith.constant dense<0xFF800000> : vector<4x8xf32>
    %285 = vector.multi_reduction <maximumf>, %284, %cst_139 [2] : vector<4x8x8xf32> to vector<4x8xf32>
    %286 = vector.shape_cast %285 : vector<4x8xf32> to vector<4x8x1xf32>
    %287 = vector.broadcast %286 : vector<4x8x1xf32> to vector<4x8x8xf32>
    %288 = arith.subf %284, %287 : vector<4x8x8xf32>
    %289 = math.exp %288 : vector<4x8x8xf32>
    %cst_140 = arith.constant dense<0.000000e+00> : vector<4x8xf32>
    %290 = vector.multi_reduction <add>, %289, %cst_140 [2] : vector<4x8x8xf32> to vector<4x8xf32>
    %291 = vector.shape_cast %290 : vector<4x8xf32> to vector<4x8x1xf32>
    %292 = tpu.reciprocal %291 {approx = true} : vector<4x8x1xf32> -> vector<4x8x1xf32>
    %293 = vector.broadcast %292 : vector<4x8x1xf32> to vector<4x8x8xf32>
    %294 = arith.mulf %289, %293 : vector<4x8x8xf32>
    %295 = arith.truncf %294 : vector<4x8x8xf32> to vector<4x8x8xbf16>
    %296 = arith.truncf %276 : vector<4x8x8xf32> to vector<4x8x8xbf16>
    %cst_141 = arith.constant dense<0.000000e+00> : vector<4x8x8xf32>
    %297 = tpu.matmul %295, %296, %cst_141 {dimension_numbers = #tpu.dot_dimension_numbers<[2], [1], [1], [2], [0, 0, 0, 1, 1, 2], [0], [0]>} : vector<4x8x8xbf16>, vector<4x8x8xbf16>, vector<4x8x8xf32> -> vector<4x8x8xf32>
    %298 = tpu.transpose %297, [0, 2, 1] : vector<4x8x8xf32> -> vector<4x8x8xf32>
    %299 = vector.shape_cast %298 : vector<4x8x8xf32> to vector<32x8xf32>
    %300 = tpu.transpose %299, [1, 0] : vector<32x8xf32> -> vector<8x32xf32>
    %301 = arith.truncf %300 : vector<8x32xf32> to vector<8x32xbf16>
    %cst_142 = arith.constant dense<0.000000e+00> : vector<8x32xf32>
    %302 = tpu.matmul %301, %263, %cst_142 {dimension_numbers = #tpu.dot_dimension_numbers<[1], [0], [0], [1], [0, 0, 1, 1], [], []>} : vector<8x32xbf16>, vector<32x32xbf16>, vector<8x32xf32> -> vector<8x32xf32>
    %303 = vector.broadcast %265 : vector<1x32xf32> to vector<8x32xf32>
    %304 = arith.addf %302, %303 : vector<8x32xf32>
    %305 = arith.addf %257, %304 : vector<8x32xf32>
    %c0_143 = arith.constant 0 : index
    %c0_144 = arith.constant 0 : index
    %c0_145 = arith.constant 0 : index
    %306 = vector.load %arg31[%c0_143, %c0_144, %c0_145] : memref<2x1x32xf32, #tpu.memory_space<vmem>>, vector<1x1x32xf32>
    %307 = vector.shape_cast %306 : vector<1x1x32xf32> to vector<1x32xf32>
    %c0_146 = arith.constant 0 : index
    %c0_147 = arith.constant 0 : index
    %c0_148 = arith.constant 0 : index
    %308 = vector.load %arg32[%c0_146, %c0_147, %c0_148] : memref<2x1x32xf32, #tpu.memory_space<vmem>>, vector<1x1x32xf32>
    %309 = vector.shape_cast %308 : vector<1x1x32xf32> to vector<1x32xf32>
    %cst_149 = arith.constant dense<0.000000e+00> : vector<8xf32>
    %310 = vector.multi_reduction <add>, %305, %cst_149 [1] : vector<8x32xf32> to vector<8xf32>
    %311 = vector.shape_cast %310 : vector<8xf32> to vector<8x1xf32>
    %cst_150 = arith.constant 3.200000e+01 : f32
    %312 = vector.broadcast %cst_150 : f32 to vector<8x1xf32>
    %313 = arith.divf %311, %312 : vector<8x1xf32>
    %314 = arith.mulf %305, %305 : vector<8x32xf32>
    %cst_151 = arith.constant dense<0.000000e+00> : vector<8xf32>
    %315 = vector.multi_reduction <add>, %314, %cst_151 [1] : vector<8x32xf32> to vector<8xf32>
    %316 = vector.shape_cast %315 : vector<8xf32> to vector<8x1xf32>
    %cst_152 = arith.constant 3.200000e+01 : f32
    %317 = vector.broadcast %cst_152 : f32 to vector<8x1xf32>
    %318 = arith.divf %316, %317 : vector<8x1xf32>
    %319 = arith.mulf %313, %313 : vector<8x1xf32>
    %320 = arith.subf %318, %319 : vector<8x1xf32>
    %321 = vector.broadcast %313 : vector<8x1xf32> to vector<8x32xf32>
    %322 = arith.subf %305, %321 : vector<8x32xf32>
    %cst_153 = arith.constant 9.99999974E-6 : f32
    %323 = vector.broadcast %cst_153 : f32 to vector<8x1xf32>
    %324 = arith.addf %320, %323 : vector<8x1xf32>
    %325 = math.rsqrt %324 : vector<8x1xf32>
    %326 = vector.broadcast %325 : vector<8x1xf32> to vector<8x32xf32>
    %327 = arith.mulf %322, %326 : vector<8x32xf32>
    %328 = vector.broadcast %307 : vector<1x32xf32> to vector<8x32xf32>
    %329 = arith.mulf %327, %328 : vector<8x32xf32>
    %330 = vector.broadcast %309 : vector<1x32xf32> to vector<8x32xf32>
    %331 = arith.addf %329, %330 : vector<8x32xf32>
    %c0_154 = arith.constant 0 : index
    %c0_155 = arith.constant 0 : index
    %c0_156 = arith.constant 0 : index
    %332 = vector.load %arg21[%c0_154, %c0_155, %c0_156] : memref<2x32x32xbf16, #tpu.memory_space<vmem>>, vector<1x32x32xbf16>
    %333 = vector.shape_cast %332 : vector<1x32x32xbf16> to vector<32x32xbf16>
    %c0_157 = arith.constant 0 : index
    %c0_158 = arith.constant 0 : index
    %c0_159 = arith.constant 0 : index
    %334 = vector.load %arg22[%c0_157, %c0_158, %c0_159] : memref<2x1x32xf32, #tpu.memory_space<vmem>>, vector<1x1x32xf32>
    %335 = vector.shape_cast %334 : vector<1x1x32xf32> to vector<1x32xf32>
    %c0_160 = arith.constant 0 : index
    %c0_161 = arith.constant 0 : index
    %c0_162 = arith.constant 0 : index
    %336 = vector.load %arg23[%c0_160, %c0_161, %c0_162] : memref<2x32x64xbf16, #tpu.memory_space<vmem>>, vector<1x32x64xbf16>
    %337 = vector.shape_cast %336 : vector<1x32x64xbf16> to vector<32x64xbf16>
    %c0_163 = arith.constant 0 : index
    %c0_164 = arith.constant 0 : index
    %c0_165 = arith.constant 0 : index
    %338 = vector.load %arg24[%c0_163, %c0_164, %c0_165] : memref<2x1x64xf32, #tpu.memory_space<vmem>>, vector<1x1x64xf32>
    %339 = vector.shape_cast %338 : vector<1x1x64xf32> to vector<1x64xf32>
    %c0_166 = arith.constant 0 : index
    %c0_167 = arith.constant 0 : index
    %c0_168 = arith.constant 0 : index
    %340 = vector.load %arg25[%c0_166, %c0_167, %c0_168] : memref<2x32x32xbf16, #tpu.memory_space<vmem>>, vector<1x32x32xbf16>
    %341 = vector.shape_cast %340 : vector<1x32x32xbf16> to vector<32x32xbf16>
    %c0_169 = arith.constant 0 : index
    %c0_170 = arith.constant 0 : index
    %c0_171 = arith.constant 0 : index
    %342 = vector.load %arg26[%c0_169, %c0_170, %c0_171] : memref<2x1x32xf32, #tpu.memory_space<vmem>>, vector<1x1x32xf32>
    %343 = vector.shape_cast %342 : vector<1x1x32xf32> to vector<1x32xf32>
    %344 = arith.truncf %331 : vector<8x32xf32> to vector<8x32xbf16>
    %cst_172 = arith.constant dense<0.000000e+00> : vector<8x32xf32>
    %345 = tpu.matmul %344, %333, %cst_172 {dimension_numbers = #tpu.dot_dimension_numbers<[1], [0], [0], [1], [0, 0, 1, 1], [], []>} : vector<8x32xbf16>, vector<32x32xbf16>, vector<8x32xf32> -> vector<8x32xf32>
    %346 = vector.broadcast %335 : vector<1x32xf32> to vector<8x32xf32>
    %347 = arith.addf %345, %346 : vector<8x32xf32>
    %348 = arith.truncf %253 : vector<8x32xf32> to vector<8x32xbf16>
    %cst_173 = arith.constant dense<0.000000e+00> : vector<8x64xf32>
    %349 = tpu.matmul %348, %337, %cst_173 {dimension_numbers = #tpu.dot_dimension_numbers<[1], [0], [0], [1], [0, 0, 1, 1], [], []>} : vector<8x32xbf16>, vector<32x64xbf16>, vector<8x64xf32> -> vector<8x64xf32>
    %350 = vector.broadcast %339 : vector<1x64xf32> to vector<8x64xf32>
    %351 = arith.addf %349, %350 : vector<8x64xf32>
    %352 = tpu.transpose %351, [1, 0] : vector<8x64xf32> -> vector<64x8xf32>
    %353 = vector.shape_cast %352 : vector<64x8xf32> to vector<8x8x8xf32>
    %354 = vector.extract_strided_slice %353 {offsets = [0, 0, 0], sizes = [4, 8, 8], strides = [1, 1, 1]} : vector<8x8x8xf32> to vector<4x8x8xf32>
    %355 = vector.extract_strided_slice %353 {offsets = [4, 0, 0], sizes = [4, 8, 8], strides = [1, 1, 1]} : vector<8x8x8xf32> to vector<4x8x8xf32>
    %356 = tpu.transpose %355, [0, 2, 1] : vector<4x8x8xf32> -> vector<4x8x8xf32>
    %357 = tpu.transpose %347, [1, 0] : vector<8x32xf32> -> vector<32x8xf32>
    %358 = vector.shape_cast %357 : vector<32x8xf32> to vector<4x8x8xf32>
    %359 = tpu.transpose %358, [0, 2, 1] : vector<4x8x8xf32> -> vector<4x8x8xf32>
    %360 = arith.truncf %359 : vector<4x8x8xf32> to vector<4x8x8xbf16>
    %361 = arith.truncf %354 : vector<4x8x8xf32> to vector<4x8x8xbf16>
    %cst_174 = arith.constant dense<0.000000e+00> : vector<4x8x8xf32>
    %362 = tpu.matmul %360, %361, %cst_174 {dimension_numbers = #tpu.dot_dimension_numbers<[2], [1], [1], [2], [0, 0, 0, 1, 1, 2], [0], [0]>} : vector<4x8x8xbf16>, vector<4x8x8xbf16>, vector<4x8x8xf32> -> vector<4x8x8xf32>
    %cst_175 = arith.constant 0.353553385 : f32
    %363 = vector.broadcast %cst_175 : f32 to vector<4x8x8xf32>
    %364 = arith.mulf %362, %363 : vector<4x8x8xf32>
    %365 = vector.broadcast %7 : vector<1x1x8xf32> to vector<4x8x8xf32>
    %366 = arith.addf %364, %365 : vector<4x8x8xf32>
    %cst_176 = arith.constant dense<0xFF800000> : vector<4x8xf32>
    %367 = vector.multi_reduction <maximumf>, %366, %cst_176 [2] : vector<4x8x8xf32> to vector<4x8xf32>
    %368 = vector.shape_cast %367 : vector<4x8xf32> to vector<4x8x1xf32>
    %369 = vector.broadcast %368 : vector<4x8x1xf32> to vector<4x8x8xf32>
    %370 = arith.subf %366, %369 : vector<4x8x8xf32>
    %371 = math.exp %370 : vector<4x8x8xf32>
    %cst_177 = arith.constant dense<0.000000e+00> : vector<4x8xf32>
    %372 = vector.multi_reduction <add>, %371, %cst_177 [2] : vector<4x8x8xf32> to vector<4x8xf32>
    %373 = vector.shape_cast %372 : vector<4x8xf32> to vector<4x8x1xf32>
    %374 = tpu.reciprocal %373 {approx = true} : vector<4x8x1xf32> -> vector<4x8x1xf32>
    %375 = vector.broadcast %374 : vector<4x8x1xf32> to vector<4x8x8xf32>
    %376 = arith.mulf %371, %375 : vector<4x8x8xf32>
    %377 = arith.truncf %376 : vector<4x8x8xf32> to vector<4x8x8xbf16>
    %378 = arith.truncf %356 : vector<4x8x8xf32> to vector<4x8x8xbf16>
    %cst_178 = arith.constant dense<0.000000e+00> : vector<4x8x8xf32>
    %379 = tpu.matmul %377, %378, %cst_178 {dimension_numbers = #tpu.dot_dimension_numbers<[2], [1], [1], [2], [0, 0, 0, 1, 1, 2], [0], [0]>} : vector<4x8x8xbf16>, vector<4x8x8xbf16>, vector<4x8x8xf32> -> vector<4x8x8xf32>
    %380 = tpu.transpose %379, [0, 2, 1] : vector<4x8x8xf32> -> vector<4x8x8xf32>
    %381 = vector.shape_cast %380 : vector<4x8x8xf32> to vector<32x8xf32>
    %382 = tpu.transpose %381, [1, 0] : vector<32x8xf32> -> vector<8x32xf32>
    %383 = arith.truncf %382 : vector<8x32xf32> to vector<8x32xbf16>
    %cst_179 = arith.constant dense<0.000000e+00> : vector<8x32xf32>
    %384 = tpu.matmul %383, %341, %cst_179 {dimension_numbers = #tpu.dot_dimension_numbers<[1], [0], [0], [1], [0, 0, 1, 1], [], []>} : vector<8x32xbf16>, vector<32x32xbf16>, vector<8x32xf32> -> vector<8x32xf32>
    %385 = vector.broadcast %343 : vector<1x32xf32> to vector<8x32xf32>
    %386 = arith.addf %384, %385 : vector<8x32xf32>
    %387 = arith.addf %331, %386 : vector<8x32xf32>
    %c0_180 = arith.constant 0 : index
    %c0_181 = arith.constant 0 : index
    %c0_182 = arith.constant 0 : index
    %388 = vector.load %arg33[%c0_180, %c0_181, %c0_182] : memref<2x1x32xf32, #tpu.memory_space<vmem>>, vector<1x1x32xf32>
    %389 = vector.shape_cast %388 : vector<1x1x32xf32> to vector<1x32xf32>
    %c0_183 = arith.constant 0 : index
    %c0_184 = arith.constant 0 : index
    %c0_185 = arith.constant 0 : index
    %390 = vector.load %arg34[%c0_183, %c0_184, %c0_185] : memref<2x1x32xf32, #tpu.memory_space<vmem>>, vector<1x1x32xf32>
    %391 = vector.shape_cast %390 : vector<1x1x32xf32> to vector<1x32xf32>
    %cst_186 = arith.constant dense<0.000000e+00> : vector<8xf32>
    %392 = vector.multi_reduction <add>, %387, %cst_186 [1] : vector<8x32xf32> to vector<8xf32>
    %393 = vector.shape_cast %392 : vector<8xf32> to vector<8x1xf32>
    %cst_187 = arith.constant 3.200000e+01 : f32
    %394 = vector.broadcast %cst_187 : f32 to vector<8x1xf32>
    %395 = arith.divf %393, %394 : vector<8x1xf32>
    %396 = arith.mulf %387, %387 : vector<8x32xf32>
    %cst_188 = arith.constant dense<0.000000e+00> : vector<8xf32>
    %397 = vector.multi_reduction <add>, %396, %cst_188 [1] : vector<8x32xf32> to vector<8xf32>
    %398 = vector.shape_cast %397 : vector<8xf32> to vector<8x1xf32>
    %cst_189 = arith.constant 3.200000e+01 : f32
    %399 = vector.broadcast %cst_189 : f32 to vector<8x1xf32>
    %400 = arith.divf %398, %399 : vector<8x1xf32>
    %401 = arith.mulf %395, %395 : vector<8x1xf32>
    %402 = arith.subf %400, %401 : vector<8x1xf32>
    %403 = vector.broadcast %395 : vector<8x1xf32> to vector<8x32xf32>
    %404 = arith.subf %387, %403 : vector<8x32xf32>
    %cst_190 = arith.constant 9.99999974E-6 : f32
    %405 = vector.broadcast %cst_190 : f32 to vector<8x1xf32>
    %406 = arith.addf %402, %405 : vector<8x1xf32>
    %407 = math.rsqrt %406 : vector<8x1xf32>
    %408 = vector.broadcast %407 : vector<8x1xf32> to vector<8x32xf32>
    %409 = arith.mulf %404, %408 : vector<8x32xf32>
    %410 = vector.broadcast %389 : vector<1x32xf32> to vector<8x32xf32>
    %411 = arith.mulf %409, %410 : vector<8x32xf32>
    %412 = vector.broadcast %391 : vector<1x32xf32> to vector<8x32xf32>
    %413 = arith.addf %411, %412 : vector<8x32xf32>
    %c0_191 = arith.constant 0 : index
    %c0_192 = arith.constant 0 : index
    %c0_193 = arith.constant 0 : index
    %414 = vector.load %arg27[%c0_191, %c0_192, %c0_193] : memref<2x32x64xbf16, #tpu.memory_space<vmem>>, vector<1x32x64xbf16>
    %415 = vector.shape_cast %414 : vector<1x32x64xbf16> to vector<32x64xbf16>
    %c0_194 = arith.constant 0 : index
    %c0_195 = arith.constant 0 : index
    %c0_196 = arith.constant 0 : index
    %416 = vector.load %arg28[%c0_194, %c0_195, %c0_196] : memref<2x1x64xf32, #tpu.memory_space<vmem>>, vector<1x1x64xf32>
    %417 = vector.shape_cast %416 : vector<1x1x64xf32> to vector<1x64xf32>
    %c0_197 = arith.constant 0 : index
    %c0_198 = arith.constant 0 : index
    %c0_199 = arith.constant 0 : index
    %418 = vector.load %arg29[%c0_197, %c0_198, %c0_199] : memref<2x64x32xbf16, #tpu.memory_space<vmem>>, vector<1x64x32xbf16>
    %419 = vector.shape_cast %418 : vector<1x64x32xbf16> to vector<64x32xbf16>
    %c0_200 = arith.constant 0 : index
    %c0_201 = arith.constant 0 : index
    %c0_202 = arith.constant 0 : index
    %420 = vector.load %arg30[%c0_200, %c0_201, %c0_202] : memref<2x1x32xf32, #tpu.memory_space<vmem>>, vector<1x1x32xf32>
    %421 = vector.shape_cast %420 : vector<1x1x32xf32> to vector<1x32xf32>
    %422 = arith.truncf %413 : vector<8x32xf32> to vector<8x32xbf16>
    %cst_203 = arith.constant dense<0.000000e+00> : vector<8x64xf32>
    %423 = tpu.matmul %422, %415, %cst_203 {dimension_numbers = #tpu.dot_dimension_numbers<[1], [0], [0], [1], [0, 0, 1, 1], [], []>} : vector<8x32xbf16>, vector<32x64xbf16>, vector<8x64xf32> -> vector<8x64xf32>
    %424 = vector.broadcast %417 : vector<1x64xf32> to vector<8x64xf32>
    %425 = arith.addf %423, %424 : vector<8x64xf32>
    %cst_204 = arith.constant 0.000000e+00 : f32
    %426 = vector.broadcast %cst_204 : f32 to vector<8x64xf32>
    %427 = arith.maximumf %425, %426 : vector<8x64xf32>
    %428 = arith.truncf %427 : vector<8x64xf32> to vector<8x64xbf16>
    %cst_205 = arith.constant dense<0.000000e+00> : vector<8x32xf32>
    %429 = tpu.matmul %428, %419, %cst_205 {dimension_numbers = #tpu.dot_dimension_numbers<[1], [0], [0], [1], [0, 0, 1, 1], [], []>} : vector<8x64xbf16>, vector<64x32xbf16>, vector<8x32xf32> -> vector<8x32xf32>
    %430 = vector.broadcast %421 : vector<1x32xf32> to vector<8x32xf32>
    %431 = arith.addf %429, %430 : vector<8x32xf32>
    %432 = arith.addf %413, %431 : vector<8x32xf32>
    %c0_206 = arith.constant 0 : index
    %c0_207 = arith.constant 0 : index
    %c0_208 = arith.constant 0 : index
    %433 = vector.load %arg35[%c0_206, %c0_207, %c0_208] : memref<2x1x32xf32, #tpu.memory_space<vmem>>, vector<1x1x32xf32>
    %434 = vector.shape_cast %433 : vector<1x1x32xf32> to vector<1x32xf32>
    %c0_209 = arith.constant 0 : index
    %c0_210 = arith.constant 0 : index
    %c0_211 = arith.constant 0 : index
    %435 = vector.load %arg36[%c0_209, %c0_210, %c0_211] : memref<2x1x32xf32, #tpu.memory_space<vmem>>, vector<1x1x32xf32>
    %436 = vector.shape_cast %435 : vector<1x1x32xf32> to vector<1x32xf32>
    %cst_212 = arith.constant dense<0.000000e+00> : vector<8xf32>
    %437 = vector.multi_reduction <add>, %432, %cst_212 [1] : vector<8x32xf32> to vector<8xf32>
    %438 = vector.shape_cast %437 : vector<8xf32> to vector<8x1xf32>
    %cst_213 = arith.constant 3.200000e+01 : f32
    %439 = vector.broadcast %cst_213 : f32 to vector<8x1xf32>
    %440 = arith.divf %438, %439 : vector<8x1xf32>
    %441 = arith.mulf %432, %432 : vector<8x32xf32>
    %cst_214 = arith.constant dense<0.000000e+00> : vector<8xf32>
    %442 = vector.multi_reduction <add>, %441, %cst_214 [1] : vector<8x32xf32> to vector<8xf32>
    %443 = vector.shape_cast %442 : vector<8xf32> to vector<8x1xf32>
    %cst_215 = arith.constant 3.200000e+01 : f32
    %444 = vector.broadcast %cst_215 : f32 to vector<8x1xf32>
    %445 = arith.divf %443, %444 : vector<8x1xf32>
    %446 = arith.mulf %440, %440 : vector<8x1xf32>
    %447 = arith.subf %445, %446 : vector<8x1xf32>
    %448 = vector.broadcast %440 : vector<8x1xf32> to vector<8x32xf32>
    %449 = arith.subf %432, %448 : vector<8x32xf32>
    %cst_216 = arith.constant 9.99999974E-6 : f32
    %450 = vector.broadcast %cst_216 : f32 to vector<8x1xf32>
    %451 = arith.addf %447, %450 : vector<8x1xf32>
    %452 = math.rsqrt %451 : vector<8x1xf32>
    %453 = vector.broadcast %452 : vector<8x1xf32> to vector<8x32xf32>
    %454 = arith.mulf %449, %453 : vector<8x32xf32>
    %455 = vector.broadcast %434 : vector<1x32xf32> to vector<8x32xf32>
    %456 = arith.mulf %454, %455 : vector<8x32xf32>
    %457 = vector.broadcast %436 : vector<1x32xf32> to vector<8x32xf32>
    %458 = arith.addf %456, %457 : vector<8x32xf32>
    %c1_217 = arith.constant 1 : index
    %c0_218 = arith.constant 0 : index
    %c0_219 = arith.constant 0 : index
    %459 = vector.load %arg17[%c1_217, %c0_218, %c0_219] : memref<2x32x96xbf16, #tpu.memory_space<vmem>>, vector<1x32x96xbf16>
    %460 = vector.shape_cast %459 : vector<1x32x96xbf16> to vector<32x96xbf16>
    %c1_220 = arith.constant 1 : index
    %c0_221 = arith.constant 0 : index
    %c0_222 = arith.constant 0 : index
    %461 = vector.load %arg18[%c1_220, %c0_221, %c0_222] : memref<2x1x96xf32, #tpu.memory_space<vmem>>, vector<1x1x96xf32>
    %462 = vector.shape_cast %461 : vector<1x1x96xf32> to vector<1x96xf32>
    %c1_223 = arith.constant 1 : index
    %c0_224 = arith.constant 0 : index
    %c0_225 = arith.constant 0 : index
    %463 = vector.load %arg19[%c1_223, %c0_224, %c0_225] : memref<2x32x32xbf16, #tpu.memory_space<vmem>>, vector<1x32x32xbf16>
    %464 = vector.shape_cast %463 : vector<1x32x32xbf16> to vector<32x32xbf16>
    %c1_226 = arith.constant 1 : index
    %c0_227 = arith.constant 0 : index
    %c0_228 = arith.constant 0 : index
    %465 = vector.load %arg20[%c1_226, %c0_227, %c0_228] : memref<2x1x32xf32, #tpu.memory_space<vmem>>, vector<1x1x32xf32>
    %466 = vector.shape_cast %465 : vector<1x1x32xf32> to vector<1x32xf32>
    %467 = arith.truncf %458 : vector<8x32xf32> to vector<8x32xbf16>
    %cst_229 = arith.constant dense<0.000000e+00> : vector<8x96xf32>
    %468 = tpu.matmul %467, %460, %cst_229 {dimension_numbers = #tpu.dot_dimension_numbers<[1], [0], [0], [1], [0, 0, 1, 1], [], []>} : vector<8x32xbf16>, vector<32x96xbf16>, vector<8x96xf32> -> vector<8x96xf32>
    %469 = vector.broadcast %462 : vector<1x96xf32> to vector<8x96xf32>
    %470 = arith.addf %468, %469 : vector<8x96xf32>
    %471 = tpu.transpose %470, [1, 0] : vector<8x96xf32> -> vector<96x8xf32>
    %472 = vector.shape_cast %471 : vector<96x8xf32> to vector<12x8x8xf32>
    %473 = vector.extract_strided_slice %472 {offsets = [0, 0, 0], sizes = [4, 8, 8], strides = [1, 1, 1]} : vector<12x8x8xf32> to vector<4x8x8xf32>
    %474 = tpu.transpose %473, [0, 2, 1] : vector<4x8x8xf32> -> vector<4x8x8xf32>
    %475 = vector.extract_strided_slice %472 {offsets = [4, 0, 0], sizes = [4, 8, 8], strides = [1, 1, 1]} : vector<12x8x8xf32> to vector<4x8x8xf32>
    %476 = vector.extract_strided_slice %472 {offsets = [8, 0, 0], sizes = [4, 8, 8], strides = [1, 1, 1]} : vector<12x8x8xf32> to vector<4x8x8xf32>
    %477 = tpu.transpose %476, [0, 2, 1] : vector<4x8x8xf32> -> vector<4x8x8xf32>
    %478 = arith.truncf %474 : vector<4x8x8xf32> to vector<4x8x8xbf16>
    %479 = arith.truncf %475 : vector<4x8x8xf32> to vector<4x8x8xbf16>
    %cst_230 = arith.constant dense<0.000000e+00> : vector<4x8x8xf32>
    %480 = tpu.matmul %478, %479, %cst_230 {dimension_numbers = #tpu.dot_dimension_numbers<[2], [1], [1], [2], [0, 0, 0, 1, 1, 2], [0], [0]>} : vector<4x8x8xbf16>, vector<4x8x8xbf16>, vector<4x8x8xf32> -> vector<4x8x8xf32>
    %cst_231 = arith.constant 0.353553385 : f32
    %481 = vector.broadcast %cst_231 : f32 to vector<4x8x8xf32>
    %482 = arith.mulf %480, %481 : vector<4x8x8xf32>
    %483 = vector.shape_cast %13 : vector<8x8xf32> to vector<1x8x8xf32>
    %484 = vector.broadcast %483 : vector<1x8x8xf32> to vector<4x8x8xf32>
    %485 = arith.addf %482, %484 : vector<4x8x8xf32>
    %cst_232 = arith.constant dense<0xFF800000> : vector<4x8xf32>
    %486 = vector.multi_reduction <maximumf>, %485, %cst_232 [2] : vector<4x8x8xf32> to vector<4x8xf32>
    %487 = vector.shape_cast %486 : vector<4x8xf32> to vector<4x8x1xf32>
    %488 = vector.broadcast %487 : vector<4x8x1xf32> to vector<4x8x8xf32>
    %489 = arith.subf %485, %488 : vector<4x8x8xf32>
    %490 = math.exp %489 : vector<4x8x8xf32>
    %cst_233 = arith.constant dense<0.000000e+00> : vector<4x8xf32>
    %491 = vector.multi_reduction <add>, %490, %cst_233 [2] : vector<4x8x8xf32> to vector<4x8xf32>
    %492 = vector.shape_cast %491 : vector<4x8xf32> to vector<4x8x1xf32>
    %493 = tpu.reciprocal %492 {approx = true} : vector<4x8x1xf32> -> vector<4x8x1xf32>
    %494 = vector.broadcast %493 : vector<4x8x1xf32> to vector<4x8x8xf32>
    %495 = arith.mulf %490, %494 : vector<4x8x8xf32>
    %496 = arith.truncf %495 : vector<4x8x8xf32> to vector<4x8x8xbf16>
    %497 = arith.truncf %477 : vector<4x8x8xf32> to vector<4x8x8xbf16>
    %cst_234 = arith.constant dense<0.000000e+00> : vector<4x8x8xf32>
    %498 = tpu.matmul %496, %497, %cst_234 {dimension_numbers = #tpu.dot_dimension_numbers<[2], [1], [1], [2], [0, 0, 0, 1, 1, 2], [0], [0]>} : vector<4x8x8xbf16>, vector<4x8x8xbf16>, vector<4x8x8xf32> -> vector<4x8x8xf32>
    %499 = tpu.transpose %498, [0, 2, 1] : vector<4x8x8xf32> -> vector<4x8x8xf32>
    %500 = vector.shape_cast %499 : vector<4x8x8xf32> to vector<32x8xf32>
    %501 = tpu.transpose %500, [1, 0] : vector<32x8xf32> -> vector<8x32xf32>
    %502 = arith.truncf %501 : vector<8x32xf32> to vector<8x32xbf16>
    %cst_235 = arith.constant dense<0.000000e+00> : vector<8x32xf32>
    %503 = tpu.matmul %502, %464, %cst_235 {dimension_numbers = #tpu.dot_dimension_numbers<[1], [0], [0], [1], [0, 0, 1, 1], [], []>} : vector<8x32xbf16>, vector<32x32xbf16>, vector<8x32xf32> -> vector<8x32xf32>
    %504 = vector.broadcast %466 : vector<1x32xf32> to vector<8x32xf32>
    %505 = arith.addf %503, %504 : vector<8x32xf32>
    %506 = arith.addf %458, %505 : vector<8x32xf32>
    %c1_236 = arith.constant 1 : index
    %c0_237 = arith.constant 0 : index
    %c0_238 = arith.constant 0 : index
    %507 = vector.load %arg31[%c1_236, %c0_237, %c0_238] : memref<2x1x32xf32, #tpu.memory_space<vmem>>, vector<1x1x32xf32>
    %508 = vector.shape_cast %507 : vector<1x1x32xf32> to vector<1x32xf32>
    %c1_239 = arith.constant 1 : index
    %c0_240 = arith.constant 0 : index
    %c0_241 = arith.constant 0 : index
    %509 = vector.load %arg32[%c1_239, %c0_240, %c0_241] : memref<2x1x32xf32, #tpu.memory_space<vmem>>, vector<1x1x32xf32>
    %510 = vector.shape_cast %509 : vector<1x1x32xf32> to vector<1x32xf32>
    %cst_242 = arith.constant dense<0.000000e+00> : vector<8xf32>
    %511 = vector.multi_reduction <add>, %506, %cst_242 [1] : vector<8x32xf32> to vector<8xf32>
    %512 = vector.shape_cast %511 : vector<8xf32> to vector<8x1xf32>
    %cst_243 = arith.constant 3.200000e+01 : f32
    %513 = vector.broadcast %cst_243 : f32 to vector<8x1xf32>
    %514 = arith.divf %512, %513 : vector<8x1xf32>
    %515 = arith.mulf %506, %506 : vector<8x32xf32>
    %cst_244 = arith.constant dense<0.000000e+00> : vector<8xf32>
    %516 = vector.multi_reduction <add>, %515, %cst_244 [1] : vector<8x32xf32> to vector<8xf32>
    %517 = vector.shape_cast %516 : vector<8xf32> to vector<8x1xf32>
    %cst_245 = arith.constant 3.200000e+01 : f32
    %518 = vector.broadcast %cst_245 : f32 to vector<8x1xf32>
    %519 = arith.divf %517, %518 : vector<8x1xf32>
    %520 = arith.mulf %514, %514 : vector<8x1xf32>
    %521 = arith.subf %519, %520 : vector<8x1xf32>
    %522 = vector.broadcast %514 : vector<8x1xf32> to vector<8x32xf32>
    %523 = arith.subf %506, %522 : vector<8x32xf32>
    %cst_246 = arith.constant 9.99999974E-6 : f32
    %524 = vector.broadcast %cst_246 : f32 to vector<8x1xf32>
    %525 = arith.addf %521, %524 : vector<8x1xf32>
    %526 = math.rsqrt %525 : vector<8x1xf32>
    %527 = vector.broadcast %526 : vector<8x1xf32> to vector<8x32xf32>
    %528 = arith.mulf %523, %527 : vector<8x32xf32>
    %529 = vector.broadcast %508 : vector<1x32xf32> to vector<8x32xf32>
    %530 = arith.mulf %528, %529 : vector<8x32xf32>
    %531 = vector.broadcast %510 : vector<1x32xf32> to vector<8x32xf32>
    %532 = arith.addf %530, %531 : vector<8x32xf32>
    %c1_247 = arith.constant 1 : index
    %c0_248 = arith.constant 0 : index
    %c0_249 = arith.constant 0 : index
    %533 = vector.load %arg21[%c1_247, %c0_248, %c0_249] : memref<2x32x32xbf16, #tpu.memory_space<vmem>>, vector<1x32x32xbf16>
    %534 = vector.shape_cast %533 : vector<1x32x32xbf16> to vector<32x32xbf16>
    %c1_250 = arith.constant 1 : index
    %c0_251 = arith.constant 0 : index
    %c0_252 = arith.constant 0 : index
    %535 = vector.load %arg22[%c1_250, %c0_251, %c0_252] : memref<2x1x32xf32, #tpu.memory_space<vmem>>, vector<1x1x32xf32>
    %536 = vector.shape_cast %535 : vector<1x1x32xf32> to vector<1x32xf32>
    %c1_253 = arith.constant 1 : index
    %c0_254 = arith.constant 0 : index
    %c0_255 = arith.constant 0 : index
    %537 = vector.load %arg23[%c1_253, %c0_254, %c0_255] : memref<2x32x64xbf16, #tpu.memory_space<vmem>>, vector<1x32x64xbf16>
    %538 = vector.shape_cast %537 : vector<1x32x64xbf16> to vector<32x64xbf16>
    %c1_256 = arith.constant 1 : index
    %c0_257 = arith.constant 0 : index
    %c0_258 = arith.constant 0 : index
    %539 = vector.load %arg24[%c1_256, %c0_257, %c0_258] : memref<2x1x64xf32, #tpu.memory_space<vmem>>, vector<1x1x64xf32>
    %540 = vector.shape_cast %539 : vector<1x1x64xf32> to vector<1x64xf32>
    %c1_259 = arith.constant 1 : index
    %c0_260 = arith.constant 0 : index
    %c0_261 = arith.constant 0 : index
    %541 = vector.load %arg25[%c1_259, %c0_260, %c0_261] : memref<2x32x32xbf16, #tpu.memory_space<vmem>>, vector<1x32x32xbf16>
    %542 = vector.shape_cast %541 : vector<1x32x32xbf16> to vector<32x32xbf16>
    %c1_262 = arith.constant 1 : index
    %c0_263 = arith.constant 0 : index
    %c0_264 = arith.constant 0 : index
    %543 = vector.load %arg26[%c1_262, %c0_263, %c0_264] : memref<2x1x32xf32, #tpu.memory_space<vmem>>, vector<1x1x32xf32>
    %544 = vector.shape_cast %543 : vector<1x1x32xf32> to vector<1x32xf32>
    %545 = arith.truncf %532 : vector<8x32xf32> to vector<8x32xbf16>
    %cst_265 = arith.constant dense<0.000000e+00> : vector<8x32xf32>
    %546 = tpu.matmul %545, %534, %cst_265 {dimension_numbers = #tpu.dot_dimension_numbers<[1], [0], [0], [1], [0, 0, 1, 1], [], []>} : vector<8x32xbf16>, vector<32x32xbf16>, vector<8x32xf32> -> vector<8x32xf32>
    %547 = vector.broadcast %536 : vector<1x32xf32> to vector<8x32xf32>
    %548 = arith.addf %546, %547 : vector<8x32xf32>
    %549 = arith.truncf %253 : vector<8x32xf32> to vector<8x32xbf16>
    %cst_266 = arith.constant dense<0.000000e+00> : vector<8x64xf32>
    %550 = tpu.matmul %549, %538, %cst_266 {dimension_numbers = #tpu.dot_dimension_numbers<[1], [0], [0], [1], [0, 0, 1, 1], [], []>} : vector<8x32xbf16>, vector<32x64xbf16>, vector<8x64xf32> -> vector<8x64xf32>
    %551 = vector.broadcast %540 : vector<1x64xf32> to vector<8x64xf32>
    %552 = arith.addf %550, %551 : vector<8x64xf32>
    %553 = tpu.transpose %552, [1, 0] : vector<8x64xf32> -> vector<64x8xf32>
    %554 = vector.shape_cast %553 : vector<64x8xf32> to vector<8x8x8xf32>
    %555 = vector.extract_strided_slice %554 {offsets = [0, 0, 0], sizes = [4, 8, 8], strides = [1, 1, 1]} : vector<8x8x8xf32> to vector<4x8x8xf32>
    %556 = vector.extract_strided_slice %554 {offsets = [4, 0, 0], sizes = [4, 8, 8], strides = [1, 1, 1]} : vector<8x8x8xf32> to vector<4x8x8xf32>
    %557 = tpu.transpose %556, [0, 2, 1] : vector<4x8x8xf32> -> vector<4x8x8xf32>
    %558 = tpu.transpose %548, [1, 0] : vector<8x32xf32> -> vector<32x8xf32>
    %559 = vector.shape_cast %558 : vector<32x8xf32> to vector<4x8x8xf32>
    %560 = tpu.transpose %559, [0, 2, 1] : vector<4x8x8xf32> -> vector<4x8x8xf32>
    %561 = arith.truncf %560 : vector<4x8x8xf32> to vector<4x8x8xbf16>
    %562 = arith.truncf %555 : vector<4x8x8xf32> to vector<4x8x8xbf16>
    %cst_267 = arith.constant dense<0.000000e+00> : vector<4x8x8xf32>
    %563 = tpu.matmul %561, %562, %cst_267 {dimension_numbers = #tpu.dot_dimension_numbers<[2], [1], [1], [2], [0, 0, 0, 1, 1, 2], [0], [0]>} : vector<4x8x8xbf16>, vector<4x8x8xbf16>, vector<4x8x8xf32> -> vector<4x8x8xf32>
    %cst_268 = arith.constant 0.353553385 : f32
    %564 = vector.broadcast %cst_268 : f32 to vector<4x8x8xf32>
    %565 = arith.mulf %563, %564 : vector<4x8x8xf32>
    %566 = vector.broadcast %7 : vector<1x1x8xf32> to vector<4x8x8xf32>
    %567 = arith.addf %565, %566 : vector<4x8x8xf32>
    %cst_269 = arith.constant dense<0xFF800000> : vector<4x8xf32>
    %568 = vector.multi_reduction <maximumf>, %567, %cst_269 [2] : vector<4x8x8xf32> to vector<4x8xf32>
    %569 = vector.shape_cast %568 : vector<4x8xf32> to vector<4x8x1xf32>
    %570 = vector.broadcast %569 : vector<4x8x1xf32> to vector<4x8x8xf32>
    %571 = arith.subf %567, %570 : vector<4x8x8xf32>
    %572 = math.exp %571 : vector<4x8x8xf32>
    %cst_270 = arith.constant dense<0.000000e+00> : vector<4x8xf32>
    %573 = vector.multi_reduction <add>, %572, %cst_270 [2] : vector<4x8x8xf32> to vector<4x8xf32>
    %574 = vector.shape_cast %573 : vector<4x8xf32> to vector<4x8x1xf32>
    %575 = tpu.reciprocal %574 {approx = true} : vector<4x8x1xf32> -> vector<4x8x1xf32>
    %576 = vector.broadcast %575 : vector<4x8x1xf32> to vector<4x8x8xf32>
    %577 = arith.mulf %572, %576 : vector<4x8x8xf32>
    %578 = arith.truncf %577 : vector<4x8x8xf32> to vector<4x8x8xbf16>
    %579 = arith.truncf %557 : vector<4x8x8xf32> to vector<4x8x8xbf16>
    %cst_271 = arith.constant dense<0.000000e+00> : vector<4x8x8xf32>
    %580 = tpu.matmul %578, %579, %cst_271 {dimension_numbers = #tpu.dot_dimension_numbers<[2], [1], [1], [2], [0, 0, 0, 1, 1, 2], [0], [0]>} : vector<4x8x8xbf16>, vector<4x8x8xbf16>, vector<4x8x8xf32> -> vector<4x8x8xf32>
    %581 = tpu.transpose %580, [0, 2, 1] : vector<4x8x8xf32> -> vector<4x8x8xf32>
    %582 = vector.shape_cast %581 : vector<4x8x8xf32> to vector<32x8xf32>
    %583 = tpu.transpose %582, [1, 0] : vector<32x8xf32> -> vector<8x32xf32>
    %584 = arith.truncf %583 : vector<8x32xf32> to vector<8x32xbf16>
    %cst_272 = arith.constant dense<0.000000e+00> : vector<8x32xf32>
    %585 = tpu.matmul %584, %542, %cst_272 {dimension_numbers = #tpu.dot_dimension_numbers<[1], [0], [0], [1], [0, 0, 1, 1], [], []>} : vector<8x32xbf16>, vector<32x32xbf16>, vector<8x32xf32> -> vector<8x32xf32>
    %586 = vector.broadcast %544 : vector<1x32xf32> to vector<8x32xf32>
    %587 = arith.addf %585, %586 : vector<8x32xf32>
    %588 = arith.addf %532, %587 : vector<8x32xf32>
    %c1_273 = arith.constant 1 : index
    %c0_274 = arith.constant 0 : index
    %c0_275 = arith.constant 0 : index
    %589 = vector.load %arg33[%c1_273, %c0_274, %c0_275] : memref<2x1x32xf32, #tpu.memory_space<vmem>>, vector<1x1x32xf32>
    %590 = vector.shape_cast %589 : vector<1x1x32xf32> to vector<1x32xf32>
    %c1_276 = arith.constant 1 : index
    %c0_277 = arith.constant 0 : index
    %c0_278 = arith.constant 0 : index
    %591 = vector.load %arg34[%c1_276, %c0_277, %c0_278] : memref<2x1x32xf32, #tpu.memory_space<vmem>>, vector<1x1x32xf32>
    %592 = vector.shape_cast %591 : vector<1x1x32xf32> to vector<1x32xf32>
    %cst_279 = arith.constant dense<0.000000e+00> : vector<8xf32>
    %593 = vector.multi_reduction <add>, %588, %cst_279 [1] : vector<8x32xf32> to vector<8xf32>
    %594 = vector.shape_cast %593 : vector<8xf32> to vector<8x1xf32>
    %cst_280 = arith.constant 3.200000e+01 : f32
    %595 = vector.broadcast %cst_280 : f32 to vector<8x1xf32>
    %596 = arith.divf %594, %595 : vector<8x1xf32>
    %597 = arith.mulf %588, %588 : vector<8x32xf32>
    %cst_281 = arith.constant dense<0.000000e+00> : vector<8xf32>
    %598 = vector.multi_reduction <add>, %597, %cst_281 [1] : vector<8x32xf32> to vector<8xf32>
    %599 = vector.shape_cast %598 : vector<8xf32> to vector<8x1xf32>
    %cst_282 = arith.constant 3.200000e+01 : f32
    %600 = vector.broadcast %cst_282 : f32 to vector<8x1xf32>
    %601 = arith.divf %599, %600 : vector<8x1xf32>
    %602 = arith.mulf %596, %596 : vector<8x1xf32>
    %603 = arith.subf %601, %602 : vector<8x1xf32>
    %604 = vector.broadcast %596 : vector<8x1xf32> to vector<8x32xf32>
    %605 = arith.subf %588, %604 : vector<8x32xf32>
    %cst_283 = arith.constant 9.99999974E-6 : f32
    %606 = vector.broadcast %cst_283 : f32 to vector<8x1xf32>
    %607 = arith.addf %603, %606 : vector<8x1xf32>
    %608 = math.rsqrt %607 : vector<8x1xf32>
    %609 = vector.broadcast %608 : vector<8x1xf32> to vector<8x32xf32>
    %610 = arith.mulf %605, %609 : vector<8x32xf32>
    %611 = vector.broadcast %590 : vector<1x32xf32> to vector<8x32xf32>
    %612 = arith.mulf %610, %611 : vector<8x32xf32>
    %613 = vector.broadcast %592 : vector<1x32xf32> to vector<8x32xf32>
    %614 = arith.addf %612, %613 : vector<8x32xf32>
    %c1_284 = arith.constant 1 : index
    %c0_285 = arith.constant 0 : index
    %c0_286 = arith.constant 0 : index
    %615 = vector.load %arg27[%c1_284, %c0_285, %c0_286] : memref<2x32x64xbf16, #tpu.memory_space<vmem>>, vector<1x32x64xbf16>
    %616 = vector.shape_cast %615 : vector<1x32x64xbf16> to vector<32x64xbf16>
    %c1_287 = arith.constant 1 : index
    %c0_288 = arith.constant 0 : index
    %c0_289 = arith.constant 0 : index
    %617 = vector.load %arg28[%c1_287, %c0_288, %c0_289] : memref<2x1x64xf32, #tpu.memory_space<vmem>>, vector<1x1x64xf32>
    %618 = vector.shape_cast %617 : vector<1x1x64xf32> to vector<1x64xf32>
    %c1_290 = arith.constant 1 : index
    %c0_291 = arith.constant 0 : index
    %c0_292 = arith.constant 0 : index
    %619 = vector.load %arg29[%c1_290, %c0_291, %c0_292] : memref<2x64x32xbf16, #tpu.memory_space<vmem>>, vector<1x64x32xbf16>
    %620 = vector.shape_cast %619 : vector<1x64x32xbf16> to vector<64x32xbf16>
    %c1_293 = arith.constant 1 : index
    %c0_294 = arith.constant 0 : index
    %c0_295 = arith.constant 0 : index
    %621 = vector.load %arg30[%c1_293, %c0_294, %c0_295] : memref<2x1x32xf32, #tpu.memory_space<vmem>>, vector<1x1x32xf32>
    %622 = vector.shape_cast %621 : vector<1x1x32xf32> to vector<1x32xf32>
    %623 = arith.truncf %614 : vector<8x32xf32> to vector<8x32xbf16>
    %cst_296 = arith.constant dense<0.000000e+00> : vector<8x64xf32>
    %624 = tpu.matmul %623, %616, %cst_296 {dimension_numbers = #tpu.dot_dimension_numbers<[1], [0], [0], [1], [0, 0, 1, 1], [], []>} : vector<8x32xbf16>, vector<32x64xbf16>, vector<8x64xf32> -> vector<8x64xf32>
    %625 = vector.broadcast %618 : vector<1x64xf32> to vector<8x64xf32>
    %626 = arith.addf %624, %625 : vector<8x64xf32>
    %cst_297 = arith.constant 0.000000e+00 : f32
    %627 = vector.broadcast %cst_297 : f32 to vector<8x64xf32>
    %628 = arith.maximumf %626, %627 : vector<8x64xf32>
    %629 = arith.truncf %628 : vector<8x64xf32> to vector<8x64xbf16>
    %cst_298 = arith.constant dense<0.000000e+00> : vector<8x32xf32>
    %630 = tpu.matmul %629, %620, %cst_298 {dimension_numbers = #tpu.dot_dimension_numbers<[1], [0], [0], [1], [0, 0, 1, 1], [], []>} : vector<8x64xbf16>, vector<64x32xbf16>, vector<8x32xf32> -> vector<8x32xf32>
    %631 = vector.broadcast %622 : vector<1x32xf32> to vector<8x32xf32>
    %632 = arith.addf %630, %631 : vector<8x32xf32>
    %633 = arith.addf %614, %632 : vector<8x32xf32>
    %c1_299 = arith.constant 1 : index
    %c0_300 = arith.constant 0 : index
    %c0_301 = arith.constant 0 : index
    %634 = vector.load %arg35[%c1_299, %c0_300, %c0_301] : memref<2x1x32xf32, #tpu.memory_space<vmem>>, vector<1x1x32xf32>
    %635 = vector.shape_cast %634 : vector<1x1x32xf32> to vector<1x32xf32>
    %c1_302 = arith.constant 1 : index
    %c0_303 = arith.constant 0 : index
    %c0_304 = arith.constant 0 : index
    %636 = vector.load %arg36[%c1_302, %c0_303, %c0_304] : memref<2x1x32xf32, #tpu.memory_space<vmem>>, vector<1x1x32xf32>
    %637 = vector.shape_cast %636 : vector<1x1x32xf32> to vector<1x32xf32>
    %cst_305 = arith.constant dense<0.000000e+00> : vector<8xf32>
    %638 = vector.multi_reduction <add>, %633, %cst_305 [1] : vector<8x32xf32> to vector<8xf32>
    %639 = vector.shape_cast %638 : vector<8xf32> to vector<8x1xf32>
    %cst_306 = arith.constant 3.200000e+01 : f32
    %640 = vector.broadcast %cst_306 : f32 to vector<8x1xf32>
    %641 = arith.divf %639, %640 : vector<8x1xf32>
    %642 = arith.mulf %633, %633 : vector<8x32xf32>
    %cst_307 = arith.constant dense<0.000000e+00> : vector<8xf32>
    %643 = vector.multi_reduction <add>, %642, %cst_307 [1] : vector<8x32xf32> to vector<8xf32>
    %644 = vector.shape_cast %643 : vector<8xf32> to vector<8x1xf32>
    %cst_308 = arith.constant 3.200000e+01 : f32
    %645 = vector.broadcast %cst_308 : f32 to vector<8x1xf32>
    %646 = arith.divf %644, %645 : vector<8x1xf32>
    %647 = arith.mulf %641, %641 : vector<8x1xf32>
    %648 = arith.subf %646, %647 : vector<8x1xf32>
    %649 = vector.broadcast %641 : vector<8x1xf32> to vector<8x32xf32>
    %650 = arith.subf %633, %649 : vector<8x32xf32>
    %cst_309 = arith.constant 9.99999974E-6 : f32
    %651 = vector.broadcast %cst_309 : f32 to vector<8x1xf32>
    %652 = arith.addf %648, %651 : vector<8x1xf32>
    %653 = math.rsqrt %652 : vector<8x1xf32>
    %654 = vector.broadcast %653 : vector<8x1xf32> to vector<8x32xf32>
    %655 = arith.mulf %650, %654 : vector<8x32xf32>
    %656 = vector.broadcast %635 : vector<1x32xf32> to vector<8x32xf32>
    %657 = arith.mulf %655, %656 : vector<8x32xf32>
    %658 = vector.broadcast %637 : vector<1x32xf32> to vector<8x32xf32>
    %659 = arith.addf %657, %658 : vector<8x32xf32>
    %660 = arith.truncf %659 : vector<8x32xf32> to vector<8x32xbf16>
    %c0_310 = arith.constant 0 : index
    %c0_311 = arith.constant 0 : index
    %661 = vector.load %arg37[%c0_310, %c0_311] : memref<32x128xbf16, #tpu.memory_space<vmem>>, vector<32x128xbf16>
    %cst_312 = arith.constant dense<0.000000e+00> : vector<8x128xf32>
    %662 = tpu.matmul %660, %661, %cst_312 {dimension_numbers = #tpu.dot_dimension_numbers<[1], [0], [0], [1], [0, 0, 1, 1], [], []>} : vector<8x32xbf16>, vector<32x128xbf16>, vector<8x128xf32> -> vector<8x128xf32>
    %c0_313 = arith.constant 0 : index
    %c0_314 = arith.constant 0 : index
    %663 = vector.load %arg38[%c0_313, %c0_314] : memref<1x128xf32, #tpu.memory_space<vmem>>, vector<1x128xf32>
    %664 = vector.broadcast %663 : vector<1x128xf32> to vector<8x128xf32>
    %665 = arith.addf %662, %664 : vector<8x128xf32>
    %c0_315 = arith.constant 0 : index
    %c0_316 = arith.constant 0 : index
    %c0_317 = arith.constant 0 : index
    %666 = vector.load %arg39[%c0_315, %c0_316, %c0_317] : memref<1x8x128xf32, #tpu.memory_space<vmem>>, vector<1x8x128xf32>
    %667 = vector.shape_cast %666 : vector<1x8x128xf32> to vector<8x128xf32>
    %668 = vector.shape_cast %665 : vector<8x128xf32> to vector<1x8x128xf32>
    tpu.vector_store %arg39[%c0_315, %c0_316, %c0_317], %668 {strides = array<i32>} : memref<1x8x128xf32, #tpu.memory_space<vmem>>, vector<1x8x128xf32>,
    return
  }
  func.func @transform_0(%arg0: i32) -> (i32, i32, i32) {
    %c0_i32 = arith.constant 0 : i32
    %c0_i32_0 = arith.constant 0 : i32
    %c0_i32_1 = arith.constant 0 : i32
    return %arg0, %c0_i32, %c0_i32_0 : i32, i32, i32
  }
  func.func @transform_1(%arg0: i32) -> (i32, i32, i32) {
    %c0_i32 = arith.constant 0 : i32
    %c0_i32_0 = arith.constant 0 : i32
    %c0_i32_1 = arith.constant 0 : i32
    return %arg0, %c0_i32, %c0_i32_0 : i32, i32, i32
  }
  func.func @transform_2(%arg0: i32) -> (i32, i32, i32) {
    %c0_i32 = arith.constant 0 : i32
    %c0_i32_0 = arith.constant 0 : i32
    %c0_i32_1 = arith.constant 0 : i32
    return %arg0, %c0_i32, %c0_i32_0 : i32, i32, i32
  }
  func.func @transform_3(%arg0: i32) -> (i32, i32) {
    %c0_i32 = arith.constant 0 : i32
    %c0_i32_0 = arith.constant 0 : i32
    %c0_i32_1 = arith.constant 0 : i32
    return %c0_i32, %c0_i32_0 : i32, i32
  }
  func.func @transform_4(%arg0: i32) -> (i32, i32, i32) {
    %c0_i32 = arith.constant 0 : i32
    %c0_i32_0 = arith.constant 0 : i32
    %c0_i32_1 = arith.constant 0 : i32
    %c0_i32_2 = arith.constant 0 : i32
    return %c0_i32, %c0_i32_0, %c0_i32_1 : i32, i32, i32
  }
  func.func @transform_5(%arg0: i32) -> (i32, i32, i32) {
    %c0_i32 = arith.constant 0 : i32
    %c0_i32_0 = arith.constant 0 : i32
    %c0_i32_1 = arith.constant 0 : i32
    %c0_i32_2 = arith.constant 0 : i32
    return %c0_i32, %c0_i32_0, %c0_i32_1 : i32, i32, i32
  }
  func.func @transform_6(%arg0: i32) -> (i32, i32, i32) {
    %c0_i32 = arith.constant 0 : i32
    %c0_i32_0 = arith.constant 0 : i32
    %c0_i32_1 = arith.constant 0 : i32
    %c0_i32_2 = arith.constant 0 : i32
    return %c0_i32, %c0_i32_0, %c0_i32_1 : i32, i32, i32
  }
  func.func @transform_7(%arg0: i32) -> (i32, i32, i32) {
    %c0_i32 = arith.constant 0 : i32
    %c0_i32_0 = arith.constant 0 : i32
    %c0_i32_1 = arith.constant 0 : i32
    %c0_i32_2 = arith.constant 0 : i32
    return %c0_i32, %c0_i32_0, %c0_i32_1 : i32, i32, i32
  }
  func.func @transform_8(%arg0: i32) -> (i32, i32, i32) {
    %c0_i32 = arith.constant 0 : i32
    %c0_i32_0 = arith.constant 0 : i32
    %c0_i32_1 = arith.constant 0 : i32
    %c0_i32_2 = arith.constant 0 : i32
    return %c0_i32, %c0_i32_0, %c0_i32_1 : i32, i32, i32
  }
  func.func @transform_9(%arg0: i32) -> (i32, i32, i32) {
    %c0_i32 = arith.constant 0 : i32
    %c0_i32_0 = arith.constant 0 : i32
    %c0_i32_1 = arith.constant 0 : i32
    %c0_i32_2 = arith.constant 0 : i32
    return %c0_i32, %c0_i32_0, %c0_i32_1 : i32, i32, i32
  }
  func.func @transform_10(%arg0: i32) -> (i32, i32, i32) {
    %c0_i32 = arith.constant 0 : i32
    %c0_i32_0 = arith.constant 0 : i32
    %c0_i32_1 = arith.constant 0 : i32
    %c0_i32_2 = arith.constant 0 : i32
    return %c0_i32, %c0_i32_0, %c0_i32_1 : i32, i32, i32
  }
  func.func @transform_11(%arg0: i32) -> (i32, i32, i32) {
    %c0_i32 = arith.constant 0 : i32
    %c0_i32_0 = arith.constant 0 : i32
    %c0_i32_1 = arith.constant 0 : i32
    %c0_i32_2 = arith.constant 0 : i32
    return %c0_i32, %c0_i32_0, %c0_i32_1 : i32, i32, i32
  }
  func.func @transform_12(%arg0: i32) -> (i32, i32, i32) {
    %c0_i32 = arith.constant 0 : i32
    %c0_i32_0 = arith.constant 0 : i32
    %c0_i32_1 = arith.constant 0 : i32
    %c0_i32_2 = arith.constant 0 : i32
    return %c0_i32, %c0_i32_0, %c0_i32_1 : i32, i32, i32
  }
  func.func @transform_13(%arg0: i32) -> (i32, i32, i32) {
    %c0_i32 = arith.constant 0 : i32
    %c0_i32_0 = arith.constant 0 : i32
    %c0_i32_1 = arith.constant 0 : i32
    %c0_i32_2 = arith.constant 0 : i32
    return %c0_i32, %c0_i32_0, %c0_i32_1 : i32, i32, i32
  }
  func.func @transform_14(%arg0: i32) -> (i32, i32, i32) {
    %c0_i32 = arith.constant 0 : i32
    %c0_i32_0 = arith.constant 0 : i32
    %c0_i32_1 = arith.constant 0 : i32
    %c0_i32_2 = arith.constant 0 : i32
    return %c0_i32, %c0_i32_0, %c0_i32_1 : i32, i32, i32
  }
  func.func @transform_15(%arg0: i32) -> (i32, i32, i32) {
    %c0_i32 = arith.constant 0 : i32
    %c0_i32_0 = arith.constant 0 : i32
    %c0_i32_1 = arith.constant 0 : i32
    %c0_i32_2 = arith.constant 0 : i32
    return %c0_i32, %c0_i32_0, %c0_i32_1 : i32, i32, i32
  }
  func.func @transform_16(%arg0: i32) -> (i32, i32, i32) {
    %c0_i32 = arith.constant 0 : i32
    %c0_i32_0 = arith.constant 0 : i32
    %c0_i32_1 = arith.constant 0 : i32
    %c0_i32_2 = arith.constant 0 : i32
    return %c0_i32, %c0_i32_0, %c0_i32_1 : i32, i32, i32
  }
  func.func @transform_17(%arg0: i32) -> (i32, i32, i32) {
    %c0_i32 = arith.constant 0 : i32
    %c0_i32_0 = arith.constant 0 : i32
    %c0_i32_1 = arith.constant 0 : i32
    %c0_i32_2 = arith.constant 0 : i32
    return %c0_i32, %c0_i32_0, %c0_i32_1 : i32, i32, i32
  }
  func.func @transform_18(%arg0: i32) -> (i32, i32, i32) {
    %c0_i32 = arith.constant 0 : i32
    %c0_i32_0 = arith.constant 0 : i32
    %c0_i32_1 = arith.constant 0 : i32
    %c0_i32_2 = arith.constant 0 : i32
    return %c0_i32, %c0_i32_0, %c0_i32_1 : i32, i32, i32
  }
  func.func @transform_19(%arg0: i32) -> (i32, i32, i32) {
    %c0_i32 = arith.constant 0 : i32
    %c0_i32_0 = arith.constant 0 : i32
    %c0_i32_1 = arith.constant 0 : i32
    %c0_i32_2 = arith.constant 0 : i32
    return %c0_i32, %c0_i32_0, %c0_i32_1 : i32, i32, i32
  }
  func.func @transform_20(%arg0: i32) -> (i32, i32, i32) {
    %c0_i32 = arith.constant 0 : i32
    %c0_i32_0 = arith.constant 0 : i32
    %c0_i32_1 = arith.constant 0 : i32
    %c0_i32_2 = arith.constant 0 : i32
    return %c0_i32, %c0_i32_0, %c0_i32_1 : i32, i32, i32
  }
  func.func @transform_21(%arg0: i32) -> (i32, i32, i32) {
    %c0_i32 = arith.constant 0 : i32
    %c0_i32_0 = arith.constant 0 : i32
    %c0_i32_1 = arith.constant 0 : i32
    %c0_i32_2 = arith.constant 0 : i32
    return %c0_i32, %c0_i32_0, %c0_i32_1 : i32, i32, i32
  }
  func.func @transform_22(%arg0: i32) -> (i32, i32, i32) {
    %c0_i32 = arith.constant 0 : i32
    %c0_i32_0 = arith.constant 0 : i32
    %c0_i32_1 = arith.constant 0 : i32
    %c0_i32_2 = arith.constant 0 : i32
    return %c0_i32, %c0_i32_0, %c0_i32_1 : i32, i32, i32
  }
  func.func @transform_23(%arg0: i32) -> (i32, i32, i32) {
    %c0_i32 = arith.constant 0 : i32
    %c0_i32_0 = arith.constant 0 : i32
    %c0_i32_1 = arith.constant 0 : i32
    %c0_i32_2 = arith.constant 0 : i32
    return %c0_i32, %c0_i32_0, %c0_i32_1 : i32, i32, i32
  }
  func.func @transform_24(%arg0: i32) -> (i32, i32, i32) {
    %c0_i32 = arith.constant 0 : i32
    %c0_i32_0 = arith.constant 0 : i32
    %c0_i32_1 = arith.constant 0 : i32
    %c0_i32_2 = arith.constant 0 : i32
    return %c0_i32, %c0_i32_0, %c0_i32_1 : i32, i32, i32
  }
  func.func @transform_25(%arg0: i32) -> (i32, i32, i32) {
    %c0_i32 = arith.constant 0 : i32
    %c0_i32_0 = arith.constant 0 : i32
    %c0_i32_1 = arith.constant 0 : i32
    %c0_i32_2 = arith.constant 0 : i32
    return %c0_i32, %c0_i32_0, %c0_i32_1 : i32, i32, i32
  }
  func.func @transform_26(%arg0: i32) -> (i32, i32, i32) {
    %c0_i32 = arith.constant 0 : i32
    %c0_i32_0 = arith.constant 0 : i32
    %c0_i32_1 = arith.constant 0 : i32
    %c0_i32_2 = arith.constant 0 : i32
    return %c0_i32, %c0_i32_0, %c0_i32_1 : i32, i32, i32
  }
  func.func @transform_27(%arg0: i32) -> (i32, i32, i32) {
    %c0_i32 = arith.constant 0 : i32
    %c0_i32_0 = arith.constant 0 : i32
    %c0_i32_1 = arith.constant 0 : i32
    %c0_i32_2 = arith.constant 0 : i32
    return %c0_i32, %c0_i32_0, %c0_i32_1 : i32, i32, i32
  }
  func.func @transform_28(%arg0: i32) -> (i32, i32, i32) {
    %c0_i32 = arith.constant 0 : i32
    %c0_i32_0 = arith.constant 0 : i32
    %c0_i32_1 = arith.constant 0 : i32
    %c0_i32_2 = arith.constant 0 : i32
    return %c0_i32, %c0_i32_0, %c0_i32_1 : i32, i32, i32
  }
  func.func @transform_29(%arg0: i32) -> (i32, i32, i32) {
    %c0_i32 = arith.constant 0 : i32
    %c0_i32_0 = arith.constant 0 : i32
    %c0_i32_1 = arith.constant 0 : i32
    %c0_i32_2 = arith.constant 0 : i32
    return %c0_i32, %c0_i32_0, %c0_i32_1 : i32, i32, i32
  }
  func.func @transform_30(%arg0: i32) -> (i32, i32, i32) {
    %c0_i32 = arith.constant 0 : i32
    %c0_i32_0 = arith.constant 0 : i32
    %c0_i32_1 = arith.constant 0 : i32
    %c0_i32_2 = arith.constant 0 : i32
    return %c0_i32, %c0_i32_0, %c0_i32_1 : i32, i32, i32
  }
  func.func @transform_31(%arg0: i32) -> (i32, i32, i32) {
    %c0_i32 = arith.constant 0 : i32
    %c0_i32_0 = arith.constant 0 : i32
    %c0_i32_1 = arith.constant 0 : i32
    %c0_i32_2 = arith.constant 0 : i32
    return %c0_i32, %c0_i32_0, %c0_i32_1 : i32, i32, i32
  }
  func.func @transform_32(%arg0: i32) -> (i32, i32, i32) {
    %c0_i32 = arith.constant 0 : i32
    %c0_i32_0 = arith.constant 0 : i32
    %c0_i32_1 = arith.constant 0 : i32
    %c0_i32_2 = arith.constant 0 : i32
    return %c0_i32, %c0_i32_0, %c0_i32_1 : i32, i32, i32
  }
  func.func @transform_33(%arg0: i32) -> (i32, i32, i32) {
    %c0_i32 = arith.constant 0 : i32
    %c0_i32_0 = arith.constant 0 : i32
    %c0_i32_1 = arith.constant 0 : i32
    %c0_i32_2 = arith.constant 0 : i32
    return %c0_i32, %c0_i32_0, %c0_i32_1 : i32, i32, i32
  }
  func.func @transform_34(%arg0: i32) -> (i32, i32, i32) {
    %c0_i32 = arith.constant 0 : i32
    %c0_i32_0 = arith.constant 0 : i32
    %c0_i32_1 = arith.constant 0 : i32
    %c0_i32_2 = arith.constant 0 : i32
    return %c0_i32, %c0_i32_0, %c0_i32_1 : i32, i32, i32
  }
  func.func @transform_35(%arg0: i32) -> (i32, i32, i32) {
    %c0_i32 = arith.constant 0 : i32
    %c0_i32_0 = arith.constant 0 : i32
    %c0_i32_1 = arith.constant 0 : i32
    %c0_i32_2 = arith.constant 0 : i32
    return %c0_i32, %c0_i32_0, %c0_i32_1 : i32, i32, i32
  }
  func.func @transform_36(%arg0: i32) -> (i32, i32) {
    %c0_i32 = arith.constant 0 : i32
    %c0_i32_0 = arith.constant 0 : i32
    %c0_i32_1 = arith.constant 0 : i32
    return %c0_i32, %c0_i32_0 : i32, i32
  }
  func.func @transform_37(%arg0: i32) -> (i32, i32) {
    %c0_i32 = arith.constant 0 : i32
    %c0_i32_0 = arith.constant 0 : i32
    %c0_i32_1 = arith.constant 0 : i32
    return %c0_i32, %c0_i32_0 : i32, i32
  }
  func.func @transform_38(%arg0: i32) -> (i32, i32, i32) {
    %c0_i32 = arith.constant 0 : i32
    %c0_i32_0 = arith.constant 0 : i32
    %c0_i32_1 = arith.constant 0 : i32
    return %arg0, %c0_i32, %c0_i32_0 : i32, i32, i32
  }
}

</mosaic_0001>

<llo_original>
// kernel: tpu_custom_call.1
$region0: #{tpu_custom_call.1}
  #allocation0 [shape = 'u32[]', space=smem, size = 0x4, offset = 0x4, fixed_abs, tag = 'smem constant byte address 0x4 - core index']
  #allocation1 [shape = 'u32[144,128]{1,0:T(1,128)}', space=vmem, size = 0x12000, scoped, tag = 'internal scratch']
  %s0 = inlined_call_operand.smem [shape: u32[39], index: -1, kind: input, shape index: {}]
  %s1 = sld [smem:[%s0]]
  %s2 = scalar_lea.smem %s0, 1
  %s3 = sld [smem:[%s2]]
  %s4 = scalar_lea.smem %s0, 2
  %s5 = sld [smem:[%s4]]
  %s6 = scalar_lea.smem %s0, 3
  %s7 = sld [smem:[%s6]]
  %s8 = scalar_lea.smem %s0, 4
  %s9 = sld [smem:[%s8]]
  %s10 = scalar_lea.smem %s0, 5
  %s11 = sld [smem:[%s10]]
  %s12 = scalar_lea.smem %s0, 6
  %s13 = sld [smem:[%s12]]
  %s14 = scalar_lea.smem %s0, 7
  %s15 = sld [smem:[%s14]]
  %s16 = scalar_lea.smem %s0, 8
  %s17 = sld [smem:[%s16]]
  %s18 = scalar_lea.smem %s0, 9
  %s19 = sld [smem:[%s18]]
  %s20 = scalar_lea.smem %s0, 10
  %s21 = sld [smem:[%s20]]
  %s22 = scalar_lea.smem %s0, 11
  %s23 = sld [smem:[%s22]]
  %s24 = scalar_lea.smem %s0, 12
  %s25 = sld [smem:[%s24]]
  %s26 = scalar_lea.smem %s0, 13
  %s27 = sld [smem:[%s26]]
  %s28 = scalar_lea.smem %s0, 14
  %s29 = sld [smem:[%s28]]
  %s30 = scalar_lea.smem %s0, 15
  %s31 = sld [smem:[%s30]]
  %s32 = scalar_lea.smem %s0, 16
  %s33 = sld [smem:[%s32]]
  %s34 = scalar_lea.smem %s0, 17
  %s35 = sld [smem:[%s34]]
  %s36 = scalar_lea.smem %s0, 18
  %s37 = sld [smem:[%s36]]
  %s38 = scalar_lea.smem %s0, 19
  %s39 = sld [smem:[%s38]]
  %s40 = scalar_lea.smem %s0, 20
  %s41 = sld [smem:[%s40]]
  %s42 = scalar_lea.smem %s0, 21
  %s43 = sld [smem:[%s42]]
  %s44 = scalar_lea.smem %s0, 22
  %s45 = sld [smem:[%s44]]
  %s46 = scalar_lea.smem %s0, 23
  %s47 = sld [smem:[%s46]]
  %s48 = scalar_lea.smem %s0, 24
  %s49 = sld [smem:[%s48]]
  %s50 = scalar_lea.smem %s0, 25
  %s51 = sld [smem:[%s50]]
  %s52 = scalar_lea.smem %s0, 26
  %s53 = sld [smem:[%s52]]
  %s54 = scalar_lea.smem %s0, 27
  %s55 = sld [smem:[%s54]]
  %s56 = scalar_lea.smem %s0, 28
  %s57 = sld [smem:[%s56]]
  %s58 = scalar_lea.smem %s0, 29
  %s59 = sld [smem:[%s58]]
  %s60 = scalar_lea.smem %s0, 30
  %s61 = sld [smem:[%s60]]
  %s62 = scalar_lea.smem %s0, 31
  %s63 = sld [smem:[%s62]]
  %s64 = scalar_lea.smem %s0, 32
  %s65 = sld [smem:[%s64]]
  %s66 = scalar_lea.smem %s0, 33
  %s67 = sld [smem:[%s66]]
  %s68 = scalar_lea.smem %s0, 34
  %s69 = sld [smem:[%s68]]
  %s70 = scalar_lea.smem %s0, 35
  %s71 = sld [smem:[%s70]]
  %s72 = scalar_lea.smem %s0, 36
  %s73 = sld [smem:[%s72]]
  %s74 = scalar_lea.smem %s0, 37
  %s75 = sld [smem:[%s74]]
  %s76 = scalar_lea.smem %s0, 38
  %s77 = sld [smem:[%s76]]
  %s78 = sld [smem:[#allocation0]]
  $region273: #{tpu_custom_call.1} parent=0
    _
  %s80 = ssub.s32 1, %s78
  %s81 = scalar_select 0, %s80, %s78
  $region1: #{tpu_custom_call.1} parent=0
    #allocation2 [shape = 'u8[8192]{0}', space=vmem, size = 0x2000, scoped, tag = 'input window, operand 0']
    #allocation3 [shape = 's32[2]{0}', space=sflag, size = 0x8, scoped, tag = 'scoped memory for tpu_custom_call.1']
    #allocation4 [shape = 's32[2]{0}', space=sflag, size = 0x8, scoped, tag = 'scoped memory for tpu_custom_call.1']
    #allocation5 [shape = 'u8[8192]{0}', space=vmem, size = 0x2000, scoped, tag = 'input window, operand 1']
    #allocation6 [shape = 's32[2]{0}', space=sflag, size = 0x8, scoped, tag = 'scoped memory for tpu_custom_call.1']
    #allocation7 [shape = 'u8[1024]{0}', space=vmem, size = 0x400, scoped, tag = 'input window, operand 2']
    #allocation8 [shape = 'u8[8192]{0}', space=vmem, size = 0x2000, scoped, tag = 'input window, operand 3, single buffered']
    #allocation9 [shape = 's32[1]{0}', space=sflag, size = 0x4, scoped, tag = 'scoped memory for tpu_custom_call.1']
    #allocation10 [shape = 'u8[1024]{0}', space=vmem, size = 0x400, scoped, tag = 'input window, operand 5, single buffered']
    #allocation11 [shape = 'u8[1024]{0}', space=vmem, size = 0x400, scoped, tag = 'input window, operand 7, single buffered']
    #allocation12 [shape = 's32[1]{0}', space=sflag, size = 0x4, scoped, tag = 'scoped memory for tpu_custom_call.1']
    #allocation13 [shape = 'u8[1024]{0}', space=vmem, size = 0x400, scoped, tag = 'input window, operand 9, single buffered']
    #allocation14 [shape = 'u8[1024]{0}', space=vmem, size = 0x400, scoped, tag = 'input window, operand 11, single buffered']
    #allocation15 [shape = 's32[1]{0}', space=sflag, size = 0x4, scoped, tag = 'scoped memory for tpu_custom_call.1']
    #allocation16 [shape = 'u8[1024]{0}', space=vmem, size = 0x400, scoped, tag = 'input window, operand 12, single buffered']
    #allocation17 [shape = 'u8[1024]{0}', space=vmem, size = 0x400, scoped, tag = 'input window, operand 13, single buffered']
    #allocation18 [shape = 's32[1]{0}', space=sflag, size = 0x4, scoped, tag = 'scoped memory for tpu_custom_call.1']
    #allocation19 [shape = 'u8[1024]{0}', space=vmem, size = 0x400, scoped, tag = 'input window, operand 14, single buffered']
    #allocation20 [shape = 'u8[1024]{0}', space=vmem, size = 0x400, scoped, tag = 'input window, operand 15, single buffered']
    #allocation21 [shape = 's32[1]{0}', space=sflag, size = 0x4, scoped, tag = 'scoped memory for tpu_custom_call.1']
    #allocation22 [shape = 'u8[1024]{0}', space=vmem, size = 0x400, scoped, tag = 'input window, operand 17, single buffered']
    #allocation23 [shape = 'u8[1024]{0}', space=vmem, size = 0x400, scoped, tag = 'input window, operand 19, single buffered']
    #allocation24 [shape = 's32[1]{0}', space=sflag, size = 0x4, scoped, tag = 'scoped memory for tpu_custom_call.1']
    #allocation25 [shape = 'u8[1024]{0}', space=vmem, size = 0x400, scoped, tag = 'input window, operand 21, single buffered']
    #allocation26 [shape = 'u8[16384]{0}', space=vmem, size = 0x4000, scoped, tag = 'input window, operand 22, single buffered']
    #allocation27 [shape = 's32[1]{0}', space=sflag, size = 0x4, scoped, tag = 'scoped memory for tpu_custom_call.1']
    #allocation28 [shape = 'u8[1024]{0}', space=vmem, size = 0x400, scoped, tag = 'input window, operand 23, single buffered']
    #allocation29 [shape = 'u8[16384]{0}', space=vmem, size = 0x4000, scoped, tag = 'input window, operand 24, single buffered']
    #allocation30 [shape = 's32[1]{0}', space=sflag, size = 0x4, scoped, tag = 'scoped memory for tpu_custom_call.1']
    #allocation31 [shape = 'u8[1024]{0}', space=vmem, size = 0x400, scoped, tag = 'input window, operand 25, single buffered']
    #allocation32 [shape = 'u8[1024]{0}', space=vmem, size = 0x400, scoped, tag = 'input window, operand 27, single buffered']
    #allocation33 [shape = 's32[1]{0}', space=sflag, size = 0x4, scoped, tag = 'scoped memory for tpu_custom_call.1']
    #allocation34 [shape = 'u8[1024]{0}', space=vmem, size = 0x400, scoped, tag = 'input window, operand 29, single buffered']
    #allocation35 [shape = 'u8[1024]{0}', space=vmem, size = 0x400, scoped, tag = 'input window, operand 30, single buffered']
    #allocation36 [shape = 's32[1]{0}', space=sflag, size = 0x4, scoped, tag = 'scoped memory for tpu_custom_call.1']
    #allocation37 [shape = 'u8[8192]{0}', space=vmem, size = 0x2000, scoped, tag = 'output window, operand 0']
    %82 = vsyncpa [#allocation3], 0
    %s83 = scalar_lea.sflag [#allocation3], 1
    %84 = vsyncpa %s83, 0
    %85 = vsyncpa [#allocation6], 0
    %s86 = scalar_lea.sflag [#allocation6], 1
    %87 = vsyncpa %s86, 0
    %88 = vsyncpa [#allocation9], 0
    %89 = vsyncpa [#allocation12], 0
    %90 = vsyncpa [#allocation15], 0
    %91 = vsyncpa [#allocation18], 0
    %92 = vsyncpa [#allocation21], 0
    %93 = vsyncpa [#allocation24], 0
    %94 = vsyncpa [#allocation27], 0
    %95 = vsyncpa [#allocation30], 0
    %96 = vsyncpa [#allocation33], 0
    %97 = vsyncpa [#allocation36], 0
    %98 = vsyncpa [#allocation4], 0
    %s99 = scalar_lea.sflag [#allocation4], 1
    %100 = vsyncpa %s99, 0
    loop: start=0, step=1, limit=4
    $region2: #{tpu_custom_call.1} parent=1 // loop_pre_header
      _
    $region3: #{tpu_custom_call.1} parent=1 // loop_header
      %s102 = sphi 0, %s106
      %p103 = scmp.ge.s32.totalorder %s102, 4
      %s112 = sphi 0, %s114
      %s115 = sphi 0, %s112
      %s116 = sphi 0, %s115
      %s132 = sphi 0, %s116
      %s138 = sphi 0, %s140
      %s141 = sphi 0, %s138
      %s142 = sphi 0, %s141
      %s158 = sphi 0, %s142
      %s164 = sphi 0, %s166
      %s167 = sphi 0, %s164
      %s168 = sphi 0, %s167
      %s184 = sphi 0, %s168
      %s188 = sphi 0, %s188
      %s190 = sphi 0, %s188
      %s191 = sphi 0, %s190
      %s205 = sphi 0, %s191
      %s209 = sphi 0, %s209
      %s211 = sphi 0, %s209
      %s212 = sphi 0, %s211
      %s226 = sphi 0, %s212
      %s230 = sphi 0, %s230
      %s232 = sphi 0, %s230
      %s233 = sphi 0, %s232
      %s247 = sphi 0, %s233
      %s251 = sphi 0, %s251
      %s253 = sphi 0, %s251
      %s254 = sphi 0, %s253
      %s268 = sphi 0, %s254
      %s272 = sphi 0, %s272
      %s274 = sphi 0, %s272
      %s275 = sphi 0, %s274
      %s289 = sphi 0, %s275
      %s293 = sphi 0, %s293
      %s295 = sphi 0, %s293
      %s296 = sphi 0, %s295
      %s310 = sphi 0, %s296
      %s314 = sphi 0, %s314
      %s316 = sphi 0, %s314
      %s317 = sphi 0, %s316
      %s331 = sphi 0, %s317
      %s335 = sphi 0, %s335
      %s337 = sphi 0, %s335
      %s338 = sphi 0, %s337
      %s352 = sphi 0, %s338
      %s356 = sphi 0, %s356
      %s358 = sphi 0, %s356
      %s359 = sphi 0, %s358
      %s373 = sphi 0, %s359
      %s377 = sphi 0, %s377
      %s379 = sphi 0, %s377
      %s380 = sphi 0, %s379
      %s394 = sphi 0, %s380
      %s398 = sphi 0, %s398
      %s400 = sphi 0, %s398
      %s401 = sphi 0, %s400
      %s415 = sphi 0, %s401
      %s419 = sphi 0, %s419
      %s421 = sphi 0, %s419
      %s422 = sphi 0, %s421
      %s436 = sphi 0, %s422
      %s440 = sphi 0, %s440
      %s442 = sphi 0, %s440
      %s443 = sphi 0, %s442
      %s457 = sphi 0, %s443
      %s461 = sphi 0, %s461
      %s463 = sphi 0, %s461
      %s464 = sphi 0, %s463
      %s478 = sphi 0, %s464
      %s482 = sphi 0, %s482
      %s484 = sphi 0, %s482
      %s485 = sphi 0, %s484
      %s499 = sphi 0, %s485
      %s503 = sphi 0, %s503
      %s505 = sphi 0, %s503
      %s506 = sphi 0, %s505
      %s520 = sphi 0, %s506
      %s524 = sphi 0, %s524
      %s526 = sphi 0, %s524
      %s527 = sphi 0, %s526
      %s541 = sphi 0, %s527
      %s545 = sphi 0, %s545
      %s547 = sphi 0, %s545
      %s548 = sphi 0, %s547
      %s562 = sphi 0, %s548
      %s566 = sphi 0, %s566
      %s568 = sphi 0, %s566
      %s569 = sphi 0, %s568
      %s583 = sphi 0, %s569
      %s587 = sphi 0, %s587
      %s589 = sphi 0, %s587
      %s590 = sphi 0, %s589
      %s604 = sphi 0, %s590
      %s608 = sphi 0, %s608
      %s610 = sphi 0, %s608
      %s611 = sphi 0, %s610
      %s625 = sphi 0, %s611
      %s629 = sphi 0, %s629
      %s631 = sphi 0, %s629
      %s632 = sphi 0, %s631
      %s646 = sphi 0, %s632
      %s650 = sphi 0, %s650
      %s652 = sphi 0, %s650
      %s653 = sphi 0, %s652
      %s667 = sphi 0, %s653
      %s671 = sphi 0, %s671
      %s673 = sphi 0, %s671
      %s674 = sphi 0, %s673
      %s688 = sphi 0, %s674
      %s692 = sphi 0, %s692
      %s694 = sphi 0, %s692
      %s695 = sphi 0, %s694
      %s709 = sphi 0, %s695
      %s713 = sphi 0, %s713
      %s715 = sphi 0, %s713
      %s716 = sphi 0, %s715
      %s730 = sphi 0, %s716
      %s734 = sphi 0, %s734
      %s736 = sphi 0, %s734
      %s737 = sphi 0, %s736
      %s751 = sphi 0, %s737
      %s755 = sphi 0, %s755
      %s757 = sphi 0, %s755
      %s758 = sphi 0, %s757
      %s772 = sphi 0, %s758
      %s776 = sphi 0, %s776
      %s778 = sphi 0, %s776
      %s779 = sphi 0, %s778
      %s793 = sphi 0, %s779
      %s797 = sphi 0, %s797
      %s799 = sphi 0, %s797
      %s800 = sphi 0, %s799
      %s814 = sphi 0, %s800
      %s818 = sphi 0, %s818
      %s820 = sphi 0, %s818
      %s821 = sphi 0, %s820
      %s835 = sphi 0, %s821
      %s839 = sphi 0, %s839
      %s841 = sphi 0, %s839
      %s842 = sphi 0, %s841
      %s856 = sphi 0, %s842
      %s860 = sphi 0, %s860
      %s862 = sphi 0, %s860
      %s863 = sphi 0, %s862
      %s877 = sphi 0, %s863
      %s881 = sphi 0, %s881
      %s883 = sphi 0, %s881
      %s884 = sphi 0, %s883
      %s898 = sphi 0, %s884
      %s902 = sphi 0, %s902
      %s904 = sphi 0, %s902
      %s905 = sphi 0, %s904
      %s919 = sphi 0, %s905
      %s925 = sphi 0, %s927
      %s928 = sphi 0, %s925
      %s929 = sphi 0, %s928
      %s945 = sphi 0, %s929
    $region4: #{tpu_custom_call.1} parent=1 // loop_header_branch
      %105 = sbr.rel (%p103) target = $region8
    $region5: #{tpu_custom_call.1} parent=1 // loop_body
      %s107 = ssub.s32 %s102, 1
      %s108 = ssub.s32 %s102, 2
      %s109 = sadd.s32 %s102, 1
      %s110 = ssub.s32 %s102, %s109
      %p111 = scmp.eq.s32.totalorder %s110, 0
      %s113 = sadd.s32 %s112, 1
      %s114 = scalar_select %p111, %s112, %s113
      %p117 = pneg %p111
      %p118 = scmp.eq.s32.totalorder %s102, 1
      %p119 = por %p117, %p118
      %p120 = scmp.ne.s32.totalorder %s112, %s115
      %p121 = scmp.eq.s32.totalorder %s102, 0
      %p122 = por %p120, %p121
      %p123 = scmp.ne.s32.totalorder %s112, %s115
      %p124 = scmp.eq.s32.totalorder %s107, 1
      %p125 = por %p123, %p124
      %p126 = scmp.ne.s32.totalorder %s115, %s116
      %p127 = scmp.eq.s32.totalorder %s107, 0
      %p128 = por %p126, %p127
      %p129 = scmp.ne.s32.totalorder %s115, %s116
      %p130 = scmp.eq.s32.totalorder %s108, 1
      %p131 = por %p129, %p130
      %p133 = scmp.ne.s32.totalorder %s116, %s132
      %p134 = scmp.eq.s32.totalorder %s108, 0
      %p135 = por %p133, %p134
      %s136 = ssub.s32 %s102, %s109
      %p137 = scmp.eq.s32.totalorder %s136, 0
      %s139 = sadd.s32 %s138, 1
      %s140 = scalar_select %p137, %s138, %s139
      %p143 = pneg %p137
      %p144 = scmp.eq.s32.totalorder %s102, 1
      %p145 = por %p143, %p144
      %p146 = scmp.ne.s32.totalorder %s138, %s141
      %p147 = scmp.eq.s32.totalorder %s102, 0
      %p148 = por %p146, %p147
      %p149 = scmp.ne.s32.totalorder %s138, %s141
      %p150 = scmp.eq.s32.totalorder %s107, 1
      %p151 = por %p149, %p150
      %p152 = scmp.ne.s32.totalorder %s141, %s142
      %p153 = scmp.eq.s32.totalorder %s107, 0
      %p154 = por %p152, %p153
      %p155 = scmp.ne.s32.totalorder %s141, %s142
      %p156 = scmp.eq.s32.totalorder %s108, 1
      %p157 = por %p155, %p156
      %p159 = scmp.ne.s32.totalorder %s142, %s158
      %p160 = scmp.eq.s32.totalorder %s108, 0
      %p161 = por %p159, %p160
      %s162 = ssub.s32 %s102, %s109
      %p163 = scmp.eq.s32.totalorder %s162, 0
      %s165 = sadd.s32 %s164, 1
      %s166 = scalar_select %p163, %s164, %s165
      %p169 = pneg %p163
      %p170 = scmp.eq.s32.totalorder %s102, 1
      %p171 = por %p169, %p170
      %p172 = scmp.ne.s32.totalorder %s164, %s167
      %p173 = scmp.eq.s32.totalorder %s102, 0
      %p174 = por %p172, %p173
      %p175 = scmp.ne.s32.totalorder %s164, %s167
      %p176 = scmp.eq.s32.totalorder %s107, 1
      %p177 = por %p175, %p176
      %p178 = scmp.ne.s32.totalorder %s167, %s168
      %p179 = scmp.eq.s32.totalorder %s107, 0
      %p180 = por %p178, %p179
      %p181 = scmp.ne.s32.totalorder %s167, %s168
      %p182 = scmp.eq.s32.totalorder %s108, 1
      %p183 = por %p181, %p182
      %p185 = scmp.ne.s32.totalorder %s168, %s184
      %p186 = scmp.eq.s32.totalorder %s108, 0
      %p187 = por %p185, %p186
      %s189 = sadd.s32 %s188, 1
      %p192 = scmp.eq.s32.totalorder %s102, 1
      %p193 = scmp.ne.s32.totalorder %s188, %s190
      %p194 = scmp.eq.s32.totalorder %s102, 0
      %p195 = por %p193, %p194
      %p196 = scmp.ne.s32.totalorder %s188, %s190
      %p197 = scmp.eq.s32.totalorder %s107, 1
      %p198 = por %p196, %p197
      %p199 = scmp.ne.s32.totalorder %s190, %s191
      %p200 = scmp.eq.s32.totalorder %s107, 0
      %p201 = por %p199, %p200
      %p202 = scmp.ne.s32.totalorder %s190, %s191
      %p203 = scmp.eq.s32.totalorder %s108, 1
      %p204 = por %p202, %p203
      %p206 = scmp.ne.s32.totalorder %s191, %s205
      %p207 = scmp.eq.s32.totalorder %s108, 0
      %p208 = por %p206, %p207
      %s210 = sadd.s32 %s209, 1
      %p213 = scmp.eq.s32.totalorder %s102, 1
      %p214 = scmp.ne.s32.totalorder %s209, %s211
      %p215 = scmp.eq.s32.totalorder %s102, 0
      %p216 = por %p214, %p215
      %p217 = scmp.ne.s32.totalorder %s209, %s211
      %p218 = scmp.eq.s32.totalorder %s107, 1
      %p219 = por %p217, %p218
      %p220 = scmp.ne.s32.totalorder %s211, %s212
      %p221 = scmp.eq.s32.totalorder %s107, 0
      %p222 = por %p220, %p221
      %p223 = scmp.ne.s32.totalorder %s211, %s212
      %p224 = scmp.eq.s32.totalorder %s108, 1
      %p225 = por %p223, %p224
      %p227 = scmp.ne.s32.totalorder %s212, %s226
      %p228 = scmp.eq.s32.totalorder %s108, 0
      %p229 = por %p227, %p228
      %s231 = sadd.s32 %s230, 1
      %p234 = scmp.eq.s32.totalorder %s102, 1
      %p235 = scmp.ne.s32.totalorder %s230, %s232
      %p236 = scmp.eq.s32.totalorder %s102, 0
      %p237 = por %p235, %p236
      %p238 = scmp.ne.s32.totalorder %s230, %s232
      %p239 = scmp.eq.s32.totalorder %s107, 1
      %p240 = por %p238, %p239
      %p241 = scmp.ne.s32.totalorder %s232, %s233
      %p242 = scmp.eq.s32.totalorder %s107, 0
      %p243 = por %p241, %p242
      %p244 = scmp.ne.s32.totalorder %s232, %s233
      %p245 = scmp.eq.s32.totalorder %s108, 1
      %p246 = por %p244, %p245
      %p248 = scmp.ne.s32.totalorder %s233, %s247
      %p249 = scmp.eq.s32.totalorder %s108, 0
      %p250 = por %p248, %p249
      %s252 = sadd.s32 %s251, 1
      %p255 = scmp.eq.s32.totalorder %s102, 1
      %p256 = scmp.ne.s32.totalorder %s251, %s253
      %p257 = scmp.eq.s32.totalorder %s102, 0
      %p258 = por %p256, %p257
      %p259 = scmp.ne.s32.totalorder %s251, %s253
      %p260 = scmp.eq.s32.totalorder %s107, 1
      %p261 = por %p259, %p260
      %p262 = scmp.ne.s32.totalorder %s253, %s254
      %p263 = scmp.eq.s32.totalorder %s107, 0
      %p264 = por %p262, %p263
      %p265 = scmp.ne.s32.totalorder %s253, %s254
      %p266 = scmp.eq.s32.totalorder %s108, 1
      %p267 = por %p265, %p266
      %p269 = scmp.ne.s32.totalorder %s254, %s268
      %p270 = scmp.eq.s32.totalorder %s108, 0
      %p271 = por %p269, %p270
      %s273 = sadd.s32 %s272, 1
      %p276 = scmp.eq.s32.totalorder %s102, 1
      %p277 = scmp.ne.s32.totalorder %s272, %s274
      %p278 = scmp.eq.s32.totalorder %s102, 0
      %p279 = por %p277, %p278
      %p280 = scmp.ne.s32.totalorder %s272, %s274
      %p281 = scmp.eq.s32.totalorder %s107, 1
      %p282 = por %p280, %p281
      %p283 = scmp.ne.s32.totalorder %s274, %s275
      %p284 = scmp.eq.s32.totalorder %s107, 0
      %p285 = por %p283, %p284
      %p286 = scmp.ne.s32.totalorder %s274, %s275
      %p287 = scmp.eq.s32.totalorder %s108, 1
      %p288 = por %p286, %p287
      %p290 = scmp.ne.s32.totalorder %s275, %s289
      %p291 = scmp.eq.s32.totalorder %s108, 0
      %p292 = por %p290, %p291
      %s294 = sadd.s32 %s293, 1
      %p297 = scmp.eq.s32.totalorder %s102, 1
      %p298 = scmp.ne.s32.totalorder %s293, %s295
      %p299 = scmp.eq.s32.totalorder %s102, 0
      %p300 = por %p298, %p299
      %p301 = scmp.ne.s32.totalorder %s293, %s295
      %p302 = scmp.eq.s32.totalorder %s107, 1
      %p303 = por %p301, %p302
      %p304 = scmp.ne.s32.totalorder %s295, %s296
      %p305 = scmp.eq.s32.totalorder %s107, 0
      %p306 = por %p304, %p305
      %p307 = scmp.ne.s32.totalorder %s295, %s296
      %p308 = scmp.eq.s32.totalorder %s108, 1
      %p309 = por %p307, %p308
      %p311 = scmp.ne.s32.totalorder %s296, %s310
      %p312 = scmp.eq.s32.totalorder %s108, 0
      %p313 = por %p311, %p312
      %s315 = sadd.s32 %s314, 1
      %p318 = scmp.eq.s32.totalorder %s102, 1
      %p319 = scmp.ne.s32.totalorder %s314, %s316
      %p320 = scmp.eq.s32.totalorder %s102, 0
      %p321 = por %p319, %p320
      %p322 = scmp.ne.s32.totalorder %s314, %s316
      %p323 = scmp.eq.s32.totalorder %s107, 1
      %p324 = por %p322, %p323
      %p325 = scmp.ne.s32.totalorder %s316, %s317
      %p326 = scmp.eq.s32.totalorder %s107, 0
      %p327 = por %p325, %p326
      %p328 = scmp.ne.s32.totalorder %s316, %s317
      %p329 = scmp.eq.s32.totalorder %s108, 1
      %p330 = por %p328, %p329
      %p332 = scmp.ne.s32.totalorder %s317, %s331
      %p333 = scmp.eq.s32.totalorder %s108, 0
      %p334 = por %p332, %p333
      %s336 = sadd.s32 %s335, 1
      %p339 = scmp.eq.s32.totalorder %s102, 1
      %p340 = scmp.ne.s32.totalorder %s335, %s337
      %p341 = scmp.eq.s32.totalorder %s102, 0
      %p342 = por %p340, %p341
      %p343 = scmp.ne.s32.totalorder %s335, %s337
      %p344 = scmp.eq.s32.totalorder %s107, 1
      %p345 = por %p343, %p344
      %p346 = scmp.ne.s32.totalorder %s337, %s338
      %p347 = scmp.eq.s32.totalorder %s107, 0
      %p348 = por %p346, %p347
      %p349 = scmp.ne.s32.totalorder %s337, %s338
      %p350 = scmp.eq.s32.totalorder %s108, 1
      %p351 = por %p349, %p350
      %p353 = scmp.ne.s32.totalorder %s338, %s352
      %p354 = scmp.eq.s32.totalorder %s108, 0
      %p355 = por %p353, %p354
      %s357 = sadd.s32 %s356, 1
      %p360 = scmp.eq.s32.totalorder %s102, 1
      %p361 = scmp.ne.s32.totalorder %s356, %s358
      %p362 = scmp.eq.s32.totalorder %s102, 0
      %p363 = por %p361, %p362
      %p364 = scmp.ne.s32.totalorder %s356, %s358
      %p365 = scmp.eq.s32.totalorder %s107, 1
      %p366 = por %p364, %p365
      %p367 = scmp.ne.s32.totalorder %s358, %s359
      %p368 = scmp.eq.s32.totalorder %s107, 0
      %p369 = por %p367, %p368
      %p370 = scmp.ne.s32.totalorder %s358, %s359
      %p371 = scmp.eq.s32.totalorder %s108, 1
      %p372 = por %p370, %p371
      %p374 = scmp.ne.s32.totalorder %s359, %s373
      %p375 = scmp.eq.s32.totalorder %s108, 0
      %p376 = por %p374, %p375
      %s378 = sadd.s32 %s377, 1
      %p381 = scmp.eq.s32.totalorder %s102, 1
      %p382 = scmp.ne.s32.totalorder %s377, %s379
      %p383 = scmp.eq.s32.totalorder %s102, 0
      %p384 = por %p382, %p383
      %p385 = scmp.ne.s32.totalorder %s377, %s379
      %p386 = scmp.eq.s32.totalorder %s107, 1
      %p387 = por %p385, %p386
      %p388 = scmp.ne.s32.totalorder %s379, %s380
      %p389 = scmp.eq.s32.totalorder %s107, 0
      %p390 = por %p388, %p389
      %p391 = scmp.ne.s32.totalorder %s379, %s380
      %p392 = scmp.eq.s32.totalorder %s108, 1
      %p393 = por %p391, %p392
      %p395 = scmp.ne.s32.totalorder %s380, %s394
      %p396 = scmp.eq.s32.totalorder %s108, 0
      %p397 = por %p395, %p396
      %s399 = sadd.s32 %s398, 1
      %p402 = scmp.eq.s32.totalorder %s102, 1
      %p403 = scmp.ne.s32.totalorder %s398, %s400
      %p404 = scmp.eq.s32.totalorder %s102, 0
      %p405 = por %p403, %p404
      %p406 = scmp.ne.s32.totalorder %s398, %s400
      %p407 = scmp.eq.s32.totalorder %s107, 1
      %p408 = por %p406, %p407
      %p409 = scmp.ne.s32.totalorder %s400, %s401
      %p410 = scmp.eq.s32.totalorder %s107, 0
      %p411 = por %p409, %p410
      %p412 = scmp.ne.s32.totalorder %s400, %s401
      %p413 = scmp.eq.s32.totalorder %s108, 1
      %p414 = por %p412, %p413
      %p416 = scmp.ne.s32.totalorder %s401, %s415
      %p417 = scmp.eq.s32.totalorder %s108, 0
      %p418 = por %p416, %p417
      %s420 = sadd.s32 %s419, 1
      %p423 = scmp.eq.s32.totalorder %s102, 1
      %p424 = scmp.ne.s32.totalorder %s419, %s421
      %p425 = scmp.eq.s32.totalorder %s102, 0
      %p426 = por %p424, %p425
      %p427 = scmp.ne.s32.totalorder %s419, %s421
      %p428 = scmp.eq.s32.totalorder %s107, 1
      %p429 = por %p427, %p428
      %p430 = scmp.ne.s32.totalorder %s421, %s422
      %p431 = scmp.eq.s32.totalorder %s107, 0
      %p432 = por %p430, %p431
      %p433 = scmp.ne.s32.totalorder %s421, %s422
      %p434 = scmp.eq.s32.totalorder %s108, 1
      %p435 = por %p433, %p434
      %p437 = scmp.ne.s32.totalorder %s422, %s436
      %p438 = scmp.eq.s32.totalorder %s108, 0
      %p439 = por %p437, %p438
      %s441 = sadd.s32 %s440, 1
      %p444 = scmp.eq.s32.totalorder %s102, 1
      %p445 = scmp.ne.s32.totalorder %s440, %s442
      %p446 = scmp.eq.s32.totalorder %s102, 0
      %p447 = por %p445, %p446
      %p448 = scmp.ne.s32.totalorder %s440, %s442
      %p449 = scmp.eq.s32.totalorder %s107, 1
      %p450 = por %p448, %p449
      %p451 = scmp.ne.s32.totalorder %s442, %s443
      %p452 = scmp.eq.s32.totalorder %s107, 0
      %p453 = por %p451, %p452
      %p454 = scmp.ne.s32.totalorder %s442, %s443
      %p455 = scmp.eq.s32.totalorder %s108, 1
      %p456 = por %p454, %p455
      %p458 = scmp.ne.s32.totalorder %s443, %s457
      %p459 = scmp.eq.s32.totalorder %s108, 0
      %p460 = por %p458, %p459
      %s462 = sadd.s32 %s461, 1
      %p465 = scmp.eq.s32.totalorder %s102, 1
      %p466 = scmp.ne.s32.totalorder %s461, %s463
      %p467 = scmp.eq.s32.totalorder %s102, 0
      %p468 = por %p466, %p467
      %p469 = scmp.ne.s32.totalorder %s461, %s463
      %p470 = scmp.eq.s32.totalorder %s107, 1
      %p471 = por %p469, %p470
      %p472 = scmp.ne.s32.totalorder %s463, %s464
      %p473 = scmp.eq.s32.totalorder %s107, 0
      %p474 = por %p472, %p473
      %p475 = scmp.ne.s32.totalorder %s463, %s464
      %p476 = scmp.eq.s32.totalorder %s108, 1
      %p477 = por %p475, %p476
      %p479 = scmp.ne.s32.totalorder %s464, %s478
      %p480 = scmp.eq.s32.totalorder %s108, 0
      %p481 = por %p479, %p480
      %s483 = sadd.s32 %s482, 1
      %p486 = scmp.eq.s32.totalorder %s102, 1
      %p487 = scmp.ne.s32.totalorder %s482, %s484
      %p488 = scmp.eq.s32.totalorder %s102, 0
      %p489 = por %p487, %p488
      %p490 = scmp.ne.s32.totalorder %s482, %s484
      %p491 = scmp.eq.s32.totalorder %s107, 1
      %p492 = por %p490, %p491
      %p493 = scmp.ne.s32.totalorder %s484, %s485
      %p494 = scmp.eq.s32.totalorder %s107, 0
      %p495 = por %p493, %p494
      %p496 = scmp.ne.s32.totalorder %s484, %s485
      %p497 = scmp.eq.s32.totalorder %s108, 1
      %p498 = por %p496, %p497
      %p500 = scmp.ne.s32.totalorder %s485, %s499
      %p501 = scmp.eq.s32.totalorder %s108, 0
      %p502 = por %p500, %p501
      %s504 = sadd.s32 %s503, 1
      %p507 = scmp.eq.s32.totalorder %s102, 1
      %p508 = scmp.ne.s32.totalorder %s503, %s505
      %p509 = scmp.eq.s32.totalorder %s102, 0
      %p510 = por %p508, %p509
      %p511 = scmp.ne.s32.totalorder %s503, %s505
      %p512 = scmp.eq.s32.totalorder %s107, 1
      %p513 = por %p511, %p512
      %p514 = scmp.ne.s32.totalorder %s505, %s506
      %p515 = scmp.eq.s32.totalorder %s107, 0
      %p516 = por %p514, %p515
      %p517 = scmp.ne.s32.totalorder %s505, %s506
      %p518 = scmp.eq.s32.totalorder %s108, 1
      %p519 = por %p517, %p518
      %p521 = scmp.ne.s32.totalorder %s506, %s520
      %p522 = scmp.eq.s32.totalorder %s108, 0
      %p523 = por %p521, %p522
      %s525 = sadd.s32 %s524, 1
      %p528 = scmp.eq.s32.totalorder %s102, 1
      %p529 = scmp.ne.s32.totalorder %s524, %s526
      %p530 = scmp.eq.s32.totalorder %s102, 0
      %p531 = por %p529, %p530
      %p532 = scmp.ne.s32.totalorder %s524, %s526
      %p533 = scmp.eq.s32.totalorder %s107, 1
      %p534 = por %p532, %p533
      %p535 = scmp.ne.s32.totalorder %s526, %s527
      %p536 = scmp.eq.s32.totalorder %s107, 0
      %p537 = por %p535, %p536
      %p538 = scmp.ne.s32.totalorder %s526, %s527
      %p539 = scmp.eq.s32.totalorder %s108, 1
      %p540 = por %p538, %p539
      %p542 = scmp.ne.s32.totalorder %s527, %s541
      %p543 = scmp.eq.s32.totalorder %s108, 0
      %p544 = por %p542, %p543
      %s546 = sadd.s32 %s545, 1
      %p549 = scmp.eq.s32.totalorder %s102, 1
      %p550 = scmp.ne.s32.totalorder %s545, %s547
      %p551 = scmp.eq.s32.totalorder %s102, 0
      %p552 = por %p550, %p551
      %p553 = scmp.ne.s32.totalorder %s545, %s547
      %p554 = scmp.eq.s32.totalorder %s107, 1
      %p555 = por %p553, %p554
      %p556 = scmp.ne.s32.totalorder %s547, %s548
      %p557 = scmp.eq.s32.totalorder %s107, 0
      %p558 = por %p556, %p557
      %p559 = scmp.ne.s32.totalorder %s547, %s548
      %p560 = scmp.eq.s32.totalorder %s108, 1
      %p561 = por %p559, %p560
      %p563 = scmp.ne.s32.totalorder %s548, %s562
      %p564 = scmp.eq.s32.totalorder %s108, 0
      %p565 = por %p563, %p564
      %s567 = sadd.s32 %s566, 1
      %p570 = scmp.eq.s32.totalorder %s102, 1
      %p571 = scmp.ne.s32.totalorder %s566, %s568
      %p572 = scmp.eq.s32.totalorder %s102, 0
      %p573 = por %p571, %p572
      %p574 = scmp.ne.s32.totalorder %s566, %s568
      %p575 = scmp.eq.s32.totalorder %s107, 1
      %p576 = por %p574, %p575
      %p577 = scmp.ne.s32.totalorder %s568, %s569
      %p578 = scmp.eq.s32.totalorder %s107, 0
      %p579 = por %p577, %p578
      %p580 = scmp.ne.s32.totalorder %s568, %s569
      %p581 = scmp.eq.s32.totalorder %s108, 1
      %p582 = por %p580, %p581
      %p584 = scmp.ne.s32.totalorder %s569, %s583
      %p585 = scmp.eq.s32.totalorder %s108, 0
      %p586 = por %p584, %p585
      %s588 = sadd.s32 %s587, 1
      %p591 = scmp.eq.s32.totalorder %s102, 1
      %p592 = scmp.ne.s32.totalorder %s587, %s589
      %p593 = scmp.eq.s32.totalorder %s102, 0
      %p594 = por %p592, %p593
      %p595 = scmp.ne.s32.totalorder %s587, %s589
      %p596 = scmp.eq.s32.totalorder %s107, 1
      %p597 = por %p595, %p596
      %p598 = scmp.ne.s32.totalorder %s589, %s590
      %p599 = scmp.eq.s32.totalorder %s107, 0
      %p600 = por %p598, %p599
      %p601 = scmp.ne.s32.totalorder %s589, %s590
      %p602 = scmp.eq.s32.totalorder %s108, 1
      %p603 = por %p601, %p602
      %p605 = scmp.ne.s32.totalorder %s590, %s604
      %p606 = scmp.eq.s32.totalorder %s108, 0
      %p607 = por %p605, %p606
      %s609 = sadd.s32 %s608, 1
      %p612 = scmp.eq.s32.totalorder %s102, 1
      %p613 = scmp.ne.s32.totalorder %s608, %s610
      %p614 = scmp.eq.s32.totalorder %s102, 0
      %p615 = por %p613, %p614
      %p616 = scmp.ne.s32.totalorder %s608, %s610
      %p617 = scmp.eq.s32.totalorder %s107, 1
      %p618 = por %p616, %p617
      %p619 = scmp.ne.s32.totalorder %s610, %s611
      %p620 = scmp.eq.s32.totalorder %s107, 0
      %p621 = por %p619, %p620
      %p622 = scmp.ne.s32.totalorder %s610, %s611
      %p623 = scmp.eq.s32.totalorder %s108, 1
      %p624 = por %p622, %p623
      %p626 = scmp.ne.s32.totalorder %s611, %s625
      %p627 = scmp.eq.s32.totalorder %s108, 0
      %p628 = por %p626, %p627
      %s630 = sadd.s32 %s629, 1
      %p633 = scmp.eq.s32.totalorder %s102, 1
      %p634 = scmp.ne.s32.totalorder %s629, %s631
      %p635 = scmp.eq.s32.totalorder %s102, 0
      %p636 = por %p634, %p635
      %p637 = scmp.ne.s32.totalorder %s629, %s631
      %p638 = scmp.eq.s32.totalorder %s107, 1
      %p639 = por %p637, %p638
      %p640 = scmp.ne.s32.totalorder %s631, %s632
      %p641 = scmp.eq.s32.totalorder %s107, 0
      %p642 = por %p640, %p641
      %p643 = scmp.ne.s32.totalorder %s631, %s632
      %p644 = scmp.eq.s32.totalorder %s108, 1
      %p645 = por %p643, %p644
      %p647 = scmp.ne.s32.totalorder %s632, %s646
      %p648 = scmp.eq.s32.totalorder %s108, 0
      %p649 = por %p647, %p648
      %s651 = sadd.s32 %s650, 1
      %p654 = scmp.eq.s32.totalorder %s102, 1
      %p655 = scmp.ne.s32.totalorder %s650, %s652
      %p656 = scmp.eq.s32.totalorder %s102, 0
      %p657 = por %p655, %p656
      %p658 = scmp.ne.s32.totalorder %s650, %s652
      %p659 = scmp.eq.s32.totalorder %s107, 1
      %p660 = por %p658, %p659
      %p661 = scmp.ne.s32.totalorder %s652, %s653
      %p662 = scmp.eq.s32.totalorder %s107, 0
      %p663 = por %p661, %p662
      %p664 = scmp.ne.s32.totalorder %s652, %s653
      %p665 = scmp.eq.s32.totalorder %s108, 1
      %p666 = por %p664, %p665
      %p668 = scmp.ne.s32.totalorder %s653, %s667
      %p669 = scmp.eq.s32.totalorder %s108, 0
      %p670 = por %p668, %p669
      %s672 = sadd.s32 %s671, 1
      %p675 = scmp.eq.s32.totalorder %s102, 1
      %p676 = scmp.ne.s32.totalorder %s671, %s673
      %p677 = scmp.eq.s32.totalorder %s102, 0
      %p678 = por %p676, %p677
      %p679 = scmp.ne.s32.totalorder %s671, %s673
      %p680 = scmp.eq.s32.totalorder %s107, 1
      %p681 = por %p679, %p680
      %p682 = scmp.ne.s32.totalorder %s673, %s674
      %p683 = scmp.eq.s32.totalorder %s107, 0
      %p684 = por %p682, %p683
      %p685 = scmp.ne.s32.totalorder %s673, %s674
      %p686 = scmp.eq.s32.totalorder %s108, 1
      %p687 = por %p685, %p686
      %p689 = scmp.ne.s32.totalorder %s674, %s688
      %p690 = scmp.eq.s32.totalorder %s108, 0
      %p691 = por %p689, %p690
      %s693 = sadd.s32 %s692, 1
      %p696 = scmp.eq.s32.totalorder %s102, 1
      %p697 = scmp.ne.s32.totalorder %s692, %s694
      %p698 = scmp.eq.s32.totalorder %s102, 0
      %p699 = por %p697, %p698
      %p700 = scmp.ne.s32.totalorder %s692, %s694
      %p701 = scmp.eq.s32.totalorder %s107, 1
      %p702 = por %p700, %p701
      %p703 = scmp.ne.s32.totalorder %s694, %s695
      %p704 = scmp.eq.s32.totalorder %s107, 0
      %p705 = por %p703, %p704
      %p706 = scmp.ne.s32.totalorder %s694, %s695
      %p707 = scmp.eq.s32.totalorder %s108, 1
      %p708 = por %p706, %p707
      %p710 = scmp.ne.s32.totalorder %s695, %s709
      %p711 = scmp.eq.s32.totalorder %s108, 0
      %p712 = por %p710, %p711
      %s714 = sadd.s32 %s713, 1
      %p717 = scmp.eq.s32.totalorder %s102, 1
      %p718 = scmp.ne.s32.totalorder %s713, %s715
      %p719 = scmp.eq.s32.totalorder %s102, 0
      %p720 = por %p718, %p719
      %p721 = scmp.ne.s32.totalorder %s713, %s715
      %p722 = scmp.eq.s32.totalorder %s107, 1
      %p723 = por %p721, %p722
      %p724 = scmp.ne.s32.totalorder %s715, %s716
      %p725 = scmp.eq.s32.totalorder %s107, 0
      %p726 = por %p724, %p725
      %p727 = scmp.ne.s32.totalorder %s715, %s716
      %p728 = scmp.eq.s32.totalorder %s108, 1
      %p729 = por %p727, %p728
      %p731 = scmp.ne.s32.totalorder %s716, %s730
      %p732 = scmp.eq.s32.totalorder %s108, 0
      %p733 = por %p731, %p732
      %s735 = sadd.s32 %s734, 1
      %p738 = scmp.eq.s32.totalorder %s102, 1
      %p739 = scmp.ne.s32.totalorder %s734, %s736
      %p740 = scmp.eq.s32.totalorder %s102, 0
      %p741 = por %p739, %p740
      %p742 = scmp.ne.s32.totalorder %s734, %s736
      %p743 = scmp.eq.s32.totalorder %s107, 1
      %p744 = por %p742, %p743
      %p745 = scmp.ne.s32.totalorder %s736, %s737
      %p746 = scmp.eq.s32.totalorder %s107, 0
      %p747 = por %p745, %p746
      %p748 = scmp.ne.s32.totalorder %s736, %s737
      %p749 = scmp.eq.s32.totalorder %s108, 1
      %p750 = por %p748, %p749
      %p752 = scmp.ne.s32.totalorder %s737, %s751
      %p753 = scmp.eq.s32.totalorder %s108, 0
      %p754 = por %p752, %p753
      %s756 = sadd.s32 %s755, 1
      %p759 = scmp.eq.s32.totalorder %s102, 1
      %p760 = scmp.ne.s32.totalorder %s755, %s757
      %p761 = scmp.eq.s32.totalorder %s102, 0
      %p762 = por %p760, %p761
      %p763 = scmp.ne.s32.totalorder %s755, %s757
      %p764 = scmp.eq.s32.totalorder %s107, 1
      %p765 = por %p763, %p764
      %p766 = scmp.ne.s32.totalorder %s757, %s758
      %p767 = scmp.eq.s32.totalorder %s107, 0
      %p768 = por %p766, %p767
      %p769 = scmp.ne.s32.totalorder %s757, %s758
      %p770 = scmp.eq.s32.totalorder %s108, 1
      %p771 = por %p769, %p770
      %p773 = scmp.ne.s32.totalorder %s758, %s772
      %p774 = scmp.eq.s32.totalorder %s108, 0
      %p775 = por %p773, %p774
      %s777 = sadd.s32 %s776, 1
      %p780 = scmp.eq.s32.totalorder %s102, 1
      %p781 = scmp.ne.s32.totalorder %s776, %s778
      %p782 = scmp.eq.s32.totalorder %s102, 0
      %p783 = por %p781, %p782
      %p784 = scmp.ne.s32.totalorder %s776, %s778
      %p785 = scmp.eq.s32.totalorder %s107, 1
      %p786 = por %p784, %p785
      %p787 = scmp.ne.s32.totalorder %s778, %s779
      %p788 = scmp.eq.s32.totalorder %s107, 0
      %p789 = por %p787, %p788
      %p790 = scmp.ne.s32.totalorder %s778, %s779
      %p791 = scmp.eq.s32.totalorder %s108, 1
      %p792 = por %p790, %p791
      %p794 = scmp.ne.s32.totalorder %s779, %s793
      %p795 = scmp.eq.s32.totalorder %s108, 0
      %p796 = por %p794, %p795
      %s798 = sadd.s32 %s797, 1
      %p801 = scmp.eq.s32.totalorder %s102, 1
      %p802 = scmp.ne.s32.totalorder %s797, %s799
      %p803 = scmp.eq.s32.totalorder %s102, 0
      %p804 = por %p802, %p803
      %p805 = scmp.ne.s32.totalorder %s797, %s799
      %p806 = scmp.eq.s32.totalorder %s107, 1
      %p807 = por %p805, %p806
      %p808 = scmp.ne.s32.totalorder %s799, %s800
      %p809 = scmp.eq.s32.totalorder %s107, 0
      %p810 = por %p808, %p809
      %p811 = scmp.ne.s32.totalorder %s799, %s800
      %p812 = scmp.eq.s32.totalorder %s108, 1
      %p813 = por %p811, %p812
      %p815 = scmp.ne.s32.totalorder %s800, %s814
      %p816 = scmp.eq.s32.totalorder %s108, 0
      %p817 = por %p815, %p816
      %s819 = sadd.s32 %s818, 1
      %p822 = scmp.eq.s32.totalorder %s102, 1
      %p823 = scmp.ne.s32.totalorder %s818, %s820
      %p824 = scmp.eq.s32.totalorder %s102, 0
      %p825 = por %p823, %p824
      %p826 = scmp.ne.s32.totalorder %s818, %s820
      %p827 = scmp.eq.s32.totalorder %s107, 1
      %p828 = por %p826, %p827
      %p829 = scmp.ne.s32.totalorder %s820, %s821
      %p830 = scmp.eq.s32.totalorder %s107, 0
      %p831 = por %p829, %p830
      %p832 = scmp.ne.s32.totalorder %s820, %s821
      %p833 = scmp.eq.s32.totalorder %s108, 1
      %p834 = por %p832, %p833
      %p836 = scmp.ne.s32.totalorder %s821, %s835
      %p837 = scmp.eq.s32.totalorder %s108, 0
      %p838 = por %p836, %p837
      %s840 = sadd.s32 %s839, 1
      %p843 = scmp.eq.s32.totalorder %s102, 1
      %p844 = scmp.ne.s32.totalorder %s839, %s841
      %p845 = scmp.eq.s32.totalorder %s102, 0
      %p846 = por %p844, %p845
      %p847 = scmp.ne.s32.totalorder %s839, %s841
      %p848 = scmp.eq.s32.totalorder %s107, 1
      %p849 = por %p847, %p848
      %p850 = scmp.ne.s32.totalorder %s841, %s842
      %p851 = scmp.eq.s32.totalorder %s107, 0
      %p852 = por %p850, %p851
      %p853 = scmp.ne.s32.totalorder %s841, %s842
      %p854 = scmp.eq.s32.totalorder %s108, 1
      %p855 = por %p853, %p854
      %p857 = scmp.ne.s32.totalorder %s842, %s856
      %p858 = scmp.eq.s32.totalorder %s108, 0
      %p859 = por %p857, %p858
      %s861 = sadd.s32 %s860, 1
      %p864 = scmp.eq.s32.totalorder %s102, 1
      %p865 = scmp.ne.s32.totalorder %s860, %s862
      %p866 = scmp.eq.s32.totalorder %s102, 0
      %p867 = por %p865, %p866
      %p868 = scmp.ne.s32.totalorder %s860, %s862
      %p869 = scmp.eq.s32.totalorder %s107, 1
      %p870 = por %p868, %p869
      %p871 = scmp.ne.s32.totalorder %s862, %s863
      %p872 = scmp.eq.s32.totalorder %s107, 0
      %p873 = por %p871, %p872
      %p874 = scmp.ne.s32.totalorder %s862, %s863
      %p875 = scmp.eq.s32.totalorder %s108, 1
      %p876 = por %p874, %p875
      %p878 = scmp.ne.s32.totalorder %s863, %s877
      %p879 = scmp.eq.s32.totalorder %s108, 0
      %p880 = por %p878, %p879
      %s882 = sadd.s32 %s881, 1
      %p885 = scmp.eq.s32.totalorder %s102, 1
      %p886 = scmp.ne.s32.totalorder %s881, %s883
      %p887 = scmp.eq.s32.totalorder %s102, 0
      %p888 = por %p886, %p887
      %p889 = scmp.ne.s32.totalorder %s881, %s883
      %p890 = scmp.eq.s32.totalorder %s107, 1
      %p891 = por %p889, %p890
      %p892 = scmp.ne.s32.totalorder %s883, %s884
      %p893 = scmp.eq.s32.totalorder %s107, 0
      %p894 = por %p892, %p893
      %p895 = scmp.ne.s32.totalorder %s883, %s884
      %p896 = scmp.eq.s32.totalorder %s108, 1
      %p897 = por %p895, %p896
      %p899 = scmp.ne.s32.totalorder %s884, %s898
      %p900 = scmp.eq.s32.totalorder %s108, 0
      %p901 = por %p899, %p900
      %s903 = sadd.s32 %s902, 1
      %p906 = scmp.eq.s32.totalorder %s102, 1
      %p907 = scmp.ne.s32.totalorder %s902, %s904
      %p908 = scmp.eq.s32.totalorder %s102, 0
      %p909 = por %p907, %p908
      %p910 = scmp.ne.s32.totalorder %s902, %s904
      %p911 = scmp.eq.s32.totalorder %s107, 1
      %p912 = por %p910, %p911
      %p913 = scmp.ne.s32.totalorder %s904, %s905
      %p914 = scmp.eq.s32.totalorder %s107, 0
      %p915 = por %p913, %p914
      %p916 = scmp.ne.s32.totalorder %s904, %s905
      %p917 = scmp.eq.s32.totalorder %s108, 1
      %p918 = por %p916, %p917
      %p920 = scmp.ne.s32.totalorder %s905, %s919
      %p921 = scmp.eq.s32.totalorder %s108, 0
      %p922 = por %p920, %p921
      %s923 = ssub.s32 %s102, %s109
      %p924 = scmp.eq.s32.totalorder %s923, 0
      %s926 = sadd.s32 %s925, 1
      %s927 = scalar_select %p924, %s925, %s926
      %p930 = pneg %p924
      %p931 = scmp.eq.s32.totalorder %s102, 1
      %p932 = por %p930, %p931
      %p933 = scmp.ne.s32.totalorder %s925, %s928
      %p934 = scmp.eq.s32.totalorder %s102, 0
      %p935 = por %p933, %p934
      %p936 = scmp.ne.s32.totalorder %s925, %s928
      %p937 = scmp.eq.s32.totalorder %s107, 1
      %p938 = por %p936, %p937
      %p939 = scmp.ne.s32.totalorder %s928, %s929
      %p940 = scmp.eq.s32.totalorder %s107, 0
      %p941 = por %p939, %p940
      %p942 = scmp.ne.s32.totalorder %s928, %s929
      %p943 = scmp.eq.s32.totalorder %s108, 1
      %p944 = por %p942, %p943
      %p946 = scmp.ne.s32.totalorder %s929, %s945
      %p947 = scmp.eq.s32.totalorder %s108, 0
      %p948 = por %p946, %p947
      %p949 = scmp.le.s32.totalorder 1, %s102
      %p950 = scmp.lt.s32.totalorder %s102, 3
      %p951 = pnand %p949, %p950
      %p952 = pneg %p951
      // Predicated region
      $region9: #{tpu_custom_call.1} parent=5 // pred_check
        _
      $region10: #{tpu_custom_call.1} parent=5 // pred_check_branch
        %954 = sbr.rel (%p951) target = $region12
      $region11: #{tpu_custom_call.1} parent=5 // pred_region
        %s955 = ssub.s32 %s102, 1
        // Predicated region
        $region13: #{tpu_custom_call.1} parent=11 // pred_check
          %p956 = pneg %p201
        $region14: #{tpu_custom_call.1} parent=11 // pred_check_branch
          %958 = sbr.rel (%p956) target = $region16
        $region15: #{tpu_custom_call.1} parent=11 // pred_region
          %s960 = ssub.s32 256, 256
          %961 = vsyncadd [#allocation9], %s960
          %s962 = sshll.u32 [#allocation8], 4
          %s963 = int_to_ptr.vmem [resolvable:$true] %s962
          %968 = dma.hbm_to_vmem [thread:$0]  %s7, 256, %s963, [#allocation9], 128, 128, 8
        $region16: #{tpu_custom_call.1} parent=11 // pred_fallthru
          _
        // Predicated region
        $region17: #{tpu_custom_call.1} parent=11 // pred_check
          %p969 = pneg %p222
        $region18: #{tpu_custom_call.1} parent=11 // pred_check_branch
          %971 = sbr.rel (%p969) target = $region20
        $region19: #{tpu_custom_call.1} parent=11 // pred_region
          _
        $region20: #{tpu_custom_call.1} parent=11 // pred_fallthru
          _
        // Predicated region
        $region21: #{tpu_custom_call.1} parent=11 // pred_check
          %p972 = pneg %p243
        $region22: #{tpu_custom_call.1} parent=11 // pred_check_branch
          %974 = sbr.rel (%p972) target = $region24
        $region23: #{tpu_custom_call.1} parent=11 // pred_region
          %s976 = ssub.s32 32, 32
          %977 = vsyncadd [#allocation9], %s976
          %s978 = sshll.u32 [#allocation10], 4
          %s979 = int_to_ptr.vmem [resolvable:$true] %s978
          %984 = dma.hbm_to_vmem [thread:$0]  %s11, 32, %s979, [#allocation9], 16, 16, 1
        $region24: #{tpu_custom_call.1} parent=11 // pred_fallthru
          _
        // Predicated region
        $region25: #{tpu_custom_call.1} parent=11 // pred_check
          %p985 = pneg %p264
        $region26: #{tpu_custom_call.1} parent=11 // pred_check_branch
          %987 = sbr.rel (%p985) target = $region28
        $region27: #{tpu_custom_call.1} parent=11 // pred_region
          _
        $region28: #{tpu_custom_call.1} parent=11 // pred_fallthru
          _
        // Predicated region
        $region29: #{tpu_custom_call.1} parent=11 // pred_check
          %p988 = pneg %p285
        $region30: #{tpu_custom_call.1} parent=11 // pred_check_branch
          %990 = sbr.rel (%p988) target = $region32
        $region31: #{tpu_custom_call.1} parent=11 // pred_region
          %s992 = ssub.s32 32, 32
          %993 = vsyncadd [#allocation12], %s992
          %s994 = sshll.u32 [#allocation11], 4
          %s995 = int_to_ptr.vmem [resolvable:$true] %s994
          %1000 = dma.hbm_to_vmem [thread:$0]  %s15, 32, %s995, [#allocation12], 16, 16, 1
        $region32: #{tpu_custom_call.1} parent=11 // pred_fallthru
          _
        // Predicated region
        $region33: #{tpu_custom_call.1} parent=11 // pred_check
          %p1001 = pneg %p306
        $region34: #{tpu_custom_call.1} parent=11 // pred_check_branch
          %1003 = sbr.rel (%p1001) target = $region36
        $region35: #{tpu_custom_call.1} parent=11 // pred_region
          _
        $region36: #{tpu_custom_call.1} parent=11 // pred_fallthru
          _
        // Predicated region
        $region37: #{tpu_custom_call.1} parent=11 // pred_check
          %p1004 = pneg %p327
        $region38: #{tpu_custom_call.1} parent=11 // pred_check_branch
          %1006 = sbr.rel (%p1004) target = $region40
        $region39: #{tpu_custom_call.1} parent=11 // pred_region
          %s1008 = ssub.s32 32, 32
          %1009 = vsyncadd [#allocation12], %s1008
          %s1010 = sshll.u32 [#allocation13], 4
          %s1011 = int_to_ptr.vmem [resolvable:$true] %s1010
          %1016 = dma.hbm_to_vmem [thread:$0]  %s19, 32, %s1011, [#allocation12], 16, 16, 1
        $region40: #{tpu_custom_call.1} parent=11 // pred_fallthru
          _
        // Predicated region
        $region41: #{tpu_custom_call.1} parent=11 // pred_check
          %p1017 = pneg %p348
        $region42: #{tpu_custom_call.1} parent=11 // pred_check_branch
          %1019 = sbr.rel (%p1017) target = $region44
        $region43: #{tpu_custom_call.1} parent=11 // pred_region
          _
        $region44: #{tpu_custom_call.1} parent=11 // pred_fallthru
          _
        // Predicated region
        $region45: #{tpu_custom_call.1} parent=11 // pred_check
          %p1020 = pneg %p369
        $region46: #{tpu_custom_call.1} parent=11 // pred_check_branch
          %1022 = sbr.rel (%p1020) target = $region48
        $region47: #{tpu_custom_call.1} parent=11 // pred_region
          %s1024 = ssub.s32 32, 32
          %1025 = vsyncadd [#allocation15], %s1024
          %s1026 = sshll.u32 [#allocation14], 4
          %s1027 = int_to_ptr.vmem [resolvable:$true] %s1026
          %1032 = dma.hbm_to_vmem [thread:$0]  %s23, 32, %s1027, [#allocation15], 16, 16, 1
        $region48: #{tpu_custom_call.1} parent=11 // pred_fallthru
          _
        // Predicated region
        $region49: #{tpu_custom_call.1} parent=11 // pred_check
          %p1033 = pneg %p390
        $region50: #{tpu_custom_call.1} parent=11 // pred_check_branch
          %1035 = sbr.rel (%p1033) target = $region52
        $region51: #{tpu_custom_call.1} parent=11 // pred_region
          %s1037 = ssub.s32 32, 32
          %1038 = vsyncadd [#allocation15], %s1037
          %s1039 = sshll.u32 [#allocation16], 4
          %s1040 = int_to_ptr.vmem [resolvable:$true] %s1039
          %1045 = dma.hbm_to_vmem [thread:$0]  %s25, 32, %s1040, [#allocation15], 16, 16, 1
        $region52: #{tpu_custom_call.1} parent=11 // pred_fallthru
          _
        // Predicated region
        $region53: #{tpu_custom_call.1} parent=11 // pred_check
          %p1046 = pneg %p411
        $region54: #{tpu_custom_call.1} parent=11 // pred_check_branch
          %1048 = sbr.rel (%p1046) target = $region56
        $region55: #{tpu_custom_call.1} parent=11 // pred_region
          %s1050 = ssub.s32 32, 32
          %1051 = vsyncadd [#allocation18], %s1050
          %s1052 = sshll.u32 [#allocation17], 4
          %s1053 = int_to_ptr.vmem [resolvable:$true] %s1052
          %1058 = dma.hbm_to_vmem [thread:$0]  %s27, 32, %s1053, [#allocation18], 16, 16, 1
        $region56: #{tpu_custom_call.1} parent=11 // pred_fallthru
          _
        // Predicated region
        $region57: #{tpu_custom_call.1} parent=11 // pred_check
          %p1059 = pneg %p432
        $region58: #{tpu_custom_call.1} parent=11 // pred_check_branch
          %1061 = sbr.rel (%p1059) target = $region60
        $region59: #{tpu_custom_call.1} parent=11 // pred_region
          %s1063 = ssub.s32 32, 32
          %1064 = vsyncadd [#allocation18], %s1063
          %s1065 = sshll.u32 [#allocation19], 4
          %s1066 = int_to_ptr.vmem [resolvable:$true] %s1065
          %1071 = dma.hbm_to_vmem [thread:$0]  %s29, 32, %s1066, [#allocation18], 16, 16, 1
        $region60: #{tpu_custom_call.1} parent=11 // pred_fallthru
          _
        // Predicated region
        $region61: #{tpu_custom_call.1} parent=11 // pred_check
          %p1072 = pneg %p453
        $region62: #{tpu_custom_call.1} parent=11 // pred_check_branch
          %1074 = sbr.rel (%p1072) target = $region64
        $region63: #{tpu_custom_call.1} parent=11 // pred_region
          %s1076 = ssub.s32 32, 32
          %1077 = vsyncadd [#allocation21], %s1076
          %s1078 = sshll.u32 [#allocation20], 4
          %s1079 = int_to_ptr.vmem [resolvable:$true] %s1078
          %1084 = dma.hbm_to_vmem [thread:$0]  %s31, 32, %s1079, [#allocation21], 16, 16, 1
        $region64: #{tpu_custom_call.1} parent=11 // pred_fallthru
          _
        // Predicated region
        $region65: #{tpu_custom_call.1} parent=11 // pred_check
          %p1085 = pneg %p474
        $region66: #{tpu_custom_call.1} parent=11 // pred_check_branch
          %1087 = sbr.rel (%p1085) target = $region68
        $region67: #{tpu_custom_call.1} parent=11 // pred_region
          _
        $region68: #{tpu_custom_call.1} parent=11 // pred_fallthru
          _
        // Predicated region
        $region69: #{tpu_custom_call.1} parent=11 // pred_check
          %p1088 = pneg %p495
        $region70: #{tpu_custom_call.1} parent=11 // pred_check_branch
          %1090 = sbr.rel (%p1088) target = $region72
        $region71: #{tpu_custom_call.1} parent=11 // pred_region
          %s1092 = ssub.s32 32, 32
          %1093 = vsyncadd [#allocation21], %s1092
          %s1094 = sshll.u32 [#allocation22], 4
          %s1095 = int_to_ptr.vmem [resolvable:$true] %s1094
          %1100 = dma.hbm_to_vmem [thread:$0]  %s35, 32, %s1095, [#allocation21], 16, 16, 1
        $region72: #{tpu_custom_call.1} parent=11 // pred_fallthru
          _
        // Predicated region
        $region73: #{tpu_custom_call.1} parent=11 // pred_check
          %p1101 = pneg %p516
        $region74: #{tpu_custom_call.1} parent=11 // pred_check_branch
          %1103 = sbr.rel (%p1101) target = $region76
        $region75: #{tpu_custom_call.1} parent=11 // pred_region
          _
        $region76: #{tpu_custom_call.1} parent=11 // pred_fallthru
          _
        // Predicated region
        $region77: #{tpu_custom_call.1} parent=11 // pred_check
          %p1104 = pneg %p537
        $region78: #{tpu_custom_call.1} parent=11 // pred_check_branch
          %1106 = sbr.rel (%p1104) target = $region80
        $region79: #{tpu_custom_call.1} parent=11 // pred_region
          %s1108 = ssub.s32 32, 32
          %1109 = vsyncadd [#allocation24], %s1108
          %s1110 = sshll.u32 [#allocation23], 4
          %s1111 = int_to_ptr.vmem [resolvable:$true] %s1110
          %1116 = dma.hbm_to_vmem [thread:$0]  %s39, 32, %s1111, [#allocation24], 16, 16, 1
        $region80: #{tpu_custom_call.1} parent=11 // pred_fallthru
          _
        // Predicated region
        $region81: #{tpu_custom_call.1} parent=11 // pred_check
          %p1117 = pneg %p558
        $region82: #{tpu_custom_call.1} parent=11 // pred_check_branch
          %1119 = sbr.rel (%p1117) target = $region84
        $region83: #{tpu_custom_call.1} parent=11 // pred_region
          _
        $region84: #{tpu_custom_call.1} parent=11 // pred_fallthru
          _
        // Predicated region
        $region85: #{tpu_custom_call.1} parent=11 // pred_check
          %p1120 = pneg %p579
        $region86: #{tpu_custom_call.1} parent=11 // pred_check_branch
          %1122 = sbr.rel (%p1120) target = $region88
        $region87: #{tpu_custom_call.1} parent=11 // pred_region
          %s1124 = ssub.s32 32, 32
          %1125 = vsyncadd [#allocation24], %s1124
          %s1126 = sshll.u32 [#allocation25], 4
          %s1127 = int_to_ptr.vmem [resolvable:$true] %s1126
          %1132 = dma.hbm_to_vmem [thread:$0]  %s43, 32, %s1127, [#allocation24], 16, 16, 1
        $region88: #{tpu_custom_call.1} parent=11 // pred_fallthru
          _
        // Predicated region
        $region89: #{tpu_custom_call.1} parent=11 // pred_check
          %p1133 = pneg %p600
        $region90: #{tpu_custom_call.1} parent=11 // pred_check_branch
          %1135 = sbr.rel (%p1133) target = $region92
        $region91: #{tpu_custom_call.1} parent=11 // pred_region
          %s1137 = ssub.s32 512, 512
          %1138 = vsyncadd [#allocation27], %s1137
          %s1139 = sshll.u32 [#allocation26], 4
          %s1140 = int_to_ptr.vmem [resolvable:$true] %s1139
          %1145 = dma.hbm_to_vmem [thread:$0]  %s45, 512, %s1140, [#allocation27], 64, 64, 4
        $region92: #{tpu_custom_call.1} parent=11 // pred_fallthru
          _
        // Predicated region
        $region93: #{tpu_custom_call.1} parent=11 // pred_check
          %p1146 = pneg %p621
        $region94: #{tpu_custom_call.1} parent=11 // pred_check_branch
          %1148 = sbr.rel (%p1146) target = $region96
        $region95: #{tpu_custom_call.1} parent=11 // pred_region
          %s1150 = ssub.s32 32, 32
          %1151 = vsyncadd [#allocation27], %s1150
          %s1152 = sshll.u32 [#allocation28], 4
          %s1153 = int_to_ptr.vmem [resolvable:$true] %s1152
          %1158 = dma.hbm_to_vmem [thread:$0]  %s47, 32, %s1153, [#allocation27], 16, 16, 1
        $region96: #{tpu_custom_call.1} parent=11 // pred_fallthru
          _
        // Predicated region
        $region97: #{tpu_custom_call.1} parent=11 // pred_check
          %p1159 = pneg %p642
        $region98: #{tpu_custom_call.1} parent=11 // pred_check_branch
          %1161 = sbr.rel (%p1159) target = $region100
        $region99: #{tpu_custom_call.1} parent=11 // pred_region
          %s1163 = ssub.s32 512, 512
          %1164 = vsyncadd [#allocation30], %s1163
          %s1165 = sshll.u32 [#allocation29], 4
          %s1166 = int_to_ptr.vmem [resolvable:$true] %s1165
          %1171 = dma.hbm_to_vmem [thread:$0]  %s49, 512, %s1166, [#allocation30], 64, 64, 4
        $region100: #{tpu_custom_call.1} parent=11 // pred_fallthru
          _
        // Predicated region
        $region101: #{tpu_custom_call.1} parent=11 // pred_check
          %p1172 = pneg %p663
        $region102: #{tpu_custom_call.1} parent=11 // pred_check_branch
          %1174 = sbr.rel (%p1172) target = $region104
        $region103: #{tpu_custom_call.1} parent=11 // pred_region
          %s1176 = ssub.s32 32, 32
          %1177 = vsyncadd [#allocation30], %s1176
          %s1178 = sshll.u32 [#allocation31], 4
          %s1179 = int_to_ptr.vmem [resolvable:$true] %s1178
          %1184 = dma.hbm_to_vmem [thread:$0]  %s51, 32, %s1179, [#allocation30], 16, 16, 1
        $region104: #{tpu_custom_call.1} parent=11 // pred_fallthru
          _
        // Predicated region
        $region105: #{tpu_custom_call.1} parent=11 // pred_check
          %p1185 = pneg %p684
        $region106: #{tpu_custom_call.1} parent=11 // pred_check_branch
          %1187 = sbr.rel (%p1185) target = $region108
        $region107: #{tpu_custom_call.1} parent=11 // pred_region
          _
        $region108: #{tpu_custom_call.1} parent=11 // pred_fallthru
          _
        // Predicated region
        $region109: #{tpu_custom_call.1} parent=11 // pred_check
          %p1188 = pneg %p705
        $region110: #{tpu_custom_call.1} parent=11 // pred_check_branch
          %1190 = sbr.rel (%p1188) target = $region112
        $region111: #{tpu_custom_call.1} parent=11 // pred_region
          %s1192 = ssub.s32 32, 32
          %1193 = vsyncadd [#allocation33], %s1192
          %s1194 = sshll.u32 [#allocation32], 4
          %s1195 = int_to_ptr.vmem [resolvable:$true] %s1194
          %1200 = dma.hbm_to_vmem [thread:$0]  %s55, 32, %s1195, [#allocation33], 16, 16, 1
        $region112: #{tpu_custom_call.1} parent=11 // pred_fallthru
          _
        // Predicated region
        $region113: #{tpu_custom_call.1} parent=11 // pred_check
          %p1201 = pneg %p726
        $region114: #{tpu_custom_call.1} parent=11 // pred_check_branch
          %1203 = sbr.rel (%p1201) target = $region116
        $region115: #{tpu_custom_call.1} parent=11 // pred_region
          _
        $region116: #{tpu_custom_call.1} parent=11 // pred_fallthru
          _
        // Predicated region
        $region117: #{tpu_custom_call.1} parent=11 // pred_check
          %p1204 = pneg %p747
        $region118: #{tpu_custom_call.1} parent=11 // pred_check_branch
          %1206 = sbr.rel (%p1204) target = $region120
        $region119: #{tpu_custom_call.1} parent=11 // pred_region
          %s1208 = ssub.s32 32, 32
          %1209 = vsyncadd [#allocation33], %s1208
          %s1210 = sshll.u32 [#allocation34], 4
          %s1211 = int_to_ptr.vmem [resolvable:$true] %s1210
          %1216 = dma.hbm_to_vmem [thread:$0]  %s59, 32, %s1211, [#allocation33], 16, 16, 1
        $region120: #{tpu_custom_call.1} parent=11 // pred_fallthru
          _
        // Predicated region
        $region121: #{tpu_custom_call.1} parent=11 // pred_check
          %p1217 = pneg %p768
        $region122: #{tpu_custom_call.1} parent=11 // pred_check_branch
          %1219 = sbr.rel (%p1217) target = $region124
        $region123: #{tpu_custom_call.1} parent=11 // pred_region
          %s1221 = ssub.s32 32, 32
          %1222 = vsyncadd [#allocation36], %s1221
          %s1223 = sshll.u32 [#allocation35], 4
          %s1224 = int_to_ptr.vmem [resolvable:$true] %s1223
          %1229 = dma.hbm_to_vmem [thread:$0]  %s61, 32, %s1224, [#allocation36], 16, 16, 1
        $region124: #{tpu_custom_call.1} parent=11 // pred_fallthru
          _
        // Predicated region
        $region125: #{tpu_custom_call.1} parent=11 // pred_check
          %p1230 = pneg %p789
        $region126: #{tpu_custom_call.1} parent=11 // pred_check_branch
          %1232 = sbr.rel (%p1230) target = $region128
        $region127: #{tpu_custom_call.1} parent=11 // pred_region
          _
        $region128: #{tpu_custom_call.1} parent=11 // pred_fallthru
          _
        // Predicated region
        $region129: #{tpu_custom_call.1} parent=11 // pred_check
          %p1233 = pneg %p810
        $region130: #{tpu_custom_call.1} parent=11 // pred_check_branch
          %1235 = sbr.rel (%p1233) target = $region132
        $region131: #{tpu_custom_call.1} parent=11 // pred_region
          _
        $region132: #{tpu_custom_call.1} parent=11 // pred_fallthru
          _
        // Predicated region
        $region133: #{tpu_custom_call.1} parent=11 // pred_check
          %p1236 = pneg %p831
        $region134: #{tpu_custom_call.1} parent=11 // pred_check_branch
          %1238 = sbr.rel (%p1236) target = $region136
        $region135: #{tpu_custom_call.1} parent=11 // pred_region
          _
        $region136: #{tpu_custom_call.1} parent=11 // pred_fallthru
          _
        // Predicated region
        $region137: #{tpu_custom_call.1} parent=11 // pred_check
          %p1239 = pneg %p852
        $region138: #{tpu_custom_call.1} parent=11 // pred_check_branch
          %1241 = sbr.rel (%p1239) target = $region140
        $region139: #{tpu_custom_call.1} parent=11 // pred_region
          _
        $region140: #{tpu_custom_call.1} parent=11 // pred_fallthru
          _
        // Predicated region
        $region141: #{tpu_custom_call.1} parent=11 // pred_check
          %p1242 = pneg %p873
        $region142: #{tpu_custom_call.1} parent=11 // pred_check_branch
          %1244 = sbr.rel (%p1242) target = $region144
        $region143: #{tpu_custom_call.1} parent=11 // pred_region
          _
        $region144: #{tpu_custom_call.1} parent=11 // pred_fallthru
          _
        // Predicated region
        $region145: #{tpu_custom_call.1} parent=11 // pred_check
          %p1245 = pneg %p894
        $region146: #{tpu_custom_call.1} parent=11 // pred_check_branch
          %1247 = sbr.rel (%p1245) target = $region148
        $region147: #{tpu_custom_call.1} parent=11 // pred_region
          _
        $region148: #{tpu_custom_call.1} parent=11 // pred_fallthru
          _
        // Predicated region
        $region149: #{tpu_custom_call.1} parent=11 // pred_check
          %p1248 = pneg %p915
        $region150: #{tpu_custom_call.1} parent=11 // pred_check_branch
          %1250 = sbr.rel (%p1248) target = $region152
        $region151: #{tpu_custom_call.1} parent=11 // pred_region
          _
        $region152: #{tpu_custom_call.1} parent=11 // pred_fallthru
          _
      $region12: #{tpu_custom_call.1} parent=5 // pred_fallthru
        _
      %p1251 = scmp.lt.s32.totalorder %s102, 2
      // Predicated region
      $region153: #{tpu_custom_call.1} parent=5 // pred_check
        %p1252 = pneg %p1251
      $region154: #{tpu_custom_call.1} parent=5 // pred_check_branch
        %1254 = sbr.rel (%p1252) target = $region156
      $region155: #{tpu_custom_call.1} parent=5 // pred_region
        // Predicated region
        $region157: #{tpu_custom_call.1} parent=155 // pred_check
          %p1255 = pneg %p122
        $region158: #{tpu_custom_call.1} parent=155 // pred_check_branch
          %1257 = sbr.rel (%p1255) target = $region160
        $region159: #{tpu_custom_call.1} parent=155 // pred_region
          %s1258 = sand.u32 %s112, 1
          %s1259 = scalar_lea.sflag [#allocation3], %s1258
          %s1260 = sand.u32 %s112, 1
          %s1261 = smul.addr %s1260, 8
          %s1262 = scalar_lea.vmem [#allocation2], %s1261
          %s1264 = ssub.s32 128, 128
          %1265 = vsyncadd %s1259, %s1264
          %s1266 = smul.addr %s102, 128
          %s1267 = scalar_lea.hbm %s1, %s1266
          %s1269 = sshll.u32 %s1262, 4
          %s1270 = int_to_ptr.vmem [resolvable:$true] %s1269
          %1272 = dma.hbm_to_vmem [thread:$0]  %s1267, 128, %s1270, %s1259
        $region160: #{tpu_custom_call.1} parent=155 // pred_fallthru
          _
        // Predicated region
        $region161: #{tpu_custom_call.1} parent=155 // pred_check
          %p1273 = pneg %p148
        $region162: #{tpu_custom_call.1} parent=155 // pred_check_branch
          %1275 = sbr.rel (%p1273) target = $region164
        $region163: #{tpu_custom_call.1} parent=155 // pred_region
          %s1276 = sand.u32 %s102, 1
          %s1277 = scalar_lea.sflag [#allocation6], %s1276
          %s1278 = sand.u32 %s138, 1
          %s1279 = smul.addr %s1278, 8
          %s1280 = scalar_lea.vmem [#allocation5], %s1279
          %s1282 = ssub.s32 128, 128
          %1283 = vsyncadd %s1277, %s1282
          %s1284 = smul.addr %s102, 128
          %s1285 = scalar_lea.hbm %s3, %s1284
          %s1287 = sshll.u32 %s1280, 4
          %s1288 = int_to_ptr.vmem [resolvable:$true] %s1287
          %1290 = dma.hbm_to_vmem [thread:$0]  %s1285, 128, %s1288, %s1277
        $region164: #{tpu_custom_call.1} parent=155 // pred_fallthru
          _
        // Predicated region
        $region165: #{tpu_custom_call.1} parent=155 // pred_check
          %p1291 = pneg %p174
        $region166: #{tpu_custom_call.1} parent=155 // pred_check_branch
          %1293 = sbr.rel (%p1291) target = $region168
        $region167: #{tpu_custom_call.1} parent=155 // pred_region
          %s1294 = sand.u32 %s102, 1
          %s1295 = scalar_lea.sflag [#allocation6], %s1294
          %s1296 = sand.u32 %s164, 1
          %s1297 = scalar_lea.vmem [#allocation7], %s1296
          %s1299 = ssub.s32 16, 16
          %1300 = vsyncadd %s1295, %s1299
          %s1301 = smul.addr %s102, 16
          %s1302 = scalar_lea.hbm %s5, %s1301
          %s1304 = sshll.u32 %s1297, 4
          %s1305 = int_to_ptr.vmem [resolvable:$true] %s1304
          %1307 = dma.hbm_to_vmem [thread:$0]  %s1302, 16, %s1305, %s1295
        $region168: #{tpu_custom_call.1} parent=155 // pred_fallthru
          _
      $region156: #{tpu_custom_call.1} parent=5 // pred_fallthru
        _
      %p1308 = scmp.le.s32.totalorder 1, %s102
      %p1309 = scmp.lt.s32.totalorder %s102, 3
      %p1310 = pnand %p1308, %p1309
      %p1311 = pneg %p1310
      // Predicated region
      $region169: #{tpu_custom_call.1} parent=5 // pred_check
        _
      $region170: #{tpu_custom_call.1} parent=5 // pred_check_branch
        %1313 = sbr.rel (%p1310) target = $region172
      $region171: #{tpu_custom_call.1} parent=5 // pred_region
        %s1314 = ssub.s32 %s102, 1
        %s1315 = sand.u32 %s115, 1
        %s1316 = scalar_lea.sflag [#allocation3], %s1315
        %s1317 = sand.u32 %s115, 1
        %s1318 = smul.addr %s1317, 8
        %s1319 = scalar_lea.vmem [#allocation2], %s1318
        // Predicated region
        $region173: #{tpu_custom_call.1} parent=171 // pred_check
          %p1320 = pneg %p128
        $region174: #{tpu_custom_call.1} parent=171 // pred_check_branch
          %1322 = sbr.rel (%p1320) target = $region176
        $region175: #{tpu_custom_call.1} parent=171 // pred_region
          %1323 = dma.done %s1316, 128
        $region176: #{tpu_custom_call.1} parent=171 // pred_fallthru
          _
        %s1324 = sand.u32 %s107, 1
        %s1325 = scalar_lea.sflag [#allocation6], %s1324
        %s1326 = sand.u32 %s141, 1
        %s1327 = smul.addr %s1326, 8
        %s1328 = scalar_lea.vmem [#allocation5], %s1327
        // Predicated region
        $region177: #{tpu_custom_call.1} parent=171 // pred_check
          %p1329 = pneg %p154
        $region178: #{tpu_custom_call.1} parent=171 // pred_check_branch
          %1331 = sbr.rel (%p1329) target = $region180
        $region179: #{tpu_custom_call.1} parent=171 // pred_region
          %1332 = dma.done %s1325, 128
        $region180: #{tpu_custom_call.1} parent=171 // pred_fallthru
          _
        %s1333 = sand.u32 %s107, 1
        %s1334 = scalar_lea.sflag [#allocation6], %s1333
        %s1335 = sand.u32 %s167, 1
        %s1336 = scalar_lea.vmem [#allocation7], %s1335
        // Predicated region
        $region181: #{tpu_custom_call.1} parent=171 // pred_check
          %p1337 = pneg %p180
        $region182: #{tpu_custom_call.1} parent=171 // pred_check_branch
          %1339 = sbr.rel (%p1337) target = $region184
        $region183: #{tpu_custom_call.1} parent=171 // pred_region
          %1340 = dma.done %s1334, 16
        $region184: #{tpu_custom_call.1} parent=171 // pred_fallthru
          _
        // Predicated region
        $region185: #{tpu_custom_call.1} parent=171 // pred_check
          %p1341 = pneg %p201
        $region186: #{tpu_custom_call.1} parent=171 // pred_check_branch
          %1343 = sbr.rel (%p1341) target = $region188
        $region187: #{tpu_custom_call.1} parent=171 // pred_region
          %1344 = dma.done [#allocation9], 256
        $region188: #{tpu_custom_call.1} parent=171 // pred_fallthru
          _
        // Predicated region
        $region189: #{tpu_custom_call.1} parent=171 // pred_check
          %p1345 = pneg %p243
        $region190: #{tpu_custom_call.1} parent=171 // pred_check_branch
          %1347 = sbr.rel (%p1345) target = $region192
        $region191: #{tpu_custom_call.1} parent=171 // pred_region
          %1348 = dma.done [#allocation9], 32
        $region192: #{tpu_custom_call.1} parent=171 // pred_fallthru
          _
        // Predicated region
        $region193: #{tpu_custom_call.1} parent=171 // pred_check
          %p1349 = pneg %p285
        $region194: #{tpu_custom_call.1} parent=171 // pred_check_branch
          %1351 = sbr.rel (%p1349) target = $region196
        $region195: #{tpu_custom_call.1} parent=171 // pred_region
          %1352 = dma.done [#allocation12], 32
        $region196: #{tpu_custom_call.1} parent=171 // pred_fallthru
          _
        // Predicated region
        $region197: #{tpu_custom_call.1} parent=171 // pred_check
          %p1353 = pneg %p327
        $region198: #{tpu_custom_call.1} parent=171 // pred_check_branch
          %1355 = sbr.rel (%p1353) target = $region200
        $region199: #{tpu_custom_call.1} parent=171 // pred_region
          %1356 = dma.done [#allocation12], 32
        $region200: #{tpu_custom_call.1} parent=171 // pred_fallthru
          _
        // Predicated region
        $region201: #{tpu_custom_call.1} parent=171 // pred_check
          %p1357 = pneg %p369
        $region202: #{tpu_custom_call.1} parent=171 // pred_check_branch
          %1359 = sbr.rel (%p1357) target = $region204
        $region203: #{tpu_custom_call.1} parent=171 // pred_region
          %1360 = dma.done [#allocation15], 32
        $region204: #{tpu_custom_call.1} parent=171 // pred_fallthru
          _
        // Predicated region
        $region205: #{tpu_custom_call.1} parent=171 // pred_check
          %p1361 = pneg %p390
        $region206: #{tpu_custom_call.1} parent=171 // pred_check_branch
          %1363 = sbr.rel (%p1361) target = $region208
        $region207: #{tpu_custom_call.1} parent=171 // pred_region
          %1364 = dma.done [#allocation15], 32
        $region208: #{tpu_custom_call.1} parent=171 // pred_fallthru
          _
        // Predicated region
        $region209: #{tpu_custom_call.1} parent=171 // pred_check
          %p1365 = pneg %p411
        $region210: #{tpu_custom_call.1} parent=171 // pred_check_branch
          %1367 = sbr.rel (%p1365) target = $region212
        $region211: #{tpu_custom_call.1} parent=171 // pred_region
          %1368 = dma.done [#allocation18], 32
        $region212: #{tpu_custom_call.1} parent=171 // pred_fallthru
          _
        // Predicated region
        $region213: #{tpu_custom_call.1} parent=171 // pred_check
          %p1369 = pneg %p432
        $region214: #{tpu_custom_call.1} parent=171 // pred_check_branch
          %1371 = sbr.rel (%p1369) target = $region216
        $region215: #{tpu_custom_call.1} parent=171 // pred_region
          %1372 = dma.done [#allocation18], 32
        $region216: #{tpu_custom_call.1} parent=171 // pred_fallthru
          _
        // Predicated region
        $region217: #{tpu_custom_call.1} parent=171 // pred_check
          %p1373 = pneg %p453
        $region218: #{tpu_custom_call.1} parent=171 // pred_check_branch
          %1375 = sbr.rel (%p1373) target = $region220
        $region219: #{tpu_custom_call.1} parent=171 // pred_region
          %1376 = dma.done [#allocation21], 32
        $region220: #{tpu_custom_call.1} parent=171 // pred_fallthru
          _
        // Predicated region
        $region221: #{tpu_custom_call.1} parent=171 // pred_check
          %p1377 = pneg %p495
        $region222: #{tpu_custom_call.1} parent=171 // pred_check_branch
          %1379 = sbr.rel (%p1377) target = $region224
        $region223: #{tpu_custom_call.1} parent=171 // pred_region
          %1380 = dma.done [#allocation21], 32
        $region224: #{tpu_custom_call.1} parent=171 // pred_fallthru
          _
        // Predicated region
        $region225: #{tpu_custom_call.1} parent=171 // pred_check
          %p1381 = pneg %p537
        $region226: #{tpu_custom_call.1} parent=171 // pred_check_branch
          %1383 = sbr.rel (%p1381) target = $region228
        $region227: #{tpu_custom_call.1} parent=171 // pred_region
          %1384 = dma.done [#allocation24], 32
        $region228: #{tpu_custom_call.1} parent=171 // pred_fallthru
          _
        // Predicated region
        $region229: #{tpu_custom_call.1} parent=171 // pred_check
          %p1385 = pneg %p579
        $region230: #{tpu_custom_call.1} parent=171 // pred_check_branch
          %1387 = sbr.rel (%p1385) target = $region232
        $region231: #{tpu_custom_call.1} parent=171 // pred_region
          %1388 = dma.done [#allocation24], 32
        $region232: #{tpu_custom_call.1} parent=171 // pred_fallthru
          _
        // Predicated region
        $region233: #{tpu_custom_call.1} parent=171 // pred_check
          %p1389 = pneg %p600
        $region234: #{tpu_custom_call.1} parent=171 // pred_check_branch
          %1391 = sbr.rel (%p1389) target = $region236
        $region235: #{tpu_custom_call.1} parent=171 // pred_region
          %1392 = dma.done [#allocation27], 512
        $region236: #{tpu_custom_call.1} parent=171 // pred_fallthru
          _
        // Predicated region
        $region237: #{tpu_custom_call.1} parent=171 // pred_check
          %p1393 = pneg %p621
        $region238: #{tpu_custom_call.1} parent=171 // pred_check_branch
          %1395 = sbr.rel (%p1393) target = $region240
        $region239: #{tpu_custom_call.1} parent=171 // pred_region
          %1396 = dma.done [#allocation27], 32
        $region240: #{tpu_custom_call.1} parent=171 // pred_fallthru
          _
        // Predicated region
        $region241: #{tpu_custom_call.1} parent=171 // pred_check
          %p1397 = pneg %p642
        $region242: #{tpu_custom_call.1} parent=171 // pred_check_branch
          %1399 = sbr.rel (%p1397) target = $region244
        $region243: #{tpu_custom_call.1} parent=171 // pred_region
          %1400 = dma.done [#allocation30], 512
        $region244: #{tpu_custom_call.1} parent=171 // pred_fallthru
          _
        // Predicated region
        $region245: #{tpu_custom_call.1} parent=171 // pred_check
          %p1401 = pneg %p663
        $region246: #{tpu_custom_call.1} parent=171 // pred_check_branch
          %1403 = sbr.rel (%p1401) target = $region248
        $region247: #{tpu_custom_call.1} parent=171 // pred_region
          %1404 = dma.done [#allocation30], 32
        $region248: #{tpu_custom_call.1} parent=171 // pred_fallthru
          _
        // Predicated region
        $region249: #{tpu_custom_call.1} parent=171 // pred_check
          %p1405 = pneg %p705
        $region250: #{tpu_custom_call.1} parent=171 // pred_check_branch
          %1407 = sbr.rel (%p1405) target = $region252
        $region251: #{tpu_custom_call.1} parent=171 // pred_region
          %1408 = dma.done [#allocation33], 32
        $region252: #{tpu_custom_call.1} parent=171 // pred_fallthru
          _
        // Predicated region
        $region253: #{tpu_custom_call.1} parent=171 // pred_check
          %p1409 = pneg %p747
        $region254: #{tpu_custom_call.1} parent=171 // pred_check_branch
          %1411 = sbr.rel (%p1409) target = $region256
        $region255: #{tpu_custom_call.1} parent=171 // pred_region
          %1412 = dma.done [#allocation33], 32
        $region256: #{tpu_custom_call.1} parent=171 // pred_fallthru
          _
        // Predicated region
        $region257: #{tpu_custom_call.1} parent=171 // pred_check
          %p1413 = pneg %p768
        $region258: #{tpu_custom_call.1} parent=171 // pred_check_branch
          %1415 = sbr.rel (%p1413) target = $region260
        $region259: #{tpu_custom_call.1} parent=171 // pred_region
          %1416 = dma.done [#allocation36], 32
        $region260: #{tpu_custom_call.1} parent=171 // pred_fallthru
          _
        %s1417 = sand.u32 %s115, 1
        %s1418 = scalar_lea.sflag [#allocation3], %s1417
        %s1419 = sand.u32 %s115, 1
        %s1420 = smul.addr %s1419, 8
        %s1421 = scalar_lea.vmem [#allocation2], %s1420
        %p1422 = pneg %p128
        %p1423 = pneg %p125
        %s1424 = sand.u32 %s107, 1
        %s1425 = scalar_lea.sflag [#allocation6], %s1424
        %s1426 = sand.u32 %s141, 1
        %s1427 = smul.addr %s1426, 8
        %s1428 = scalar_lea.vmem [#allocation5], %s1427
        %p1429 = pneg %p154
        %p1430 = pneg %p151
        %s1431 = sand.u32 %s107, 1
        %s1432 = scalar_lea.sflag [#allocation6], %s1431
        %s1433 = sand.u32 %s167, 1
        %s1434 = scalar_lea.vmem [#allocation7], %s1433
        %p1435 = pneg %p180
        %p1436 = pneg %p177
        %p1437 = pneg %p201
        %p1438 = pneg %p198
        %p1439 = pneg %p222
        %p1440 = pneg %p219
        %p1441 = pneg %p243
        %p1442 = pneg %p240
        %p1443 = pneg %p264
        %p1444 = pneg %p261
        %p1445 = pneg %p285
        %p1446 = pneg %p282
        %p1447 = pneg %p306
        %p1448 = pneg %p303
        %p1449 = pneg %p327
        %p1450 = pneg %p324
        %p1451 = pneg %p348
        %p1452 = pneg %p345
        %p1453 = pneg %p369
        %p1454 = pneg %p366
        %p1455 = pneg %p390
        %p1456 = pneg %p387
        %p1457 = pneg %p411
        %p1458 = pneg %p408
        %p1459 = pneg %p432
        %p1460 = pneg %p429
        %p1461 = pneg %p453
        %p1462 = pneg %p450
        %p1463 = pneg %p474
        %p1464 = pneg %p471
        %p1465 = pneg %p495
        %p1466 = pneg %p492
        %p1467 = pneg %p516
        %p1468 = pneg %p513
        %p1469 = pneg %p537
        %p1470 = pneg %p534
        %p1471 = pneg %p558
        %p1472 = pneg %p555
        %p1473 = pneg %p579
        %p1474 = pneg %p576
        %p1475 = pneg %p600
        %p1476 = pneg %p597
        %p1477 = pneg %p621
        %p1478 = pneg %p618
        %p1479 = pneg %p642
        %p1480 = pneg %p639
        %p1481 = pneg %p663
        %p1482 = pneg %p660
        %p1483 = pneg %p684
        %p1484 = pneg %p681
        %p1485 = pneg %p705
        %p1486 = pneg %p702
        %p1487 = pneg %p726
        %p1488 = pneg %p723
        %p1489 = pneg %p747
        %p1490 = pneg %p744
        %p1491 = pneg %p768
        %p1492 = pneg %p765
        %p1493 = pneg %p789
        %p1494 = pneg %p786
        %p1495 = pneg %p810
        %p1496 = pneg %p807
        %p1497 = pneg %p831
        %p1498 = pneg %p828
        %p1499 = pneg %p852
        %p1500 = pneg %p849
        %p1501 = pneg %p873
        %p1502 = pneg %p870
        %p1503 = pneg %p894
        %p1504 = pneg %p891
        %p1505 = pneg %p915
        %p1506 = pneg %p912
        %p1507 = pneg %p941
        %p1508 = pneg %p938
        %s1509 = sand.u32 %s928, 1
        %s1510 = scalar_lea.sflag [#allocation4], %s1509
        %s1511 = sand.u32 %s928, 1
        %s1512 = smul.addr %s1511, 8
        %s1513 = scalar_lea.vmem [#allocation37], %s1512
        %v1515 = vld [vmem:[#allocation8] sm:$0xff]
        %v1516 = vld [vmem:[%s1336] sm:$0x1]
        %v1517 = vsub.f32 %v1516, 1.0
        %v1518 = vmul.f32 %v1517, 1e+09
        %v1519 = vlaneseq
        %v1520 = vshrl.u32 %v1519, 7
        %v1521 = vlaneseq
        %v1522 = vand.u32 %v1521, 127
        %vm1523 = vcmp.ge.s32.totalorder %v1520, %v1522
        %v1524 = vsel %vm1523, 0.0, -1e+09
        %v1525 = vld [vmem:[%s1319] sm:$0xff]
        %v1526 = vadd.f32 %v1525, %v1515
        %v1527 = vld [vmem:[%s9] sm:$0xf]
        %v1528 = vld [vmem:[%s9 + $0x4] sm:$0xf]
        %v1529 = vld [vmem:[%s9 + $0x8] sm:$0xf]
        %v1530 = vld [vmem:[%s9 + $0xc] sm:$0xf]
        %v1531 = vld [vmem:[#allocation10] sm:$0x1]
        %v1532 = vld [vmem:[%s13] sm:$0xf]
        %v1533 = vld [vmem:[%s13 + $0x4] sm:$0xf]
        %v1534 = vld [vmem:[%s13 + $0x8] sm:$0xf]
        %v1535 = vld [vmem:[%s13 + $0xc] sm:$0xf]
        %v1536 = vld [vmem:[#allocation11] sm:$0x1]
        %v1537 = vpack.c.bf16 %v1526, %v1526
        %v1539 = vlaneseq
        %v1540 = vshrl.u32 %v1539, 7
        %v1541 = vsub.s32 0, %v1540
        %v1542 = vrot.slane %v1531, %v1541
        %v1548 = vunpack.c.l.b16 %v1527
        %v1549 = vunpack.c.l.b16 %v1528
        %v1550 = vunpack.c.l.b16 %v1529
        %v1551 = vunpack.c.l.b16 %v1530
        %v1552 = vpack.c.b16 %v1549, %v1548
        %v1553 = vpack.c.b16 %v1551, %v1550
        %vm1556 = vcmask 261120
        %v1558 = vsel %vm1556, %v1537, 0
        %1560 = vmatprep.subr.bf16.mxu0 0
        %1561 = vmatpush1.bf16.msra.mxu0 %v1552
        %1562 = vmatprep.subr.bf16.mxu0 0
        %1563 = vmatpush1.bf16.msra.mxu0 %v1553
        %1564 = vmatprep.subr.bf16.mxu0 0
        %1565 = vmatpush1.bf16.msra.mxu0 0
        %1566 = vmatprep.subr.bf16.mxu0 0
        %1567 = vmatpush1.bf16.msra.mxu0 0
        %1568 = vmatprep.subr.bf16.mxu0 0
        %1569 = vmatpush1.bf16.msra.mxu0 0
        %1570 = vmatprep.subr.bf16.mxu0 0
        %1571 = vmatpush1.bf16.msra.mxu0 0
        %1572 = vmatprep.subr.bf16.mxu0 0
        %1573 = vmatpush1.bf16.msra.mxu0 0
        %1574 = vmatprep.subr.bf16.mxu0 0
        %1575 = vmatpush1.bf16.msra.mxu0 0
        %1576 = vmatprep.subr.bf16.mxu0 0
        %1577 = vmatpush1.bf16.msra.mxu0 0
        %1578 = vmatprep.subr.bf16.mxu0 0
        %1579 = vmatpush1.bf16.msra.mxu0 0
        %1580 = vmatprep.subr.bf16.mxu0 0
        %1581 = vmatpush1.bf16.msra.mxu0 0
        %1582 = vmatprep.subr.bf16.mxu0 0
        %1583 = vmatpush1.bf16.msra.mxu0 0
        %1584 = vmatprep.subr.bf16.mxu0 0
        %1585 = vmatpush1.bf16.msra.mxu0 0
        %1586 = vmatprep.subr.bf16.mxu0 0
        %1587 = vmatpush1.bf16.msra.mxu0 0
        %1588 = vmatprep.subr.bf16.mxu0 0
        %1589 = vmatpush1.bf16.msra.mxu0 0
        %1590 = vmatprep.subr.bf16.mxu0 0
        %1591 = vmatpush1.bf16.msra.mxu0 0
        %1592 = vmatprep.mubr.bf16.mxu0 0
        %1593 = vmatmul.mubr.bf16.gmra.mrb[0].mxu0 %v1558
        %v1594 = vpop.f32.mrb[0].mxu0
        %v1595 = vadd.f32 %v1542, %v1594
        %v1596 = vpop.f32.mrb[0].mxu0
        %v1597 = vpop.f32.mrb[0].mxu0
        %v1598 = vpop.f32.mrb[0].mxu0
        %1599 = vdwg.mxu0
        %1600 = vxpose.xlu0.b32.start [1/16] %v1595, 128
        %1601 = vxpose.xlu0.b32.cont [2/16] 0.0, 128
        %1602 = vxpose.xlu0.b32.cont [3/16] 0.0, 128
        %1603 = vxpose.xlu0.b32.cont [4/16] 0.0, 128
        %1604 = vxpose.xlu0.b32.cont [5/16] 0.0, 128
        %1605 = vxpose.xlu0.b32.cont [6/16] 0.0, 128
        %1606 = vxpose.xlu0.b32.cont [7/16] 0.0, 128
        %1607 = vxpose.xlu0.b32.cont [8/16] 0.0, 128
        %1608 = vxpose.xlu0.b32.cont [9/16] 0.0, 128
        %1609 = vxpose.xlu0.b32.cont [10/16] 0.0, 128
        %1610 = vxpose.xlu0.b32.cont [11/16] 0.0, 128
        %1611 = vxpose.xlu0.b32.cont [12/16] 0.0, 128
        %1612 = vxpose.xlu0.b32.cont [13/16] 0.0, 128
        %1613 = vxpose.xlu0.b32.cont [14/16] 0.0, 128
        %1614 = vxpose.xlu0.b32.cont [15/16] 0.0, 128
        %1615 = vxpose.xlu0.b32.end [16/16] 0.0, 128
        %v1616 = vpop.trf.xlu0
        %v1617 = vpop.trf.xlu0
        %v1618 = vpop.trf.xlu0
        %v1619 = vpop.trf.xlu0
        %v1620 = vpop.trf.xlu0
        %v1621 = vpop.trf.xlu0
        %v1622 = vpop.trf.xlu0
        %v1623 = vpop.trf.xlu0
        %v1624 = vpop.trf.xlu0
        %v1625 = vpop.trf.xlu0
        %v1626 = vpop.trf.xlu0
        %v1627 = vpop.trf.xlu0
        %v1628 = vpop.trf.xlu0
        %v1629 = vpop.trf.xlu0
        %v1630 = vpop.trf.xlu0
        %v1631 = vpop.trf.xlu0
        %1632 = vxpose.xlu0.b32.start [1/16] %v1616, 128
        %1633 = vxpose.xlu0.b32.cont [2/16] 0.0, 128
        %1634 = vxpose.xlu0.b32.cont [3/16] 0.0, 128
        %1635 = vxpose.xlu0.b32.cont [4/16] 0.0, 128
        %1636 = vxpose.xlu0.b32.cont [5/16] 0.0, 128
        %1637 = vxpose.xlu0.b32.cont [6/16] 0.0, 128
        %1638 = vxpose.xlu0.b32.cont [7/16] 0.0, 128
        %1639 = vxpose.xlu0.b32.cont [8/16] 0.0, 128
        %1640 = vxpose.xlu0.b32.cont [9/16] 0.0, 128
        %1641 = vxpose.xlu0.b32.cont [10/16] 0.0, 128
        %1642 = vxpose.xlu0.b32.cont [11/16] 0.0, 128
        %1643 = vxpose.xlu0.b32.cont [12/16] 0.0, 128
        %1644 = vxpose.xlu0.b32.cont [13/16] 0.0, 128
        %1645 = vxpose.xlu0.b32.cont [14/16] 0.0, 128
        %1646 = vxpose.xlu0.b32.cont [15/16] 0.0, 128
        %1647 = vxpose.xlu0.b32.end [16/16] 0.0, 128
        %v1648 = vpop.trf.xlu0
        %v1649 = vpop.trf.xlu0
        %v1650 = vpop.trf.xlu0
        %v1651 = vpop.trf.xlu0
        %v1652 = vpop.trf.xlu0
        %v1653 = vpop.trf.xlu0
        %v1654 = vpop.trf.xlu0
        %v1655 = vpop.trf.xlu0
        %v1656 = vpop.trf.xlu0
        %v1657 = vpop.trf.xlu0
        %v1658 = vpop.trf.xlu0
        %v1659 = vpop.trf.xlu0
        %v1660 = vpop.trf.xlu0
        %v1661 = vpop.trf.xlu0
        %v1662 = vpop.trf.xlu0
        %v1663 = vpop.trf.xlu0
        %1664 = vxpose.xlu0.b32.start [1/16] %v1617, 128
        %1665 = vxpose.xlu0.b32.cont [2/16] 0.0, 128
        %1666 = vxpose.xlu0.b32.cont [3/16] 0.0, 128
        %1667 = vxpose.xlu0.b32.cont [4/16] 0.0, 128
        %1668 = vxpose.xlu0.b32.cont [5/16] 0.0, 128
        %1669 = vxpose.xlu0.b32.cont [6/16] 0.0, 128
        %1670 = vxpose.xlu0.b32.cont [7/16] 0.0, 128
        %1671 = vxpose.xlu0.b32.cont [8/16] 0.0, 128
        %1672 = vxpose.xlu0.b32.cont [9/16] 0.0, 128
        %1673 = vxpose.xlu0.b32.cont [10/16] 0.0, 128
        %1674 = vxpose.xlu0.b32.cont [11/16] 0.0, 128
        %1675 = vxpose.xlu0.b32.cont [12/16] 0.0, 128
        %1676 = vxpose.xlu0.b32.cont [13/16] 0.0, 128
        %1677 = vxpose.xlu0.b32.cont [14/16] 0.0, 128
        %1678 = vxpose.xlu0.b32.cont [15/16] 0.0, 128
        %1679 = vxpose.xlu0.b32.end [16/16] 0.0, 128
        %v1680 = vpop.trf.xlu0
        %v1681 = vpop.trf.xlu0
        %v1682 = vpop.trf.xlu0
        %v1683 = vpop.trf.xlu0
        %v1684 = vpop.trf.xlu0
        %v1685 = vpop.trf.xlu0
        %v1686 = vpop.trf.xlu0
        %v1687 = vpop.trf.xlu0
        %v1688 = vpop.trf.xlu0
        %v1689 = vpop.trf.xlu0
        %v1690 = vpop.trf.xlu0
        %v1691 = vpop.trf.xlu0
        %v1692 = vpop.trf.xlu0
        %v1693 = vpop.trf.xlu0
        %v1694 = vpop.trf.xlu0
        %v1695 = vpop.trf.xlu0
        %1696 = vxpose.xlu0.b32.start [1/16] %v1618, 128
        %1697 = vxpose.xlu0.b32.cont [2/16] 0.0, 128
        %1698 = vxpose.xlu0.b32.cont [3/16] 0.0, 128
        %1699 = vxpose.xlu0.b32.cont [4/16] 0.0, 128
        %1700 = vxpose.xlu0.b32.cont [5/16] 0.0, 128
        %1701 = vxpose.xlu0.b32.cont [6/16] 0.0, 128
        %1702 = vxpose.xlu0.b32.cont [7/16] 0.0, 128
        %1703 = vxpose.xlu0.b32.cont [8/16] 0.0, 128
        %1704 = vxpose.xlu0.b32.cont [9/16] 0.0, 128
        %1705 = vxpose.xlu0.b32.cont [10/16] 0.0, 128
        %1706 = vxpose.xlu0.b32.cont [11/16] 0.0, 128
        %1707 = vxpose.xlu0.b32.cont [12/16] 0.0, 128
        %1708 = vxpose.xlu0.b32.cont [13/16] 0.0, 128
        %1709 = vxpose.xlu0.b32.cont [14/16] 0.0, 128
        %1710 = vxpose.xlu0.b32.cont [15/16] 0.0, 128
        %1711 = vxpose.xlu0.b32.end [16/16] 0.0, 128
        %v1712 = vpop.trf.xlu0
        %v1713 = vpop.trf.xlu0
        %v1714 = vpop.trf.xlu0
        %v1715 = vpop.trf.xlu0
        %v1716 = vpop.trf.xlu0
        %v1717 = vpop.trf.xlu0
        %v1718 = vpop.trf.xlu0
        %v1719 = vpop.trf.xlu0
        %v1720 = vpop.trf.xlu0
        %v1721 = vpop.trf.xlu0
        %v1722 = vpop.trf.xlu0
        %v1723 = vpop.trf.xlu0
        %v1724 = vpop.trf.xlu0
        %v1725 = vpop.trf.xlu0
        %v1726 = vpop.trf.xlu0
        %v1727 = vpop.trf.xlu0
        %1728 = vxpose.xlu0.b32.start [1/16] %v1619, 128
        %1729 = vxpose.xlu0.b32.cont [2/16] 0.0, 128
        %1730 = vxpose.xlu0.b32.cont [3/16] 0.0, 128
        %1731 = vxpose.xlu0.b32.cont [4/16] 0.0, 128
        %1732 = vxpose.xlu0.b32.cont [5/16] 0.0, 128
        %1733 = vxpose.xlu0.b32.cont [6/16] 0.0, 128
        %1734 = vxpose.xlu0.b32.cont [7/16] 0.0, 128
        %1735 = vxpose.xlu0.b32.cont [8/16] 0.0, 128
        %1736 = vxpose.xlu0.b32.cont [9/16] 0.0, 128
        %1737 = vxpose.xlu0.b32.cont [10/16] 0.0, 128
        %1738 = vxpose.xlu0.b32.cont [11/16] 0.0, 128
        %1739 = vxpose.xlu0.b32.cont [12/16] 0.0, 128
        %1740 = vxpose.xlu0.b32.cont [13/16] 0.0, 128
        %1741 = vxpose.xlu0.b32.cont [14/16] 0.0, 128
        %1742 = vxpose.xlu0.b32.cont [15/16] 0.0, 128
        %1743 = vxpose.xlu0.b32.end [16/16] 0.0, 128
        %v1744 = vpop.trf.xlu0
        %v1745 = vpop.trf.xlu0
        %v1746 = vpop.trf.xlu0
        %v1747 = vpop.trf.xlu0
        %v1748 = vpop.trf.xlu0
        %v1749 = vpop.trf.xlu0
        %v1750 = vpop.trf.xlu0
        %v1751 = vpop.trf.xlu0
        %v1752 = vpop.trf.xlu0
        %v1753 = vpop.trf.xlu0
        %v1754 = vpop.trf.xlu0
        %v1755 = vpop.trf.xlu0
        %v1756 = vpop.trf.xlu0
        %v1757 = vpop.trf.xlu0
        %v1758 = vpop.trf.xlu0
        %v1759 = vpop.trf.xlu0
        %1760 = vxpose.xlu0.b32.start [1/16] %v1624, 128
        %1761 = vxpose.xlu0.b32.cont [2/16] 0.0, 128
        %1762 = vxpose.xlu0.b32.cont [3/16] 0.0, 128
        %1763 = vxpose.xlu0.b32.cont [4/16] 0.0, 128
        %1764 = vxpose.xlu0.b32.cont [5/16] 0.0, 128
        %1765 = vxpose.xlu0.b32.cont [6/16] 0.0, 128
        %1766 = vxpose.xlu0.b32.cont [7/16] 0.0, 128
        %1767 = vxpose.xlu0.b32.cont [8/16] 0.0, 128
        %1768 = vxpose.xlu0.b32.cont [9/16] 0.0, 128
        %1769 = vxpose.xlu0.b32.cont [10/16] 0.0, 128
        %1770 = vxpose.xlu0.b32.cont [11/16] 0.0, 128
        %1771 = vxpose.xlu0.b32.cont [12/16] 0.0, 128
        %1772 = vxpose.xlu0.b32.cont [13/16] 0.0, 128
        %1773 = vxpose.xlu0.b32.cont [14/16] 0.0, 128
        %1774 = vxpose.xlu0.b32.cont [15/16] 0.0, 128
        %1775 = vxpose.xlu0.b32.end [16/16] 0.0, 128
        %v1776 = vpop.trf.xlu0
        %v1777 = vpop.trf.xlu0
        %v1778 = vpop.trf.xlu0
        %v1779 = vpop.trf.xlu0
        %v1780 = vpop.trf.xlu0
        %v1781 = vpop.trf.xlu0
        %v1782 = vpop.trf.xlu0
        %v1783 = vpop.trf.xlu0
        %v1784 = vpop.trf.xlu0
        %v1785 = vpop.trf.xlu0
        %v1786 = vpop.trf.xlu0
        %v1787 = vpop.trf.xlu0
        %v1788 = vpop.trf.xlu0
        %v1789 = vpop.trf.xlu0
        %v1790 = vpop.trf.xlu0
        %v1791 = vpop.trf.xlu0
        %1792 = vxpose.xlu0.b32.start [1/16] %v1625, 128
        %1793 = vxpose.xlu0.b32.cont [2/16] 0.0, 128
        %1794 = vxpose.xlu0.b32.cont [3/16] 0.0, 128
        %1795 = vxpose.xlu0.b32.cont [4/16] 0.0, 128
        %1796 = vxpose.xlu0.b32.cont [5/16] 0.0, 128
        %1797 = vxpose.xlu0.b32.cont [6/16] 0.0, 128
        %1798 = vxpose.xlu0.b32.cont [7/16] 0.0, 128
        %1799 = vxpose.xlu0.b32.cont [8/16] 0.0, 128
        %1800 = vxpose.xlu0.b32.cont [9/16] 0.0, 128
        %1801 = vxpose.xlu0.b32.cont [10/16] 0.0, 128
        %1802 = vxpose.xlu0.b32.cont [11/16] 0.0, 128
        %1803 = vxpose.xlu0.b32.cont [12/16] 0.0, 128
        %1804 = vxpose.xlu0.b32.cont [13/16] 0.0, 128
        %1805 = vxpose.xlu0.b32.cont [14/16] 0.0, 128
        %1806 = vxpose.xlu0.b32.cont [15/16] 0.0, 128
        %1807 = vxpose.xlu0.b32.end [16/16] 0.0, 128
        %v1808 = vpop.trf.xlu0
        %v1809 = vpop.trf.xlu0
        %v1810 = vpop.trf.xlu0
        %v1811 = vpop.trf.xlu0
        %v1812 = vpop.trf.xlu0
        %v1813 = vpop.trf.xlu0
        %v1814 = vpop.trf.xlu0
        %v1815 = vpop.trf.xlu0
        %v1816 = vpop.trf.xlu0
        %v1817 = vpop.trf.xlu0
        %v1818 = vpop.trf.xlu0
        %v1819 = vpop.trf.xlu0
        %v1820 = vpop.trf.xlu0
        %v1821 = vpop.trf.xlu0
        %v1822 = vpop.trf.xlu0
        %v1823 = vpop.trf.xlu0
        %1824 = vxpose.xlu0.b32.start [1/16] %v1626, 128
        %1825 = vxpose.xlu0.b32.cont [2/16] 0.0, 128
        %1826 = vxpose.xlu0.b32.cont [3/16] 0.0, 128
        %1827 = vxpose.xlu0.b32.cont [4/16] 0.0, 128
        %1828 = vxpose.xlu0.b32.cont [5/16] 0.0, 128
        %1829 = vxpose.xlu0.b32.cont [6/16] 0.0, 128
        %1830 = vxpose.xlu0.b32.cont [7/16] 0.0, 128
        %1831 = vxpose.xlu0.b32.cont [8/16] 0.0, 128
        %1832 = vxpose.xlu0.b32.cont [9/16] 0.0, 128
        %1833 = vxpose.xlu0.b32.cont [10/16] 0.0, 128
        %1834 = vxpose.xlu0.b32.cont [11/16] 0.0, 128
        %1835 = vxpose.xlu0.b32.cont [12/16] 0.0, 128
        %1836 = vxpose.xlu0.b32.cont [13/16] 0.0, 128
        %1837 = vxpose.xlu0.b32.cont [14/16] 0.0, 128
        %1838 = vxpose.xlu0.b32.cont [15/16] 0.0, 128
        %1839 = vxpose.xlu0.b32.end [16/16] 0.0, 128
        %v1840 = vpop.trf.xlu0
        %v1841 = vpop.trf.xlu0
        %v1842 = vpop.trf.xlu0
        %v1843 = vpop.trf.xlu0
        %v1844 = vpop.trf.xlu0
        %v1845 = vpop.trf.xlu0
        %v1846 = vpop.trf.xlu0
        %v1847 = vpop.trf.xlu0
        %v1848 = vpop.trf.xlu0
        %v1849 = vpop.trf.xlu0
        %v1850 = vpop.trf.xlu0
        %v1851 = vpop.trf.xlu0
        %v1852 = vpop.trf.xlu0
        %v1853 = vpop.trf.xlu0
        %v1854 = vpop.trf.xlu0
        %v1855 = vpop.trf.xlu0
        %1856 = vxpose.xlu0.b32.start [1/16] %v1627, 128
        %1857 = vxpose.xlu0.b32.cont [2/16] 0.0, 128
        %1858 = vxpose.xlu0.b32.cont [3/16] 0.0, 128
        %1859 = vxpose.xlu0.b32.cont [4/16] 0.0, 128
        %1860 = vxpose.xlu0.b32.cont [5/16] 0.0, 128
        %1861 = vxpose.xlu0.b32.cont [6/16] 0.0, 128
        %1862 = vxpose.xlu0.b32.cont [7/16] 0.0, 128
        %1863 = vxpose.xlu0.b32.cont [8/16] 0.0, 128
        %1864 = vxpose.xlu0.b32.cont [9/16] 0.0, 128
        %1865 = vxpose.xlu0.b32.cont [10/16] 0.0, 128
        %1866 = vxpose.xlu0.b32.cont [11/16] 0.0, 128
        %1867 = vxpose.xlu0.b32.cont [12/16] 0.0, 128
        %1868 = vxpose.xlu0.b32.cont [13/16] 0.0, 128
        %1869 = vxpose.xlu0.b32.cont [14/16] 0.0, 128
        %1870 = vxpose.xlu0.b32.cont [15/16] 0.0, 128
        %1871 = vxpose.xlu0.b32.end [16/16] 0.0, 128
        %v1872 = vpop.trf.xlu0
        %v1873 = vpop.trf.xlu0
        %v1874 = vpop.trf.xlu0
        %v1875 = vpop.trf.xlu0
        %v1876 = vpop.trf.xlu0
        %v1877 = vpop.trf.xlu0
        %v1878 = vpop.trf.xlu0
        %v1879 = vpop.trf.xlu0
        %v1880 = vpop.trf.xlu0
        %v1881 = vpop.trf.xlu0
        %v1882 = vpop.trf.xlu0
        %v1883 = vpop.trf.xlu0
        %v1884 = vpop.trf.xlu0
        %v1885 = vpop.trf.xlu0
        %v1886 = vpop.trf.xlu0
        %v1887 = vpop.trf.xlu0
        %v1888 = vpack.c.bf16 %v1648, %v1648
        %v1889 = vpack.c.bf16 %v1680, %v1680
        %v1890 = vpack.c.bf16 %v1712, %v1712
        %v1891 = vpack.c.bf16 %v1744, %v1744
        %v1892 = vpack.c.bf16 %v1620, %v1620
        %v1893 = vpack.c.bf16 %v1621, %v1621
        %v1894 = vpack.c.bf16 %v1622, %v1622
        %v1895 = vpack.c.bf16 %v1623, %v1623
        %vm1896 = vcmask 64512
        %v1898 = vsel %vm1896, %v1888, 0
        %vm1900 = vcmask 1043456
        %v1902 = vsel %vm1900, %v1892, 0
        %1904 = vmatprep.subr.bf16.mxu0 0
        %1905 = vmatpush1.bf16.msra.mxu0 %v1902
        %1906 = vmatprep.subr.bf16.mxu0 0
        %1907 = vmatpush1.bf16.msra.mxu0 0
        %1908 = vmatprep.subr.bf16.mxu0 0
        %1909 = vmatpush1.bf16.msra.mxu0 0
        %1910 = vmatprep.subr.bf16.mxu0 0
        %1911 = vmatpush1.bf16.msra.mxu0 0
        %1912 = vmatprep.subr.bf16.mxu0 0
        %1913 = vmatpush1.bf16.msra.mxu0 0
        %1914 = vmatprep.subr.bf16.mxu0 0
        %1915 = vmatpush1.bf16.msra.mxu0 0
        %1916 = vmatprep.subr.bf16.mxu0 0
        %1917 = vmatpush1.bf16.msra.mxu0 0
        %1918 = vmatprep.subr.bf16.mxu0 0
        %1919 = vmatpush1.bf16.msra.mxu0 0
        %1920 = vmatprep.subr.bf16.mxu0 0
        %1921 = vmatpush1.bf16.msra.mxu0 0
        %1922 = vmatprep.subr.bf16.mxu0 0
        %1923 = vmatpush1.bf16.msra.mxu0 0
        %1924 = vmatprep.subr.bf16.mxu0 0
        %1925 = vmatpush1.bf16.msra.mxu0 0
        %1926 = vmatprep.subr.bf16.mxu0 0
        %1927 = vmatpush1.bf16.msra.mxu0 0
        %1928 = vmatprep.subr.bf16.mxu0 0
        %1929 = vmatpush1.bf16.msra.mxu0 0
        %1930 = vmatprep.subr.bf16.mxu0 0
        %1931 = vmatpush1.bf16.msra.mxu0 0
        %1932 = vmatprep.subr.bf16.mxu0 0
        %1933 = vmatpush1.bf16.msra.mxu0 0
        %1934 = vmatprep.subr.bf16.mxu0 0
        %1935 = vmatpush1.bf16.msra.mxu0 0
        %1936 = vmatprep.mubr.bf16.mxu0 0
        %1937 = vmatmul.mubr.bf16.gmra.mrb[0].mxu0 %v1898
        %v1938 = vpop.f32.mrb[0].mxu0
        %v1939 = vadd.f32 0.0, %v1938
        %v1940 = vpop.f32.mrb[0].mxu0
        %v1941 = vpop.f32.mrb[0].mxu0
        %v1942 = vpop.f32.mrb[0].mxu0
        %1943 = vdwg.mxu0
        %v1945 = vsel %vm1896, %v1889, 0
        %v1948 = vsel %vm1900, %v1893, 0
        %1950 = vmatprep.subr.bf16.mxu0 0
        %1951 = vmatpush1.bf16.msra.mxu0 %v1948
        %1952 = vmatprep.subr.bf16.mxu0 0
        %1953 = vmatpush1.bf16.msra.mxu0 0
        %1954 = vmatprep.subr.bf16.mxu0 0
        %1955 = vmatpush1.bf16.msra.mxu0 0
        %1956 = vmatprep.subr.bf16.mxu0 0
        %1957 = vmatpush1.bf16.msra.mxu0 0
        %1958 = vmatprep.subr.bf16.mxu0 0
        %1959 = vmatpush1.bf16.msra.mxu0 0
        %1960 = vmatprep.subr.bf16.mxu0 0
        %1961 = vmatpush1.bf16.msra.mxu0 0
        %1962 = vmatprep.subr.bf16.mxu0 0
        %1963 = vmatpush1.bf16.msra.mxu0 0
        %1964 = vmatprep.subr.bf16.mxu0 0
        %1965 = vmatpush1.bf16.msra.mxu0 0
        %1966 = vmatprep.subr.bf16.mxu0 0
        %1967 = vmatpush1.bf16.msra.mxu0 0
        %1968 = vmatprep.subr.bf16.mxu0 0
        %1969 = vmatpush1.bf16.msra.mxu0 0
        %1970 = vmatprep.subr.bf16.mxu0 0
        %1971 = vmatpush1.bf16.msra.mxu0 0
        %1972 = vmatprep.subr.bf16.mxu0 0
        %1973 = vmatpush1.bf16.msra.mxu0 0
        %1974 = vmatprep.subr.bf16.mxu0 0
        %1975 = vmatpush1.bf16.msra.mxu0 0
        %1976 = vmatprep.subr.bf16.mxu0 0
        %1977 = vmatpush1.bf16.msra.mxu0 0
        %1978 = vmatprep.subr.bf16.mxu0 0
        %1979 = vmatpush1.bf16.msra.mxu0 0
        %1980 = vmatprep.subr.bf16.mxu0 0
        %1981 = vmatpush1.bf16.msra.mxu0 0
        %1982 = vmatprep.mubr.bf16.mxu0 0
        %1983 = vmatmul.mubr.bf16.gmra.mrb[0].mxu0 %v1945
        %v1984 = vpop.f32.mrb[0].mxu0
        %v1985 = vadd.f32 0.0, %v1984
        %v1986 = vpop.f32.mrb[0].mxu0
        %v1987 = vpop.f32.mrb[0].mxu0
        %v1988 = vpop.f32.mrb[0].mxu0
        %1989 = vdwg.mxu0
        %v1991 = vsel %vm1896, %v1890, 0
        %v1994 = vsel %vm1900, %v1894, 0
        %1996 = vmatprep.subr.bf16.mxu0 0
        %1997 = vmatpush1.bf16.msra.mxu0 %v1994
        %1998 = vmatprep.subr.bf16.mxu0 0
        %1999 = vmatpush1.bf16.msra.mxu0 0
        %2000 = vmatprep.subr.bf16.mxu0 0
        %2001 = vmatpush1.bf16.msra.mxu0 0
        %2002 = vmatprep.subr.bf16.mxu0 0
        %2003 = vmatpush1.bf16.msra.mxu0 0
        %2004 = vmatprep.subr.bf16.mxu0 0
        %2005 = vmatpush1.bf16.msra.mxu0 0
        %2006 = vmatprep.subr.bf16.mxu0 0
        %2007 = vmatpush1.bf16.msra.mxu0 0
        %2008 = vmatprep.subr.bf16.mxu0 0
        %2009 = vmatpush1.bf16.msra.mxu0 0
        %2010 = vmatprep.subr.bf16.mxu0 0
        %2011 = vmatpush1.bf16.msra.mxu0 0
        %2012 = vmatprep.subr.bf16.mxu0 0
        %2013 = vmatpush1.bf16.msra.mxu0 0
        %2014 = vmatprep.subr.bf16.mxu0 0
        %2015 = vmatpush1.bf16.msra.mxu0 0
        %2016 = vmatprep.subr.bf16.mxu0 0
        %2017 = vmatpush1.bf16.msra.mxu0 0
        %2018 = vmatprep.subr.bf16.mxu0 0
        %2019 = vmatpush1.bf16.msra.mxu0 0
        %2020 = vmatprep.subr.bf16.mxu0 0
        %2021 = vmatpush1.bf16.msra.mxu0 0
        %2022 = vmatprep.subr.bf16.mxu0 0
        %2023 = vmatpush1.bf16.msra.mxu0 0
        %2024 = vmatprep.subr.bf16.mxu0 0
        %2025 = vmatpush1.bf16.msra.mxu0 0
        %2026 = vmatprep.subr.bf16.mxu0 0
        %2027 = vmatpush1.bf16.msra.mxu0 0
        %2028 = vmatprep.mubr.bf16.mxu0 0
        %2029 = vmatmul.mubr.bf16.gmra.mrb[0].mxu0 %v1991
        %v2030 = vpop.f32.mrb[0].mxu0
        %v2031 = vadd.f32 0.0, %v2030
        %v2032 = vpop.f32.mrb[0].mxu0
        %v2033 = vpop.f32.mrb[0].mxu0
        %v2034 = vpop.f32.mrb[0].mxu0
        %2035 = vdwg.mxu0
        %v2037 = vsel %vm1896, %v1891, 0
        %v2040 = vsel %vm1900, %v1895, 0
        %2042 = vmatprep.subr.bf16.mxu0 0
        %2043 = vmatpush1.bf16.msra.mxu0 %v2040
        %2044 = vmatprep.subr.bf16.mxu0 0
        %2045 = vmatpush1.bf16.msra.mxu0 0
        %2046 = vmatprep.subr.bf16.mxu0 0
        %2047 = vmatpush1.bf16.msra.mxu0 0
        %2048 = vmatprep.subr.bf16.mxu0 0
        %2049 = vmatpush1.bf16.msra.mxu0 0
        %2050 = vmatprep.subr.bf16.mxu0 0
        %2051 = vmatpush1.bf16.msra.mxu0 0
        %2052 = vmatprep.subr.bf16.mxu0 0
        %2053 = vmatpush1.bf16.msra.mxu0 0
        %2054 = vmatprep.subr.bf16.mxu0 0
        %2055 = vmatpush1.bf16.msra.mxu0 0
        %2056 = vmatprep.subr.bf16.mxu0 0
        %2057 = vmatpush1.bf16.msra.mxu0 0
        %2058 = vmatprep.subr.bf16.mxu0 0
        %2059 = vmatpush1.bf16.msra.mxu0 0
        %2060 = vmatprep.subr.bf16.mxu0 0
        %2061 = vmatpush1.bf16.msra.mxu0 0
        %2062 = vmatprep.subr.bf16.mxu0 0
        %2063 = vmatpush1.bf16.msra.mxu0 0
        %2064 = vmatprep.subr.bf16.mxu0 0
        %2065 = vmatpush1.bf16.msra.mxu0 0
        %2066 = vmatprep.subr.bf16.mxu0 0
        %2067 = vmatpush1.bf16.msra.mxu0 0
        %2068 = vmatprep.subr.bf16.mxu0 0
        %2069 = vmatpush1.bf16.msra.mxu0 0
        %2070 = vmatprep.subr.bf16.mxu0 0
        %2071 = vmatpush1.bf16.msra.mxu0 0
        %2072 = vmatprep.subr.bf16.mxu0 0
        %2073 = vmatpush1.bf16.msra.mxu0 0
        %2074 = vmatprep.mubr.bf16.mxu0 0
        %2075 = vmatmul.mubr.bf16.gmra.mrb[0].mxu0 %v2037
        %v2076 = vpop.f32.mrb[0].mxu0
        %v2077 = vadd.f32 0.0, %v2076
        %v2078 = vpop.f32.mrb[0].mxu0
        %v2079 = vpop.f32.mrb[0].mxu0
        %v2080 = vpop.f32.mrb[0].mxu0
        %2081 = vdwg.mxu0
        %v2082 = vmul.f32 %v1939, 0.35355338
        %v2083 = vmul.f32 %v1985, 0.35355338
        %v2084 = vmul.f32 %v2031, 0.35355338
        %v2085 = vmul.f32 %v2077, 0.35355338
        %v2087 = vlaneseq
        %v2088 = vshrl.u32 %v2087, 7
        %v2089 = vsub.s32 0, %v2088
        %v2090 = vrot.slane %v1518, %v2089
        %v2092 = vadd.f32 %v2082, %v2090
        %v2093 = vadd.f32 %v2083, %v2090
        %v2094 = vadd.f32 %v2084, %v2090
        %v2095 = vadd.f32 %v2085, %v2090
        %v2096 = vsel %vm1896, %v2092, -inf
        %2097 = vmax.xlane.f32.xlu0 %v2096
        %v2098 = vpop.xlane.xlu0 %2097
        %v2099 = vsel %vm1896, %v2093, -inf
        %2100 = vmax.xlane.f32.xlu0 %v2099
        %v2101 = vpop.xlane.xlu0 %2100
        %v2102 = vsel %vm1896, %v2094, -inf
        %2103 = vmax.xlane.f32.xlu0 %v2102
        %v2104 = vpop.xlane.xlu0 %2103
        %v2105 = vsel %vm1896, %v2095, -inf
        %2106 = vmax.xlane.f32.xlu0 %v2105
        %v2107 = vpop.xlane.xlu0 %2106
        %v2108 = vsub.f32 %v2092, %v2098
        %v2109 = vsub.f32 %v2093, %v2101
        %v2110 = vsub.f32 %v2094, %v2104
        %v2111 = vsub.f32 %v2095, %v2107
        %v2112 = vmul.f32 %v2108, 1.442695
        %v2113 = vpow.pop %v2112
        %v2114 = vmul.f32 %v2109, 1.442695
        %v2115 = vpow.pop %v2114
        %v2116 = vmul.f32 %v2110, 1.442695
        %v2117 = vpow.pop %v2116
        %v2118 = vmul.f32 %v2111, 1.442695
        %v2119 = vpow.pop %v2118
        %v2120 = vsel %vm1896, %v2113, 0.0
        %2121 = vadd.xlane.f32.xlu0 %v2120
        %v2122 = vpop.xlane.xlu0 %2121
        %v2123 = vsel %vm1896, %v2115, 0.0
        %2124 = vadd.xlane.f32.xlu0 %v2123
        %v2125 = vpop.xlane.xlu0 %2124
        %v2126 = vsel %vm1896, %v2117, 0.0
        %2127 = vadd.xlane.f32.xlu0 %v2126
        %v2128 = vpop.xlane.xlu0 %2127
        %v2129 = vsel %vm1896, %v2119, 0.0
        %2130 = vadd.xlane.f32.xlu0 %v2129
        %v2131 = vpop.xlane.xlu0 %2130
        %v2132 = vrcp.pop %v2122
        %v2133 = vrcp.pop %v2125
        %v2134 = vrcp.pop %v2128
        %v2135 = vrcp.pop %v2131
        %v2136 = vmul.f32 %v2113, %v2132
        %v2137 = vmul.f32 %v2115, %v2133
        %v2138 = vmul.f32 %v2117, %v2134
        %v2139 = vmul.f32 %v2119, %v2135
        %v2140 = vpack.c.bf16 %v2136, %v2136
        %v2141 = vpack.c.bf16 %v2137, %v2137
        %v2142 = vpack.c.bf16 %v2138, %v2138
        %v2143 = vpack.c.bf16 %v2139, %v2139
        %v2144 = vpack.c.bf16 %v1776, %v1776
        %v2145 = vpack.c.bf16 %v1808, %v1808
        %v2146 = vpack.c.bf16 %v1840, %v1840
        %v2147 = vpack.c.bf16 %v1872, %v1872
        %v2149 = vsel %vm1896, %v2140, 0
        %v2152 = vsel %vm1900, %v2144, 0
        %2154 = vmatprep.subr.bf16.mxu0 0
        %2155 = vmatpush1.bf16.msra.mxu0 %v2152
        %2156 = vmatprep.subr.bf16.mxu0 0
        %2157 = vmatpush1.bf16.msra.mxu0 0
        %2158 = vmatprep.subr.bf16.mxu0 0
        %2159 = vmatpush1.bf16.msra.mxu0 0
        %2160 = vmatprep.subr.bf16.mxu0 0
        %2161 = vmatpush1.bf16.msra.mxu0 0
        %2162 = vmatprep.subr.bf16.mxu0 0
        %2163 = vmatpush1.bf16.msra.mxu0 0
        %2164 = vmatprep.subr.bf16.mxu0 0
        %2165 = vmatpush1.bf16.msra.mxu0 0
        %2166 = vmatprep.subr.bf16.mxu0 0
        %2167 = vmatpush1.bf16.msra.mxu0 0
        %2168 = vmatprep.subr.bf16.mxu0 0
        %2169 = vmatpush1.bf16.msra.mxu0 0
        %2170 = vmatprep.subr.bf16.mxu0 0
        %2171 = vmatpush1.bf16.msra.mxu0 0
        %2172 = vmatprep.subr.bf16.mxu0 0
        %2173 = vmatpush1.bf16.msra.mxu0 0
        %2174 = vmatprep.subr.bf16.mxu0 0
        %2175 = vmatpush1.bf16.msra.mxu0 0
        %2176 = vmatprep.subr.bf16.mxu0 0
        %2177 = vmatpush1.bf16.msra.mxu0 0
        %2178 = vmatprep.subr.bf16.mxu0 0
        %2179 = vmatpush1.bf16.msra.mxu0 0
        %2180 = vmatprep.subr.bf16.mxu0 0
        %2181 = vmatpush1.bf16.msra.mxu0 0
        %2182 = vmatprep.subr.bf16.mxu0 0
        %2183 = vmatpush1.bf16.msra.mxu0 0
        %2184 = vmatprep.subr.bf16.mxu0 0
        %2185 = vmatpush1.bf16.msra.mxu0 0
        %2186 = vmatprep.mubr.bf16.mxu0 0
        %2187 = vmatmul.mubr.bf16.gmra.mrb[0].mxu0 %v2149
        %v2188 = vpop.f32.mrb[0].mxu0
        %v2189 = vadd.f32 0.0, %v2188
        %v2190 = vpop.f32.mrb[0].mxu0
        %v2191 = vpop.f32.mrb[0].mxu0
        %v2192 = vpop.f32.mrb[0].mxu0
        %2193 = vdwg.mxu0
        %v2195 = vsel %vm1896, %v2141, 0
        %v2198 = vsel %vm1900, %v2145, 0
        %2200 = vmatprep.subr.bf16.mxu0 0
        %2201 = vmatpush1.bf16.msra.mxu0 %v2198
        %2202 = vmatprep.subr.bf16.mxu0 0
        %2203 = vmatpush1.bf16.msra.mxu0 0
        %2204 = vmatprep.subr.bf16.mxu0 0
        %2205 = vmatpush1.bf16.msra.mxu0 0
        %2206 = vmatprep.subr.bf16.mxu0 0
        %2207 = vmatpush1.bf16.msra.mxu0 0
        %2208 = vmatprep.subr.bf16.mxu0 0
        %2209 = vmatpush1.bf16.msra.mxu0 0
        %2210 = vmatprep.subr.bf16.mxu0 0
        %2211 = vmatpush1.bf16.msra.mxu0 0
        %2212 = vmatprep.subr.bf16.mxu0 0
        %2213 = vmatpush1.bf16.msra.mxu0 0
        %2214 = vmatprep.subr.bf16.mxu0 0
        %2215 = vmatpush1.bf16.msra.mxu0 0
        %2216 = vmatprep.subr.bf16.mxu0 0
        %2217 = vmatpush1.bf16.msra.mxu0 0
        %2218 = vmatprep.subr.bf16.mxu0 0
        %2219 = vmatpush1.bf16.msra.mxu0 0
        %2220 = vmatprep.subr.bf16.mxu0 0
        %2221 = vmatpush1.bf16.msra.mxu0 0
        %2222 = vmatprep.subr.bf16.mxu0 0
        %2223 = vmatpush1.bf16.msra.mxu0 0
        %2224 = vmatprep.subr.bf16.mxu0 0
        %2225 = vmatpush1.bf16.msra.mxu0 0
        %2226 = vmatprep.subr.bf16.mxu0 0
        %2227 = vmatpush1.bf16.msra.mxu0 0
        %2228 = vmatprep.subr.bf16.mxu0 0
        %2229 = vmatpush1.bf16.msra.mxu0 0
        %2230 = vmatprep.subr.bf16.mxu0 0
        %2231 = vmatpush1.bf16.msra.mxu0 0
        %2232 = vmatprep.mubr.bf16.mxu0 0
        %2233 = vmatmul.mubr.bf16.gmra.mrb[0].mxu0 %v2195
        %v2234 = vpop.f32.mrb[0].mxu0
        %v2235 = vadd.f32 0.0, %v2234
        %v2236 = vpop.f32.mrb[0].mxu0
        %v2237 = vpop.f32.mrb[0].mxu0
        %v2238 = vpop.f32.mrb[0].mxu0
        %2239 = vdwg.mxu0
        %v2241 = vsel %vm1896, %v2142, 0
        %v2244 = vsel %vm1900, %v2146, 0
        %2246 = vmatprep.subr.bf16.mxu0 0
        %2247 = vmatpush1.bf16.msra.mxu0 %v2244
        %2248 = vmatprep.subr.bf16.mxu0 0
        %2249 = vmatpush1.bf16.msra.mxu0 0
        %2250 = vmatprep.subr.bf16.mxu0 0
        %2251 = vmatpush1.bf16.msra.mxu0 0
        %2252 = vmatprep.subr.bf16.mxu0 0
        %2253 = vmatpush1.bf16.msra.mxu0 0
        %2254 = vmatprep.subr.bf16.mxu0 0
        %2255 = vmatpush1.bf16.msra.mxu0 0
        %2256 = vmatprep.subr.bf16.mxu0 0
        %2257 = vmatpush1.bf16.msra.mxu0 0
        %2258 = vmatprep.subr.bf16.mxu0 0
        %2259 = vmatpush1.bf16.msra.mxu0 0
        %2260 = vmatprep.subr.bf16.mxu0 0
        %2261 = vmatpush1.bf16.msra.mxu0 0
        %2262 = vmatprep.subr.bf16.mxu0 0
        %2263 = vmatpush1.bf16.msra.mxu0 0
        %2264 = vmatprep.subr.bf16.mxu0 0
        %2265 = vmatpush1.bf16.msra.mxu0 0
        %2266 = vmatprep.subr.bf16.mxu0 0
        %2267 = vmatpush1.bf16.msra.mxu0 0
        %2268 = vmatprep.subr.bf16.mxu0 0
        %2269 = vmatpush1.bf16.msra.mxu0 0
        %2270 = vmatprep.subr.bf16.mxu0 0
        %2271 = vmatpush1.bf16.msra.mxu0 0
        %2272 = vmatprep.subr.bf16.mxu0 0
        %2273 = vmatpush1.bf16.msra.mxu0 0
        %2274 = vmatprep.subr.bf16.mxu0 0
        %2275 = vmatpush1.bf16.msra.mxu0 0
        %2276 = vmatprep.subr.bf16.mxu0 0
        %2277 = vmatpush1.bf16.msra.mxu0 0
        %2278 = vmatprep.mubr.bf16.mxu0 0
        %2279 = vmatmul.mubr.bf16.gmra.mrb[0].mxu0 %v2241
        %v2280 = vpop.f32.mrb[0].mxu0
        %v2281 = vadd.f32 0.0, %v2280
        %v2282 = vpop.f32.mrb[0].mxu0
        %v2283 = vpop.f32.mrb[0].mxu0
        %v2284 = vpop.f32.mrb[0].mxu0
        %2285 = vdwg.mxu0
        %v2287 = vsel %vm1896, %v2143, 0
        %v2290 = vsel %vm1900, %v2147, 0
        %2292 = vmatprep.subr.bf16.mxu0 0
        %2293 = vmatpush1.bf16.msra.mxu0 %v2290
        %2294 = vmatprep.subr.bf16.mxu0 0
        %2295 = vmatpush1.bf16.msra.mxu0 0
        %2296 = vmatprep.subr.bf16.mxu0 0
        %2297 = vmatpush1.bf16.msra.mxu0 0
        %2298 = vmatprep.subr.bf16.mxu0 0
        %2299 = vmatpush1.bf16.msra.mxu0 0
        %2300 = vmatprep.subr.bf16.mxu0 0
        %2301 = vmatpush1.bf16.msra.mxu0 0
        %2302 = vmatprep.subr.bf16.mxu0 0
        %2303 = vmatpush1.bf16.msra.mxu0 0
        %2304 = vmatprep.subr.bf16.mxu0 0
        %2305 = vmatpush1.bf16.msra.mxu0 0
        %2306 = vmatprep.subr.bf16.mxu0 0
        %2307 = vmatpush1.bf16.msra.mxu0 0
        %2308 = vmatprep.subr.bf16.mxu0 0
        %2309 = vmatpush1.bf16.msra.mxu0 0
        %2310 = vmatprep.subr.bf16.mxu0 0
        %2311 = vmatpush1.bf16.msra.mxu0 0
        %2312 = vmatprep.subr.bf16.mxu0 0
        %2313 = vmatpush1.bf16.msra.mxu0 0
        %2314 = vmatprep.subr.bf16.mxu0 0
        %2315 = vmatpush1.bf16.msra.mxu0 0
        %2316 = vmatprep.subr.bf16.mxu0 0
        %2317 = vmatpush1.bf16.msra.mxu0 0
        %2318 = vmatprep.subr.bf16.mxu0 0
        %2319 = vmatpush1.bf16.msra.mxu0 0
        %2320 = vmatprep.subr.bf16.mxu0 0
        %2321 = vmatpush1.bf16.msra.mxu0 0
        %2322 = vmatprep.subr.bf16.mxu0 0
        %2323 = vmatpush1.bf16.msra.mxu0 0
        %2324 = vmatprep.mubr.bf16.mxu0 0
        %2325 = vmatmul.mubr.bf16.gmra.mrb[0].mxu0 %v2287
        %v2326 = vpop.f32.mrb[0].mxu0
        %v2327 = vadd.f32 0.0, %v2326
        %v2328 = vpop.f32.mrb[0].mxu0
        %v2329 = vpop.f32.mrb[0].mxu0
        %v2330 = vpop.f32.mrb[0].mxu0
        %2331 = vdwg.mxu0
        %2332 = vxpose.xlu0.b32.start [1/16] %v2189, 128
        %2333 = vxpose.xlu0.b32.cont [2/16] 0.0, 128
        %2334 = vxpose.xlu0.b32.cont [3/16] 0.0, 128
        %2335 = vxpose.xlu0.b32.cont [4/16] 0.0, 128
        %2336 = vxpose.xlu0.b32.cont [5/16] 0.0, 128
        %2337 = vxpose.xlu0.b32.cont [6/16] 0.0, 128
        %2338 = vxpose.xlu0.b32.cont [7/16] 0.0, 128
        %2339 = vxpose.xlu0.b32.cont [8/16] 0.0, 128
        %2340 = vxpose.xlu0.b32.cont [9/16] 0.0, 128
        %2341 = vxpose.xlu0.b32.cont [10/16] 0.0, 128
        %2342 = vxpose.xlu0.b32.cont [11/16] 0.0, 128
        %2343 = vxpose.xlu0.b32.cont [12/16] 0.0, 128
        %2344 = vxpose.xlu0.b32.cont [13/16] 0.0, 128
        %2345 = vxpose.xlu0.b32.cont [14/16] 0.0, 128
        %2346 = vxpose.xlu0.b32.cont [15/16] 0.0, 128
        %2347 = vxpose.xlu0.b32.end [16/16] 0.0, 128
        %v2348 = vpop.trf.xlu0
        %v2349 = vpop.trf.xlu0
        %v2350 = vpop.trf.xlu0
        %v2351 = vpop.trf.xlu0
        %v2352 = vpop.trf.xlu0
        %v2353 = vpop.trf.xlu0
        %v2354 = vpop.trf.xlu0
        %v2355 = vpop.trf.xlu0
        %v2356 = vpop.trf.xlu0
        %v2357 = vpop.trf.xlu0
        %v2358 = vpop.trf.xlu0
        %v2359 = vpop.trf.xlu0
        %v2360 = vpop.trf.xlu0
        %v2361 = vpop.trf.xlu0
        %v2362 = vpop.trf.xlu0
        %v2363 = vpop.trf.xlu0
        %2364 = vxpose.xlu0.b32.start [1/16] %v2235, 128
        %2365 = vxpose.xlu0.b32.cont [2/16] 0.0, 128
        %2366 = vxpose.xlu0.b32.cont [3/16] 0.0, 128
        %2367 = vxpose.xlu0.b32.cont [4/16] 0.0, 128
        %2368 = vxpose.xlu0.b32.cont [5/16] 0.0, 128
        %2369 = vxpose.xlu0.b32.cont [6/16] 0.0, 128
        %2370 = vxpose.xlu0.b32.cont [7/16] 0.0, 128
        %2371 = vxpose.xlu0.b32.cont [8/16] 0.0, 128
        %2372 = vxpose.xlu0.b32.cont [9/16] 0.0, 128
        %2373 = vxpose.xlu0.b32.cont [10/16] 0.0, 128
        %2374 = vxpose.xlu0.b32.cont [11/16] 0.0, 128
        %2375 = vxpose.xlu0.b32.cont [12/16] 0.0, 128
        %2376 = vxpose.xlu0.b32.cont [13/16] 0.0, 128
        %2377 = vxpose.xlu0.b32.cont [14/16] 0.0, 128
        %2378 = vxpose.xlu0.b32.cont [15/16] 0.0, 128
        %2379 = vxpose.xlu0.b32.end [16/16] 0.0, 128
        %v2380 = vpop.trf.xlu0
        %v2381 = vpop.trf.xlu0
        %v2382 = vpop.trf.xlu0
        %v2383 = vpop.trf.xlu0
        %v2384 = vpop.trf.xlu0
        %v2385 = vpop.trf.xlu0
        %v2386 = vpop.trf.xlu0
        %v2387 = vpop.trf.xlu0
        %v2388 = vpop.trf.xlu0
        %v2389 = vpop.trf.xlu0
        %v2390 = vpop.trf.xlu0
        %v2391 = vpop.trf.xlu0
        %v2392 = vpop.trf.xlu0
        %v2393 = vpop.trf.xlu0
        %v2394 = vpop.trf.xlu0
        %v2395 = vpop.trf.xlu0
        %2396 = vxpose.xlu0.b32.start [1/16] %v2281, 128
        %2397 = vxpose.xlu0.b32.cont [2/16] 0.0, 128
        %2398 = vxpose.xlu0.b32.cont [3/16] 0.0, 128
        %2399 = vxpose.xlu0.b32.cont [4/16] 0.0, 128
        %2400 = vxpose.xlu0.b32.cont [5/16] 0.0, 128
        %2401 = vxpose.xlu0.b32.cont [6/16] 0.0, 128
        %2402 = vxpose.xlu0.b32.cont [7/16] 0.0, 128
        %2403 = vxpose.xlu0.b32.cont [8/16] 0.0, 128
        %2404 = vxpose.xlu0.b32.cont [9/16] 0.0, 128
        %2405 = vxpose.xlu0.b32.cont [10/16] 0.0, 128
        %2406 = vxpose.xlu0.b32.cont [11/16] 0.0, 128
        %2407 = vxpose.xlu0.b32.cont [12/16] 0.0, 128
        %2408 = vxpose.xlu0.b32.cont [13/16] 0.0, 128
        %2409 = vxpose.xlu0.b32.cont [14/16] 0.0, 128
        %2410 = vxpose.xlu0.b32.cont [15/16] 0.0, 128
        %2411 = vxpose.xlu0.b32.end [16/16] 0.0, 128
        %v2412 = vpop.trf.xlu0
        %v2413 = vpop.trf.xlu0
        %v2414 = vpop.trf.xlu0
        %v2415 = vpop.trf.xlu0
        %v2416 = vpop.trf.xlu0
        %v2417 = vpop.trf.xlu0
        %v2418 = vpop.trf.xlu0
        %v2419 = vpop.trf.xlu0
        %v2420 = vpop.trf.xlu0
        %v2421 = vpop.trf.xlu0
        %v2422 = vpop.trf.xlu0
        %v2423 = vpop.trf.xlu0
        %v2424 = vpop.trf.xlu0
        %v2425 = vpop.trf.xlu0
        %v2426 = vpop.trf.xlu0
        %v2427 = vpop.trf.xlu0
        %2428 = vxpose.xlu0.b32.start [1/16] %v2327, 128
        %2429 = vxpose.xlu0.b32.cont [2/16] 0.0, 128
        %2430 = vxpose.xlu0.b32.cont [3/16] 0.0, 128
        %2431 = vxpose.xlu0.b32.cont [4/16] 0.0, 128
        %2432 = vxpose.xlu0.b32.cont [5/16] 0.0, 128
        %2433 = vxpose.xlu0.b32.cont [6/16] 0.0, 128
        %2434 = vxpose.xlu0.b32.cont [7/16] 0.0, 128
        %2435 = vxpose.xlu0.b32.cont [8/16] 0.0, 128
        %2436 = vxpose.xlu0.b32.cont [9/16] 0.0, 128
        %2437 = vxpose.xlu0.b32.cont [10/16] 0.0, 128
        %2438 = vxpose.xlu0.b32.cont [11/16] 0.0, 128
        %2439 = vxpose.xlu0.b32.cont [12/16] 0.0, 128
        %2440 = vxpose.xlu0.b32.cont [13/16] 0.0, 128
        %2441 = vxpose.xlu0.b32.cont [14/16] 0.0, 128
        %2442 = vxpose.xlu0.b32.cont [15/16] 0.0, 128
        %2443 = vxpose.xlu0.b32.end [16/16] 0.0, 128
        %v2444 = vpop.trf.xlu0
        %v2445 = vpop.trf.xlu0
        %v2446 = vpop.trf.xlu0
        %v2447 = vpop.trf.xlu0
        %v2448 = vpop.trf.xlu0
        %v2449 = vpop.trf.xlu0
        %v2450 = vpop.trf.xlu0
        %v2451 = vpop.trf.xlu0
        %v2452 = vpop.trf.xlu0
        %v2453 = vpop.trf.xlu0
        %v2454 = vpop.trf.xlu0
        %v2455 = vpop.trf.xlu0
        %v2456 = vpop.trf.xlu0
        %v2457 = vpop.trf.xlu0
        %v2458 = vpop.trf.xlu0
        %v2459 = vpop.trf.xlu0
        %2460 = vxpose.xlu0.b32.start [1/16] %v2348, 128
        %2461 = vxpose.xlu0.b32.cont [2/16] %v2380, 128
        %2462 = vxpose.xlu0.b32.cont [3/16] %v2412, 128
        %2463 = vxpose.xlu0.b32.cont [4/16] %v2444, 128
        %2464 = vxpose.xlu0.b32.cont [5/16] 0.0, 128
        %2465 = vxpose.xlu0.b32.cont [6/16] 0.0, 128
        %2466 = vxpose.xlu0.b32.cont [7/16] 0.0, 128
        %2467 = vxpose.xlu0.b32.cont [8/16] 0.0, 128
        %2468 = vxpose.xlu0.b32.cont [9/16] 0.0, 128
        %2469 = vxpose.xlu0.b32.cont [10/16] 0.0, 128
        %2470 = vxpose.xlu0.b32.cont [11/16] 0.0, 128
        %2471 = vxpose.xlu0.b32.cont [12/16] 0.0, 128
        %2472 = vxpose.xlu0.b32.cont [13/16] 0.0, 128
        %2473 = vxpose.xlu0.b32.cont [14/16] 0.0, 128
        %2474 = vxpose.xlu0.b32.cont [15/16] 0.0, 128
        %2475 = vxpose.xlu0.b32.end [16/16] 0.0, 128
        %v2476 = vpop.trf.xlu0
        %v2477 = vpop.trf.xlu0
        %v2478 = vpop.trf.xlu0
        %v2479 = vpop.trf.xlu0
        %v2480 = vpop.trf.xlu0
        %v2481 = vpop.trf.xlu0
        %v2482 = vpop.trf.xlu0
        %v2483 = vpop.trf.xlu0
        %v2484 = vpop.trf.xlu0
        %v2485 = vpop.trf.xlu0
        %v2486 = vpop.trf.xlu0
        %v2487 = vpop.trf.xlu0
        %v2488 = vpop.trf.xlu0
        %v2489 = vpop.trf.xlu0
        %v2490 = vpop.trf.xlu0
        %v2491 = vpop.trf.xlu0
        %v2492 = vpack.c.bf16 %v2476, %v2476
        %v2494 = vlaneseq
        %v2495 = vshrl.u32 %v2494, 7
        %v2496 = vsub.s32 0, %v2495
        %v2497 = vrot.slane %v1536, %v2496
        %v2503 = vunpack.c.l.b16 %v1532
        %v2504 = vunpack.c.l.b16 %v1533
        %v2505 = vunpack.c.l.b16 %v1534
        %v2506 = vunpack.c.l.b16 %v1535
        %v2507 = vpack.c.b16 %v2504, %v2503
        %v2508 = vpack.c.b16 %v2506, %v2505
        %v2512 = vsel %vm1556, %v2492, 0
        %2514 = vmatprep.subr.bf16.mxu0 0
        %2515 = vmatpush1.bf16.msra.mxu0 %v2507
        %2516 = vmatprep.subr.bf16.mxu0 0
        %2517 = vmatpush1.bf16.msra.mxu0 %v2508
        %2518 = vmatprep.subr.bf16.mxu0 0
        %2519 = vmatpush1.bf16.msra.mxu0 0
        %2520 = vmatprep.subr.bf16.mxu0 0
        %2521 = vmatpush1.bf16.msra.mxu0 0
        %2522 = vmatprep.subr.bf16.mxu0 0
        %2523 = vmatpush1.bf16.msra.mxu0 0
        %2524 = vmatprep.subr.bf16.mxu0 0
        %2525 = vmatpush1.bf16.msra.mxu0 0
        %2526 = vmatprep.subr.bf16.mxu0 0
        %2527 = vmatpush1.bf16.msra.mxu0 0
        %2528 = vmatprep.subr.bf16.mxu0 0
        %2529 = vmatpush1.bf16.msra.mxu0 0
        %2530 = vmatprep.subr.bf16.mxu0 0
        %2531 = vmatpush1.bf16.msra.mxu0 0
        %2532 = vmatprep.subr.bf16.mxu0 0
        %2533 = vmatpush1.bf16.msra.mxu0 0
        %2534 = vmatprep.subr.bf16.mxu0 0
        %2535 = vmatpush1.bf16.msra.mxu0 0
        %2536 = vmatprep.subr.bf16.mxu0 0
        %2537 = vmatpush1.bf16.msra.mxu0 0
        %2538 = vmatprep.subr.bf16.mxu0 0
        %2539 = vmatpush1.bf16.msra.mxu0 0
        %2540 = vmatprep.subr.bf16.mxu0 0
        %2541 = vmatpush1.bf16.msra.mxu0 0
        %2542 = vmatprep.subr.bf16.mxu0 0
        %2543 = vmatpush1.bf16.msra.mxu0 0
        %2544 = vmatprep.subr.bf16.mxu0 0
        %2545 = vmatpush1.bf16.msra.mxu0 0
        %2546 = vmatprep.mubr.bf16.mxu0 0
        %2547 = vmatmul.mubr.bf16.gmra.mrb[0].mxu0 %v2512
        %v2548 = vpop.f32.mrb[0].mxu0
        %v2549 = vadd.f32 %v2497, %v2548
        %v2550 = vpop.f32.mrb[0].mxu0
        %v2551 = vpop.f32.mrb[0].mxu0
        %v2552 = vpop.f32.mrb[0].mxu0
        %2553 = vdwg.mxu0
        %v2554 = vadd.f32 %v1526, %v2549
        %v2555 = vld [vmem:[#allocation16] sm:$0x1]
        %v2556 = vld [vmem:[#allocation17] sm:$0x1]
        %v2557 = vsel %vm1556, %v2554, 0.0
        %2558 = vadd.xlane.f32.xlu0 %v2557
        %v2559 = vpop.xlane.xlu0 %2558
        %v2560 = vrcp.pop 32.0
        %v2561 = vmul.f32 %v2559, %v2560
        %v2562 = vmul.f32 %v2554, %v2554
        %v2563 = vsel %vm1556, %v2562, 0.0
        %2564 = vadd.xlane.f32.xlu0 %v2563
        %v2565 = vpop.xlane.xlu0 %2564
        %v2566 = vmul.f32 %v2565, %v2560
        %v2567 = vmul.f32 %v2561, %v2561
        %v2568 = vsub.f32 %v2566, %v2567
        %v2569 = vsub.f32 %v2554, %v2561
        %v2570 = vadd.f32 %v2568, 1e-05
        %v2571 = vrsqrt.pop %v2570
        %v2572 = vmul.f32 %v2569, %v2571
        %v2574 = vlaneseq
        %v2575 = vshrl.u32 %v2574, 7
        %v2576 = vsub.s32 0, %v2575
        %v2577 = vrot.slane %v2555, %v2576
        %v2579 = vmul.f32 %v2572, %v2577
        %v2581 = vlaneseq
        %v2582 = vshrl.u32 %v2581, 7
        %v2583 = vsub.s32 0, %v2582
        %v2584 = vrot.slane %v2556, %v2583
        %v2586 = vadd.f32 %v2579, %v2584
        %v2587 = vld [vmem:[%s17] sm:$0xf]
        %v2588 = vld [vmem:[%s17 + $0x4] sm:$0xf]
        %v2589 = vld [vmem:[%s17 + $0x8] sm:$0xf]
        %v2590 = vld [vmem:[%s17 + $0xc] sm:$0xf]
        %v2591 = vld [vmem:[#allocation13] sm:$0x1]
        %v2592 = vld [vmem:[%s21] sm:$0xf]
        %v2593 = vld [vmem:[%s21 + $0x4] sm:$0xf]
        %v2594 = vld [vmem:[%s21 + $0x8] sm:$0xf]
        %v2595 = vld [vmem:[%s21 + $0xc] sm:$0xf]
        %v2596 = vld [vmem:[%s21 + $0x10] sm:$0xf]
        %v2597 = vld [vmem:[%s21 + $0x14] sm:$0xf]
        %v2598 = vld [vmem:[%s21 + $0x18] sm:$0xf]
        %v2599 = vld [vmem:[%s21 + $0x1c] sm:$0xf]
        %v2600 = vld [vmem:[#allocation14] sm:$0x1]
        %v2601 = vpack.c.bf16 %v2586, %v2586
        %v2603 = vlaneseq
        %v2604 = vshrl.u32 %v2603, 7
        %v2605 = vsub.s32 0, %v2604
        %v2606 = vrot.slane %v2591, %v2605
        %v2612 = vunpack.c.l.b16 %v2587
        %v2613 = vunpack.c.l.b16 %v2588
        %v2614 = vunpack.c.l.b16 %v2589
        %v2615 = vunpack.c.l.b16 %v2590
        %v2616 = vpack.c.b16 %v2613, %v2612
        %v2617 = vpack.c.b16 %v2615, %v2614
        %v2621 = vsel %vm1556, %v2601, 0
        %2623 = vmatprep.subr.bf16.mxu0 0
        %2624 = vmatpush1.bf16.msra.mxu0 %v2616
        %2625 = vmatprep.subr.bf16.mxu0 0
        %2626 = vmatpush1.bf16.msra.mxu0 %v2617
        %2627 = vmatprep.subr.bf16.mxu0 0
        %2628 = vmatpush1.bf16.msra.mxu0 0
        %2629 = vmatprep.subr.bf16.mxu0 0
        %2630 = vmatpush1.bf16.msra.mxu0 0
        %2631 = vmatprep.subr.bf16.mxu0 0
        %2632 = vmatpush1.bf16.msra.mxu0 0
        %2633 = vmatprep.subr.bf16.mxu0 0
        %2634 = vmatpush1.bf16.msra.mxu0 0
        %2635 = vmatprep.subr.bf16.mxu0 0
        %2636 = vmatpush1.bf16.msra.mxu0 0
        %2637 = vmatprep.subr.bf16.mxu0 0
        %2638 = vmatpush1.bf16.msra.mxu0 0
        %2639 = vmatprep.subr.bf16.mxu0 0
        %2640 = vmatpush1.bf16.msra.mxu0 0
        %2641 = vmatprep.subr.bf16.mxu0 0
        %2642 = vmatpush1.bf16.msra.mxu0 0
        %2643 = vmatprep.subr.bf16.mxu0 0
        %2644 = vmatpush1.bf16.msra.mxu0 0
        %2645 = vmatprep.subr.bf16.mxu0 0
        %2646 = vmatpush1.bf16.msra.mxu0 0
        %2647 = vmatprep.subr.bf16.mxu0 0
        %2648 = vmatpush1.bf16.msra.mxu0 0
        %2649 = vmatprep.subr.bf16.mxu0 0
        %2650 = vmatpush1.bf16.msra.mxu0 0
        %2651 = vmatprep.subr.bf16.mxu0 0
        %2652 = vmatpush1.bf16.msra.mxu0 0
        %2653 = vmatprep.subr.bf16.mxu0 0
        %2654 = vmatpush1.bf16.msra.mxu0 0
        %2655 = vmatprep.mubr.bf16.mxu0 0
        %2656 = vmatmul.mubr.bf16.gmra.mrb[0].mxu0 %v2621
        %v2657 = vpop.f32.mrb[0].mxu0
        %v2658 = vadd.f32 %v2606, %v2657
        %v2659 = vpop.f32.mrb[0].mxu0
        %v2660 = vpop.f32.mrb[0].mxu0
        %v2661 = vpop.f32.mrb[0].mxu0
        %2662 = vdwg.mxu0
        %v2663 = vmax.f32 %v2658, 0.0
        %v2664 = vpack.c.bf16 %v2663, %v2663
        %v2666 = vlaneseq
        %v2667 = vshrl.u32 %v2666, 7
        %v2668 = vsub.s32 0, %v2667
        %v2669 = vrot.slane %v2600, %v2668
        %v2679 = vunpack.c.l.b16 %v2592
        %v2680 = vunpack.c.l.b16 %v2593
        %v2681 = vunpack.c.l.b16 %v2594
        %v2682 = vunpack.c.l.b16 %v2595
        %v2683 = vunpack.c.l.b16 %v2596
        %v2684 = vunpack.c.l.b16 %v2597
        %v2685 = vunpack.c.l.b16 %v2598
        %v2686 = vunpack.c.l.b16 %v2599
        %v2687 = vpack.c.b16 %v2680, %v2679
        %v2688 = vpack.c.b16 %v2682, %v2681
        %v2689 = vpack.c.b16 %v2684, %v2683
        %v2690 = vpack.c.b16 %v2686, %v2685
        %vm2695 = vcmask 523264
        %v2697 = vsel %vm2695, %v2664, 0
        %2699 = vmatprep.subr.bf16.mxu0 0
        %2700 = vmatpush1.bf16.msra.mxu0 %v2687
        %2701 = vmatprep.subr.bf16.mxu0 0
        %2702 = vmatpush1.bf16.msra.mxu0 %v2688
        %2703 = vmatprep.subr.bf16.mxu0 0
        %2704 = vmatpush1.bf16.msra.mxu0 %v2689
        %2705 = vmatprep.subr.bf16.mxu0 0
        %2706 = vmatpush1.bf16.msra.mxu0 %v2690
        %2707 = vmatprep.subr.bf16.mxu0 0
        %2708 = vmatpush1.bf16.msra.mxu0 0
        %2709 = vmatprep.subr.bf16.mxu0 0
        %2710 = vmatpush1.bf16.msra.mxu0 0
        %2711 = vmatprep.subr.bf16.mxu0 0
        %2712 = vmatpush1.bf16.msra.mxu0 0
        %2713 = vmatprep.subr.bf16.mxu0 0
        %2714 = vmatpush1.bf16.msra.mxu0 0
        %2715 = vmatprep.subr.bf16.mxu0 0
        %2716 = vmatpush1.bf16.msra.mxu0 0
        %2717 = vmatprep.subr.bf16.mxu0 0
        %2718 = vmatpush1.bf16.msra.mxu0 0
        %2719 = vmatprep.subr.bf16.mxu0 0
        %2720 = vmatpush1.bf16.msra.mxu0 0
        %2721 = vmatprep.subr.bf16.mxu0 0
        %2722 = vmatpush1.bf16.msra.mxu0 0
        %2723 = vmatprep.subr.bf16.mxu0 0
        %2724 = vmatpush1.bf16.msra.mxu0 0
        %2725 = vmatprep.subr.bf16.mxu0 0
        %2726 = vmatpush1.bf16.msra.mxu0 0
        %2727 = vmatprep.subr.bf16.mxu0 0
        %2728 = vmatpush1.bf16.msra.mxu0 0
        %2729 = vmatprep.subr.bf16.mxu0 0
        %2730 = vmatpush1.bf16.msra.mxu0 0
        %2731 = vmatprep.mubr.bf16.mxu0 0
        %2732 = vmatmul.mubr.bf16.gmra.mrb[0].mxu0 %v2697
        %v2733 = vpop.f32.mrb[0].mxu0
        %v2734 = vadd.f32 %v2669, %v2733
        %v2735 = vpop.f32.mrb[0].mxu0
        %v2736 = vpop.f32.mrb[0].mxu0
        %v2737 = vpop.f32.mrb[0].mxu0
        %2738 = vdwg.mxu0
        %v2739 = vadd.f32 %v2586, %v2734
        %v2740 = vld [vmem:[#allocation19] sm:$0x1]
        %v2741 = vld [vmem:[#allocation20] sm:$0x1]
        %v2742 = vsel %vm1556, %v2739, 0.0
        %2743 = vadd.xlane.f32.xlu0 %v2742
        %v2744 = vpop.xlane.xlu0 %2743
        %v2745 = vmul.f32 %v2744, %v2560
        %v2746 = vmul.f32 %v2739, %v2739
        %v2747 = vsel %vm1556, %v2746, 0.0
        %2748 = vadd.xlane.f32.xlu0 %v2747
        %v2749 = vpop.xlane.xlu0 %2748
        %v2750 = vmul.f32 %v2749, %v2560
        %v2751 = vmul.f32 %v2745, %v2745
        %v2752 = vsub.f32 %v2750, %v2751
        %v2753 = vsub.f32 %v2739, %v2745
        %v2754 = vadd.f32 %v2752, 1e-05
        %v2755 = vrsqrt.pop %v2754
        %v2756 = vmul.f32 %v2753, %v2755
        %v2758 = vlaneseq
        %v2759 = vshrl.u32 %v2758, 7
        %v2760 = vsub.s32 0, %v2759
        %v2761 = vrot.slane %v2740, %v2760
        %v2763 = vmul.f32 %v2756, %v2761
        %v2765 = vlaneseq
        %v2766 = vshrl.u32 %v2765, 7
        %v2767 = vsub.s32 0, %v2766
        %v2768 = vrot.slane %v2741, %v2767
        %v2770 = vadd.f32 %v2763, %v2768
        %s2771 = scalar_lea.vmem %s9, 16
        %v2772 = vld [vmem:[%s2771] sm:$0xf]
        %v2773 = vld [vmem:[%s2771 + $0x4] sm:$0xf]
        %v2774 = vld [vmem:[%s2771 + $0x8] sm:$0xf]
        %v2775 = vld [vmem:[%s2771 + $0xc] sm:$0xf]
        %s2776 = scalar_lea.vmem [#allocation10], 1
        %v2777 = vld [vmem:[%s2776] sm:$0x1]
        %s2778 = scalar_lea.vmem %s13, 16
        %v2779 = vld [vmem:[%s2778] sm:$0xf]
        %v2780 = vld [vmem:[%s2778 + $0x4] sm:$0xf]
        %v2781 = vld [vmem:[%s2778 + $0x8] sm:$0xf]
        %v2782 = vld [vmem:[%s2778 + $0xc] sm:$0xf]
        %s2783 = scalar_lea.vmem [#allocation11], 1
        %v2784 = vld [vmem:[%s2783] sm:$0x1]
        %v2785 = vpack.c.bf16 %v2770, %v2770
        %v2787 = vlaneseq
        %v2788 = vshrl.u32 %v2787, 7
        %v2789 = vsub.s32 0, %v2788
        %v2790 = vrot.slane %v2777, %v2789
        %v2796 = vunpack.c.l.b16 %v2772
        %v2797 = vunpack.c.l.b16 %v2773
        %v2798 = vunpack.c.l.b16 %v2774
        %v2799 = vunpack.c.l.b16 %v2775
        %v2800 = vpack.c.b16 %v2797, %v2796
        %v2801 = vpack.c.b16 %v2799, %v2798
        %v2805 = vsel %vm1556, %v2785, 0
        %2807 = vmatprep.subr.bf16.mxu0 0
        %2808 = vmatpush1.bf16.msra.mxu0 %v2800
        %2809 = vmatprep.subr.bf16.mxu0 0
        %2810 = vmatpush1.bf16.msra.mxu0 %v2801
        %2811 = vmatprep.subr.bf16.mxu0 0
        %2812 = vmatpush1.bf16.msra.mxu0 0
        %2813 = vmatprep.subr.bf16.mxu0 0
        %2814 = vmatpush1.bf16.msra.mxu0 0
        %2815 = vmatprep.subr.bf16.mxu0 0
        %2816 = vmatpush1.bf16.msra.mxu0 0
        %2817 = vmatprep.subr.bf16.mxu0 0
        %2818 = vmatpush1.bf16.msra.mxu0 0
        %2819 = vmatprep.subr.bf16.mxu0 0
        %2820 = vmatpush1.bf16.msra.mxu0 0
        %2821 = vmatprep.subr.bf16.mxu0 0
        %2822 = vmatpush1.bf16.msra.mxu0 0
        %2823 = vmatprep.subr.bf16.mxu0 0
        %2824 = vmatpush1.bf16.msra.mxu0 0
        %2825 = vmatprep.subr.bf16.mxu0 0
        %2826 = vmatpush1.bf16.msra.mxu0 0
        %2827 = vmatprep.subr.bf16.mxu0 0
        %2828 = vmatpush1.bf16.msra.mxu0 0
        %2829 = vmatprep.subr.bf16.mxu0 0
        %2830 = vmatpush1.bf16.msra.mxu0 0
        %2831 = vmatprep.subr.bf16.mxu0 0
        %2832 = vmatpush1.bf16.msra.mxu0 0
        %2833 = vmatprep.subr.bf16.mxu0 0
        %2834 = vmatpush1.bf16.msra.mxu0 0
        %2835 = vmatprep.subr.bf16.mxu0 0
        %2836 = vmatpush1.bf16.msra.mxu0 0
        %2837 = vmatprep.subr.bf16.mxu0 0
        %2838 = vmatpush1.bf16.msra.mxu0 0
        %2839 = vmatprep.mubr.bf16.mxu0 0
        %2840 = vmatmul.mubr.bf16.gmra.mrb[0].mxu0 %v2805
        %v2841 = vpop.f32.mrb[0].mxu0
        %v2842 = vadd.f32 %v2790, %v2841
        %v2843 = vpop.f32.mrb[0].mxu0
        %v2844 = vpop.f32.mrb[0].mxu0
        %v2845 = vpop.f32.mrb[0].mxu0
        %2846 = vdwg.mxu0
        %2847 = vxpose.xlu0.b32.start [1/16] %v2842, 128
        %2848 = vxpose.xlu0.b32.cont [2/16] 0.0, 128
        %2849 = vxpose.xlu0.b32.cont [3/16] 0.0, 128
        %2850 = vxpose.xlu0.b32.cont [4/16] 0.0, 128
        %2851 = vxpose.xlu0.b32.cont [5/16] 0.0, 128
        %2852 = vxpose.xlu0.b32.cont [6/16] 0.0, 128
        %2853 = vxpose.xlu0.b32.cont [7/16] 0.0, 128
        %2854 = vxpose.xlu0.b32.cont [8/16] 0.0, 128
        %2855 = vxpose.xlu0.b32.cont [9/16] 0.0, 128
        %2856 = vxpose.xlu0.b32.cont [10/16] 0.0, 128
        %2857 = vxpose.xlu0.b32.cont [11/16] 0.0, 128
        %2858 = vxpose.xlu0.b32.cont [12/16] 0.0, 128
        %2859 = vxpose.xlu0.b32.cont [13/16] 0.0, 128
        %2860 = vxpose.xlu0.b32.cont [14/16] 0.0, 128
        %2861 = vxpose.xlu0.b32.cont [15/16] 0.0, 128
        %2862 = vxpose.xlu0.b32.end [16/16] 0.0, 128
        %v2863 = vpop.trf.xlu0
        %v2864 = vpop.trf.xlu0
        %v2865 = vpop.trf.xlu0
        %v2866 = vpop.trf.xlu0
        %v2867 = vpop.trf.xlu0
        %v2868 = vpop.trf.xlu0
        %v2869 = vpop.trf.xlu0
        %v2870 = vpop.trf.xlu0
        %v2871 = vpop.trf.xlu0
        %v2872 = vpop.trf.xlu0
        %v2873 = vpop.trf.xlu0
        %v2874 = vpop.trf.xlu0
        %v2875 = vpop.trf.xlu0
        %v2876 = vpop.trf.xlu0
        %v2877 = vpop.trf.xlu0
        %v2878 = vpop.trf.xlu0
        %2879 = vxpose.xlu0.b32.start [1/16] %v2863, 128
        %2880 = vxpose.xlu0.b32.cont [2/16] 0.0, 128
        %2881 = vxpose.xlu0.b32.cont [3/16] 0.0, 128
        %2882 = vxpose.xlu0.b32.cont [4/16] 0.0, 128
        %2883 = vxpose.xlu0.b32.cont [5/16] 0.0, 128
        %2884 = vxpose.xlu0.b32.cont [6/16] 0.0, 128
        %2885 = vxpose.xlu0.b32.cont [7/16] 0.0, 128
        %2886 = vxpose.xlu0.b32.cont [8/16] 0.0, 128
        %2887 = vxpose.xlu0.b32.cont [9/16] 0.0, 128
        %2888 = vxpose.xlu0.b32.cont [10/16] 0.0, 128
        %2889 = vxpose.xlu0.b32.cont [11/16] 0.0, 128
        %2890 = vxpose.xlu0.b32.cont [12/16] 0.0, 128
        %2891 = vxpose.xlu0.b32.cont [13/16] 0.0, 128
        %2892 = vxpose.xlu0.b32.cont [14/16] 0.0, 128
        %2893 = vxpose.xlu0.b32.cont [15/16] 0.0, 128
        %2894 = vxpose.xlu0.b32.end [16/16] 0.0, 128
        %v2895 = vpop.trf.xlu0
        %v2896 = vpop.trf.xlu0
        %v2897 = vpop.trf.xlu0
        %v2898 = vpop.trf.xlu0
        %v2899 = vpop.trf.xlu0
        %v2900 = vpop.trf.xlu0
        %v2901 = vpop.trf.xlu0
        %v2902 = vpop.trf.xlu0
        %v2903 = vpop.trf.xlu0
        %v2904 = vpop.trf.xlu0
        %v2905 = vpop.trf.xlu0
        %v2906 = vpop.trf.xlu0
        %v2907 = vpop.trf.xlu0
        %v2908 = vpop.trf.xlu0
        %v2909 = vpop.trf.xlu0
        %v2910 = vpop.trf.xlu0
        %2911 = vxpose.xlu0.b32.start [1/16] %v2864, 128
        %2912 = vxpose.xlu0.b32.cont [2/16] 0.0, 128
        %2913 = vxpose.xlu0.b32.cont [3/16] 0.0, 128
        %2914 = vxpose.xlu0.b32.cont [4/16] 0.0, 128
        %2915 = vxpose.xlu0.b32.cont [5/16] 0.0, 128
        %2916 = vxpose.xlu0.b32.cont [6/16] 0.0, 128
        %2917 = vxpose.xlu0.b32.cont [7/16] 0.0, 128
        %2918 = vxpose.xlu0.b32.cont [8/16] 0.0, 128
        %2919 = vxpose.xlu0.b32.cont [9/16] 0.0, 128
        %2920 = vxpose.xlu0.b32.cont [10/16] 0.0, 128
        %2921 = vxpose.xlu0.b32.cont [11/16] 0.0, 128
        %2922 = vxpose.xlu0.b32.cont [12/16] 0.0, 128
        %2923 = vxpose.xlu0.b32.cont [13/16] 0.0, 128
        %2924 = vxpose.xlu0.b32.cont [14/16] 0.0, 128
        %2925 = vxpose.xlu0.b32.cont [15/16] 0.0, 128
        %2926 = vxpose.xlu0.b32.end [16/16] 0.0, 128
        %v2927 = vpop.trf.xlu0
        %v2928 = vpop.trf.xlu0
        %v2929 = vpop.trf.xlu0
        %v2930 = vpop.trf.xlu0
        %v2931 = vpop.trf.xlu0
        %v2932 = vpop.trf.xlu0
        %v2933 = vpop.trf.xlu0
        %v2934 = vpop.trf.xlu0
        %v2935 = vpop.trf.xlu0
        %v2936 = vpop.trf.xlu0
        %v2937 = vpop.trf.xlu0
        %v2938 = vpop.trf.xlu0
        %v2939 = vpop.trf.xlu0
        %v2940 = vpop.trf.xlu0
        %v2941 = vpop.trf.xlu0
        %v2942 = vpop.trf.xlu0
        %2943 = vxpose.xlu0.b32.start [1/16] %v2865, 128
        %2944 = vxpose.xlu0.b32.cont [2/16] 0.0, 128
        %2945 = vxpose.xlu0.b32.cont [3/16] 0.0, 128
        %2946 = vxpose.xlu0.b32.cont [4/16] 0.0, 128
        %2947 = vxpose.xlu0.b32.cont [5/16] 0.0, 128
        %2948 = vxpose.xlu0.b32.cont [6/16] 0.0, 128
        %2949 = vxpose.xlu0.b32.cont [7/16] 0.0, 128
        %2950 = vxpose.xlu0.b32.cont [8/16] 0.0, 128
        %2951 = vxpose.xlu0.b32.cont [9/16] 0.0, 128
        %2952 = vxpose.xlu0.b32.cont [10/16] 0.0, 128
        %2953 = vxpose.xlu0.b32.cont [11/16] 0.0, 128
        %2954 = vxpose.xlu0.b32.cont [12/16] 0.0, 128
        %2955 = vxpose.xlu0.b32.cont [13/16] 0.0, 128
        %2956 = vxpose.xlu0.b32.cont [14/16] 0.0, 128
        %2957 = vxpose.xlu0.b32.cont [15/16] 0.0, 128
        %2958 = vxpose.xlu0.b32.end [16/16] 0.0, 128
        %v2959 = vpop.trf.xlu0
        %v2960 = vpop.trf.xlu0
        %v2961 = vpop.trf.xlu0
        %v2962 = vpop.trf.xlu0
        %v2963 = vpop.trf.xlu0
        %v2964 = vpop.trf.xlu0
        %v2965 = vpop.trf.xlu0
        %v2966 = vpop.trf.xlu0
        %v2967 = vpop.trf.xlu0
        %v2968 = vpop.trf.xlu0
        %v2969 = vpop.trf.xlu0
        %v2970 = vpop.trf.xlu0
        %v2971 = vpop.trf.xlu0
        %v2972 = vpop.trf.xlu0
        %v2973 = vpop.trf.xlu0
        %v2974 = vpop.trf.xlu0
        %2975 = vxpose.xlu0.b32.start [1/16] %v2866, 128
        %2976 = vxpose.xlu0.b32.cont [2/16] 0.0, 128
        %2977 = vxpose.xlu0.b32.cont [3/16] 0.0, 128
        %2978 = vxpose.xlu0.b32.cont [4/16] 0.0, 128
        %2979 = vxpose.xlu0.b32.cont [5/16] 0.0, 128
        %2980 = vxpose.xlu0.b32.cont [6/16] 0.0, 128
        %2981 = vxpose.xlu0.b32.cont [7/16] 0.0, 128
        %2982 = vxpose.xlu0.b32.cont [8/16] 0.0, 128
        %2983 = vxpose.xlu0.b32.cont [9/16] 0.0, 128
        %2984 = vxpose.xlu0.b32.cont [10/16] 0.0, 128
        %2985 = vxpose.xlu0.b32.cont [11/16] 0.0, 128
        %2986 = vxpose.xlu0.b32.cont [12/16] 0.0, 128
        %2987 = vxpose.xlu0.b32.cont [13/16] 0.0, 128
        %2988 = vxpose.xlu0.b32.cont [14/16] 0.0, 128
        %2989 = vxpose.xlu0.b32.cont [15/16] 0.0, 128
        %2990 = vxpose.xlu0.b32.end [16/16] 0.0, 128
        %v2991 = vpop.trf.xlu0
        %v2992 = vpop.trf.xlu0
        %v2993 = vpop.trf.xlu0
        %v2994 = vpop.trf.xlu0
        %v2995 = vpop.trf.xlu0
        %v2996 = vpop.trf.xlu0
        %v2997 = vpop.trf.xlu0
        %v2998 = vpop.trf.xlu0
        %v2999 = vpop.trf.xlu0
        %v3000 = vpop.trf.xlu0
        %v3001 = vpop.trf.xlu0
        %v3002 = vpop.trf.xlu0
        %v3003 = vpop.trf.xlu0
        %v3004 = vpop.trf.xlu0
        %v3005 = vpop.trf.xlu0
        %v3006 = vpop.trf.xlu0
        %3007 = vxpose.xlu0.b32.start [1/16] %v2871, 128
        %3008 = vxpose.xlu0.b32.cont [2/16] 0.0, 128
        %3009 = vxpose.xlu0.b32.cont [3/16] 0.0, 128
        %3010 = vxpose.xlu0.b32.cont [4/16] 0.0, 128
        %3011 = vxpose.xlu0.b32.cont [5/16] 0.0, 128
        %3012 = vxpose.xlu0.b32.cont [6/16] 0.0, 128
        %3013 = vxpose.xlu0.b32.cont [7/16] 0.0, 128
        %3014 = vxpose.xlu0.b32.cont [8/16] 0.0, 128
        %3015 = vxpose.xlu0.b32.cont [9/16] 0.0, 128
        %3016 = vxpose.xlu0.b32.cont [10/16] 0.0, 128
        %3017 = vxpose.xlu0.b32.cont [11/16] 0.0, 128
        %3018 = vxpose.xlu0.b32.cont [12/16] 0.0, 128
        %3019 = vxpose.xlu0.b32.cont [13/16] 0.0, 128
        %3020 = vxpose.xlu0.b32.cont [14/16] 0.0, 128
        %3021 = vxpose.xlu0.b32.cont [15/16] 0.0, 128
        %3022 = vxpose.xlu0.b32.end [16/16] 0.0, 128
        %v3023 = vpop.trf.xlu0
        %v3024 = vpop.trf.xlu0
        %v3025 = vpop.trf.xlu0
        %v3026 = vpop.trf.xlu0
        %v3027 = vpop.trf.xlu0
        %v3028 = vpop.trf.xlu0
        %v3029 = vpop.trf.xlu0
        %v3030 = vpop.trf.xlu0
        %v3031 = vpop.trf.xlu0
        %v3032 = vpop.trf.xlu0
        %v3033 = vpop.trf.xlu0
        %v3034 = vpop.trf.xlu0
        %v3035 = vpop.trf.xlu0
        %v3036 = vpop.trf.xlu0
        %v3037 = vpop.trf.xlu0
        %v3038 = vpop.trf.xlu0
        %3039 = vxpose.xlu0.b32.start [1/16] %v2872, 128
        %3040 = vxpose.xlu0.b32.cont [2/16] 0.0, 128
        %3041 = vxpose.xlu0.b32.cont [3/16] 0.0, 128
        %3042 = vxpose.xlu0.b32.cont [4/16] 0.0, 128
        %3043 = vxpose.xlu0.b32.cont [5/16] 0.0, 128
        %3044 = vxpose.xlu0.b32.cont [6/16] 0.0, 128
        %3045 = vxpose.xlu0.b32.cont [7/16] 0.0, 128
        %3046 = vxpose.xlu0.b32.cont [8/16] 0.0, 128
        %3047 = vxpose.xlu0.b32.cont [9/16] 0.0, 128
        %3048 = vxpose.xlu0.b32.cont [10/16] 0.0, 128
        %3049 = vxpose.xlu0.b32.cont [11/16] 0.0, 128
        %3050 = vxpose.xlu0.b32.cont [12/16] 0.0, 128
        %3051 = vxpose.xlu0.b32.cont [13/16] 0.0, 128
        %3052 = vxpose.xlu0.b32.cont [14/16] 0.0, 128
        %3053 = vxpose.xlu0.b32.cont [15/16] 0.0, 128
        %3054 = vxpose.xlu0.b32.end [16/16] 0.0, 128
        %v3055 = vpop.trf.xlu0
        %v3056 = vpop.trf.xlu0
        %v3057 = vpop.trf.xlu0
        %v3058 = vpop.trf.xlu0
        %v3059 = vpop.trf.xlu0
        %v3060 = vpop.trf.xlu0
        %v3061 = vpop.trf.xlu0
        %v3062 = vpop.trf.xlu0
        %v3063 = vpop.trf.xlu0
        %v3064 = vpop.trf.xlu0
        %v3065 = vpop.trf.xlu0
        %v3066 = vpop.trf.xlu0
        %v3067 = vpop.trf.xlu0
        %v3068 = vpop.trf.xlu0
        %v3069 = vpop.trf.xlu0
        %v3070 = vpop.trf.xlu0
        %3071 = vxpose.xlu0.b32.start [1/16] %v2873, 128
        %3072 = vxpose.xlu0.b32.cont [2/16] 0.0, 128
        %3073 = vxpose.xlu0.b32.cont [3/16] 0.0, 128
        %3074 = vxpose.xlu0.b32.cont [4/16] 0.0, 128
        %3075 = vxpose.xlu0.b32.cont [5/16] 0.0, 128
        %3076 = vxpose.xlu0.b32.cont [6/16] 0.0, 128
        %3077 = vxpose.xlu0.b32.cont [7/16] 0.0, 128
        %3078 = vxpose.xlu0.b32.cont [8/16] 0.0, 128
        %3079 = vxpose.xlu0.b32.cont [9/16] 0.0, 128
        %3080 = vxpose.xlu0.b32.cont [10/16] 0.0, 128
        %3081 = vxpose.xlu0.b32.cont [11/16] 0.0, 128
        %3082 = vxpose.xlu0.b32.cont [12/16] 0.0, 128
        %3083 = vxpose.xlu0.b32.cont [13/16] 0.0, 128
        %3084 = vxpose.xlu0.b32.cont [14/16] 0.0, 128
        %3085 = vxpose.xlu0.b32.cont [15/16] 0.0, 128
        %3086 = vxpose.xlu0.b32.end [16/16] 0.0, 128
        %v3087 = vpop.trf.xlu0
        %v3088 = vpop.trf.xlu0
        %v3089 = vpop.trf.xlu0
        %v3090 = vpop.trf.xlu0
        %v3091 = vpop.trf.xlu0
        %v3092 = vpop.trf.xlu0
        %v3093 = vpop.trf.xlu0
        %v3094 = vpop.trf.xlu0
        %v3095 = vpop.trf.xlu0
        %v3096 = vpop.trf.xlu0
        %v3097 = vpop.trf.xlu0
        %v3098 = vpop.trf.xlu0
        %v3099 = vpop.trf.xlu0
        %v3100 = vpop.trf.xlu0
        %v3101 = vpop.trf.xlu0
        %v3102 = vpop.trf.xlu0
        %3103 = vxpose.xlu0.b32.start [1/16] %v2874, 128
        %3104 = vxpose.xlu0.b32.cont [2/16] 0.0, 128
        %3105 = vxpose.xlu0.b32.cont [3/16] 0.0, 128
        %3106 = vxpose.xlu0.b32.cont [4/16] 0.0, 128
        %3107 = vxpose.xlu0.b32.cont [5/16] 0.0, 128
        %3108 = vxpose.xlu0.b32.cont [6/16] 0.0, 128
        %3109 = vxpose.xlu0.b32.cont [7/16] 0.0, 128
        %3110 = vxpose.xlu0.b32.cont [8/16] 0.0, 128
        %3111 = vxpose.xlu0.b32.cont [9/16] 0.0, 128
        %3112 = vxpose.xlu0.b32.cont [10/16] 0.0, 128
        %3113 = vxpose.xlu0.b32.cont [11/16] 0.0, 128
        %3114 = vxpose.xlu0.b32.cont [12/16] 0.0, 128
        %3115 = vxpose.xlu0.b32.cont [13/16] 0.0, 128
        %3116 = vxpose.xlu0.b32.cont [14/16] 0.0, 128
        %3117 = vxpose.xlu0.b32.cont [15/16] 0.0, 128
        %3118 = vxpose.xlu0.b32.end [16/16] 0.0, 128
        %v3119 = vpop.trf.xlu0
        %v3120 = vpop.trf.xlu0
        %v3121 = vpop.trf.xlu0
        %v3122 = vpop.trf.xlu0
        %v3123 = vpop.trf.xlu0
        %v3124 = vpop.trf.xlu0
        %v3125 = vpop.trf.xlu0
        %v3126 = vpop.trf.xlu0
        %v3127 = vpop.trf.xlu0
        %v3128 = vpop.trf.xlu0
        %v3129 = vpop.trf.xlu0
        %v3130 = vpop.trf.xlu0
        %v3131 = vpop.trf.xlu0
        %v3132 = vpop.trf.xlu0
        %v3133 = vpop.trf.xlu0
        %v3134 = vpop.trf.xlu0
        %v3135 = vpack.c.bf16 %v2895, %v2895
        %v3136 = vpack.c.bf16 %v2927, %v2927
        %v3137 = vpack.c.bf16 %v2959, %v2959
        %v3138 = vpack.c.bf16 %v2991, %v2991
        %v3139 = vpack.c.bf16 %v2867, %v2867
        %v3140 = vpack.c.bf16 %v2868, %v2868
        %v3141 = vpack.c.bf16 %v2869, %v2869
        %v3142 = vpack.c.bf16 %v2870, %v2870
        %v3144 = vsel %vm1896, %v3135, 0
        %v3147 = vsel %vm1900, %v3139, 0
        %3149 = vmatprep.subr.bf16.mxu0 0
        %3150 = vmatpush1.bf16.msra.mxu0 %v3147
        %3151 = vmatprep.subr.bf16.mxu0 0
        %3152 = vmatpush1.bf16.msra.mxu0 0
        %3153 = vmatprep.subr.bf16.mxu0 0
        %3154 = vmatpush1.bf16.msra.mxu0 0
        %3155 = vmatprep.subr.bf16.mxu0 0
        %3156 = vmatpush1.bf16.msra.mxu0 0
        %3157 = vmatprep.subr.bf16.mxu0 0
        %3158 = vmatpush1.bf16.msra.mxu0 0
        %3159 = vmatprep.subr.bf16.mxu0 0
        %3160 = vmatpush1.bf16.msra.mxu0 0
        %3161 = vmatprep.subr.bf16.mxu0 0
        %3162 = vmatpush1.bf16.msra.mxu0 0
        %3163 = vmatprep.subr.bf16.mxu0 0
        %3164 = vmatpush1.bf16.msra.mxu0 0
        %3165 = vmatprep.subr.bf16.mxu0 0
        %3166 = vmatpush1.bf16.msra.mxu0 0
        %3167 = vmatprep.subr.bf16.mxu0 0
        %3168 = vmatpush1.bf16.msra.mxu0 0
        %3169 = vmatprep.subr.bf16.mxu0 0
        %3170 = vmatpush1.bf16.msra.mxu0 0
        %3171 = vmatprep.subr.bf16.mxu0 0
        %3172 = vmatpush1.bf16.msra.mxu0 0
        %3173 = vmatprep.subr.bf16.mxu0 0
        %3174 = vmatpush1.bf16.msra.mxu0 0
        %3175 = vmatprep.subr.bf16.mxu0 0
        %3176 = vmatpush1.bf16.msra.mxu0 0
        %3177 = vmatprep.subr.bf16.mxu0 0
        %3178 = vmatpush1.bf16.msra.mxu0 0
        %3179 = vmatprep.subr.bf16.mxu0 0
        %3180 = vmatpush1.bf16.msra.mxu0 0
        %3181 = vmatprep.mubr.bf16.mxu0 0
        %3182 = vmatmul.mubr.bf16.gmra.mrb[0].mxu0 %v3144
        %v3183 = vpop.f32.mrb[0].mxu0
        %v3184 = vadd.f32 0.0, %v3183
        %v3185 = vpop.f32.mrb[0].mxu0
        %v3186 = vpop.f32.mrb[0].mxu0
        %v3187 = vpop.f32.mrb[0].mxu0
        %3188 = vdwg.mxu0
        %v3190 = vsel %vm1896, %v3136, 0
        %v3193 = vsel %vm1900, %v3140, 0
        %3195 = vmatprep.subr.bf16.mxu0 0
        %3196 = vmatpush1.bf16.msra.mxu0 %v3193
        %3197 = vmatprep.subr.bf16.mxu0 0
        %3198 = vmatpush1.bf16.msra.mxu0 0
        %3199 = vmatprep.subr.bf16.mxu0 0
        %3200 = vmatpush1.bf16.msra.mxu0 0
        %3201 = vmatprep.subr.bf16.mxu0 0
        %3202 = vmatpush1.bf16.msra.mxu0 0
        %3203 = vmatprep.subr.bf16.mxu0 0
        %3204 = vmatpush1.bf16.msra.mxu0 0
        %3205 = vmatprep.subr.bf16.mxu0 0
        %3206 = vmatpush1.bf16.msra.mxu0 0
        %3207 = vmatprep.subr.bf16.mxu0 0
        %3208 = vmatpush1.bf16.msra.mxu0 0
        %3209 = vmatprep.subr.bf16.mxu0 0
        %3210 = vmatpush1.bf16.msra.mxu0 0
        %3211 = vmatprep.subr.bf16.mxu0 0
        %3212 = vmatpush1.bf16.msra.mxu0 0
        %3213 = vmatprep.subr.bf16.mxu0 0
        %3214 = vmatpush1.bf16.msra.mxu0 0
        %3215 = vmatprep.subr.bf16.mxu0 0
        %3216 = vmatpush1.bf16.msra.mxu0 0
        %3217 = vmatprep.subr.bf16.mxu0 0
        %3218 = vmatpush1.bf16.msra.mxu0 0
        %3219 = vmatprep.subr.bf16.mxu0 0
        %3220 = vmatpush1.bf16.msra.mxu0 0
        %3221 = vmatprep.subr.bf16.mxu0 0
        %3222 = vmatpush1.bf16.msra.mxu0 0
        %3223 = vmatprep.subr.bf16.mxu0 0
        %3224 = vmatpush1.bf16.msra.mxu0 0
        %3225 = vmatprep.subr.bf16.mxu0 0
        %3226 = vmatpush1.bf16.msra.mxu0 0
        %3227 = vmatprep.mubr.bf16.mxu0 0
        %3228 = vmatmul.mubr.bf16.gmra.mrb[0].mxu0 %v3190
        %v3229 = vpop.f32.mrb[0].mxu0
        %v3230 = vadd.f32 0.0, %v3229
        %v3231 = vpop.f32.mrb[0].mxu0
        %v3232 = vpop.f32.mrb[0].mxu0
        %v3233 = vpop.f32.mrb[0].mxu0
        %3234 = vdwg.mxu0
        %v3236 = vsel %vm1896, %v3137, 0
        %v3239 = vsel %vm1900, %v3141, 0
        %3241 = vmatprep.subr.bf16.mxu0 0
        %3242 = vmatpush1.bf16.msra.mxu0 %v3239
        %3243 = vmatprep.subr.bf16.mxu0 0
        %3244 = vmatpush1.bf16.msra.mxu0 0
        %3245 = vmatprep.subr.bf16.mxu0 0
        %3246 = vmatpush1.bf16.msra.mxu0 0
        %3247 = vmatprep.subr.bf16.mxu0 0
        %3248 = vmatpush1.bf16.msra.mxu0 0
        %3249 = vmatprep.subr.bf16.mxu0 0
        %3250 = vmatpush1.bf16.msra.mxu0 0
        %3251 = vmatprep.subr.bf16.mxu0 0
        %3252 = vmatpush1.bf16.msra.mxu0 0
        %3253 = vmatprep.subr.bf16.mxu0 0
        %3254 = vmatpush1.bf16.msra.mxu0 0
        %3255 = vmatprep.subr.bf16.mxu0 0
        %3256 = vmatpush1.bf16.msra.mxu0 0
        %3257 = vmatprep.subr.bf16.mxu0 0
        %3258 = vmatpush1.bf16.msra.mxu0 0
        %3259 = vmatprep.subr.bf16.mxu0 0
        %3260 = vmatpush1.bf16.msra.mxu0 0
        %3261 = vmatprep.subr.bf16.mxu0 0
        %3262 = vmatpush1.bf16.msra.mxu0 0
        %3263 = vmatprep.subr.bf16.mxu0 0
        %3264 = vmatpush1.bf16.msra.mxu0 0
        %3265 = vmatprep.subr.bf16.mxu0 0
        %3266 = vmatpush1.bf16.msra.mxu0 0
        %3267 = vmatprep.subr.bf16.mxu0 0
        %3268 = vmatpush1.bf16.msra.mxu0 0
        %3269 = vmatprep.subr.bf16.mxu0 0
        %3270 = vmatpush1.bf16.msra.mxu0 0
        %3271 = vmatprep.subr.bf16.mxu0 0
        %3272 = vmatpush1.bf16.msra.mxu0 0
        %3273 = vmatprep.mubr.bf16.mxu0 0
        %3274 = vmatmul.mubr.bf16.gmra.mrb[0].mxu0 %v3236
        %v3275 = vpop.f32.mrb[0].mxu0
        %v3276 = vadd.f32 0.0, %v3275
        %v3277 = vpop.f32.mrb[0].mxu0
        %v3278 = vpop.f32.mrb[0].mxu0
        %v3279 = vpop.f32.mrb[0].mxu0
        %3280 = vdwg.mxu0
        %v3282 = vsel %vm1896, %v3138, 0
        %v3285 = vsel %vm1900, %v3142, 0
        %3287 = vmatprep.subr.bf16.mxu0 0
        %3288 = vmatpush1.bf16.msra.mxu0 %v3285
        %3289 = vmatprep.subr.bf16.mxu0 0
        %3290 = vmatpush1.bf16.msra.mxu0 0
        %3291 = vmatprep.subr.bf16.mxu0 0
        %3292 = vmatpush1.bf16.msra.mxu0 0
        %3293 = vmatprep.subr.bf16.mxu0 0
        %3294 = vmatpush1.bf16.msra.mxu0 0
        %3295 = vmatprep.subr.bf16.mxu0 0
        %3296 = vmatpush1.bf16.msra.mxu0 0
        %3297 = vmatprep.subr.bf16.mxu0 0
        %3298 = vmatpush1.bf16.msra.mxu0 0
        %3299 = vmatprep.subr.bf16.mxu0 0
        %3300 = vmatpush1.bf16.msra.mxu0 0
        %3301 = vmatprep.subr.bf16.mxu0 0
        %3302 = vmatpush1.bf16.msra.mxu0 0
        %3303 = vmatprep.subr.bf16.mxu0 0
        %3304 = vmatpush1.bf16.msra.mxu0 0
        %3305 = vmatprep.subr.bf16.mxu0 0
        %3306 = vmatpush1.bf16.msra.mxu0 0
        %3307 = vmatprep.subr.bf16.mxu0 0
        %3308 = vmatpush1.bf16.msra.mxu0 0
        %3309 = vmatprep.subr.bf16.mxu0 0
        %3310 = vmatpush1.bf16.msra.mxu0 0
        %3311 = vmatprep.subr.bf16.mxu0 0
        %3312 = vmatpush1.bf16.msra.mxu0 0
        %3313 = vmatprep.subr.bf16.mxu0 0
        %3314 = vmatpush1.bf16.msra.mxu0 0
        %3315 = vmatprep.subr.bf16.mxu0 0
        %3316 = vmatpush1.bf16.msra.mxu0 0
        %3317 = vmatprep.subr.bf16.mxu0 0
        %3318 = vmatpush1.bf16.msra.mxu0 0
        %3319 = vmatprep.mubr.bf16.mxu0 0
        %3320 = vmatmul.mubr.bf16.gmra.mrb[0].mxu0 %v3282
        %v3321 = vpop.f32.mrb[0].mxu0
        %v3322 = vadd.f32 0.0, %v3321
        %v3323 = vpop.f32.mrb[0].mxu0
        %v3324 = vpop.f32.mrb[0].mxu0
        %v3325 = vpop.f32.mrb[0].mxu0
        %3326 = vdwg.mxu0
        %v3327 = vmul.f32 %v3184, 0.35355338
        %v3328 = vmul.f32 %v3230, 0.35355338
        %v3329 = vmul.f32 %v3276, 0.35355338
        %v3330 = vmul.f32 %v3322, 0.35355338
        %v3331 = vadd.f32 %v3327, %v2090
        %v3332 = vadd.f32 %v3328, %v2090
        %v3333 = vadd.f32 %v3329, %v2090
        %v3334 = vadd.f32 %v3330, %v2090
        %v3335 = vsel %vm1896, %v3331, -inf
        %3336 = vmax.xlane.f32.xlu0 %v3335
        %v3337 = vpop.xlane.xlu0 %3336
        %v3338 = vsel %vm1896, %v3332, -inf
        %3339 = vmax.xlane.f32.xlu0 %v3338
        %v3340 = vpop.xlane.xlu0 %3339
        %v3341 = vsel %vm1896, %v3333, -inf
        %3342 = vmax.xlane.f32.xlu0 %v3341
        %v3343 = vpop.xlane.xlu0 %3342
        %v3344 = vsel %vm1896, %v3334, -inf
        %3345 = vmax.xlane.f32.xlu0 %v3344
        %v3346 = vpop.xlane.xlu0 %3345
        %v3347 = vsub.f32 %v3331, %v3337
        %v3348 = vsub.f32 %v3332, %v3340
        %v3349 = vsub.f32 %v3333, %v3343
        %v3350 = vsub.f32 %v3334, %v3346
        %v3351 = vmul.f32 %v3347, 1.442695
        %v3352 = vpow.pop %v3351
        %v3353 = vmul.f32 %v3348, 1.442695
        %v3354 = vpow.pop %v3353
        %v3355 = vmul.f32 %v3349, 1.442695
        %v3356 = vpow.pop %v3355
        %v3357 = vmul.f32 %v3350, 1.442695
        %v3358 = vpow.pop %v3357
        %v3359 = vsel %vm1896, %v3352, 0.0
        %3360 = vadd.xlane.f32.xlu0 %v3359
        %v3361 = vpop.xlane.xlu0 %3360
        %v3362 = vsel %vm1896, %v3354, 0.0
        %3363 = vadd.xlane.f32.xlu0 %v3362
        %v3364 = vpop.xlane.xlu0 %3363
        %v3365 = vsel %vm1896, %v3356, 0.0
        %3366 = vadd.xlane.f32.xlu0 %v3365
        %v3367 = vpop.xlane.xlu0 %3366
        %v3368 = vsel %vm1896, %v3358, 0.0
        %3369 = vadd.xlane.f32.xlu0 %v3368
        %v3370 = vpop.xlane.xlu0 %3369
        %v3371 = vrcp.pop %v3361
        %v3372 = vrcp.pop %v3364
        %v3373 = vrcp.pop %v3367
        %v3374 = vrcp.pop %v3370
        %v3375 = vmul.f32 %v3352, %v3371
        %v3376 = vmul.f32 %v3354, %v3372
        %v3377 = vmul.f32 %v3356, %v3373
        %v3378 = vmul.f32 %v3358, %v3374
        %v3379 = vpack.c.bf16 %v3375, %v3375
        %v3380 = vpack.c.bf16 %v3376, %v3376
        %v3381 = vpack.c.bf16 %v3377, %v3377
        %v3382 = vpack.c.bf16 %v3378, %v3378
        %v3383 = vpack.c.bf16 %v3023, %v3023
        %v3384 = vpack.c.bf16 %v3055, %v3055
        %v3385 = vpack.c.bf16 %v3087, %v3087
        %v3386 = vpack.c.bf16 %v3119, %v3119
        %v3388 = vsel %vm1896, %v3379, 0
        %v3391 = vsel %vm1900, %v3383, 0
        %3393 = vmatprep.subr.bf16.mxu0 0
        %3394 = vmatpush1.bf16.msra.mxu0 %v3391
        %3395 = vmatprep.subr.bf16.mxu0 0
        %3396 = vmatpush1.bf16.msra.mxu0 0
        %3397 = vmatprep.subr.bf16.mxu0 0
        %3398 = vmatpush1.bf16.msra.mxu0 0
        %3399 = vmatprep.subr.bf16.mxu0 0
        %3400 = vmatpush1.bf16.msra.mxu0 0
        %3401 = vmatprep.subr.bf16.mxu0 0
        %3402 = vmatpush1.bf16.msra.mxu0 0
        %3403 = vmatprep.subr.bf16.mxu0 0
        %3404 = vmatpush1.bf16.msra.mxu0 0
        %3405 = vmatprep.subr.bf16.mxu0 0
        %3406 = vmatpush1.bf16.msra.mxu0 0
        %3407 = vmatprep.subr.bf16.mxu0 0
        %3408 = vmatpush1.bf16.msra.mxu0 0
        %3409 = vmatprep.subr.bf16.mxu0 0
        %3410 = vmatpush1.bf16.msra.mxu0 0
        %3411 = vmatprep.subr.bf16.mxu0 0
        %3412 = vmatpush1.bf16.msra.mxu0 0
        %3413 = vmatprep.subr.bf16.mxu0 0
        %3414 = vmatpush1.bf16.msra.mxu0 0
        %3415 = vmatprep.subr.bf16.mxu0 0
        %3416 = vmatpush1.bf16.msra.mxu0 0
        %3417 = vmatprep.subr.bf16.mxu0 0
        %3418 = vmatpush1.bf16.msra.mxu0 0
        %3419 = vmatprep.subr.bf16.mxu0 0
        %3420 = vmatpush1.bf16.msra.mxu0 0
        %3421 = vmatprep.subr.bf16.mxu0 0
        %3422 = vmatpush1.bf16.msra.mxu0 0
        %3423 = vmatprep.subr.bf16.mxu0 0
        %3424 = vmatpush1.bf16.msra.mxu0 0
        %3425 = vmatprep.mubr.bf16.mxu0 0
        %3426 = vmatmul.mubr.bf16.gmra.mrb[0].mxu0 %v3388
        %v3427 = vpop.f32.mrb[0].mxu0
        %v3428 = vadd.f32 0.0, %v3427
        %v3429 = vpop.f32.mrb[0].mxu0
        %v3430 = vpop.f32.mrb[0].mxu0
        %v3431 = vpop.f32.mrb[0].mxu0
        %3432 = vdwg.mxu0
        %v3434 = vsel %vm1896, %v3380, 0
        %v3437 = vsel %vm1900, %v3384, 0
        %3439 = vmatprep.subr.bf16.mxu0 0
        %3440 = vmatpush1.bf16.msra.mxu0 %v3437
        %3441 = vmatprep.subr.bf16.mxu0 0
        %3442 = vmatpush1.bf16.msra.mxu0 0
        %3443 = vmatprep.subr.bf16.mxu0 0
        %3444 = vmatpush1.bf16.msra.mxu0 0
        %3445 = vmatprep.subr.bf16.mxu0 0
        %3446 = vmatpush1.bf16.msra.mxu0 0
        %3447 = vmatprep.subr.bf16.mxu0 0
        %3448 = vmatpush1.bf16.msra.mxu0 0
        %3449 = vmatprep.subr.bf16.mxu0 0
        %3450 = vmatpush1.bf16.msra.mxu0 0
        %3451 = vmatprep.subr.bf16.mxu0 0
        %3452 = vmatpush1.bf16.msra.mxu0 0
        %3453 = vmatprep.subr.bf16.mxu0 0
        %3454 = vmatpush1.bf16.msra.mxu0 0
        %3455 = vmatprep.subr.bf16.mxu0 0
        %3456 = vmatpush1.bf16.msra.mxu0 0
        %3457 = vmatprep.subr.bf16.mxu0 0
        %3458 = vmatpush1.bf16.msra.mxu0 0
        %3459 = vmatprep.subr.bf16.mxu0 0
        %3460 = vmatpush1.bf16.msra.mxu0 0
        %3461 = vmatprep.subr.bf16.mxu0 0
        %3462 = vmatpush1.bf16.msra.mxu0 0
        %3463 = vmatprep.subr.bf16.mxu0 0
        %3464 = vmatpush1.bf16.msra.mxu0 0
        %3465 = vmatprep.subr.bf16.mxu0 0
        %3466 = vmatpush1.bf16.msra.mxu0 0
        %3467 = vmatprep.subr.bf16.mxu0 0
        %3468 = vmatpush1.bf16.msra.mxu0 0
        %3469 = vmatprep.subr.bf16.mxu0 0
        %3470 = vmatpush1.bf16.msra.mxu0 0
        %3471 = vmatprep.mubr.bf16.mxu0 0
        %3472 = vmatmul.mubr.bf16.gmra.mrb[0].mxu0 %v3434
        %v3473 = vpop.f32.mrb[0].mxu0
        %v3474 = vadd.f32 0.0, %v3473
        %v3475 = vpop.f32.mrb[0].mxu0
        %v3476 = vpop.f32.mrb[0].mxu0
        %v3477 = vpop.f32.mrb[0].mxu0
        %3478 = vdwg.mxu0
        %v3480 = vsel %vm1896, %v3381, 0
        %v3483 = vsel %vm1900, %v3385, 0
        %3485 = vmatprep.subr.bf16.mxu0 0
        %3486 = vmatpush1.bf16.msra.mxu0 %v3483
        %3487 = vmatprep.subr.bf16.mxu0 0
        %3488 = vmatpush1.bf16.msra.mxu0 0
        %3489 = vmatprep.subr.bf16.mxu0 0
        %3490 = vmatpush1.bf16.msra.mxu0 0
        %3491 = vmatprep.subr.bf16.mxu0 0
        %3492 = vmatpush1.bf16.msra.mxu0 0
        %3493 = vmatprep.subr.bf16.mxu0 0
        %3494 = vmatpush1.bf16.msra.mxu0 0
        %3495 = vmatprep.subr.bf16.mxu0 0
        %3496 = vmatpush1.bf16.msra.mxu0 0
        %3497 = vmatprep.subr.bf16.mxu0 0
        %3498 = vmatpush1.bf16.msra.mxu0 0
        %3499 = vmatprep.subr.bf16.mxu0 0
        %3500 = vmatpush1.bf16.msra.mxu0 0
        %3501 = vmatprep.subr.bf16.mxu0 0
        %3502 = vmatpush1.bf16.msra.mxu0 0
        %3503 = vmatprep.subr.bf16.mxu0 0
        %3504 = vmatpush1.bf16.msra.mxu0 0
        %3505 = vmatprep.subr.bf16.mxu0 0
        %3506 = vmatpush1.bf16.msra.mxu0 0
        %3507 = vmatprep.subr.bf16.mxu0 0
        %3508 = vmatpush1.bf16.msra.mxu0 0
        %3509 = vmatprep.subr.bf16.mxu0 0
        %3510 = vmatpush1.bf16.msra.mxu0 0
        %3511 = vmatprep.subr.bf16.mxu0 0
        %3512 = vmatpush1.bf16.msra.mxu0 0
        %3513 = vmatprep.subr.bf16.mxu0 0
        %3514 = vmatpush1.bf16.msra.mxu0 0
        %3515 = vmatprep.subr.bf16.mxu0 0
        %3516 = vmatpush1.bf16.msra.mxu0 0
        %3517 = vmatprep.mubr.bf16.mxu0 0
        %3518 = vmatmul.mubr.bf16.gmra.mrb[0].mxu0 %v3480
        %v3519 = vpop.f32.mrb[0].mxu0
        %v3520 = vadd.f32 0.0, %v3519
        %v3521 = vpop.f32.mrb[0].mxu0
        %v3522 = vpop.f32.mrb[0].mxu0
        %v3523 = vpop.f32.mrb[0].mxu0
        %3524 = vdwg.mxu0
        %v3526 = vsel %vm1896, %v3382, 0
        %v3529 = vsel %vm1900, %v3386, 0
        %3531 = vmatprep.subr.bf16.mxu0 0
        %3532 = vmatpush1.bf16.msra.mxu0 %v3529
        %3533 = vmatprep.subr.bf16.mxu0 0
        %3534 = vmatpush1.bf16.msra.mxu0 0
        %3535 = vmatprep.subr.bf16.mxu0 0
        %3536 = vmatpush1.bf16.msra.mxu0 0
        %3537 = vmatprep.subr.bf16.mxu0 0
        %3538 = vmatpush1.bf16.msra.mxu0 0
        %3539 = vmatprep.subr.bf16.mxu0 0
        %3540 = vmatpush1.bf16.msra.mxu0 0
        %3541 = vmatprep.subr.bf16.mxu0 0
        %3542 = vmatpush1.bf16.msra.mxu0 0
        %3543 = vmatprep.subr.bf16.mxu0 0
        %3544 = vmatpush1.bf16.msra.mxu0 0
        %3545 = vmatprep.subr.bf16.mxu0 0
        %3546 = vmatpush1.bf16.msra.mxu0 0
        %3547 = vmatprep.subr.bf16.mxu0 0
        %3548 = vmatpush1.bf16.msra.mxu0 0
        %3549 = vmatprep.subr.bf16.mxu0 0
        %3550 = vmatpush1.bf16.msra.mxu0 0
        %3551 = vmatprep.subr.bf16.mxu0 0
        %3552 = vmatpush1.bf16.msra.mxu0 0
        %3553 = vmatprep.subr.bf16.mxu0 0
        %3554 = vmatpush1.bf16.msra.mxu0 0
        %3555 = vmatprep.subr.bf16.mxu0 0
        %3556 = vmatpush1.bf16.msra.mxu0 0
        %3557 = vmatprep.subr.bf16.mxu0 0
        %3558 = vmatpush1.bf16.msra.mxu0 0
        %3559 = vmatprep.subr.bf16.mxu0 0
        %3560 = vmatpush1.bf16.msra.mxu0 0
        %3561 = vmatprep.subr.bf16.mxu0 0
        %3562 = vmatpush1.bf16.msra.mxu0 0
        %3563 = vmatprep.mubr.bf16.mxu0 0
        %3564 = vmatmul.mubr.bf16.gmra.mrb[0].mxu0 %v3526
        %v3565 = vpop.f32.mrb[0].mxu0
        %v3566 = vadd.f32 0.0, %v3565
        %v3567 = vpop.f32.mrb[0].mxu0
        %v3568 = vpop.f32.mrb[0].mxu0
        %v3569 = vpop.f32.mrb[0].mxu0
        %3570 = vdwg.mxu0
        %3571 = vxpose.xlu0.b32.start [1/16] %v3428, 128
        %3572 = vxpose.xlu0.b32.cont [2/16] 0.0, 128
        %3573 = vxpose.xlu0.b32.cont [3/16] 0.0, 128
        %3574 = vxpose.xlu0.b32.cont [4/16] 0.0, 128
        %3575 = vxpose.xlu0.b32.cont [5/16] 0.0, 128
        %3576 = vxpose.xlu0.b32.cont [6/16] 0.0, 128
        %3577 = vxpose.xlu0.b32.cont [7/16] 0.0, 128
        %3578 = vxpose.xlu0.b32.cont [8/16] 0.0, 128
        %3579 = vxpose.xlu0.b32.cont [9/16] 0.0, 128
        %3580 = vxpose.xlu0.b32.cont [10/16] 0.0, 128
        %3581 = vxpose.xlu0.b32.cont [11/16] 0.0, 128
        %3582 = vxpose.xlu0.b32.cont [12/16] 0.0, 128
        %3583 = vxpose.xlu0.b32.cont [13/16] 0.0, 128
        %3584 = vxpose.xlu0.b32.cont [14/16] 0.0, 128
        %3585 = vxpose.xlu0.b32.cont [15/16] 0.0, 128
        %3586 = vxpose.xlu0.b32.end [16/16] 0.0, 128
        %v3587 = vpop.trf.xlu0
        %v3588 = vpop.trf.xlu0
        %v3589 = vpop.trf.xlu0
        %v3590 = vpop.trf.xlu0
        %v3591 = vpop.trf.xlu0
        %v3592 = vpop.trf.xlu0
        %v3593 = vpop.trf.xlu0
        %v3594 = vpop.trf.xlu0
        %v3595 = vpop.trf.xlu0
        %v3596 = vpop.trf.xlu0
        %v3597 = vpop.trf.xlu0
        %v3598 = vpop.trf.xlu0
        %v3599 = vpop.trf.xlu0
        %v3600 = vpop.trf.xlu0
        %v3601 = vpop.trf.xlu0
        %v3602 = vpop.trf.xlu0
        %3603 = vxpose.xlu0.b32.start [1/16] %v3474, 128
        %3604 = vxpose.xlu0.b32.cont [2/16] 0.0, 128
        %3605 = vxpose.xlu0.b32.cont [3/16] 0.0, 128
        %3606 = vxpose.xlu0.b32.cont [4/16] 0.0, 128
        %3607 = vxpose.xlu0.b32.cont [5/16] 0.0, 128
        %3608 = vxpose.xlu0.b32.cont [6/16] 0.0, 128
        %3609 = vxpose.xlu0.b32.cont [7/16] 0.0, 128
        %3610 = vxpose.xlu0.b32.cont [8/16] 0.0, 128
        %3611 = vxpose.xlu0.b32.cont [9/16] 0.0, 128
        %3612 = vxpose.xlu0.b32.cont [10/16] 0.0, 128
        %3613 = vxpose.xlu0.b32.cont [11/16] 0.0, 128
        %3614 = vxpose.xlu0.b32.cont [12/16] 0.0, 128
        %3615 = vxpose.xlu0.b32.cont [13/16] 0.0, 128
        %3616 = vxpose.xlu0.b32.cont [14/16] 0.0, 128
        %3617 = vxpose.xlu0.b32.cont [15/16] 0.0, 128
        %3618 = vxpose.xlu0.b32.end [16/16] 0.0, 128
        %v3619 = vpop.trf.xlu0
        %v3620 = vpop.trf.xlu0
        %v3621 = vpop.trf.xlu0
        %v3622 = vpop.trf.xlu0
        %v3623 = vpop.trf.xlu0
        %v3624 = vpop.trf.xlu0
        %v3625 = vpop.trf.xlu0
        %v3626 = vpop.trf.xlu0
        %v3627 = vpop.trf.xlu0
        %v3628 = vpop.trf.xlu0
        %v3629 = vpop.trf.xlu0
        %v3630 = vpop.trf.xlu0
        %v3631 = vpop.trf.xlu0
        %v3632 = vpop.trf.xlu0
        %v3633 = vpop.trf.xlu0
        %v3634 = vpop.trf.xlu0
        %3635 = vxpose.xlu0.b32.start [1/16] %v3520, 128
        %3636 = vxpose.xlu0.b32.cont [2/16] 0.0, 128
        %3637 = vxpose.xlu0.b32.cont [3/16] 0.0, 128
        %3638 = vxpose.xlu0.b32.cont [4/16] 0.0, 128
        %3639 = vxpose.xlu0.b32.cont [5/16] 0.0, 128
        %3640 = vxpose.xlu0.b32.cont [6/16] 0.0, 128
        %3641 = vxpose.xlu0.b32.cont [7/16] 0.0, 128
        %3642 = vxpose.xlu0.b32.cont [8/16] 0.0, 128
        %3643 = vxpose.xlu0.b32.cont [9/16] 0.0, 128
        %3644 = vxpose.xlu0.b32.cont [10/16] 0.0, 128
        %3645 = vxpose.xlu0.b32.cont [11/16] 0.0, 128
        %3646 = vxpose.xlu0.b32.cont [12/16] 0.0, 128
        %3647 = vxpose.xlu0.b32.cont [13/16] 0.0, 128
        %3648 = vxpose.xlu0.b32.cont [14/16] 0.0, 128
        %3649 = vxpose.xlu0.b32.cont [15/16] 0.0, 128
        %3650 = vxpose.xlu0.b32.end [16/16] 0.0, 128
        %v3651 = vpop.trf.xlu0
        %v3652 = vpop.trf.xlu0
        %v3653 = vpop.trf.xlu0
        %v3654 = vpop.trf.xlu0
        %v3655 = vpop.trf.xlu0
        %v3656 = vpop.trf.xlu0
        %v3657 = vpop.trf.xlu0
        %v3658 = vpop.trf.xlu0
        %v3659 = vpop.trf.xlu0
        %v3660 = vpop.trf.xlu0
        %v3661 = vpop.trf.xlu0
        %v3662 = vpop.trf.xlu0
        %v3663 = vpop.trf.xlu0
        %v3664 = vpop.trf.xlu0
        %v3665 = vpop.trf.xlu0
        %v3666 = vpop.trf.xlu0
        %3667 = vxpose.xlu0.b32.start [1/16] %v3566, 128
        %3668 = vxpose.xlu0.b32.cont [2/16] 0.0, 128
        %3669 = vxpose.xlu0.b32.cont [3/16] 0.0, 128
        %3670 = vxpose.xlu0.b32.cont [4/16] 0.0, 128
        %3671 = vxpose.xlu0.b32.cont [5/16] 0.0, 128
        %3672 = vxpose.xlu0.b32.cont [6/16] 0.0, 128
        %3673 = vxpose.xlu0.b32.cont [7/16] 0.0, 128
        %3674 = vxpose.xlu0.b32.cont [8/16] 0.0, 128
        %3675 = vxpose.xlu0.b32.cont [9/16] 0.0, 128
        %3676 = vxpose.xlu0.b32.cont [10/16] 0.0, 128
        %3677 = vxpose.xlu0.b32.cont [11/16] 0.0, 128
        %3678 = vxpose.xlu0.b32.cont [12/16] 0.0, 128
        %3679 = vxpose.xlu0.b32.cont [13/16] 0.0, 128
        %3680 = vxpose.xlu0.b32.cont [14/16] 0.0, 128
        %3681 = vxpose.xlu0.b32.cont [15/16] 0.0, 128
        %3682 = vxpose.xlu0.b32.end [16/16] 0.0, 128
        %v3683 = vpop.trf.xlu0
        %v3684 = vpop.trf.xlu0
        %v3685 = vpop.trf.xlu0
        %v3686 = vpop.trf.xlu0
        %v3687 = vpop.trf.xlu0
        %v3688 = vpop.trf.xlu0
        %v3689 = vpop.trf.xlu0
        %v3690 = vpop.trf.xlu0
        %v3691 = vpop.trf.xlu0
        %v3692 = vpop.trf.xlu0
        %v3693 = vpop.trf.xlu0
        %v3694 = vpop.trf.xlu0
        %v3695 = vpop.trf.xlu0
        %v3696 = vpop.trf.xlu0
        %v3697 = vpop.trf.xlu0
        %v3698 = vpop.trf.xlu0
        %3699 = vxpose.xlu0.b32.start [1/16] %v3587, 128
        %3700 = vxpose.xlu0.b32.cont [2/16] %v3619, 128
        %3701 = vxpose.xlu0.b32.cont [3/16] %v3651, 128
        %3702 = vxpose.xlu0.b32.cont [4/16] %v3683, 128
        %3703 = vxpose.xlu0.b32.cont [5/16] 0.0, 128
        %3704 = vxpose.xlu0.b32.cont [6/16] 0.0, 128
        %3705 = vxpose.xlu0.b32.cont [7/16] 0.0, 128
        %3706 = vxpose.xlu0.b32.cont [8/16] 0.0, 128
        %3707 = vxpose.xlu0.b32.cont [9/16] 0.0, 128
        %3708 = vxpose.xlu0.b32.cont [10/16] 0.0, 128
        %3709 = vxpose.xlu0.b32.cont [11/16] 0.0, 128
        %3710 = vxpose.xlu0.b32.cont [12/16] 0.0, 128
        %3711 = vxpose.xlu0.b32.cont [13/16] 0.0, 128
        %3712 = vxpose.xlu0.b32.cont [14/16] 0.0, 128
        %3713 = vxpose.xlu0.b32.cont [15/16] 0.0, 128
        %3714 = vxpose.xlu0.b32.end [16/16] 0.0, 128
        %v3715 = vpop.trf.xlu0
        %v3716 = vpop.trf.xlu0
        %v3717 = vpop.trf.xlu0
        %v3718 = vpop.trf.xlu0
        %v3719 = vpop.trf.xlu0
        %v3720 = vpop.trf.xlu0
        %v3721 = vpop.trf.xlu0
        %v3722 = vpop.trf.xlu0
        %v3723 = vpop.trf.xlu0
        %v3724 = vpop.trf.xlu0
        %v3725 = vpop.trf.xlu0
        %v3726 = vpop.trf.xlu0
        %v3727 = vpop.trf.xlu0
        %v3728 = vpop.trf.xlu0
        %v3729 = vpop.trf.xlu0
        %v3730 = vpop.trf.xlu0
        %v3731 = vpack.c.bf16 %v3715, %v3715
        %v3733 = vlaneseq
        %v3734 = vshrl.u32 %v3733, 7
        %v3735 = vsub.s32 0, %v3734
        %v3736 = vrot.slane %v2784, %v3735
        %v3742 = vunpack.c.l.b16 %v2779
        %v3743 = vunpack.c.l.b16 %v2780
        %v3744 = vunpack.c.l.b16 %v2781
        %v3745 = vunpack.c.l.b16 %v2782
        %v3746 = vpack.c.b16 %v3743, %v3742
        %v3747 = vpack.c.b16 %v3745, %v3744
        %v3751 = vsel %vm1556, %v3731, 0
        %3753 = vmatprep.subr.bf16.mxu0 0
        %3754 = vmatpush1.bf16.msra.mxu0 %v3746
        %3755 = vmatprep.subr.bf16.mxu0 0
        %3756 = vmatpush1.bf16.msra.mxu0 %v3747
        %3757 = vmatprep.subr.bf16.mxu0 0
        %3758 = vmatpush1.bf16.msra.mxu0 0
        %3759 = vmatprep.subr.bf16.mxu0 0
        %3760 = vmatpush1.bf16.msra.mxu0 0
        %3761 = vmatprep.subr.bf16.mxu0 0
        %3762 = vmatpush1.bf16.msra.mxu0 0
        %3763 = vmatprep.subr.bf16.mxu0 0
        %3764 = vmatpush1.bf16.msra.mxu0 0
        %3765 = vmatprep.subr.bf16.mxu0 0
        %3766 = vmatpush1.bf16.msra.mxu0 0
        %3767 = vmatprep.subr.bf16.mxu0 0
        %3768 = vmatpush1.bf16.msra.mxu0 0
        %3769 = vmatprep.subr.bf16.mxu0 0
        %3770 = vmatpush1.bf16.msra.mxu0 0
        %3771 = vmatprep.subr.bf16.mxu0 0
        %3772 = vmatpush1.bf16.msra.mxu0 0
        %3773 = vmatprep.subr.bf16.mxu0 0
        %3774 = vmatpush1.bf16.msra.mxu0 0
        %3775 = vmatprep.subr.bf16.mxu0 0
        %3776 = vmatpush1.bf16.msra.mxu0 0
        %3777 = vmatprep.subr.bf16.mxu0 0
        %3778 = vmatpush1.bf16.msra.mxu0 0
        %3779 = vmatprep.subr.bf16.mxu0 0
        %3780 = vmatpush1.bf16.msra.mxu0 0
        %3781 = vmatprep.subr.bf16.mxu0 0
        %3782 = vmatpush1.bf16.msra.mxu0 0
        %3783 = vmatprep.subr.bf16.mxu0 0
        %3784 = vmatpush1.bf16.msra.mxu0 0
        %3785 = vmatprep.mubr.bf16.mxu0 0
        %3786 = vmatmul.mubr.bf16.gmra.mrb[0].mxu0 %v3751
        %v3787 = vpop.f32.mrb[0].mxu0
        %v3788 = vadd.f32 %v3736, %v3787
        %v3789 = vpop.f32.mrb[0].mxu0
        %v3790 = vpop.f32.mrb[0].mxu0
        %v3791 = vpop.f32.mrb[0].mxu0
        %3792 = vdwg.mxu0
        %v3793 = vadd.f32 %v2770, %v3788
        %s3794 = scalar_lea.vmem [#allocation16], 1
        %v3795 = vld [vmem:[%s3794] sm:$0x1]
        %s3796 = scalar_lea.vmem [#allocation17], 1
        %v3797 = vld [vmem:[%s3796] sm:$0x1]
        %v3798 = vsel %vm1556, %v3793, 0.0
        %3799 = vadd.xlane.f32.xlu0 %v3798
        %v3800 = vpop.xlane.xlu0 %3799
        %v3801 = vmul.f32 %v3800, %v2560
        %v3802 = vmul.f32 %v3793, %v3793
        %v3803 = vsel %vm1556, %v3802, 0.0
        %3804 = vadd.xlane.f32.xlu0 %v3803
        %v3805 = vpop.xlane.xlu0 %3804
        %v3806 = vmul.f32 %v3805, %v2560
        %v3807 = vmul.f32 %v3801, %v3801
        %v3808 = vsub.f32 %v3806, %v3807
        %v3809 = vsub.f32 %v3793, %v3801
        %v3810 = vadd.f32 %v3808, 1e-05
        %v3811 = vrsqrt.pop %v3810
        %v3812 = vmul.f32 %v3809, %v3811
        %v3814 = vlaneseq
        %v3815 = vshrl.u32 %v3814, 7
        %v3816 = vsub.s32 0, %v3815
        %v3817 = vrot.slane %v3795, %v3816
        %v3819 = vmul.f32 %v3812, %v3817
        %v3821 = vlaneseq
        %v3822 = vshrl.u32 %v3821, 7
        %v3823 = vsub.s32 0, %v3822
        %v3824 = vrot.slane %v3797, %v3823
        %v3826 = vadd.f32 %v3819, %v3824
        %s3827 = scalar_lea.vmem %s17, 16
        %v3828 = vld [vmem:[%s3827] sm:$0xf]
        %v3829 = vld [vmem:[%s3827 + $0x4] sm:$0xf]
        %v3830 = vld [vmem:[%s3827 + $0x8] sm:$0xf]
        %v3831 = vld [vmem:[%s3827 + $0xc] sm:$0xf]
        %s3832 = scalar_lea.vmem [#allocation13], 1
        %v3833 = vld [vmem:[%s3832] sm:$0x1]
        %s3834 = scalar_lea.vmem %s21, 32
        %v3835 = vld [vmem:[%s3834] sm:$0xf]
        %v3836 = vld [vmem:[%s3834 + $0x4] sm:$0xf]
        %v3837 = vld [vmem:[%s3834 + $0x8] sm:$0xf]
        %v3838 = vld [vmem:[%s3834 + $0xc] sm:$0xf]
        %v3839 = vld [vmem:[%s3834 + $0x10] sm:$0xf]
        %v3840 = vld [vmem:[%s3834 + $0x14] sm:$0xf]
        %v3841 = vld [vmem:[%s3834 + $0x18] sm:$0xf]
        %v3842 = vld [vmem:[%s3834 + $0x1c] sm:$0xf]
        %s3843 = scalar_lea.vmem [#allocation14], 1
        %v3844 = vld [vmem:[%s3843] sm:$0x1]
        %v3845 = vpack.c.bf16 %v3826, %v3826
        %v3847 = vlaneseq
        %v3848 = vshrl.u32 %v3847, 7
        %v3849 = vsub.s32 0, %v3848
        %v3850 = vrot.slane %v3833, %v3849
        %v3856 = vunpack.c.l.b16 %v3828
        %v3857 = vunpack.c.l.b16 %v3829
        %v3858 = vunpack.c.l.b16 %v3830
        %v3859 = vunpack.c.l.b16 %v3831
        %v3860 = vpack.c.b16 %v3857, %v3856
        %v3861 = vpack.c.b16 %v3859, %v3858
        %v3865 = vsel %vm1556, %v3845, 0
        %3867 = vmatprep.subr.bf16.mxu0 0
        %3868 = vmatpush1.bf16.msra.mxu0 %v3860
        %3869 = vmatprep.subr.bf16.mxu0 0
        %3870 = vmatpush1.bf16.msra.mxu0 %v3861
        %3871 = vmatprep.subr.bf16.mxu0 0
        %3872 = vmatpush1.bf16.msra.mxu0 0
        %3873 = vmatprep.subr.bf16.mxu0 0
        %3874 = vmatpush1.bf16.msra.mxu0 0
        %3875 = vmatprep.subr.bf16.mxu0 0
        %3876 = vmatpush1.bf16.msra.mxu0 0
        %3877 = vmatprep.subr.bf16.mxu0 0
        %3878 = vmatpush1.bf16.msra.mxu0 0
        %3879 = vmatprep.subr.bf16.mxu0 0
        %3880 = vmatpush1.bf16.msra.mxu0 0
        %3881 = vmatprep.subr.bf16.mxu0 0
        %3882 = vmatpush1.bf16.msra.mxu0 0
        %3883 = vmatprep.subr.bf16.mxu0 0
        %3884 = vmatpush1.bf16.msra.mxu0 0
        %3885 = vmatprep.subr.bf16.mxu0 0
        %3886 = vmatpush1.bf16.msra.mxu0 0
        %3887 = vmatprep.subr.bf16.mxu0 0
        %3888 = vmatpush1.bf16.msra.mxu0 0
        %3889 = vmatprep.subr.bf16.mxu0 0
        %3890 = vmatpush1.bf16.msra.mxu0 0
        %3891 = vmatprep.subr.bf16.mxu0 0
        %3892 = vmatpush1.bf16.msra.mxu0 0
        %3893 = vmatprep.subr.bf16.mxu0 0
        %3894 = vmatpush1.bf16.msra.mxu0 0
        %3895 = vmatprep.subr.bf16.mxu0 0
        %3896 = vmatpush1.bf16.msra.mxu0 0
        %3897 = vmatprep.subr.bf16.mxu0 0
        %3898 = vmatpush1.bf16.msra.mxu0 0
        %3899 = vmatprep.mubr.bf16.mxu0 0
        %3900 = vmatmul.mubr.bf16.gmra.mrb[0].mxu0 %v3865
        %v3901 = vpop.f32.mrb[0].mxu0
        %v3902 = vadd.f32 %v3850, %v3901
        %v3903 = vpop.f32.mrb[0].mxu0
        %v3904 = vpop.f32.mrb[0].mxu0
        %v3905 = vpop.f32.mrb[0].mxu0
        %3906 = vdwg.mxu0
        %v3907 = vmax.f32 %v3902, 0.0
        %v3908 = vpack.c.bf16 %v3907, %v3907
        %v3910 = vlaneseq
        %v3911 = vshrl.u32 %v3910, 7
        %v3912 = vsub.s32 0, %v3911
        %v3913 = vrot.slane %v3844, %v3912
        %v3923 = vunpack.c.l.b16 %v3835
        %v3924 = vunpack.c.l.b16 %v3836
        %v3925 = vunpack.c.l.b16 %v3837
        %v3926 = vunpack.c.l.b16 %v3838
        %v3927 = vunpack.c.l.b16 %v3839
        %v3928 = vunpack.c.l.b16 %v3840
        %v3929 = vunpack.c.l.b16 %v3841
        %v3930 = vunpack.c.l.b16 %v3842
        %v3931 = vpack.c.b16 %v3924, %v3923
        %v3932 = vpack.c.b16 %v3926, %v3925
        %v3933 = vpack.c.b16 %v3928, %v3927
        %v3934 = vpack.c.b16 %v3930, %v3929
        %v3940 = vsel %vm2695, %v3908, 0
        %3942 = vmatprep.subr.bf16.mxu0 0
        %3943 = vmatpush1.bf16.msra.mxu0 %v3931
        %3944 = vmatprep.subr.bf16.mxu0 0
        %3945 = vmatpush1.bf16.msra.mxu0 %v3932
        %3946 = vmatprep.subr.bf16.mxu0 0
        %3947 = vmatpush1.bf16.msra.mxu0 %v3933
        %3948 = vmatprep.subr.bf16.mxu0 0
        %3949 = vmatpush1.bf16.msra.mxu0 %v3934
        %3950 = vmatprep.subr.bf16.mxu0 0
        %3951 = vmatpush1.bf16.msra.mxu0 0
        %3952 = vmatprep.subr.bf16.mxu0 0
        %3953 = vmatpush1.bf16.msra.mxu0 0
        %3954 = vmatprep.subr.bf16.mxu0 0
        %3955 = vmatpush1.bf16.msra.mxu0 0
        %3956 = vmatprep.subr.bf16.mxu0 0
        %3957 = vmatpush1.bf16.msra.mxu0 0
        %3958 = vmatprep.subr.bf16.mxu0 0
        %3959 = vmatpush1.bf16.msra.mxu0 0
        %3960 = vmatprep.subr.bf16.mxu0 0
        %3961 = vmatpush1.bf16.msra.mxu0 0
        %3962 = vmatprep.subr.bf16.mxu0 0
        %3963 = vmatpush1.bf16.msra.mxu0 0
        %3964 = vmatprep.subr.bf16.mxu0 0
        %3965 = vmatpush1.bf16.msra.mxu0 0
        %3966 = vmatprep.subr.bf16.mxu0 0
        %3967 = vmatpush1.bf16.msra.mxu0 0
        %3968 = vmatprep.subr.bf16.mxu0 0
        %3969 = vmatpush1.bf16.msra.mxu0 0
        %3970 = vmatprep.subr.bf16.mxu0 0
        %3971 = vmatpush1.bf16.msra.mxu0 0
        %3972 = vmatprep.subr.bf16.mxu0 0
        %3973 = vmatpush1.bf16.msra.mxu0 0
        %3974 = vmatprep.mubr.bf16.mxu0 0
        %3975 = vmatmul.mubr.bf16.gmra.mrb[0].mxu0 %v3940
        %v3976 = vpop.f32.mrb[0].mxu0
        %v3977 = vadd.f32 %v3913, %v3976
        %v3978 = vpop.f32.mrb[0].mxu0
        %v3979 = vpop.f32.mrb[0].mxu0
        %v3980 = vpop.f32.mrb[0].mxu0
        %3981 = vdwg.mxu0
        %v3982 = vadd.f32 %v3826, %v3977
        %s3983 = scalar_lea.vmem [#allocation19], 1
        %v3984 = vld [vmem:[%s3983] sm:$0x1]
        %s3985 = scalar_lea.vmem [#allocation20], 1
        %v3986 = vld [vmem:[%s3985] sm:$0x1]
        %v3987 = vsel %vm1556, %v3982, 0.0
        %3988 = vadd.xlane.f32.xlu0 %v3987
        %v3989 = vpop.xlane.xlu0 %3988
        %v3990 = vmul.f32 %v3989, %v2560
        %v3991 = vmul.f32 %v3982, %v3982
        %v3992 = vsel %vm1556, %v3991, 0.0
        %3993 = vadd.xlane.f32.xlu0 %v3992
        %v3994 = vpop.xlane.xlu0 %3993
        %v3995 = vmul.f32 %v3994, %v2560
        %v3996 = vmul.f32 %v3990, %v3990
        %v3997 = vsub.f32 %v3995, %v3996
        %v3998 = vsub.f32 %v3982, %v3990
        %v3999 = vadd.f32 %v3997, 1e-05
        %v4000 = vrsqrt.pop %v3999
        %v4001 = vmul.f32 %v3998, %v4000
        %v4003 = vlaneseq
        %v4004 = vshrl.u32 %v4003, 7
        %v4005 = vsub.s32 0, %v4004
        %v4006 = vrot.slane %v3984, %v4005
        %v4008 = vmul.f32 %v4001, %v4006
        %v4010 = vlaneseq
        %v4011 = vshrl.u32 %v4010, 7
        %v4012 = vsub.s32 0, %v4011
        %v4013 = vrot.slane %v3986, %v4012
        %v4015 = vadd.f32 %v4008, %v4013
        %v4016 = vld [vmem:[%s1328] sm:$0xff]
        %v4017 = vadd.f32 %v4016, %v1515
        %v4018 = vld [vmem:[%s33] sm:$0xf]
        %v4019 = vld [vmem:[%s33 + $0x4] sm:$0xf]
        %v4020 = vld [vmem:[%s33 + $0x8] sm:$0xf]
        %v4021 = vld [vmem:[%s33 + $0xc] sm:$0xf]
        %v4022 = vld [vmem:[#allocation22] sm:$0x1]
        %v4023 = vld [vmem:[%s37] sm:$0xf]
        %v4024 = vld [vmem:[%s37 + $0x4] sm:$0xf]
        %v4025 = vld [vmem:[%s37 + $0x8] sm:$0xf]
        %v4026 = vld [vmem:[%s37 + $0xc] sm:$0xf]
        %v4027 = vld [vmem:[#allocation23] sm:$0x1]
        %v4028 = vpack.c.bf16 %v4017, %v4017
        %v4030 = vlaneseq
        %v4031 = vshrl.u32 %v4030, 7
        %v4032 = vsub.s32 0, %v4031
        %v4033 = vrot.slane %v4022, %v4032
        %v4039 = vunpack.c.l.b16 %v4018
        %v4040 = vunpack.c.l.b16 %v4019
        %v4041 = vunpack.c.l.b16 %v4020
        %v4042 = vunpack.c.l.b16 %v4021
        %v4043 = vpack.c.b16 %v4040, %v4039
        %v4044 = vpack.c.b16 %v4042, %v4041
        %v4048 = vsel %vm1556, %v4028, 0
        %4050 = vmatprep.subr.bf16.mxu0 0
        %4051 = vmatpush1.bf16.msra.mxu0 %v4043
        %4052 = vmatprep.subr.bf16.mxu0 0
        %4053 = vmatpush1.bf16.msra.mxu0 %v4044
        %4054 = vmatprep.subr.bf16.mxu0 0
        %4055 = vmatpush1.bf16.msra.mxu0 0
        %4056 = vmatprep.subr.bf16.mxu0 0
        %4057 = vmatpush1.bf16.msra.mxu0 0
        %4058 = vmatprep.subr.bf16.mxu0 0
        %4059 = vmatpush1.bf16.msra.mxu0 0
        %4060 = vmatprep.subr.bf16.mxu0 0
        %4061 = vmatpush1.bf16.msra.mxu0 0
        %4062 = vmatprep.subr.bf16.mxu0 0
        %4063 = vmatpush1.bf16.msra.mxu0 0
        %4064 = vmatprep.subr.bf16.mxu0 0
        %4065 = vmatpush1.bf16.msra.mxu0 0
        %4066 = vmatprep.subr.bf16.mxu0 0
        %4067 = vmatpush1.bf16.msra.mxu0 0
        %4068 = vmatprep.subr.bf16.mxu0 0
        %4069 = vmatpush1.bf16.msra.mxu0 0
        %4070 = vmatprep.subr.bf16.mxu0 0
        %4071 = vmatpush1.bf16.msra.mxu0 0
        %4072 = vmatprep.subr.bf16.mxu0 0
        %4073 = vmatpush1.bf16.msra.mxu0 0
        %4074 = vmatprep.subr.bf16.mxu0 0
        %4075 = vmatpush1.bf16.msra.mxu0 0
        %4076 = vmatprep.subr.bf16.mxu0 0
        %4077 = vmatpush1.bf16.msra.mxu0 0
        %4078 = vmatprep.subr.bf16.mxu0 0
        %4079 = vmatpush1.bf16.msra.mxu0 0
        %4080 = vmatprep.subr.bf16.mxu0 0
        %4081 = vmatpush1.bf16.msra.mxu0 0
        %4082 = vmatprep.mubr.bf16.mxu0 0
        %4083 = vmatmul.mubr.bf16.gmra.mrb[0].mxu0 %v4048
        %v4084 = vpop.f32.mrb[0].mxu0
        %v4085 = vadd.f32 %v4033, %v4084
        %v4086 = vpop.f32.mrb[0].mxu0
        %v4087 = vpop.f32.mrb[0].mxu0
        %v4088 = vpop.f32.mrb[0].mxu0
        %4089 = vdwg.mxu0
        %4090 = vxpose.xlu0.b32.start [1/16] %v4085, 128
        %4091 = vxpose.xlu0.b32.cont [2/16] 0.0, 128
        %4092 = vxpose.xlu0.b32.cont [3/16] 0.0, 128
        %4093 = vxpose.xlu0.b32.cont [4/16] 0.0, 128
        %4094 = vxpose.xlu0.b32.cont [5/16] 0.0, 128
        %4095 = vxpose.xlu0.b32.cont [6/16] 0.0, 128
        %4096 = vxpose.xlu0.b32.cont [7/16] 0.0, 128
        %4097 = vxpose.xlu0.b32.cont [8/16] 0.0, 128
        %4098 = vxpose.xlu0.b32.cont [9/16] 0.0, 128
        %4099 = vxpose.xlu0.b32.cont [10/16] 0.0, 128
        %4100 = vxpose.xlu0.b32.cont [11/16] 0.0, 128
        %4101 = vxpose.xlu0.b32.cont [12/16] 0.0, 128
        %4102 = vxpose.xlu0.b32.cont [13/16] 0.0, 128
        %4103 = vxpose.xlu0.b32.cont [14/16] 0.0, 128
        %4104 = vxpose.xlu0.b32.cont [15/16] 0.0, 128
        %4105 = vxpose.xlu0.b32.end [16/16] 0.0, 128
        %v4106 = vpop.trf.xlu0
        %v4107 = vpop.trf.xlu0
        %v4108 = vpop.trf.xlu0
        %v4109 = vpop.trf.xlu0
        %v4110 = vpop.trf.xlu0
        %v4111 = vpop.trf.xlu0
        %v4112 = vpop.trf.xlu0
        %v4113 = vpop.trf.xlu0
        %v4114 = vpop.trf.xlu0
        %v4115 = vpop.trf.xlu0
        %v4116 = vpop.trf.xlu0
        %v4117 = vpop.trf.xlu0
        %v4118 = vpop.trf.xlu0
        %v4119 = vpop.trf.xlu0
        %v4120 = vpop.trf.xlu0
        %v4121 = vpop.trf.xlu0
        %4122 = vxpose.xlu0.b32.start [1/16] %v4106, 128
        %4123 = vxpose.xlu0.b32.cont [2/16] 0.0, 128
        %4124 = vxpose.xlu0.b32.cont [3/16] 0.0, 128
        %4125 = vxpose.xlu0.b32.cont [4/16] 0.0, 128
        %4126 = vxpose.xlu0.b32.cont [5/16] 0.0, 128
        %4127 = vxpose.xlu0.b32.cont [6/16] 0.0, 128
        %4128 = vxpose.xlu0.b32.cont [7/16] 0.0, 128
        %4129 = vxpose.xlu0.b32.cont [8/16] 0.0, 128
        %4130 = vxpose.xlu0.b32.cont [9/16] 0.0, 128
        %4131 = vxpose.xlu0.b32.cont [10/16] 0.0, 128
        %4132 = vxpose.xlu0.b32.cont [11/16] 0.0, 128
        %4133 = vxpose.xlu0.b32.cont [12/16] 0.0, 128
        %4134 = vxpose.xlu0.b32.cont [13/16] 0.0, 128
        %4135 = vxpose.xlu0.b32.cont [14/16] 0.0, 128
        %4136 = vxpose.xlu0.b32.cont [15/16] 0.0, 128
        %4137 = vxpose.xlu0.b32.end [16/16] 0.0, 128
        %v4138 = vpop.trf.xlu0
        %v4139 = vpop.trf.xlu0
        %v4140 = vpop.trf.xlu0
        %v4141 = vpop.trf.xlu0
        %v4142 = vpop.trf.xlu0
        %v4143 = vpop.trf.xlu0
        %v4144 = vpop.trf.xlu0
        %v4145 = vpop.trf.xlu0
        %v4146 = vpop.trf.xlu0
        %v4147 = vpop.trf.xlu0
        %v4148 = vpop.trf.xlu0
        %v4149 = vpop.trf.xlu0
        %v4150 = vpop.trf.xlu0
        %v4151 = vpop.trf.xlu0
        %v4152 = vpop.trf.xlu0
        %v4153 = vpop.trf.xlu0
        %4154 = vxpose.xlu0.b32.start [1/16] %v4107, 128
        %4155 = vxpose.xlu0.b32.cont [2/16] 0.0, 128
        %4156 = vxpose.xlu0.b32.cont [3/16] 0.0, 128
        %4157 = vxpose.xlu0.b32.cont [4/16] 0.0, 128
        %4158 = vxpose.xlu0.b32.cont [5/16] 0.0, 128
        %4159 = vxpose.xlu0.b32.cont [6/16] 0.0, 128
        %4160 = vxpose.xlu0.b32.cont [7/16] 0.0, 128
        %4161 = vxpose.xlu0.b32.cont [8/16] 0.0, 128
        %4162 = vxpose.xlu0.b32.cont [9/16] 0.0, 128
        %4163 = vxpose.xlu0.b32.cont [10/16] 0.0, 128
        %4164 = vxpose.xlu0.b32.cont [11/16] 0.0, 128
        %4165 = vxpose.xlu0.b32.cont [12/16] 0.0, 128
        %4166 = vxpose.xlu0.b32.cont [13/16] 0.0, 128
        %4167 = vxpose.xlu0.b32.cont [14/16] 0.0, 128
        %4168 = vxpose.xlu0.b32.cont [15/16] 0.0, 128
        %4169 = vxpose.xlu0.b32.end [16/16] 0.0, 128
        %v4170 = vpop.trf.xlu0
        %v4171 = vpop.trf.xlu0
        %v4172 = vpop.trf.xlu0
        %v4173 = vpop.trf.xlu0
        %v4174 = vpop.trf.xlu0
        %v4175 = vpop.trf.xlu0
        %v4176 = vpop.trf.xlu0
        %v4177 = vpop.trf.xlu0
        %v4178 = vpop.trf.xlu0
        %v4179 = vpop.trf.xlu0
        %v4180 = vpop.trf.xlu0
        %v4181 = vpop.trf.xlu0
        %v4182 = vpop.trf.xlu0
        %v4183 = vpop.trf.xlu0
        %v4184 = vpop.trf.xlu0
        %v4185 = vpop.trf.xlu0
        %4186 = vxpose.xlu0.b32.start [1/16] %v4108, 128
        %4187 = vxpose.xlu0.b32.cont [2/16] 0.0, 128
        %4188 = vxpose.xlu0.b32.cont [3/16] 0.0, 128
        %4189 = vxpose.xlu0.b32.cont [4/16] 0.0, 128
        %4190 = vxpose.xlu0.b32.cont [5/16] 0.0, 128
        %4191 = vxpose.xlu0.b32.cont [6/16] 0.0, 128
        %4192 = vxpose.xlu0.b32.cont [7/16] 0.0, 128
        %4193 = vxpose.xlu0.b32.cont [8/16] 0.0, 128
        %4194 = vxpose.xlu0.b32.cont [9/16] 0.0, 128
        %4195 = vxpose.xlu0.b32.cont [10/16] 0.0, 128
        %4196 = vxpose.xlu0.b32.cont [11/16] 0.0, 128
        %4197 = vxpose.xlu0.b32.cont [12/16] 0.0, 128
        %4198 = vxpose.xlu0.b32.cont [13/16] 0.0, 128
        %4199 = vxpose.xlu0.b32.cont [14/16] 0.0, 128
        %4200 = vxpose.xlu0.b32.cont [15/16] 0.0, 128
        %4201 = vxpose.xlu0.b32.end [16/16] 0.0, 128
        %v4202 = vpop.trf.xlu0
        %v4203 = vpop.trf.xlu0
        %v4204 = vpop.trf.xlu0
        %v4205 = vpop.trf.xlu0
        %v4206 = vpop.trf.xlu0
        %v4207 = vpop.trf.xlu0
        %v4208 = vpop.trf.xlu0
        %v4209 = vpop.trf.xlu0
        %v4210 = vpop.trf.xlu0
        %v4211 = vpop.trf.xlu0
        %v4212 = vpop.trf.xlu0
        %v4213 = vpop.trf.xlu0
        %v4214 = vpop.trf.xlu0
        %v4215 = vpop.trf.xlu0
        %v4216 = vpop.trf.xlu0
        %v4217 = vpop.trf.xlu0
        %4218 = vxpose.xlu0.b32.start [1/16] %v4109, 128
        %4219 = vxpose.xlu0.b32.cont [2/16] 0.0, 128
        %4220 = vxpose.xlu0.b32.cont [3/16] 0.0, 128
        %4221 = vxpose.xlu0.b32.cont [4/16] 0.0, 128
        %4222 = vxpose.xlu0.b32.cont [5/16] 0.0, 128
        %4223 = vxpose.xlu0.b32.cont [6/16] 0.0, 128
        %4224 = vxpose.xlu0.b32.cont [7/16] 0.0, 128
        %4225 = vxpose.xlu0.b32.cont [8/16] 0.0, 128
        %4226 = vxpose.xlu0.b32.cont [9/16] 0.0, 128
        %4227 = vxpose.xlu0.b32.cont [10/16] 0.0, 128
        %4228 = vxpose.xlu0.b32.cont [11/16] 0.0, 128
        %4229 = vxpose.xlu0.b32.cont [12/16] 0.0, 128
        %4230 = vxpose.xlu0.b32.cont [13/16] 0.0, 128
        %4231 = vxpose.xlu0.b32.cont [14/16] 0.0, 128
        %4232 = vxpose.xlu0.b32.cont [15/16] 0.0, 128
        %4233 = vxpose.xlu0.b32.end [16/16] 0.0, 128
        %v4234 = vpop.trf.xlu0
        %v4235 = vpop.trf.xlu0
        %v4236 = vpop.trf.xlu0
        %v4237 = vpop.trf.xlu0
        %v4238 = vpop.trf.xlu0
        %v4239 = vpop.trf.xlu0
        %v4240 = vpop.trf.xlu0
        %v4241 = vpop.trf.xlu0
        %v4242 = vpop.trf.xlu0
        %v4243 = vpop.trf.xlu0
        %v4244 = vpop.trf.xlu0
        %v4245 = vpop.trf.xlu0
        %v4246 = vpop.trf.xlu0
        %v4247 = vpop.trf.xlu0
        %v4248 = vpop.trf.xlu0
        %v4249 = vpop.trf.xlu0
        %4250 = vxpose.xlu0.b32.start [1/16] %v4114, 128
        %4251 = vxpose.xlu0.b32.cont [2/16] 0.0, 128
        %4252 = vxpose.xlu0.b32.cont [3/16] 0.0, 128
        %4253 = vxpose.xlu0.b32.cont [4/16] 0.0, 128
        %4254 = vxpose.xlu0.b32.cont [5/16] 0.0, 128
        %4255 = vxpose.xlu0.b32.cont [6/16] 0.0, 128
        %4256 = vxpose.xlu0.b32.cont [7/16] 0.0, 128
        %4257 = vxpose.xlu0.b32.cont [8/16] 0.0, 128
        %4258 = vxpose.xlu0.b32.cont [9/16] 0.0, 128
        %4259 = vxpose.xlu0.b32.cont [10/16] 0.0, 128
        %4260 = vxpose.xlu0.b32.cont [11/16] 0.0, 128
        %4261 = vxpose.xlu0.b32.cont [12/16] 0.0, 128
        %4262 = vxpose.xlu0.b32.cont [13/16] 0.0, 128
        %4263 = vxpose.xlu0.b32.cont [14/16] 0.0, 128
        %4264 = vxpose.xlu0.b32.cont [15/16] 0.0, 128
        %4265 = vxpose.xlu0.b32.end [16/16] 0.0, 128
        %v4266 = vpop.trf.xlu0
        %v4267 = vpop.trf.xlu0
        %v4268 = vpop.trf.xlu0
        %v4269 = vpop.trf.xlu0
        %v4270 = vpop.trf.xlu0
        %v4271 = vpop.trf.xlu0
        %v4272 = vpop.trf.xlu0
        %v4273 = vpop.trf.xlu0
        %v4274 = vpop.trf.xlu0
        %v4275 = vpop.trf.xlu0
        %v4276 = vpop.trf.xlu0
        %v4277 = vpop.trf.xlu0
        %v4278 = vpop.trf.xlu0
        %v4279 = vpop.trf.xlu0
        %v4280 = vpop.trf.xlu0
        %v4281 = vpop.trf.xlu0
        %4282 = vxpose.xlu0.b32.start [1/16] %v4115, 128
        %4283 = vxpose.xlu0.b32.cont [2/16] 0.0, 128
        %4284 = vxpose.xlu0.b32.cont [3/16] 0.0, 128
        %4285 = vxpose.xlu0.b32.cont [4/16] 0.0, 128
        %4286 = vxpose.xlu0.b32.cont [5/16] 0.0, 128
        %4287 = vxpose.xlu0.b32.cont [6/16] 0.0, 128
        %4288 = vxpose.xlu0.b32.cont [7/16] 0.0, 128
        %4289 = vxpose.xlu0.b32.cont [8/16] 0.0, 128
        %4290 = vxpose.xlu0.b32.cont [9/16] 0.0, 128
        %4291 = vxpose.xlu0.b32.cont [10/16] 0.0, 128
        %4292 = vxpose.xlu0.b32.cont [11/16] 0.0, 128
        %4293 = vxpose.xlu0.b32.cont [12/16] 0.0, 128
        %4294 = vxpose.xlu0.b32.cont [13/16] 0.0, 128
        %4295 = vxpose.xlu0.b32.cont [14/16] 0.0, 128
        %4296 = vxpose.xlu0.b32.cont [15/16] 0.0, 128
        %4297 = vxpose.xlu0.b32.end [16/16] 0.0, 128
        %v4298 = vpop.trf.xlu0
        %v4299 = vpop.trf.xlu0
        %v4300 = vpop.trf.xlu0
        %v4301 = vpop.trf.xlu0
        %v4302 = vpop.trf.xlu0
        %v4303 = vpop.trf.xlu0
        %v4304 = vpop.trf.xlu0
        %v4305 = vpop.trf.xlu0
        %v4306 = vpop.trf.xlu0
        %v4307 = vpop.trf.xlu0
        %v4308 = vpop.trf.xlu0
        %v4309 = vpop.trf.xlu0
        %v4310 = vpop.trf.xlu0
        %v4311 = vpop.trf.xlu0
        %v4312 = vpop.trf.xlu0
        %v4313 = vpop.trf.xlu0
        %4314 = vxpose.xlu0.b32.start [1/16] %v4116, 128
        %4315 = vxpose.xlu0.b32.cont [2/16] 0.0, 128
        %4316 = vxpose.xlu0.b32.cont [3/16] 0.0, 128
        %4317 = vxpose.xlu0.b32.cont [4/16] 0.0, 128
        %4318 = vxpose.xlu0.b32.cont [5/16] 0.0, 128
        %4319 = vxpose.xlu0.b32.cont [6/16] 0.0, 128
        %4320 = vxpose.xlu0.b32.cont [7/16] 0.0, 128
        %4321 = vxpose.xlu0.b32.cont [8/16] 0.0, 128
        %4322 = vxpose.xlu0.b32.cont [9/16] 0.0, 128
        %4323 = vxpose.xlu0.b32.cont [10/16] 0.0, 128
        %4324 = vxpose.xlu0.b32.cont [11/16] 0.0, 128
        %4325 = vxpose.xlu0.b32.cont [12/16] 0.0, 128
        %4326 = vxpose.xlu0.b32.cont [13/16] 0.0, 128
        %4327 = vxpose.xlu0.b32.cont [14/16] 0.0, 128
        %4328 = vxpose.xlu0.b32.cont [15/16] 0.0, 128
        %4329 = vxpose.xlu0.b32.end [16/16] 0.0, 128
        %v4330 = vpop.trf.xlu0
        %v4331 = vpop.trf.xlu0
        %v4332 = vpop.trf.xlu0
        %v4333 = vpop.trf.xlu0
        %v4334 = vpop.trf.xlu0
        %v4335 = vpop.trf.xlu0
        %v4336 = vpop.trf.xlu0
        %v4337 = vpop.trf.xlu0
        %v4338 = vpop.trf.xlu0
        %v4339 = vpop.trf.xlu0
        %v4340 = vpop.trf.xlu0
        %v4341 = vpop.trf.xlu0
        %v4342 = vpop.trf.xlu0
        %v4343 = vpop.trf.xlu0
        %v4344 = vpop.trf.xlu0
        %v4345 = vpop.trf.xlu0
        %4346 = vxpose.xlu0.b32.start [1/16] %v4117, 128
        %4347 = vxpose.xlu0.b32.cont [2/16] 0.0, 128
        %4348 = vxpose.xlu0.b32.cont [3/16] 0.0, 128
        %4349 = vxpose.xlu0.b32.cont [4/16] 0.0, 128
        %4350 = vxpose.xlu0.b32.cont [5/16] 0.0, 128
        %4351 = vxpose.xlu0.b32.cont [6/16] 0.0, 128
        %4352 = vxpose.xlu0.b32.cont [7/16] 0.0, 128
        %4353 = vxpose.xlu0.b32.cont [8/16] 0.0, 128
        %4354 = vxpose.xlu0.b32.cont [9/16] 0.0, 128
        %4355 = vxpose.xlu0.b32.cont [10/16] 0.0, 128
        %4356 = vxpose.xlu0.b32.cont [11/16] 0.0, 128
        %4357 = vxpose.xlu0.b32.cont [12/16] 0.0, 128
        %4358 = vxpose.xlu0.b32.cont [13/16] 0.0, 128
        %4359 = vxpose.xlu0.b32.cont [14/16] 0.0, 128
        %4360 = vxpose.xlu0.b32.cont [15/16] 0.0, 128
        %4361 = vxpose.xlu0.b32.end [16/16] 0.0, 128
        %v4362 = vpop.trf.xlu0
        %v4363 = vpop.trf.xlu0
        %v4364 = vpop.trf.xlu0
        %v4365 = vpop.trf.xlu0
        %v4366 = vpop.trf.xlu0
        %v4367 = vpop.trf.xlu0
        %v4368 = vpop.trf.xlu0
        %v4369 = vpop.trf.xlu0
        %v4370 = vpop.trf.xlu0
        %v4371 = vpop.trf.xlu0
        %v4372 = vpop.trf.xlu0
        %v4373 = vpop.trf.xlu0
        %v4374 = vpop.trf.xlu0
        %v4375 = vpop.trf.xlu0
        %v4376 = vpop.trf.xlu0
        %v4377 = vpop.trf.xlu0
        %v4378 = vpack.c.bf16 %v4138, %v4138
        %v4379 = vpack.c.bf16 %v4170, %v4170
        %v4380 = vpack.c.bf16 %v4202, %v4202
        %v4381 = vpack.c.bf16 %v4234, %v4234
        %v4382 = vpack.c.bf16 %v4110, %v4110
        %v4383 = vpack.c.bf16 %v4111, %v4111
        %v4384 = vpack.c.bf16 %v4112, %v4112
        %v4385 = vpack.c.bf16 %v4113, %v4113
        %v4387 = vsel %vm1896, %v4378, 0
        %v4390 = vsel %vm1900, %v4382, 0
        %4392 = vmatprep.subr.bf16.mxu0 0
        %4393 = vmatpush1.bf16.msra.mxu0 %v4390
        %4394 = vmatprep.subr.bf16.mxu0 0
        %4395 = vmatpush1.bf16.msra.mxu0 0
        %4396 = vmatprep.subr.bf16.mxu0 0
        %4397 = vmatpush1.bf16.msra.mxu0 0
        %4398 = vmatprep.subr.bf16.mxu0 0
        %4399 = vmatpush1.bf16.msra.mxu0 0
        %4400 = vmatprep.subr.bf16.mxu0 0
        %4401 = vmatpush1.bf16.msra.mxu0 0
        %4402 = vmatprep.subr.bf16.mxu0 0
        %4403 = vmatpush1.bf16.msra.mxu0 0
        %4404 = vmatprep.subr.bf16.mxu0 0
        %4405 = vmatpush1.bf16.msra.mxu0 0
        %4406 = vmatprep.subr.bf16.mxu0 0
        %4407 = vmatpush1.bf16.msra.mxu0 0
        %4408 = vmatprep.subr.bf16.mxu0 0
        %4409 = vmatpush1.bf16.msra.mxu0 0
        %4410 = vmatprep.subr.bf16.mxu0 0
        %4411 = vmatpush1.bf16.msra.mxu0 0
        %4412 = vmatprep.subr.bf16.mxu0 0
        %4413 = vmatpush1.bf16.msra.mxu0 0
        %4414 = vmatprep.subr.bf16.mxu0 0
        %4415 = vmatpush1.bf16.msra.mxu0 0
        %4416 = vmatprep.subr.bf16.mxu0 0
        %4417 = vmatpush1.bf16.msra.mxu0 0
        %4418 = vmatprep.subr.bf16.mxu0 0
        %4419 = vmatpush1.bf16.msra.mxu0 0
        %4420 = vmatprep.subr.bf16.mxu0 0
        %4421 = vmatpush1.bf16.msra.mxu0 0
        %4422 = vmatprep.subr.bf16.mxu0 0
        %4423 = vmatpush1.bf16.msra.mxu0 0
        %4424 = vmatprep.mubr.bf16.mxu0 0
        %4425 = vmatmul.mubr.bf16.gmra.mrb[0].mxu0 %v4387
        %v4426 = vpop.f32.mrb[0].mxu0
        %v4427 = vadd.f32 0.0, %v4426
        %v4428 = vpop.f32.mrb[0].mxu0
        %v4429 = vpop.f32.mrb[0].mxu0
        %v4430 = vpop.f32.mrb[0].mxu0
        %4431 = vdwg.mxu0
        %v4433 = vsel %vm1896, %v4379, 0
        %v4436 = vsel %vm1900, %v4383, 0
        %4438 = vmatprep.subr.bf16.mxu0 0
        %4439 = vmatpush1.bf16.msra.mxu0 %v4436
        %4440 = vmatprep.subr.bf16.mxu0 0
        %4441 = vmatpush1.bf16.msra.mxu0 0
        %4442 = vmatprep.subr.bf16.mxu0 0
        %4443 = vmatpush1.bf16.msra.mxu0 0
        %4444 = vmatprep.subr.bf16.mxu0 0
        %4445 = vmatpush1.bf16.msra.mxu0 0
        %4446 = vmatprep.subr.bf16.mxu0 0
        %4447 = vmatpush1.bf16.msra.mxu0 0
        %4448 = vmatprep.subr.bf16.mxu0 0
        %4449 = vmatpush1.bf16.msra.mxu0 0
        %4450 = vmatprep.subr.bf16.mxu0 0
        %4451 = vmatpush1.bf16.msra.mxu0 0
        %4452 = vmatprep.subr.bf16.mxu0 0
        %4453 = vmatpush1.bf16.msra.mxu0 0
        %4454 = vmatprep.subr.bf16.mxu0 0
        %4455 = vmatpush1.bf16.msra.mxu0 0
        %4456 = vmatprep.subr.bf16.mxu0 0
        %4457 = vmatpush1.bf16.msra.mxu0 0
        %4458 = vmatprep.subr.bf16.mxu0 0
        %4459 = vmatpush1.bf16.msra.mxu0 0
        %4460 = vmatprep.subr.bf16.mxu0 0
        %4461 = vmatpush1.bf16.msra.mxu0 0
        %4462 = vmatprep.subr.bf16.mxu0 0
        %4463 = vmatpush1.bf16.msra.mxu0 0
        %4464 = vmatprep.subr.bf16.mxu0 0
        %4465 = vmatpush1.bf16.msra.mxu0 0
        %4466 = vmatprep.subr.bf16.mxu0 0
        %4467 = vmatpush1.bf16.msra.mxu0 0
        %4468 = vmatprep.subr.bf16.mxu0 0
        %4469 = vmatpush1.bf16.msra.mxu0 0
        %4470 = vmatprep.mubr.bf16.mxu0 0
        %4471 = vmatmul.mubr.bf16.gmra.mrb[0].mxu0 %v4433
        %v4472 = vpop.f32.mrb[0].mxu0
        %v4473 = vadd.f32 0.0, %v4472
        %v4474 = vpop.f32.mrb[0].mxu0
        %v4475 = vpop.f32.mrb[0].mxu0
        %v4476 = vpop.f32.mrb[0].mxu0
        %4477 = vdwg.mxu0
        %v4479 = vsel %vm1896, %v4380, 0
        %v4482 = vsel %vm1900, %v4384, 0
        %4484 = vmatprep.subr.bf16.mxu0 0
        %4485 = vmatpush1.bf16.msra.mxu0 %v4482
        %4486 = vmatprep.subr.bf16.mxu0 0
        %4487 = vmatpush1.bf16.msra.mxu0 0
        %4488 = vmatprep.subr.bf16.mxu0 0
        %4489 = vmatpush1.bf16.msra.mxu0 0
        %4490 = vmatprep.subr.bf16.mxu0 0
        %4491 = vmatpush1.bf16.msra.mxu0 0
        %4492 = vmatprep.subr.bf16.mxu0 0
        %4493 = vmatpush1.bf16.msra.mxu0 0
        %4494 = vmatprep.subr.bf16.mxu0 0
        %4495 = vmatpush1.bf16.msra.mxu0 0
        %4496 = vmatprep.subr.bf16.mxu0 0
        %4497 = vmatpush1.bf16.msra.mxu0 0
        %4498 = vmatprep.subr.bf16.mxu0 0
        %4499 = vmatpush1.bf16.msra.mxu0 0
        %4500 = vmatprep.subr.bf16.mxu0 0
        %4501 = vmatpush1.bf16.msra.mxu0 0
        %4502 = vmatprep.subr.bf16.mxu0 0
        %4503 = vmatpush1.bf16.msra.mxu0 0
        %4504 = vmatprep.subr.bf16.mxu0 0
        %4505 = vmatpush1.bf16.msra.mxu0 0
        %4506 = vmatprep.subr.bf16.mxu0 0
        %4507 = vmatpush1.bf16.msra.mxu0 0
        %4508 = vmatprep.subr.bf16.mxu0 0
        %4509 = vmatpush1.bf16.msra.mxu0 0
        %4510 = vmatprep.subr.bf16.mxu0 0
        %4511 = vmatpush1.bf16.msra.mxu0 0
        %4512 = vmatprep.subr.bf16.mxu0 0
        %4513 = vmatpush1.bf16.msra.mxu0 0
        %4514 = vmatprep.subr.bf16.mxu0 0
        %4515 = vmatpush1.bf16.msra.mxu0 0
        %4516 = vmatprep.mubr.bf16.mxu0 0
        %4517 = vmatmul.mubr.bf16.gmra.mrb[0].mxu0 %v4479
        %v4518 = vpop.f32.mrb[0].mxu0
        %v4519 = vadd.f32 0.0, %v4518
        %v4520 = vpop.f32.mrb[0].mxu0
        %v4521 = vpop.f32.mrb[0].mxu0
        %v4522 = vpop.f32.mrb[0].mxu0
        %4523 = vdwg.mxu0
        %v4525 = vsel %vm1896, %v4381, 0
        %v4528 = vsel %vm1900, %v4385, 0
        %4530 = vmatprep.subr.bf16.mxu0 0
        %4531 = vmatpush1.bf16.msra.mxu0 %v4528
        %4532 = vmatprep.subr.bf16.mxu0 0
        %4533 = vmatpush1.bf16.msra.mxu0 0
        %4534 = vmatprep.subr.bf16.mxu0 0
        %4535 = vmatpush1.bf16.msra.mxu0 0
        %4536 = vmatprep.subr.bf16.mxu0 0
        %4537 = vmatpush1.bf16.msra.mxu0 0
        %4538 = vmatprep.subr.bf16.mxu0 0
        %4539 = vmatpush1.bf16.msra.mxu0 0
        %4540 = vmatprep.subr.bf16.mxu0 0
        %4541 = vmatpush1.bf16.msra.mxu0 0
        %4542 = vmatprep.subr.bf16.mxu0 0
        %4543 = vmatpush1.bf16.msra.mxu0 0
        %4544 = vmatprep.subr.bf16.mxu0 0
        %4545 = vmatpush1.bf16.msra.mxu0 0
        %4546 = vmatprep.subr.bf16.mxu0 0
        %4547 = vmatpush1.bf16.msra.mxu0 0
        %4548 = vmatprep.subr.bf16.mxu0 0
        %4549 = vmatpush1.bf16.msra.mxu0 0
        %4550 = vmatprep.subr.bf16.mxu0 0
        %4551 = vmatpush1.bf16.msra.mxu0 0
        %4552 = vmatprep.subr.bf16.mxu0 0
        %4553 = vmatpush1.bf16.msra.mxu0 0
        %4554 = vmatprep.subr.bf16.mxu0 0
        %4555 = vmatpush1.bf16.msra.mxu0 0
        %4556 = vmatprep.subr.bf16.mxu0 0
        %4557 = vmatpush1.bf16.msra.mxu0 0
        %4558 = vmatprep.subr.bf16.mxu0 0
        %4559 = vmatpush1.bf16.msra.mxu0 0
        %4560 = vmatprep.subr.bf16.mxu0 0
        %4561 = vmatpush1.bf16.msra.mxu0 0
        %4562 = vmatprep.mubr.bf16.mxu0 0
        %4563 = vmatmul.mubr.bf16.gmra.mrb[0].mxu0 %v4525
        %v4564 = vpop.f32.mrb[0].mxu0
        %v4565 = vadd.f32 0.0, %v4564
        %v4566 = vpop.f32.mrb[0].mxu0
        %v4567 = vpop.f32.mrb[0].mxu0
        %v4568 = vpop.f32.mrb[0].mxu0
        %4569 = vdwg.mxu0
        %v4570 = vmul.f32 %v4427, 0.35355338
        %v4571 = vmul.f32 %v4473, 0.35355338
        %v4572 = vmul.f32 %v4519, 0.35355338
        %v4573 = vmul.f32 %v4565, 0.35355338
        %v4574 = vadd.f32 %v4570, %v1524
        %v4575 = vadd.f32 %v4571, %v1524
        %v4576 = vadd.f32 %v4572, %v1524
        %v4577 = vadd.f32 %v4573, %v1524
        %v4578 = vsel %vm1896, %v4574, -inf
        %4579 = vmax.xlane.f32.xlu0 %v4578
        %v4580 = vpop.xlane.xlu0 %4579
        %v4581 = vsel %vm1896, %v4575, -inf
        %4582 = vmax.xlane.f32.xlu0 %v4581
        %v4583 = vpop.xlane.xlu0 %4582
        %v4584 = vsel %vm1896, %v4576, -inf
        %4585 = vmax.xlane.f32.xlu0 %v4584
        %v4586 = vpop.xlane.xlu0 %4585
        %v4587 = vsel %vm1896, %v4577, -inf
        %4588 = vmax.xlane.f32.xlu0 %v4587
        %v4589 = vpop.xlane.xlu0 %4588
        %v4590 = vsub.f32 %v4574, %v4580
        %v4591 = vsub.f32 %v4575, %v4583
        %v4592 = vsub.f32 %v4576, %v4586
        %v4593 = vsub.f32 %v4577, %v4589
        %v4594 = vmul.f32 %v4590, 1.442695
        %v4595 = vpow.pop %v4594
        %v4596 = vmul.f32 %v4591, 1.442695
        %v4597 = vpow.pop %v4596
        %v4598 = vmul.f32 %v4592, 1.442695
        %v4599 = vpow.pop %v4598
        %v4600 = vmul.f32 %v4593, 1.442695
        %v4601 = vpow.pop %v4600
        %v4602 = vsel %vm1896, %v4595, 0.0
        %4603 = vadd.xlane.f32.xlu0 %v4602
        %v4604 = vpop.xlane.xlu0 %4603
        %v4605 = vsel %vm1896, %v4597, 0.0
        %4606 = vadd.xlane.f32.xlu0 %v4605
        %v4607 = vpop.xlane.xlu0 %4606
        %v4608 = vsel %vm1896, %v4599, 0.0
        %4609 = vadd.xlane.f32.xlu0 %v4608
        %v4610 = vpop.xlane.xlu0 %4609
        %v4611 = vsel %vm1896, %v4601, 0.0
        %4612 = vadd.xlane.f32.xlu0 %v4611
        %v4613 = vpop.xlane.xlu0 %4612
        %v4614 = vrcp.pop %v4604
        %v4615 = vrcp.pop %v4607
        %v4616 = vrcp.pop %v4610
        %v4617 = vrcp.pop %v4613
        %v4618 = vmul.f32 %v4595, %v4614
        %v4619 = vmul.f32 %v4597, %v4615
        %v4620 = vmul.f32 %v4599, %v4616
        %v4621 = vmul.f32 %v4601, %v4617
        %v4622 = vpack.c.bf16 %v4618, %v4618
        %v4623 = vpack.c.bf16 %v4619, %v4619
        %v4624 = vpack.c.bf16 %v4620, %v4620
        %v4625 = vpack.c.bf16 %v4621, %v4621
        %v4626 = vpack.c.bf16 %v4266, %v4266
        %v4627 = vpack.c.bf16 %v4298, %v4298
        %v4628 = vpack.c.bf16 %v4330, %v4330
        %v4629 = vpack.c.bf16 %v4362, %v4362
        %v4631 = vsel %vm1896, %v4622, 0
        %v4634 = vsel %vm1900, %v4626, 0
        %4636 = vmatprep.subr.bf16.mxu0 0
        %4637 = vmatpush1.bf16.msra.mxu0 %v4634
        %4638 = vmatprep.subr.bf16.mxu0 0
        %4639 = vmatpush1.bf16.msra.mxu0 0
        %4640 = vmatprep.subr.bf16.mxu0 0
        %4641 = vmatpush1.bf16.msra.mxu0 0
        %4642 = vmatprep.subr.bf16.mxu0 0
        %4643 = vmatpush1.bf16.msra.mxu0 0
        %4644 = vmatprep.subr.bf16.mxu0 0
        %4645 = vmatpush1.bf16.msra.mxu0 0
        %4646 = vmatprep.subr.bf16.mxu0 0
        %4647 = vmatpush1.bf16.msra.mxu0 0
        %4648 = vmatprep.subr.bf16.mxu0 0
        %4649 = vmatpush1.bf16.msra.mxu0 0
        %4650 = vmatprep.subr.bf16.mxu0 0
        %4651 = vmatpush1.bf16.msra.mxu0 0
        %4652 = vmatprep.subr.bf16.mxu0 0
        %4653 = vmatpush1.bf16.msra.mxu0 0
        %4654 = vmatprep.subr.bf16.mxu0 0
        %4655 = vmatpush1.bf16.msra.mxu0 0
        %4656 = vmatprep.subr.bf16.mxu0 0
        %4657 = vmatpush1.bf16.msra.mxu0 0
        %4658 = vmatprep.subr.bf16.mxu0 0
        %4659 = vmatpush1.bf16.msra.mxu0 0
        %4660 = vmatprep.subr.bf16.mxu0 0
        %4661 = vmatpush1.bf16.msra.mxu0 0
        %4662 = vmatprep.subr.bf16.mxu0 0
        %4663 = vmatpush1.bf16.msra.mxu0 0
        %4664 = vmatprep.subr.bf16.mxu0 0
        %4665 = vmatpush1.bf16.msra.mxu0 0
        %4666 = vmatprep.subr.bf16.mxu0 0
        %4667 = vmatpush1.bf16.msra.mxu0 0
        %4668 = vmatprep.mubr.bf16.mxu0 0
        %4669 = vmatmul.mubr.bf16.gmra.mrb[0].mxu0 %v4631
        %v4670 = vpop.f32.mrb[0].mxu0
        %v4671 = vadd.f32 0.0, %v4670
        %v4672 = vpop.f32.mrb[0].mxu0
        %v4673 = vpop.f32.mrb[0].mxu0
        %v4674 = vpop.f32.mrb[0].mxu0
        %4675 = vdwg.mxu0
        %v4677 = vsel %vm1896, %v4623, 0
        %v4680 = vsel %vm1900, %v4627, 0
        %4682 = vmatprep.subr.bf16.mxu0 0
        %4683 = vmatpush1.bf16.msra.mxu0 %v4680
        %4684 = vmatprep.subr.bf16.mxu0 0
        %4685 = vmatpush1.bf16.msra.mxu0 0
        %4686 = vmatprep.subr.bf16.mxu0 0
        %4687 = vmatpush1.bf16.msra.mxu0 0
        %4688 = vmatprep.subr.bf16.mxu0 0
        %4689 = vmatpush1.bf16.msra.mxu0 0
        %4690 = vmatprep.subr.bf16.mxu0 0
        %4691 = vmatpush1.bf16.msra.mxu0 0
        %4692 = vmatprep.subr.bf16.mxu0 0
        %4693 = vmatpush1.bf16.msra.mxu0 0
        %4694 = vmatprep.subr.bf16.mxu0 0
        %4695 = vmatpush1.bf16.msra.mxu0 0
        %4696 = vmatprep.subr.bf16.mxu0 0
        %4697 = vmatpush1.bf16.msra.mxu0 0
        %4698 = vmatprep.subr.bf16.mxu0 0
        %4699 = vmatpush1.bf16.msra.mxu0 0
        %4700 = vmatprep.subr.bf16.mxu0 0
        %4701 = vmatpush1.bf16.msra.mxu0 0
        %4702 = vmatprep.subr.bf16.mxu0 0
        %4703 = vmatpush1.bf16.msra.mxu0 0
        %4704 = vmatprep.subr.bf16.mxu0 0
        %4705 = vmatpush1.bf16.msra.mxu0 0
        %4706 = vmatprep.subr.bf16.mxu0 0
        %4707 = vmatpush1.bf16.msra.mxu0 0
        %4708 = vmatprep.subr.bf16.mxu0 0
        %4709 = vmatpush1.bf16.msra.mxu0 0
        %4710 = vmatprep.subr.bf16.mxu0 0
        %4711 = vmatpush1.bf16.msra.mxu0 0
        %4712 = vmatprep.subr.bf16.mxu0 0
        %4713 = vmatpush1.bf16.msra.mxu0 0
        %4714 = vmatprep.mubr.bf16.mxu0 0
        %4715 = vmatmul.mubr.bf16.gmra.mrb[0].mxu0 %v4677
        %v4716 = vpop.f32.mrb[0].mxu0
        %v4717 = vadd.f32 0.0, %v4716
        %v4718 = vpop.f32.mrb[0].mxu0
        %v4719 = vpop.f32.mrb[0].mxu0
        %v4720 = vpop.f32.mrb[0].mxu0
        %4721 = vdwg.mxu0
        %v4723 = vsel %vm1896, %v4624, 0
        %v4726 = vsel %vm1900, %v4628, 0
        %4728 = vmatprep.subr.bf16.mxu0 0
        %4729 = vmatpush1.bf16.msra.mxu0 %v4726
        %4730 = vmatprep.subr.bf16.mxu0 0
        %4731 = vmatpush1.bf16.msra.mxu0 0
        %4732 = vmatprep.subr.bf16.mxu0 0
        %4733 = vmatpush1.bf16.msra.mxu0 0
        %4734 = vmatprep.subr.bf16.mxu0 0
        %4735 = vmatpush1.bf16.msra.mxu0 0
        %4736 = vmatprep.subr.bf16.mxu0 0
        %4737 = vmatpush1.bf16.msra.mxu0 0
        %4738 = vmatprep.subr.bf16.mxu0 0
        %4739 = vmatpush1.bf16.msra.mxu0 0
        %4740 = vmatprep.subr.bf16.mxu0 0
        %4741 = vmatpush1.bf16.msra.mxu0 0
        %4742 = vmatprep.subr.bf16.mxu0 0
        %4743 = vmatpush1.bf16.msra.mxu0 0
        %4744 = vmatprep.subr.bf16.mxu0 0
        %4745 = vmatpush1.bf16.msra.mxu0 0
        %4746 = vmatprep.subr.bf16.mxu0 0
        %4747 = vmatpush1.bf16.msra.mxu0 0
        %4748 = vmatprep.subr.bf16.mxu0 0
        %4749 = vmatpush1.bf16.msra.mxu0 0
        %4750 = vmatprep.subr.bf16.mxu0 0
        %4751 = vmatpush1.bf16.msra.mxu0 0
        %4752 = vmatprep.subr.bf16.mxu0 0
        %4753 = vmatpush1.bf16.msra.mxu0 0
        %4754 = vmatprep.subr.bf16.mxu0 0
        %4755 = vmatpush1.bf16.msra.mxu0 0
        %4756 = vmatprep.subr.bf16.mxu0 0
        %4757 = vmatpush1.bf16.msra.mxu0 0
        %4758 = vmatprep.subr.bf16.mxu0 0
        %4759 = vmatpush1.bf16.msra.mxu0 0
        %4760 = vmatprep.mubr.bf16.mxu0 0
        %4761 = vmatmul.mubr.bf16.gmra.mrb[0].mxu0 %v4723
        %v4762 = vpop.f32.mrb[0].mxu0
        %v4763 = vadd.f32 0.0, %v4762
        %v4764 = vpop.f32.mrb[0].mxu0
        %v4765 = vpop.f32.mrb[0].mxu0
        %v4766 = vpop.f32.mrb[0].mxu0
        %4767 = vdwg.mxu0
        %v4769 = vsel %vm1896, %v4625, 0
        %v4772 = vsel %vm1900, %v4629, 0
        %4774 = vmatprep.subr.bf16.mxu0 0
        %4775 = vmatpush1.bf16.msra.mxu0 %v4772
        %4776 = vmatprep.subr.bf16.mxu0 0
        %4777 = vmatpush1.bf16.msra.mxu0 0
        %4778 = vmatprep.subr.bf16.mxu0 0
        %4779 = vmatpush1.bf16.msra.mxu0 0
        %4780 = vmatprep.subr.bf16.mxu0 0
        %4781 = vmatpush1.bf16.msra.mxu0 0
        %4782 = vmatprep.subr.bf16.mxu0 0
        %4783 = vmatpush1.bf16.msra.mxu0 0
        %4784 = vmatprep.subr.bf16.mxu0 0
        %4785 = vmatpush1.bf16.msra.mxu0 0
        %4786 = vmatprep.subr.bf16.mxu0 0
        %4787 = vmatpush1.bf16.msra.mxu0 0
        %4788 = vmatprep.subr.bf16.mxu0 0
        %4789 = vmatpush1.bf16.msra.mxu0 0
        %4790 = vmatprep.subr.bf16.mxu0 0
        %4791 = vmatpush1.bf16.msra.mxu0 0
        %4792 = vmatprep.subr.bf16.mxu0 0
        %4793 = vmatpush1.bf16.msra.mxu0 0
        %4794 = vmatprep.subr.bf16.mxu0 0
        %4795 = vmatpush1.bf16.msra.mxu0 0
        %4796 = vmatprep.subr.bf16.mxu0 0
        %4797 = vmatpush1.bf16.msra.mxu0 0
        %4798 = vmatprep.subr.bf16.mxu0 0
        %4799 = vmatpush1.bf16.msra.mxu0 0
        %4800 = vmatprep.subr.bf16.mxu0 0
        %4801 = vmatpush1.bf16.msra.mxu0 0
        %4802 = vmatprep.subr.bf16.mxu0 0
        %4803 = vmatpush1.bf16.msra.mxu0 0
        %4804 = vmatprep.subr.bf16.mxu0 0
        %4805 = vmatpush1.bf16.msra.mxu0 0
        %4806 = vmatprep.mubr.bf16.mxu0 0
        %4807 = vmatmul.mubr.bf16.gmra.mrb[0].mxu0 %v4769
        %v4808 = vpop.f32.mrb[0].mxu0
        %v4809 = vadd.f32 0.0, %v4808
        %v4810 = vpop.f32.mrb[0].mxu0
        %v4811 = vpop.f32.mrb[0].mxu0
        %v4812 = vpop.f32.mrb[0].mxu0
        %4813 = vdwg.mxu0
        %4814 = vxpose.xlu0.b32.start [1/16] %v4671, 128
        %4815 = vxpose.xlu0.b32.cont [2/16] 0.0, 128
        %4816 = vxpose.xlu0.b32.cont [3/16] 0.0, 128
        %4817 = vxpose.xlu0.b32.cont [4/16] 0.0, 128
        %4818 = vxpose.xlu0.b32.cont [5/16] 0.0, 128
        %4819 = vxpose.xlu0.b32.cont [6/16] 0.0, 128
        %4820 = vxpose.xlu0.b32.cont [7/16] 0.0, 128
        %4821 = vxpose.xlu0.b32.cont [8/16] 0.0, 128
        %4822 = vxpose.xlu0.b32.cont [9/16] 0.0, 128
        %4823 = vxpose.xlu0.b32.cont [10/16] 0.0, 128
        %4824 = vxpose.xlu0.b32.cont [11/16] 0.0, 128
        %4825 = vxpose.xlu0.b32.cont [12/16] 0.0, 128
        %4826 = vxpose.xlu0.b32.cont [13/16] 0.0, 128
        %4827 = vxpose.xlu0.b32.cont [14/16] 0.0, 128
        %4828 = vxpose.xlu0.b32.cont [15/16] 0.0, 128
        %4829 = vxpose.xlu0.b32.end [16/16] 0.0, 128
        %v4830 = vpop.trf.xlu0
        %v4831 = vpop.trf.xlu0
        %v4832 = vpop.trf.xlu0
        %v4833 = vpop.trf.xlu0
        %v4834 = vpop.trf.xlu0
        %v4835 = vpop.trf.xlu0
        %v4836 = vpop.trf.xlu0
        %v4837 = vpop.trf.xlu0
        %v4838 = vpop.trf.xlu0
        %v4839 = vpop.trf.xlu0
        %v4840 = vpop.trf.xlu0
        %v4841 = vpop.trf.xlu0
        %v4842 = vpop.trf.xlu0
        %v4843 = vpop.trf.xlu0
        %v4844 = vpop.trf.xlu0
        %v4845 = vpop.trf.xlu0
        %4846 = vxpose.xlu0.b32.start [1/16] %v4717, 128
        %4847 = vxpose.xlu0.b32.cont [2/16] 0.0, 128
        %4848 = vxpose.xlu0.b32.cont [3/16] 0.0, 128
        %4849 = vxpose.xlu0.b32.cont [4/16] 0.0, 128
        %4850 = vxpose.xlu0.b32.cont [5/16] 0.0, 128
        %4851 = vxpose.xlu0.b32.cont [6/16] 0.0, 128
        %4852 = vxpose.xlu0.b32.cont [7/16] 0.0, 128
        %4853 = vxpose.xlu0.b32.cont [8/16] 0.0, 128
        %4854 = vxpose.xlu0.b32.cont [9/16] 0.0, 128
        %4855 = vxpose.xlu0.b32.cont [10/16] 0.0, 128
        %4856 = vxpose.xlu0.b32.cont [11/16] 0.0, 128
        %4857 = vxpose.xlu0.b32.cont [12/16] 0.0, 128
        %4858 = vxpose.xlu0.b32.cont [13/16] 0.0, 128
        %4859 = vxpose.xlu0.b32.cont [14/16] 0.0, 128
        %4860 = vxpose.xlu0.b32.cont [15/16] 0.0, 128
        %4861 = vxpose.xlu0.b32.end [16/16] 0.0, 128
        %v4862 = vpop.trf.xlu0
        %v4863 = vpop.trf.xlu0
        %v4864 = vpop.trf.xlu0
        %v4865 = vpop.trf.xlu0
        %v4866 = vpop.trf.xlu0
        %v4867 = vpop.trf.xlu0
        %v4868 = vpop.trf.xlu0
        %v4869 = vpop.trf.xlu0
        %v4870 = vpop.trf.xlu0
        %v4871 = vpop.trf.xlu0
        %v4872 = vpop.trf.xlu0
        %v4873 = vpop.trf.xlu0
        %v4874 = vpop.trf.xlu0
        %v4875 = vpop.trf.xlu0
        %v4876 = vpop.trf.xlu0
        %v4877 = vpop.trf.xlu0
        %4878 = vxpose.xlu0.b32.start [1/16] %v4763, 128
        %4879 = vxpose.xlu0.b32.cont [2/16] 0.0, 128
        %4880 = vxpose.xlu0.b32.cont [3/16] 0.0, 128
        %4881 = vxpose.xlu0.b32.cont [4/16] 0.0, 128
        %4882 = vxpose.xlu0.b32.cont [5/16] 0.0, 128
        %4883 = vxpose.xlu0.b32.cont [6/16] 0.0, 128
        %4884 = vxpose.xlu0.b32.cont [7/16] 0.0, 128
        %4885 = vxpose.xlu0.b32.cont [8/16] 0.0, 128
        %4886 = vxpose.xlu0.b32.cont [9/16] 0.0, 128
        %4887 = vxpose.xlu0.b32.cont [10/16] 0.0, 128
        %4888 = vxpose.xlu0.b32.cont [11/16] 0.0, 128
        %4889 = vxpose.xlu0.b32.cont [12/16] 0.0, 128
        %4890 = vxpose.xlu0.b32.cont [13/16] 0.0, 128
        %4891 = vxpose.xlu0.b32.cont [14/16] 0.0, 128
        %4892 = vxpose.xlu0.b32.cont [15/16] 0.0, 128
        %4893 = vxpose.xlu0.b32.end [16/16] 0.0, 128
        %v4894 = vpop.trf.xlu0
        %v4895 = vpop.trf.xlu0
        %v4896 = vpop.trf.xlu0
        %v4897 = vpop.trf.xlu0
        %v4898 = vpop.trf.xlu0
        %v4899 = vpop.trf.xlu0
        %v4900 = vpop.trf.xlu0
        %v4901 = vpop.trf.xlu0
        %v4902 = vpop.trf.xlu0
        %v4903 = vpop.trf.xlu0
        %v4904 = vpop.trf.xlu0
        %v4905 = vpop.trf.xlu0
        %v4906 = vpop.trf.xlu0
        %v4907 = vpop.trf.xlu0
        %v4908 = vpop.trf.xlu0
        %v4909 = vpop.trf.xlu0
        %4910 = vxpose.xlu0.b32.start [1/16] %v4809, 128
        %4911 = vxpose.xlu0.b32.cont [2/16] 0.0, 128
        %4912 = vxpose.xlu0.b32.cont [3/16] 0.0, 128
        %4913 = vxpose.xlu0.b32.cont [4/16] 0.0, 128
        %4914 = vxpose.xlu0.b32.cont [5/16] 0.0, 128
        %4915 = vxpose.xlu0.b32.cont [6/16] 0.0, 128
        %4916 = vxpose.xlu0.b32.cont [7/16] 0.0, 128
        %4917 = vxpose.xlu0.b32.cont [8/16] 0.0, 128
        %4918 = vxpose.xlu0.b32.cont [9/16] 0.0, 128
        %4919 = vxpose.xlu0.b32.cont [10/16] 0.0, 128
        %4920 = vxpose.xlu0.b32.cont [11/16] 0.0, 128
        %4921 = vxpose.xlu0.b32.cont [12/16] 0.0, 128
        %4922 = vxpose.xlu0.b32.cont [13/16] 0.0, 128
        %4923 = vxpose.xlu0.b32.cont [14/16] 0.0, 128
        %4924 = vxpose.xlu0.b32.cont [15/16] 0.0, 128
        %4925 = vxpose.xlu0.b32.end [16/16] 0.0, 128
        %v4926 = vpop.trf.xlu0
        %v4927 = vpop.trf.xlu0
        %v4928 = vpop.trf.xlu0
        %v4929 = vpop.trf.xlu0
        %v4930 = vpop.trf.xlu0
        %v4931 = vpop.trf.xlu0
        %v4932 = vpop.trf.xlu0
        %v4933 = vpop.trf.xlu0
        %v4934 = vpop.trf.xlu0
        %v4935 = vpop.trf.xlu0
        %v4936 = vpop.trf.xlu0
        %v4937 = vpop.trf.xlu0
        %v4938 = vpop.trf.xlu0
        %v4939 = vpop.trf.xlu0
        %v4940 = vpop.trf.xlu0
        %v4941 = vpop.trf.xlu0
        %4942 = vxpose.xlu0.b32.start [1/16] %v4830, 128
        %4943 = vxpose.xlu0.b32.cont [2/16] %v4862, 128
        %4944 = vxpose.xlu0.b32.cont [3/16] %v4894, 128
        %4945 = vxpose.xlu0.b32.cont [4/16] %v4926, 128
        %4946 = vxpose.xlu0.b32.cont [5/16] 0.0, 128
        %4947 = vxpose.xlu0.b32.cont [6/16] 0.0, 128
        %4948 = vxpose.xlu0.b32.cont [7/16] 0.0, 128
        %4949 = vxpose.xlu0.b32.cont [8/16] 0.0, 128
        %4950 = vxpose.xlu0.b32.cont [9/16] 0.0, 128
        %4951 = vxpose.xlu0.b32.cont [10/16] 0.0, 128
        %4952 = vxpose.xlu0.b32.cont [11/16] 0.0, 128
        %4953 = vxpose.xlu0.b32.cont [12/16] 0.0, 128
        %4954 = vxpose.xlu0.b32.cont [13/16] 0.0, 128
        %4955 = vxpose.xlu0.b32.cont [14/16] 0.0, 128
        %4956 = vxpose.xlu0.b32.cont [15/16] 0.0, 128
        %4957 = vxpose.xlu0.b32.end [16/16] 0.0, 128
        %v4958 = vpop.trf.xlu0
        %v4959 = vpop.trf.xlu0
        %v4960 = vpop.trf.xlu0
        %v4961 = vpop.trf.xlu0
        %v4962 = vpop.trf.xlu0
        %v4963 = vpop.trf.xlu0
        %v4964 = vpop.trf.xlu0
        %v4965 = vpop.trf.xlu0
        %v4966 = vpop.trf.xlu0
        %v4967 = vpop.trf.xlu0
        %v4968 = vpop.trf.xlu0
        %v4969 = vpop.trf.xlu0
        %v4970 = vpop.trf.xlu0
        %v4971 = vpop.trf.xlu0
        %v4972 = vpop.trf.xlu0
        %v4973 = vpop.trf.xlu0
        %v4974 = vpack.c.bf16 %v4958, %v4958
        %v4976 = vlaneseq
        %v4977 = vshrl.u32 %v4976, 7
        %v4978 = vsub.s32 0, %v4977
        %v4979 = vrot.slane %v4027, %v4978
        %v4985 = vunpack.c.l.b16 %v4023
        %v4986 = vunpack.c.l.b16 %v4024
        %v4987 = vunpack.c.l.b16 %v4025
        %v4988 = vunpack.c.l.b16 %v4026
        %v4989 = vpack.c.b16 %v4986, %v4985
        %v4990 = vpack.c.b16 %v4988, %v4987
        %v4994 = vsel %vm1556, %v4974, 0
        %4996 = vmatprep.subr.bf16.mxu0 0
        %4997 = vmatpush1.bf16.msra.mxu0 %v4989
        %4998 = vmatprep.subr.bf16.mxu0 0
        %4999 = vmatpush1.bf16.msra.mxu0 %v4990
        %5000 = vmatprep.subr.bf16.mxu0 0
        %5001 = vmatpush1.bf16.msra.mxu0 0
        %5002 = vmatprep.subr.bf16.mxu0 0
        %5003 = vmatpush1.bf16.msra.mxu0 0
        %5004 = vmatprep.subr.bf16.mxu0 0
        %5005 = vmatpush1.bf16.msra.mxu0 0
        %5006 = vmatprep.subr.bf16.mxu0 0
        %5007 = vmatpush1.bf16.msra.mxu0 0
        %5008 = vmatprep.subr.bf16.mxu0 0
        %5009 = vmatpush1.bf16.msra.mxu0 0
        %5010 = vmatprep.subr.bf16.mxu0 0
        %5011 = vmatpush1.bf16.msra.mxu0 0
        %5012 = vmatprep.subr.bf16.mxu0 0
        %5013 = vmatpush1.bf16.msra.mxu0 0
        %5014 = vmatprep.subr.bf16.mxu0 0
        %5015 = vmatpush1.bf16.msra.mxu0 0
        %5016 = vmatprep.subr.bf16.mxu0 0
        %5017 = vmatpush1.bf16.msra.mxu0 0
        %5018 = vmatprep.subr.bf16.mxu0 0
        %5019 = vmatpush1.bf16.msra.mxu0 0
        %5020 = vmatprep.subr.bf16.mxu0 0
        %5021 = vmatpush1.bf16.msra.mxu0 0
        %5022 = vmatprep.subr.bf16.mxu0 0
        %5023 = vmatpush1.bf16.msra.mxu0 0
        %5024 = vmatprep.subr.bf16.mxu0 0
        %5025 = vmatpush1.bf16.msra.mxu0 0
        %5026 = vmatprep.subr.bf16.mxu0 0
        %5027 = vmatpush1.bf16.msra.mxu0 0
        %5028 = vmatprep.mubr.bf16.mxu0 0
        %5029 = vmatmul.mubr.bf16.gmra.mrb[0].mxu0 %v4994
        %v5030 = vpop.f32.mrb[0].mxu0
        %v5031 = vadd.f32 %v4979, %v5030
        %v5032 = vpop.f32.mrb[0].mxu0
        %v5033 = vpop.f32.mrb[0].mxu0
        %v5034 = vpop.f32.mrb[0].mxu0
        %5035 = vdwg.mxu0
        %v5036 = vadd.f32 %v4017, %v5031
        %v5037 = vld [vmem:[#allocation35] sm:$0x1]
        %v5038 = vld [vmem:[%s63] sm:$0x1]
        %v5039 = vsel %vm1556, %v5036, 0.0
        %5040 = vadd.xlane.f32.xlu0 %v5039
        %v5041 = vpop.xlane.xlu0 %5040
        %v5042 = vmul.f32 %v5041, %v2560
        %v5043 = vmul.f32 %v5036, %v5036
        %v5044 = vsel %vm1556, %v5043, 0.0
        %5045 = vadd.xlane.f32.xlu0 %v5044
        %v5046 = vpop.xlane.xlu0 %5045
        %v5047 = vmul.f32 %v5046, %v2560
        %v5048 = vmul.f32 %v5042, %v5042
        %v5049 = vsub.f32 %v5047, %v5048
        %v5050 = vsub.f32 %v5036, %v5042
        %v5051 = vadd.f32 %v5049, 1e-05
        %v5052 = vrsqrt.pop %v5051
        %v5053 = vmul.f32 %v5050, %v5052
        %v5055 = vlaneseq
        %v5056 = vshrl.u32 %v5055, 7
        %v5057 = vsub.s32 0, %v5056
        %v5058 = vrot.slane %v5037, %v5057
        %v5060 = vmul.f32 %v5053, %v5058
        %v5062 = vlaneseq
        %v5063 = vshrl.u32 %v5062, 7
        %v5064 = vsub.s32 0, %v5063
        %v5065 = vrot.slane %v5038, %v5064
        %v5067 = vadd.f32 %v5060, %v5065
        %v5068 = vld [vmem:[%s41] sm:$0xf]
        %v5069 = vld [vmem:[%s41 + $0x4] sm:$0xf]
        %v5070 = vld [vmem:[%s41 + $0x8] sm:$0xf]
        %v5071 = vld [vmem:[%s41 + $0xc] sm:$0xf]
        %v5072 = vld [vmem:[#allocation25] sm:$0x1]
        %v5073 = vld [vmem:[#allocation26] sm:$0xf]
        %v5074 = vld [vmem:[#allocation26 + $0x4] sm:$0xf]
        %v5075 = vld [vmem:[#allocation26 + $0x8] sm:$0xf]
        %v5076 = vld [vmem:[#allocation26 + $0xc] sm:$0xf]
        %v5077 = vld [vmem:[#allocation28] sm:$0x1]
        %v5078 = vld [vmem:[#allocation29] sm:$0xf]
        %v5079 = vld [vmem:[#allocation29 + $0x4] sm:$0xf]
        %v5080 = vld [vmem:[#allocation29 + $0x8] sm:$0xf]
        %v5081 = vld [vmem:[#allocation29 + $0xc] sm:$0xf]
        %v5082 = vld [vmem:[#allocation31] sm:$0x1]
        %v5083 = vpack.c.bf16 %v5067, %v5067
        %v5085 = vlaneseq
        %v5086 = vshrl.u32 %v5085, 7
        %v5087 = vsub.s32 0, %v5086
        %v5088 = vrot.slane %v5072, %v5087
        %v5094 = vunpack.c.l.b16 %v5068
        %v5095 = vunpack.c.l.b16 %v5069
        %v5096 = vunpack.c.l.b16 %v5070
        %v5097 = vunpack.c.l.b16 %v5071
        %v5098 = vpack.c.b16 %v5095, %v5094
        %v5099 = vpack.c.b16 %v5097, %v5096
        %v5103 = vsel %vm1556, %v5083, 0
        %5105 = vmatprep.subr.bf16.mxu0 0
        %5106 = vmatpush1.bf16.msra.mxu0 %v5098
        %5107 = vmatprep.subr.bf16.mxu0 0
        %5108 = vmatpush1.bf16.msra.mxu0 %v5099
        %5109 = vmatprep.subr.bf16.mxu0 0
        %5110 = vmatpush1.bf16.msra.mxu0 0
        %5111 = vmatprep.subr.bf16.mxu0 0
        %5112 = vmatpush1.bf16.msra.mxu0 0
        %5113 = vmatprep.subr.bf16.mxu0 0
        %5114 = vmatpush1.bf16.msra.mxu0 0
        %5115 = vmatprep.subr.bf16.mxu0 0
        %5116 = vmatpush1.bf16.msra.mxu0 0
        %5117 = vmatprep.subr.bf16.mxu0 0
        %5118 = vmatpush1.bf16.msra.mxu0 0
        %5119 = vmatprep.subr.bf16.mxu0 0
        %5120 = vmatpush1.bf16.msra.mxu0 0
        %5121 = vmatprep.subr.bf16.mxu0 0
        %5122 = vmatpush1.bf16.msra.mxu0 0
        %5123 = vmatprep.subr.bf16.mxu0 0
        %5124 = vmatpush1.bf16.msra.mxu0 0
        %5125 = vmatprep.subr.bf16.mxu0 0
        %5126 = vmatpush1.bf16.msra.mxu0 0
        %5127 = vmatprep.subr.bf16.mxu0 0
        %5128 = vmatpush1.bf16.msra.mxu0 0
        %5129 = vmatprep.subr.bf16.mxu0 0
        %5130 = vmatpush1.bf16.msra.mxu0 0
        %5131 = vmatprep.subr.bf16.mxu0 0
        %5132 = vmatpush1.bf16.msra.mxu0 0
        %5133 = vmatprep.subr.bf16.mxu0 0
        %5134 = vmatpush1.bf16.msra.mxu0 0
        %5135 = vmatprep.subr.bf16.mxu0 0
        %5136 = vmatpush1.bf16.msra.mxu0 0
        %5137 = vmatprep.mubr.bf16.mxu0 0
        %5138 = vmatmul.mubr.bf16.gmra.mrb[0].mxu0 %v5103
        %v5139 = vpop.f32.mrb[0].mxu0
        %v5140 = vadd.f32 %v5088, %v5139
        %v5141 = vpop.f32.mrb[0].mxu0
        %v5142 = vpop.f32.mrb[0].mxu0
        %v5143 = vpop.f32.mrb[0].mxu0
        %5144 = vdwg.mxu0
        %v5145 = vpack.c.bf16 %v4015, %v4015
        %v5147 = vlaneseq
        %v5148 = vshrl.u32 %v5147, 7
        %v5149 = vsub.s32 0, %v5148
        %v5150 = vrot.slane %v5077, %v5149
        %v5156 = vunpack.c.l.b16 %v5073
        %v5157 = vunpack.c.l.b16 %v5074
        %v5158 = vunpack.c.l.b16 %v5075
        %v5159 = vunpack.c.l.b16 %v5076
        %v5160 = vpack.c.b16 %v5157, %v5156
        %v5161 = vpack.c.b16 %v5159, %v5158
        %v5165 = vsel %vm1556, %v5145, 0
        %5167 = vmatprep.subr.bf16.mxu0 0
        %5168 = vmatpush1.bf16.msra.mxu0 %v5160
        %5169 = vmatprep.subr.bf16.mxu0 0
        %5170 = vmatpush1.bf16.msra.mxu0 %v5161
        %5171 = vmatprep.subr.bf16.mxu0 0
        %5172 = vmatpush1.bf16.msra.mxu0 0
        %5173 = vmatprep.subr.bf16.mxu0 0
        %5174 = vmatpush1.bf16.msra.mxu0 0
        %5175 = vmatprep.subr.bf16.mxu0 0
        %5176 = vmatpush1.bf16.msra.mxu0 0
        %5177 = vmatprep.subr.bf16.mxu0 0
        %5178 = vmatpush1.bf16.msra.mxu0 0
        %5179 = vmatprep.subr.bf16.mxu0 0
        %5180 = vmatpush1.bf16.msra.mxu0 0
        %5181 = vmatprep.subr.bf16.mxu0 0
        %5182 = vmatpush1.bf16.msra.mxu0 0
        %5183 = vmatprep.subr.bf16.mxu0 0
        %5184 = vmatpush1.bf16.msra.mxu0 0
        %5185 = vmatprep.subr.bf16.mxu0 0
        %5186 = vmatpush1.bf16.msra.mxu0 0
        %5187 = vmatprep.subr.bf16.mxu0 0
        %5188 = vmatpush1.bf16.msra.mxu0 0
        %5189 = vmatprep.subr.bf16.mxu0 0
        %5190 = vmatpush1.bf16.msra.mxu0 0
        %5191 = vmatprep.subr.bf16.mxu0 0
        %5192 = vmatpush1.bf16.msra.mxu0 0
        %5193 = vmatprep.subr.bf16.mxu0 0
        %5194 = vmatpush1.bf16.msra.mxu0 0
        %5195 = vmatprep.subr.bf16.mxu0 0
        %5196 = vmatpush1.bf16.msra.mxu0 0
        %5197 = vmatprep.subr.bf16.mxu0 0
        %5198 = vmatpush1.bf16.msra.mxu0 0
        %5199 = vmatprep.mubr.bf16.mxu0 0
        %5200 = vmatmul.mubr.bf16.gmra.mrb[0].mxu0 %v5165
        %v5201 = vpop.f32.mrb[0].mxu0
        %v5202 = vadd.f32 %v5150, %v5201
        %v5203 = vpop.f32.mrb[0].mxu0
        %v5204 = vpop.f32.mrb[0].mxu0
        %v5205 = vpop.f32.mrb[0].mxu0
        %5206 = vdwg.mxu0
        %5207 = vxpose.xlu0.b32.start [1/16] %v5202, 128
        %5208 = vxpose.xlu0.b32.cont [2/16] 0.0, 128
        %5209 = vxpose.xlu0.b32.cont [3/16] 0.0, 128
        %5210 = vxpose.xlu0.b32.cont [4/16] 0.0, 128
        %5211 = vxpose.xlu0.b32.cont [5/16] 0.0, 128
        %5212 = vxpose.xlu0.b32.cont [6/16] 0.0, 128
        %5213 = vxpose.xlu0.b32.cont [7/16] 0.0, 128
        %5214 = vxpose.xlu0.b32.cont [8/16] 0.0, 128
        %5215 = vxpose.xlu0.b32.cont [9/16] 0.0, 128
        %5216 = vxpose.xlu0.b32.cont [10/16] 0.0, 128
        %5217 = vxpose.xlu0.b32.cont [11/16] 0.0, 128
        %5218 = vxpose.xlu0.b32.cont [12/16] 0.0, 128
        %5219 = vxpose.xlu0.b32.cont [13/16] 0.0, 128
        %5220 = vxpose.xlu0.b32.cont [14/16] 0.0, 128
        %5221 = vxpose.xlu0.b32.cont [15/16] 0.0, 128
        %5222 = vxpose.xlu0.b32.end [16/16] 0.0, 128
        %v5223 = vpop.trf.xlu0
        %v5224 = vpop.trf.xlu0
        %v5225 = vpop.trf.xlu0
        %v5226 = vpop.trf.xlu0
        %v5227 = vpop.trf.xlu0
        %v5228 = vpop.trf.xlu0
        %v5229 = vpop.trf.xlu0
        %v5230 = vpop.trf.xlu0
        %v5231 = vpop.trf.xlu0
        %v5232 = vpop.trf.xlu0
        %v5233 = vpop.trf.xlu0
        %v5234 = vpop.trf.xlu0
        %v5235 = vpop.trf.xlu0
        %v5236 = vpop.trf.xlu0
        %v5237 = vpop.trf.xlu0
        %v5238 = vpop.trf.xlu0
        %5239 = vxpose.xlu0.b32.start [1/16] %v5227, 128
        %5240 = vxpose.xlu0.b32.cont [2/16] 0.0, 128
        %5241 = vxpose.xlu0.b32.cont [3/16] 0.0, 128
        %5242 = vxpose.xlu0.b32.cont [4/16] 0.0, 128
        %5243 = vxpose.xlu0.b32.cont [5/16] 0.0, 128
        %5244 = vxpose.xlu0.b32.cont [6/16] 0.0, 128
        %5245 = vxpose.xlu0.b32.cont [7/16] 0.0, 128
        %5246 = vxpose.xlu0.b32.cont [8/16] 0.0, 128
        %5247 = vxpose.xlu0.b32.cont [9/16] 0.0, 128
        %5248 = vxpose.xlu0.b32.cont [10/16] 0.0, 128
        %5249 = vxpose.xlu0.b32.cont [11/16] 0.0, 128
        %5250 = vxpose.xlu0.b32.cont [12/16] 0.0, 128
        %5251 = vxpose.xlu0.b32.cont [13/16] 0.0, 128
        %5252 = vxpose.xlu0.b32.cont [14/16] 0.0, 128
        %5253 = vxpose.xlu0.b32.cont [15/16] 0.0, 128
        %5254 = vxpose.xlu0.b32.end [16/16] 0.0, 128
        %v5255 = vpop.trf.xlu0
        %v5256 = vpop.trf.xlu0
        %v5257 = vpop.trf.xlu0
        %v5258 = vpop.trf.xlu0
        %v5259 = vpop.trf.xlu0
        %v5260 = vpop.trf.xlu0
        %v5261 = vpop.trf.xlu0
        %v5262 = vpop.trf.xlu0
        %v5263 = vpop.trf.xlu0
        %v5264 = vpop.trf.xlu0
        %v5265 = vpop.trf.xlu0
        %v5266 = vpop.trf.xlu0
        %v5267 = vpop.trf.xlu0
        %v5268 = vpop.trf.xlu0
        %v5269 = vpop.trf.xlu0
        %v5270 = vpop.trf.xlu0
        %5271 = vxpose.xlu0.b32.start [1/16] %v5228, 128
        %5272 = vxpose.xlu0.b32.cont [2/16] 0.0, 128
        %5273 = vxpose.xlu0.b32.cont [3/16] 0.0, 128
        %5274 = vxpose.xlu0.b32.cont [4/16] 0.0, 128
        %5275 = vxpose.xlu0.b32.cont [5/16] 0.0, 128
        %5276 = vxpose.xlu0.b32.cont [6/16] 0.0, 128
        %5277 = vxpose.xlu0.b32.cont [7/16] 0.0, 128
        %5278 = vxpose.xlu0.b32.cont [8/16] 0.0, 128
        %5279 = vxpose.xlu0.b32.cont [9/16] 0.0, 128
        %5280 = vxpose.xlu0.b32.cont [10/16] 0.0, 128
        %5281 = vxpose.xlu0.b32.cont [11/16] 0.0, 128
        %5282 = vxpose.xlu0.b32.cont [12/16] 0.0, 128
        %5283 = vxpose.xlu0.b32.cont [13/16] 0.0, 128
        %5284 = vxpose.xlu0.b32.cont [14/16] 0.0, 128
        %5285 = vxpose.xlu0.b32.cont [15/16] 0.0, 128
        %5286 = vxpose.xlu0.b32.end [16/16] 0.0, 128
        %v5287 = vpop.trf.xlu0
        %v5288 = vpop.trf.xlu0
        %v5289 = vpop.trf.xlu0
        %v5290 = vpop.trf.xlu0
        %v5291 = vpop.trf.xlu0
        %v5292 = vpop.trf.xlu0
        %v5293 = vpop.trf.xlu0
        %v5294 = vpop.trf.xlu0
        %v5295 = vpop.trf.xlu0
        %v5296 = vpop.trf.xlu0
        %v5297 = vpop.trf.xlu0
        %v5298 = vpop.trf.xlu0
        %v5299 = vpop.trf.xlu0
        %v5300 = vpop.trf.xlu0
        %v5301 = vpop.trf.xlu0
        %v5302 = vpop.trf.xlu0
        %5303 = vxpose.xlu0.b32.start [1/16] %v5229, 128
        %5304 = vxpose.xlu0.b32.cont [2/16] 0.0, 128
        %5305 = vxpose.xlu0.b32.cont [3/16] 0.0, 128
        %5306 = vxpose.xlu0.b32.cont [4/16] 0.0, 128
        %5307 = vxpose.xlu0.b32.cont [5/16] 0.0, 128
        %5308 = vxpose.xlu0.b32.cont [6/16] 0.0, 128
        %5309 = vxpose.xlu0.b32.cont [7/16] 0.0, 128
        %5310 = vxpose.xlu0.b32.cont [8/16] 0.0, 128
        %5311 = vxpose.xlu0.b32.cont [9/16] 0.0, 128
        %5312 = vxpose.xlu0.b32.cont [10/16] 0.0, 128
        %5313 = vxpose.xlu0.b32.cont [11/16] 0.0, 128
        %5314 = vxpose.xlu0.b32.cont [12/16] 0.0, 128
        %5315 = vxpose.xlu0.b32.cont [13/16] 0.0, 128
        %5316 = vxpose.xlu0.b32.cont [14/16] 0.0, 128
        %5317 = vxpose.xlu0.b32.cont [15/16] 0.0, 128
        %5318 = vxpose.xlu0.b32.end [16/16] 0.0, 128
        %v5319 = vpop.trf.xlu0
        %v5320 = vpop.trf.xlu0
        %v5321 = vpop.trf.xlu0
        %v5322 = vpop.trf.xlu0
        %v5323 = vpop.trf.xlu0
        %v5324 = vpop.trf.xlu0
        %v5325 = vpop.trf.xlu0
        %v5326 = vpop.trf.xlu0
        %v5327 = vpop.trf.xlu0
        %v5328 = vpop.trf.xlu0
        %v5329 = vpop.trf.xlu0
        %v5330 = vpop.trf.xlu0
        %v5331 = vpop.trf.xlu0
        %v5332 = vpop.trf.xlu0
        %v5333 = vpop.trf.xlu0
        %v5334 = vpop.trf.xlu0
        %5335 = vxpose.xlu0.b32.start [1/16] %v5230, 128
        %5336 = vxpose.xlu0.b32.cont [2/16] 0.0, 128
        %5337 = vxpose.xlu0.b32.cont [3/16] 0.0, 128
        %5338 = vxpose.xlu0.b32.cont [4/16] 0.0, 128
        %5339 = vxpose.xlu0.b32.cont [5/16] 0.0, 128
        %5340 = vxpose.xlu0.b32.cont [6/16] 0.0, 128
        %5341 = vxpose.xlu0.b32.cont [7/16] 0.0, 128
        %5342 = vxpose.xlu0.b32.cont [8/16] 0.0, 128
        %5343 = vxpose.xlu0.b32.cont [9/16] 0.0, 128
        %5344 = vxpose.xlu0.b32.cont [10/16] 0.0, 128
        %5345 = vxpose.xlu0.b32.cont [11/16] 0.0, 128
        %5346 = vxpose.xlu0.b32.cont [12/16] 0.0, 128
        %5347 = vxpose.xlu0.b32.cont [13/16] 0.0, 128
        %5348 = vxpose.xlu0.b32.cont [14/16] 0.0, 128
        %5349 = vxpose.xlu0.b32.cont [15/16] 0.0, 128
        %5350 = vxpose.xlu0.b32.end [16/16] 0.0, 128
        %v5351 = vpop.trf.xlu0
        %v5352 = vpop.trf.xlu0
        %v5353 = vpop.trf.xlu0
        %v5354 = vpop.trf.xlu0
        %v5355 = vpop.trf.xlu0
        %v5356 = vpop.trf.xlu0
        %v5357 = vpop.trf.xlu0
        %v5358 = vpop.trf.xlu0
        %v5359 = vpop.trf.xlu0
        %v5360 = vpop.trf.xlu0
        %v5361 = vpop.trf.xlu0
        %v5362 = vpop.trf.xlu0
        %v5363 = vpop.trf.xlu0
        %v5364 = vpop.trf.xlu0
        %v5365 = vpop.trf.xlu0
        %v5366 = vpop.trf.xlu0
        %5367 = vxpose.xlu0.b32.start [1/16] %v5140, 128
        %5368 = vxpose.xlu0.b32.cont [2/16] 0.0, 128
        %5369 = vxpose.xlu0.b32.cont [3/16] 0.0, 128
        %5370 = vxpose.xlu0.b32.cont [4/16] 0.0, 128
        %5371 = vxpose.xlu0.b32.cont [5/16] 0.0, 128
        %5372 = vxpose.xlu0.b32.cont [6/16] 0.0, 128
        %5373 = vxpose.xlu0.b32.cont [7/16] 0.0, 128
        %5374 = vxpose.xlu0.b32.cont [8/16] 0.0, 128
        %5375 = vxpose.xlu0.b32.cont [9/16] 0.0, 128
        %5376 = vxpose.xlu0.b32.cont [10/16] 0.0, 128
        %5377 = vxpose.xlu0.b32.cont [11/16] 0.0, 128
        %5378 = vxpose.xlu0.b32.cont [12/16] 0.0, 128
        %5379 = vxpose.xlu0.b32.cont [13/16] 0.0, 128
        %5380 = vxpose.xlu0.b32.cont [14/16] 0.0, 128
        %5381 = vxpose.xlu0.b32.cont [15/16] 0.0, 128
        %5382 = vxpose.xlu0.b32.end [16/16] 0.0, 128
        %v5383 = vpop.trf.xlu0
        %v5384 = vpop.trf.xlu0
        %v5385 = vpop.trf.xlu0
        %v5386 = vpop.trf.xlu0
        %v5387 = vpop.trf.xlu0
        %v5388 = vpop.trf.xlu0
        %v5389 = vpop.trf.xlu0
        %v5390 = vpop.trf.xlu0
        %v5391 = vpop.trf.xlu0
        %v5392 = vpop.trf.xlu0
        %v5393 = vpop.trf.xlu0
        %v5394 = vpop.trf.xlu0
        %v5395 = vpop.trf.xlu0
        %v5396 = vpop.trf.xlu0
        %v5397 = vpop.trf.xlu0
        %v5398 = vpop.trf.xlu0
        %5399 = vxpose.xlu0.b32.start [1/16] %v5383, 128
        %5400 = vxpose.xlu0.b32.cont [2/16] 0.0, 128
        %5401 = vxpose.xlu0.b32.cont [3/16] 0.0, 128
        %5402 = vxpose.xlu0.b32.cont [4/16] 0.0, 128
        %5403 = vxpose.xlu0.b32.cont [5/16] 0.0, 128
        %5404 = vxpose.xlu0.b32.cont [6/16] 0.0, 128
        %5405 = vxpose.xlu0.b32.cont [7/16] 0.0, 128
        %5406 = vxpose.xlu0.b32.cont [8/16] 0.0, 128
        %5407 = vxpose.xlu0.b32.cont [9/16] 0.0, 128
        %5408 = vxpose.xlu0.b32.cont [10/16] 0.0, 128
        %5409 = vxpose.xlu0.b32.cont [11/16] 0.0, 128
        %5410 = vxpose.xlu0.b32.cont [12/16] 0.0, 128
        %5411 = vxpose.xlu0.b32.cont [13/16] 0.0, 128
        %5412 = vxpose.xlu0.b32.cont [14/16] 0.0, 128
        %5413 = vxpose.xlu0.b32.cont [15/16] 0.0, 128
        %5414 = vxpose.xlu0.b32.end [16/16] 0.0, 128
        %v5415 = vpop.trf.xlu0
        %v5416 = vpop.trf.xlu0
        %v5417 = vpop.trf.xlu0
        %v5418 = vpop.trf.xlu0
        %v5419 = vpop.trf.xlu0
        %v5420 = vpop.trf.xlu0
        %v5421 = vpop.trf.xlu0
        %v5422 = vpop.trf.xlu0
        %v5423 = vpop.trf.xlu0
        %v5424 = vpop.trf.xlu0
        %v5425 = vpop.trf.xlu0
        %v5426 = vpop.trf.xlu0
        %v5427 = vpop.trf.xlu0
        %v5428 = vpop.trf.xlu0
        %v5429 = vpop.trf.xlu0
        %v5430 = vpop.trf.xlu0
        %5431 = vxpose.xlu0.b32.start [1/16] %v5384, 128
        %5432 = vxpose.xlu0.b32.cont [2/16] 0.0, 128
        %5433 = vxpose.xlu0.b32.cont [3/16] 0.0, 128
        %5434 = vxpose.xlu0.b32.cont [4/16] 0.0, 128
        %5435 = vxpose.xlu0.b32.cont [5/16] 0.0, 128
        %5436 = vxpose.xlu0.b32.cont [6/16] 0.0, 128
        %5437 = vxpose.xlu0.b32.cont [7/16] 0.0, 128
        %5438 = vxpose.xlu0.b32.cont [8/16] 0.0, 128
        %5439 = vxpose.xlu0.b32.cont [9/16] 0.0, 128
        %5440 = vxpose.xlu0.b32.cont [10/16] 0.0, 128
        %5441 = vxpose.xlu0.b32.cont [11/16] 0.0, 128
        %5442 = vxpose.xlu0.b32.cont [12/16] 0.0, 128
        %5443 = vxpose.xlu0.b32.cont [13/16] 0.0, 128
        %5444 = vxpose.xlu0.b32.cont [14/16] 0.0, 128
        %5445 = vxpose.xlu0.b32.cont [15/16] 0.0, 128
        %5446 = vxpose.xlu0.b32.end [16/16] 0.0, 128
        %v5447 = vpop.trf.xlu0
        %v5448 = vpop.trf.xlu0
        %v5449 = vpop.trf.xlu0
        %v5450 = vpop.trf.xlu0
        %v5451 = vpop.trf.xlu0
        %v5452 = vpop.trf.xlu0
        %v5453 = vpop.trf.xlu0
        %v5454 = vpop.trf.xlu0
        %v5455 = vpop.trf.xlu0
        %v5456 = vpop.trf.xlu0
        %v5457 = vpop.trf.xlu0
        %v5458 = vpop.trf.xlu0
        %v5459 = vpop.trf.xlu0
        %v5460 = vpop.trf.xlu0
        %v5461 = vpop.trf.xlu0
        %v5462 = vpop.trf.xlu0
        %5463 = vxpose.xlu0.b32.start [1/16] %v5385, 128
        %5464 = vxpose.xlu0.b32.cont [2/16] 0.0, 128
        %5465 = vxpose.xlu0.b32.cont [3/16] 0.0, 128
        %5466 = vxpose.xlu0.b32.cont [4/16] 0.0, 128
        %5467 = vxpose.xlu0.b32.cont [5/16] 0.0, 128
        %5468 = vxpose.xlu0.b32.cont [6/16] 0.0, 128
        %5469 = vxpose.xlu0.b32.cont [7/16] 0.0, 128
        %5470 = vxpose.xlu0.b32.cont [8/16] 0.0, 128
        %5471 = vxpose.xlu0.b32.cont [9/16] 0.0, 128
        %5472 = vxpose.xlu0.b32.cont [10/16] 0.0, 128
        %5473 = vxpose.xlu0.b32.cont [11/16] 0.0, 128
        %5474 = vxpose.xlu0.b32.cont [12/16] 0.0, 128
        %5475 = vxpose.xlu0.b32.cont [13/16] 0.0, 128
        %5476 = vxpose.xlu0.b32.cont [14/16] 0.0, 128
        %5477 = vxpose.xlu0.b32.cont [15/16] 0.0, 128
        %5478 = vxpose.xlu0.b32.end [16/16] 0.0, 128
        %v5479 = vpop.trf.xlu0
        %v5480 = vpop.trf.xlu0
        %v5481 = vpop.trf.xlu0
        %v5482 = vpop.trf.xlu0
        %v5483 = vpop.trf.xlu0
        %v5484 = vpop.trf.xlu0
        %v5485 = vpop.trf.xlu0
        %v5486 = vpop.trf.xlu0
        %v5487 = vpop.trf.xlu0
        %v5488 = vpop.trf.xlu0
        %v5489 = vpop.trf.xlu0
        %v5490 = vpop.trf.xlu0
        %v5491 = vpop.trf.xlu0
        %v5492 = vpop.trf.xlu0
        %v5493 = vpop.trf.xlu0
        %v5494 = vpop.trf.xlu0
        %5495 = vxpose.xlu0.b32.start [1/16] %v5386, 128
        %5496 = vxpose.xlu0.b32.cont [2/16] 0.0, 128
        %5497 = vxpose.xlu0.b32.cont [3/16] 0.0, 128
        %5498 = vxpose.xlu0.b32.cont [4/16] 0.0, 128
        %5499 = vxpose.xlu0.b32.cont [5/16] 0.0, 128
        %5500 = vxpose.xlu0.b32.cont [6/16] 0.0, 128
        %5501 = vxpose.xlu0.b32.cont [7/16] 0.0, 128
        %5502 = vxpose.xlu0.b32.cont [8/16] 0.0, 128
        %5503 = vxpose.xlu0.b32.cont [9/16] 0.0, 128
        %5504 = vxpose.xlu0.b32.cont [10/16] 0.0, 128
        %5505 = vxpose.xlu0.b32.cont [11/16] 0.0, 128
        %5506 = vxpose.xlu0.b32.cont [12/16] 0.0, 128
        %5507 = vxpose.xlu0.b32.cont [13/16] 0.0, 128
        %5508 = vxpose.xlu0.b32.cont [14/16] 0.0, 128
        %5509 = vxpose.xlu0.b32.cont [15/16] 0.0, 128
        %5510 = vxpose.xlu0.b32.end [16/16] 0.0, 128
        %v5511 = vpop.trf.xlu0
        %v5512 = vpop.trf.xlu0
        %v5513 = vpop.trf.xlu0
        %v5514 = vpop.trf.xlu0
        %v5515 = vpop.trf.xlu0
        %v5516 = vpop.trf.xlu0
        %v5517 = vpop.trf.xlu0
        %v5518 = vpop.trf.xlu0
        %v5519 = vpop.trf.xlu0
        %v5520 = vpop.trf.xlu0
        %v5521 = vpop.trf.xlu0
        %v5522 = vpop.trf.xlu0
        %v5523 = vpop.trf.xlu0
        %v5524 = vpop.trf.xlu0
        %v5525 = vpop.trf.xlu0
        %v5526 = vpop.trf.xlu0
        %v5527 = vpack.c.bf16 %v5415, %v5415
        %v5528 = vpack.c.bf16 %v5447, %v5447
        %v5529 = vpack.c.bf16 %v5479, %v5479
        %v5530 = vpack.c.bf16 %v5511, %v5511
        %v5531 = vpack.c.bf16 %v5223, %v5223
        %v5532 = vpack.c.bf16 %v5224, %v5224
        %v5533 = vpack.c.bf16 %v5225, %v5225
        %v5534 = vpack.c.bf16 %v5226, %v5226
        %v5536 = vsel %vm1896, %v5527, 0
        %v5539 = vsel %vm1900, %v5531, 0
        %5541 = vmatprep.subr.bf16.mxu0 0
        %5542 = vmatpush1.bf16.msra.mxu0 %v5539
        %5543 = vmatprep.subr.bf16.mxu0 0
        %5544 = vmatpush1.bf16.msra.mxu0 0
        %5545 = vmatprep.subr.bf16.mxu0 0
        %5546 = vmatpush1.bf16.msra.mxu0 0
        %5547 = vmatprep.subr.bf16.mxu0 0
        %5548 = vmatpush1.bf16.msra.mxu0 0
        %5549 = vmatprep.subr.bf16.mxu0 0
        %5550 = vmatpush1.bf16.msra.mxu0 0
        %5551 = vmatprep.subr.bf16.mxu0 0
        %5552 = vmatpush1.bf16.msra.mxu0 0
        %5553 = vmatprep.subr.bf16.mxu0 0
        %5554 = vmatpush1.bf16.msra.mxu0 0
        %5555 = vmatprep.subr.bf16.mxu0 0
        %5556 = vmatpush1.bf16.msra.mxu0 0
        %5557 = vmatprep.subr.bf16.mxu0 0
        %5558 = vmatpush1.bf16.msra.mxu0 0
        %5559 = vmatprep.subr.bf16.mxu0 0
        %5560 = vmatpush1.bf16.msra.mxu0 0
        %5561 = vmatprep.subr.bf16.mxu0 0
        %5562 = vmatpush1.bf16.msra.mxu0 0
        %5563 = vmatprep.subr.bf16.mxu0 0
        %5564 = vmatpush1.bf16.msra.mxu0 0
        %5565 = vmatprep.subr.bf16.mxu0 0
        %5566 = vmatpush1.bf16.msra.mxu0 0
        %5567 = vmatprep.subr.bf16.mxu0 0
        %5568 = vmatpush1.bf16.msra.mxu0 0
        %5569 = vmatprep.subr.bf16.mxu0 0
        %5570 = vmatpush1.bf16.msra.mxu0 0
        %5571 = vmatprep.subr.bf16.mxu0 0
        %5572 = vmatpush1.bf16.msra.mxu0 0
        %5573 = vmatprep.mubr.bf16.mxu0 0
        %5574 = vmatmul.mubr.bf16.gmra.mrb[0].mxu0 %v5536
        %v5575 = vpop.f32.mrb[0].mxu0
        %v5576 = vadd.f32 0.0, %v5575
        %v5577 = vpop.f32.mrb[0].mxu0
        %v5578 = vpop.f32.mrb[0].mxu0
        %v5579 = vpop.f32.mrb[0].mxu0
        %5580 = vdwg.mxu0
        %v5582 = vsel %vm1896, %v5528, 0
        %v5585 = vsel %vm1900, %v5532, 0
        %5587 = vmatprep.subr.bf16.mxu0 0
        %5588 = vmatpush1.bf16.msra.mxu0 %v5585
        %5589 = vmatprep.subr.bf16.mxu0 0
        %5590 = vmatpush1.bf16.msra.mxu0 0
        %5591 = vmatprep.subr.bf16.mxu0 0
        %5592 = vmatpush1.bf16.msra.mxu0 0
        %5593 = vmatprep.subr.bf16.mxu0 0
        %5594 = vmatpush1.bf16.msra.mxu0 0
        %5595 = vmatprep.subr.bf16.mxu0 0
        %5596 = vmatpush1.bf16.msra.mxu0 0
        %5597 = vmatprep.subr.bf16.mxu0 0
        %5598 = vmatpush1.bf16.msra.mxu0 0
        %5599 = vmatprep.subr.bf16.mxu0 0
        %5600 = vmatpush1.bf16.msra.mxu0 0
        %5601 = vmatprep.subr.bf16.mxu0 0
        %5602 = vmatpush1.bf16.msra.mxu0 0
        %5603 = vmatprep.subr.bf16.mxu0 0
        %5604 = vmatpush1.bf16.msra.mxu0 0
        %5605 = vmatprep.subr.bf16.mxu0 0
        %5606 = vmatpush1.bf16.msra.mxu0 0
        %5607 = vmatprep.subr.bf16.mxu0 0
        %5608 = vmatpush1.bf16.msra.mxu0 0
        %5609 = vmatprep.subr.bf16.mxu0 0
        %5610 = vmatpush1.bf16.msra.mxu0 0
        %5611 = vmatprep.subr.bf16.mxu0 0
        %5612 = vmatpush1.bf16.msra.mxu0 0
        %5613 = vmatprep.subr.bf16.mxu0 0
        %5614 = vmatpush1.bf16.msra.mxu0 0
        %5615 = vmatprep.subr.bf16.mxu0 0
        %5616 = vmatpush1.bf16.msra.mxu0 0
        %5617 = vmatprep.subr.bf16.mxu0 0
        %5618 = vmatpush1.bf16.msra.mxu0 0
        %5619 = vmatprep.mubr.bf16.mxu0 0
        %5620 = vmatmul.mubr.bf16.gmra.mrb[0].mxu0 %v5582
        %v5621 = vpop.f32.mrb[0].mxu0
        %v5622 = vadd.f32 0.0, %v5621
        %v5623 = vpop.f32.mrb[0].mxu0
        %v5624 = vpop.f32.mrb[0].mxu0
        %v5625 = vpop.f32.mrb[0].mxu0
        %5626 = vdwg.mxu0
        %v5628 = vsel %vm1896, %v5529, 0
        %v5631 = vsel %vm1900, %v5533, 0
        %5633 = vmatprep.subr.bf16.mxu0 0
        %5634 = vmatpush1.bf16.msra.mxu0 %v5631
        %5635 = vmatprep.subr.bf16.mxu0 0
        %5636 = vmatpush1.bf16.msra.mxu0 0
        %5637 = vmatprep.subr.bf16.mxu0 0
        %5638 = vmatpush1.bf16.msra.mxu0 0
        %5639 = vmatprep.subr.bf16.mxu0 0
        %5640 = vmatpush1.bf16.msra.mxu0 0
        %5641 = vmatprep.subr.bf16.mxu0 0
        %5642 = vmatpush1.bf16.msra.mxu0 0
        %5643 = vmatprep.subr.bf16.mxu0 0
        %5644 = vmatpush1.bf16.msra.mxu0 0
        %5645 = vmatprep.subr.bf16.mxu0 0
        %5646 = vmatpush1.bf16.msra.mxu0 0
        %5647 = vmatprep.subr.bf16.mxu0 0
        %5648 = vmatpush1.bf16.msra.mxu0 0
        %5649 = vmatprep.subr.bf16.mxu0 0
        %5650 = vmatpush1.bf16.msra.mxu0 0
        %5651 = vmatprep.subr.bf16.mxu0 0
        %5652 = vmatpush1.bf16.msra.mxu0 0
        %5653 = vmatprep.subr.bf16.mxu0 0
        %5654 = vmatpush1.bf16.msra.mxu0 0
        %5655 = vmatprep.subr.bf16.mxu0 0
        %5656 = vmatpush1.bf16.msra.mxu0 0
        %5657 = vmatprep.subr.bf16.mxu0 0
        %5658 = vmatpush1.bf16.msra.mxu0 0
        %5659 = vmatprep.subr.bf16.mxu0 0
        %5660 = vmatpush1.bf16.msra.mxu0 0
        %5661 = vmatprep.subr.bf16.mxu0 0
        %5662 = vmatpush1.bf16.msra.mxu0 0
        %5663 = vmatprep.subr.bf16.mxu0 0
        %5664 = vmatpush1.bf16.msra.mxu0 0
        %5665 = vmatprep.mubr.bf16.mxu0 0
        %5666 = vmatmul.mubr.bf16.gmra.mrb[0].mxu0 %v5628
        %v5667 = vpop.f32.mrb[0].mxu0
        %v5668 = vadd.f32 0.0, %v5667
        %v5669 = vpop.f32.mrb[0].mxu0
        %v5670 = vpop.f32.mrb[0].mxu0
        %v5671 = vpop.f32.mrb[0].mxu0
        %5672 = vdwg.mxu0
        %v5674 = vsel %vm1896, %v5530, 0
        %v5677 = vsel %vm1900, %v5534, 0
        %5679 = vmatprep.subr.bf16.mxu0 0
        %5680 = vmatpush1.bf16.msra.mxu0 %v5677
        %5681 = vmatprep.subr.bf16.mxu0 0
        %5682 = vmatpush1.bf16.msra.mxu0 0
        %5683 = vmatprep.subr.bf16.mxu0 0
        %5684 = vmatpush1.bf16.msra.mxu0 0
        %5685 = vmatprep.subr.bf16.mxu0 0
        %5686 = vmatpush1.bf16.msra.mxu0 0
        %5687 = vmatprep.subr.bf16.mxu0 0
        %5688 = vmatpush1.bf16.msra.mxu0 0
        %5689 = vmatprep.subr.bf16.mxu0 0
        %5690 = vmatpush1.bf16.msra.mxu0 0
        %5691 = vmatprep.subr.bf16.mxu0 0
        %5692 = vmatpush1.bf16.msra.mxu0 0
        %5693 = vmatprep.subr.bf16.mxu0 0
        %5694 = vmatpush1.bf16.msra.mxu0 0
        %5695 = vmatprep.subr.bf16.mxu0 0
        %5696 = vmatpush1.bf16.msra.mxu0 0
        %5697 = vmatprep.subr.bf16.mxu0 0
        %5698 = vmatpush1.bf16.msra.mxu0 0
        %5699 = vmatprep.subr.bf16.mxu0 0
        %5700 = vmatpush1.bf16.msra.mxu0 0
        %5701 = vmatprep.subr.bf16.mxu0 0
        %5702 = vmatpush1.bf16.msra.mxu0 0
        %5703 = vmatprep.subr.bf16.mxu0 0
        %5704 = vmatpush1.bf16.msra.mxu0 0
        %5705 = vmatprep.subr.bf16.mxu0 0
        %5706 = vmatpush1.bf16.msra.mxu0 0
        %5707 = vmatprep.subr.bf16.mxu0 0
        %5708 = vmatpush1.bf16.msra.mxu0 0
        %5709 = vmatprep.subr.bf16.mxu0 0
        %5710 = vmatpush1.bf16.msra.mxu0 0
        %5711 = vmatprep.mubr.bf16.mxu0 0
        %5712 = vmatmul.mubr.bf16.gmra.mrb[0].mxu0 %v5674
        %v5713 = vpop.f32.mrb[0].mxu0
        %v5714 = vadd.f32 0.0, %v5713
        %v5715 = vpop.f32.mrb[0].mxu0
        %v5716 = vpop.f32.mrb[0].mxu0
        %v5717 = vpop.f32.mrb[0].mxu0
        %5718 = vdwg.mxu0
        %v5719 = vmul.f32 %v5576, 0.35355338
        %v5720 = vmul.f32 %v5622, 0.35355338
        %v5721 = vmul.f32 %v5668, 0.35355338
        %v5722 = vmul.f32 %v5714, 0.35355338
        %v5723 = vadd.f32 %v5719, %v2090
        %v5724 = vadd.f32 %v5720, %v2090
        %v5725 = vadd.f32 %v5721, %v2090
        %v5726 = vadd.f32 %v5722, %v2090
        %v5727 = vsel %vm1896, %v5723, -inf
        %5728 = vmax.xlane.f32.xlu0 %v5727
        %v5729 = vpop.xlane.xlu0 %5728
        %v5730 = vsel %vm1896, %v5724, -inf
        %5731 = vmax.xlane.f32.xlu0 %v5730
        %v5732 = vpop.xlane.xlu0 %5731
        %v5733 = vsel %vm1896, %v5725, -inf
        %5734 = vmax.xlane.f32.xlu0 %v5733
        %v5735 = vpop.xlane.xlu0 %5734
        %v5736 = vsel %vm1896, %v5726, -inf
        %5737 = vmax.xlane.f32.xlu0 %v5736
        %v5738 = vpop.xlane.xlu0 %5737
        %v5739 = vsub.f32 %v5723, %v5729
        %v5740 = vsub.f32 %v5724, %v5732
        %v5741 = vsub.f32 %v5725, %v5735
        %v5742 = vsub.f32 %v5726, %v5738
        %v5743 = vmul.f32 %v5739, 1.442695
        %v5744 = vpow.pop %v5743
        %v5745 = vmul.f32 %v5740, 1.442695
        %v5746 = vpow.pop %v5745
        %v5747 = vmul.f32 %v5741, 1.442695
        %v5748 = vpow.pop %v5747
        %v5749 = vmul.f32 %v5742, 1.442695
        %v5750 = vpow.pop %v5749
        %v5751 = vsel %vm1896, %v5744, 0.0
        %5752 = vadd.xlane.f32.xlu0 %v5751
        %v5753 = vpop.xlane.xlu0 %5752
        %v5754 = vsel %vm1896, %v5746, 0.0
        %5755 = vadd.xlane.f32.xlu0 %v5754
        %v5756 = vpop.xlane.xlu0 %5755
        %v5757 = vsel %vm1896, %v5748, 0.0
        %5758 = vadd.xlane.f32.xlu0 %v5757
        %v5759 = vpop.xlane.xlu0 %5758
        %v5760 = vsel %vm1896, %v5750, 0.0
        %5761 = vadd.xlane.f32.xlu0 %v5760
        %v5762 = vpop.xlane.xlu0 %5761
        %v5763 = vrcp.pop %v5753
        %v5764 = vrcp.pop %v5756
        %v5765 = vrcp.pop %v5759
        %v5766 = vrcp.pop %v5762
        %v5767 = vmul.f32 %v5744, %v5763
        %v5768 = vmul.f32 %v5746, %v5764
        %v5769 = vmul.f32 %v5748, %v5765
        %v5770 = vmul.f32 %v5750, %v5766
        %v5771 = vpack.c.bf16 %v5767, %v5767
        %v5772 = vpack.c.bf16 %v5768, %v5768
        %v5773 = vpack.c.bf16 %v5769, %v5769
        %v5774 = vpack.c.bf16 %v5770, %v5770
        %v5775 = vpack.c.bf16 %v5255, %v5255
        %v5776 = vpack.c.bf16 %v5287, %v5287
        %v5777 = vpack.c.bf16 %v5319, %v5319
        %v5778 = vpack.c.bf16 %v5351, %v5351
        %v5780 = vsel %vm1896, %v5771, 0
        %v5783 = vsel %vm1900, %v5775, 0
        %5785 = vmatprep.subr.bf16.mxu0 0
        %5786 = vmatpush1.bf16.msra.mxu0 %v5783
        %5787 = vmatprep.subr.bf16.mxu0 0
        %5788 = vmatpush1.bf16.msra.mxu0 0
        %5789 = vmatprep.subr.bf16.mxu0 0
        %5790 = vmatpush1.bf16.msra.mxu0 0
        %5791 = vmatprep.subr.bf16.mxu0 0
        %5792 = vmatpush1.bf16.msra.mxu0 0
        %5793 = vmatprep.subr.bf16.mxu0 0
        %5794 = vmatpush1.bf16.msra.mxu0 0
        %5795 = vmatprep.subr.bf16.mxu0 0
        %5796 = vmatpush1.bf16.msra.mxu0 0
        %5797 = vmatprep.subr.bf16.mxu0 0
        %5798 = vmatpush1.bf16.msra.mxu0 0
        %5799 = vmatprep.subr.bf16.mxu0 0
        %5800 = vmatpush1.bf16.msra.mxu0 0
        %5801 = vmatprep.subr.bf16.mxu0 0
        %5802 = vmatpush1.bf16.msra.mxu0 0
        %5803 = vmatprep.subr.bf16.mxu0 0
        %5804 = vmatpush1.bf16.msra.mxu0 0
        %5805 = vmatprep.subr.bf16.mxu0 0
        %5806 = vmatpush1.bf16.msra.mxu0 0
        %5807 = vmatprep.subr.bf16.mxu0 0
        %5808 = vmatpush1.bf16.msra.mxu0 0
        %5809 = vmatprep.subr.bf16.mxu0 0
        %5810 = vmatpush1.bf16.msra.mxu0 0
        %5811 = vmatprep.subr.bf16.mxu0 0
        %5812 = vmatpush1.bf16.msra.mxu0 0
        %5813 = vmatprep.subr.bf16.mxu0 0
        %5814 = vmatpush1.bf16.msra.mxu0 0
        %5815 = vmatprep.subr.bf16.mxu0 0
        %5816 = vmatpush1.bf16.msra.mxu0 0
        %5817 = vmatprep.mubr.bf16.mxu0 0
        %5818 = vmatmul.mubr.bf16.gmra.mrb[0].mxu0 %v5780
        %v5819 = vpop.f32.mrb[0].mxu0
        %v5820 = vadd.f32 0.0, %v5819
        %v5821 = vpop.f32.mrb[0].mxu0
        %v5822 = vpop.f32.mrb[0].mxu0
        %v5823 = vpop.f32.mrb[0].mxu0
        %5824 = vdwg.mxu0
        %v5826 = vsel %vm1896, %v5772, 0
        %v5829 = vsel %vm1900, %v5776, 0
        %5831 = vmatprep.subr.bf16.mxu0 0
        %5832 = vmatpush1.bf16.msra.mxu0 %v5829
        %5833 = vmatprep.subr.bf16.mxu0 0
        %5834 = vmatpush1.bf16.msra.mxu0 0
        %5835 = vmatprep.subr.bf16.mxu0 0
        %5836 = vmatpush1.bf16.msra.mxu0 0
        %5837 = vmatprep.subr.bf16.mxu0 0
        %5838 = vmatpush1.bf16.msra.mxu0 0
        %5839 = vmatprep.subr.bf16.mxu0 0
        %5840 = vmatpush1.bf16.msra.mxu0 0
        %5841 = vmatprep.subr.bf16.mxu0 0
        %5842 = vmatpush1.bf16.msra.mxu0 0
        %5843 = vmatprep.subr.bf16.mxu0 0
        %5844 = vmatpush1.bf16.msra.mxu0 0
        %5845 = vmatprep.subr.bf16.mxu0 0
        %5846 = vmatpush1.bf16.msra.mxu0 0
        %5847 = vmatprep.subr.bf16.mxu0 0
        %5848 = vmatpush1.bf16.msra.mxu0 0
        %5849 = vmatprep.subr.bf16.mxu0 0
        %5850 = vmatpush1.bf16.msra.mxu0 0
        %5851 = vmatprep.subr.bf16.mxu0 0
        %5852 = vmatpush1.bf16.msra.mxu0 0
        %5853 = vmatprep.subr.bf16.mxu0 0
        %5854 = vmatpush1.bf16.msra.mxu0 0
        %5855 = vmatprep.subr.bf16.mxu0 0
        %5856 = vmatpush1.bf16.msra.mxu0 0
        %5857 = vmatprep.subr.bf16.mxu0 0
        %5858 = vmatpush1.bf16.msra.mxu0 0
        %5859 = vmatprep.subr.bf16.mxu0 0
        %5860 = vmatpush1.bf16.msra.mxu0 0
        %5861 = vmatprep.subr.bf16.mxu0 0
        %5862 = vmatpush1.bf16.msra.mxu0 0
        %5863 = vmatprep.mubr.bf16.mxu0 0
        %5864 = vmatmul.mubr.bf16.gmra.mrb[0].mxu0 %v5826
        %v5865 = vpop.f32.mrb[0].mxu0
        %v5866 = vadd.f32 0.0, %v5865
        %v5867 = vpop.f32.mrb[0].mxu0
        %v5868 = vpop.f32.mrb[0].mxu0
        %v5869 = vpop.f32.mrb[0].mxu0
        %5870 = vdwg.mxu0
        %v5872 = vsel %vm1896, %v5773, 0
        %v5875 = vsel %vm1900, %v5777, 0
        %5877 = vmatprep.subr.bf16.mxu0 0
        %5878 = vmatpush1.bf16.msra.mxu0 %v5875
        %5879 = vmatprep.subr.bf16.mxu0 0
        %5880 = vmatpush1.bf16.msra.mxu0 0
        %5881 = vmatprep.subr.bf16.mxu0 0
        %5882 = vmatpush1.bf16.msra.mxu0 0
        %5883 = vmatprep.subr.bf16.mxu0 0
        %5884 = vmatpush1.bf16.msra.mxu0 0
        %5885 = vmatprep.subr.bf16.mxu0 0
        %5886 = vmatpush1.bf16.msra.mxu0 0
        %5887 = vmatprep.subr.bf16.mxu0 0
        %5888 = vmatpush1.bf16.msra.mxu0 0
        %5889 = vmatprep.subr.bf16.mxu0 0
        %5890 = vmatpush1.bf16.msra.mxu0 0
        %5891 = vmatprep.subr.bf16.mxu0 0
        %5892 = vmatpush1.bf16.msra.mxu0 0
        %5893 = vmatprep.subr.bf16.mxu0 0
        %5894 = vmatpush1.bf16.msra.mxu0 0
        %5895 = vmatprep.subr.bf16.mxu0 0
        %5896 = vmatpush1.bf16.msra.mxu0 0
        %5897 = vmatprep.subr.bf16.mxu0 0
        %5898 = vmatpush1.bf16.msra.mxu0 0
        %5899 = vmatprep.subr.bf16.mxu0 0
        %5900 = vmatpush1.bf16.msra.mxu0 0
        %5901 = vmatprep.subr.bf16.mxu0 0
        %5902 = vmatpush1.bf16.msra.mxu0 0
        %5903 = vmatprep.subr.bf16.mxu0 0
        %5904 = vmatpush1.bf16.msra.mxu0 0
        %5905 = vmatprep.subr.bf16.mxu0 0
        %5906 = vmatpush1.bf16.msra.mxu0 0
        %5907 = vmatprep.subr.bf16.mxu0 0
        %5908 = vmatpush1.bf16.msra.mxu0 0
        %5909 = vmatprep.mubr.bf16.mxu0 0
        %5910 = vmatmul.mubr.bf16.gmra.mrb[0].mxu0 %v5872
        %v5911 = vpop.f32.mrb[0].mxu0
        %v5912 = vadd.f32 0.0, %v5911
        %v5913 = vpop.f32.mrb[0].mxu0
        %v5914 = vpop.f32.mrb[0].mxu0
        %v5915 = vpop.f32.mrb[0].mxu0
        %5916 = vdwg.mxu0
        %v5918 = vsel %vm1896, %v5774, 0
        %v5921 = vsel %vm1900, %v5778, 0
        %5923 = vmatprep.subr.bf16.mxu0 0
        %5924 = vmatpush1.bf16.msra.mxu0 %v5921
        %5925 = vmatprep.subr.bf16.mxu0 0
        %5926 = vmatpush1.bf16.msra.mxu0 0
        %5927 = vmatprep.subr.bf16.mxu0 0
        %5928 = vmatpush1.bf16.msra.mxu0 0
        %5929 = vmatprep.subr.bf16.mxu0 0
        %5930 = vmatpush1.bf16.msra.mxu0 0
        %5931 = vmatprep.subr.bf16.mxu0 0
        %5932 = vmatpush1.bf16.msra.mxu0 0
        %5933 = vmatprep.subr.bf16.mxu0 0
        %5934 = vmatpush1.bf16.msra.mxu0 0
        %5935 = vmatprep.subr.bf16.mxu0 0
        %5936 = vmatpush1.bf16.msra.mxu0 0
        %5937 = vmatprep.subr.bf16.mxu0 0
        %5938 = vmatpush1.bf16.msra.mxu0 0
        %5939 = vmatprep.subr.bf16.mxu0 0
        %5940 = vmatpush1.bf16.msra.mxu0 0
        %5941 = vmatprep.subr.bf16.mxu0 0
        %5942 = vmatpush1.bf16.msra.mxu0 0
        %5943 = vmatprep.subr.bf16.mxu0 0
        %5944 = vmatpush1.bf16.msra.mxu0 0
        %5945 = vmatprep.subr.bf16.mxu0 0
        %5946 = vmatpush1.bf16.msra.mxu0 0
        %5947 = vmatprep.subr.bf16.mxu0 0
        %5948 = vmatpush1.bf16.msra.mxu0 0
        %5949 = vmatprep.subr.bf16.mxu0 0
        %5950 = vmatpush1.bf16.msra.mxu0 0
        %5951 = vmatprep.subr.bf16.mxu0 0
        %5952 = vmatpush1.bf16.msra.mxu0 0
        %5953 = vmatprep.subr.bf16.mxu0 0
        %5954 = vmatpush1.bf16.msra.mxu0 0
        %5955 = vmatprep.mubr.bf16.mxu0 0
        %5956 = vmatmul.mubr.bf16.gmra.mrb[0].mxu0 %v5918
        %v5957 = vpop.f32.mrb[0].mxu0
        %v5958 = vadd.f32 0.0, %v5957
        %v5959 = vpop.f32.mrb[0].mxu0
        %v5960 = vpop.f32.mrb[0].mxu0
        %v5961 = vpop.f32.mrb[0].mxu0
        %5962 = vdwg.mxu0
        %5963 = vxpose.xlu0.b32.start [1/16] %v5820, 128
        %5964 = vxpose.xlu0.b32.cont [2/16] 0.0, 128
        %5965 = vxpose.xlu0.b32.cont [3/16] 0.0, 128
        %5966 = vxpose.xlu0.b32.cont [4/16] 0.0, 128
        %5967 = vxpose.xlu0.b32.cont [5/16] 0.0, 128
        %5968 = vxpose.xlu0.b32.cont [6/16] 0.0, 128
        %5969 = vxpose.xlu0.b32.cont [7/16] 0.0, 128
        %5970 = vxpose.xlu0.b32.cont [8/16] 0.0, 128
        %5971 = vxpose.xlu0.b32.cont [9/16] 0.0, 128
        %5972 = vxpose.xlu0.b32.cont [10/16] 0.0, 128
        %5973 = vxpose.xlu0.b32.cont [11/16] 0.0, 128
        %5974 = vxpose.xlu0.b32.cont [12/16] 0.0, 128
        %5975 = vxpose.xlu0.b32.cont [13/16] 0.0, 128
        %5976 = vxpose.xlu0.b32.cont [14/16] 0.0, 128
        %5977 = vxpose.xlu0.b32.cont [15/16] 0.0, 128
        %5978 = vxpose.xlu0.b32.end [16/16] 0.0, 128
        %v5979 = vpop.trf.xlu0
        %v5980 = vpop.trf.xlu0
        %v5981 = vpop.trf.xlu0
        %v5982 = vpop.trf.xlu0
        %v5983 = vpop.trf.xlu0
        %v5984 = vpop.trf.xlu0
        %v5985 = vpop.trf.xlu0
        %v5986 = vpop.trf.xlu0
        %v5987 = vpop.trf.xlu0
        %v5988 = vpop.trf.xlu0
        %v5989 = vpop.trf.xlu0
        %v5990 = vpop.trf.xlu0
        %v5991 = vpop.trf.xlu0
        %v5992 = vpop.trf.xlu0
        %v5993 = vpop.trf.xlu0
        %v5994 = vpop.trf.xlu0
        %5995 = vxpose.xlu0.b32.start [1/16] %v5866, 128
        %5996 = vxpose.xlu0.b32.cont [2/16] 0.0, 128
        %5997 = vxpose.xlu0.b32.cont [3/16] 0.0, 128
        %5998 = vxpose.xlu0.b32.cont [4/16] 0.0, 128
        %5999 = vxpose.xlu0.b32.cont [5/16] 0.0, 128
        %6000 = vxpose.xlu0.b32.cont [6/16] 0.0, 128
        %6001 = vxpose.xlu0.b32.cont [7/16] 0.0, 128
        %6002 = vxpose.xlu0.b32.cont [8/16] 0.0, 128
        %6003 = vxpose.xlu0.b32.cont [9/16] 0.0, 128
        %6004 = vxpose.xlu0.b32.cont [10/16] 0.0, 128
        %6005 = vxpose.xlu0.b32.cont [11/16] 0.0, 128
        %6006 = vxpose.xlu0.b32.cont [12/16] 0.0, 128
        %6007 = vxpose.xlu0.b32.cont [13/16] 0.0, 128
        %6008 = vxpose.xlu0.b32.cont [14/16] 0.0, 128
        %6009 = vxpose.xlu0.b32.cont [15/16] 0.0, 128
        %6010 = vxpose.xlu0.b32.end [16/16] 0.0, 128
        %v6011 = vpop.trf.xlu0
        %v6012 = vpop.trf.xlu0
        %v6013 = vpop.trf.xlu0
        %v6014 = vpop.trf.xlu0
        %v6015 = vpop.trf.xlu0
        %v6016 = vpop.trf.xlu0
        %v6017 = vpop.trf.xlu0
        %v6018 = vpop.trf.xlu0
        %v6019 = vpop.trf.xlu0
        %v6020 = vpop.trf.xlu0
        %v6021 = vpop.trf.xlu0
        %v6022 = vpop.trf.xlu0
        %v6023 = vpop.trf.xlu0
        %v6024 = vpop.trf.xlu0
        %v6025 = vpop.trf.xlu0
        %v6026 = vpop.trf.xlu0
        %6027 = vxpose.xlu0.b32.start [1/16] %v5912, 128
        %6028 = vxpose.xlu0.b32.cont [2/16] 0.0, 128
        %6029 = vxpose.xlu0.b32.cont [3/16] 0.0, 128
        %6030 = vxpose.xlu0.b32.cont [4/16] 0.0, 128
        %6031 = vxpose.xlu0.b32.cont [5/16] 0.0, 128
        %6032 = vxpose.xlu0.b32.cont [6/16] 0.0, 128
        %6033 = vxpose.xlu0.b32.cont [7/16] 0.0, 128
        %6034 = vxpose.xlu0.b32.cont [8/16] 0.0, 128
        %6035 = vxpose.xlu0.b32.cont [9/16] 0.0, 128
        %6036 = vxpose.xlu0.b32.cont [10/16] 0.0, 128
        %6037 = vxpose.xlu0.b32.cont [11/16] 0.0, 128
        %6038 = vxpose.xlu0.b32.cont [12/16] 0.0, 128
        %6039 = vxpose.xlu0.b32.cont [13/16] 0.0, 128
        %6040 = vxpose.xlu0.b32.cont [14/16] 0.0, 128
        %6041 = vxpose.xlu0.b32.cont [15/16] 0.0, 128
        %6042 = vxpose.xlu0.b32.end [16/16] 0.0, 128
        %v6043 = vpop.trf.xlu0
        %v6044 = vpop.trf.xlu0
        %v6045 = vpop.trf.xlu0
        %v6046 = vpop.trf.xlu0
        %v6047 = vpop.trf.xlu0
        %v6048 = vpop.trf.xlu0
        %v6049 = vpop.trf.xlu0
        %v6050 = vpop.trf.xlu0
        %v6051 = vpop.trf.xlu0
        %v6052 = vpop.trf.xlu0
        %v6053 = vpop.trf.xlu0
        %v6054 = vpop.trf.xlu0
        %v6055 = vpop.trf.xlu0
        %v6056 = vpop.trf.xlu0
        %v6057 = vpop.trf.xlu0
        %v6058 = vpop.trf.xlu0
        %6059 = vxpose.xlu0.b32.start [1/16] %v5958, 128
        %6060 = vxpose.xlu0.b32.cont [2/16] 0.0, 128
        %6061 = vxpose.xlu0.b32.cont [3/16] 0.0, 128
        %6062 = vxpose.xlu0.b32.cont [4/16] 0.0, 128
        %6063 = vxpose.xlu0.b32.cont [5/16] 0.0, 128
        %6064 = vxpose.xlu0.b32.cont [6/16] 0.0, 128
        %6065 = vxpose.xlu0.b32.cont [7/16] 0.0, 128
        %6066 = vxpose.xlu0.b32.cont [8/16] 0.0, 128
        %6067 = vxpose.xlu0.b32.cont [9/16] 0.0, 128
        %6068 = vxpose.xlu0.b32.cont [10/16] 0.0, 128
        %6069 = vxpose.xlu0.b32.cont [11/16] 0.0, 128
        %6070 = vxpose.xlu0.b32.cont [12/16] 0.0, 128
        %6071 = vxpose.xlu0.b32.cont [13/16] 0.0, 128
        %6072 = vxpose.xlu0.b32.cont [14/16] 0.0, 128
        %6073 = vxpose.xlu0.b32.cont [15/16] 0.0, 128
        %6074 = vxpose.xlu0.b32.end [16/16] 0.0, 128
        %v6075 = vpop.trf.xlu0
        %v6076 = vpop.trf.xlu0
        %v6077 = vpop.trf.xlu0
        %v6078 = vpop.trf.xlu0
        %v6079 = vpop.trf.xlu0
        %v6080 = vpop.trf.xlu0
        %v6081 = vpop.trf.xlu0
        %v6082 = vpop.trf.xlu0
        %v6083 = vpop.trf.xlu0
        %v6084 = vpop.trf.xlu0
        %v6085 = vpop.trf.xlu0
        %v6086 = vpop.trf.xlu0
        %v6087 = vpop.trf.xlu0
        %v6088 = vpop.trf.xlu0
        %v6089 = vpop.trf.xlu0
        %v6090 = vpop.trf.xlu0
        %6091 = vxpose.xlu0.b32.start [1/16] %v5979, 128
        %6092 = vxpose.xlu0.b32.cont [2/16] %v6011, 128
        %6093 = vxpose.xlu0.b32.cont [3/16] %v6043, 128
        %6094 = vxpose.xlu0.b32.cont [4/16] %v6075, 128
        %6095 = vxpose.xlu0.b32.cont [5/16] 0.0, 128
        %6096 = vxpose.xlu0.b32.cont [6/16] 0.0, 128
        %6097 = vxpose.xlu0.b32.cont [7/16] 0.0, 128
        %6098 = vxpose.xlu0.b32.cont [8/16] 0.0, 128
        %6099 = vxpose.xlu0.b32.cont [9/16] 0.0, 128
        %6100 = vxpose.xlu0.b32.cont [10/16] 0.0, 128
        %6101 = vxpose.xlu0.b32.cont [11/16] 0.0, 128
        %6102 = vxpose.xlu0.b32.cont [12/16] 0.0, 128
        %6103 = vxpose.xlu0.b32.cont [13/16] 0.0, 128
        %6104 = vxpose.xlu0.b32.cont [14/16] 0.0, 128
        %6105 = vxpose.xlu0.b32.cont [15/16] 0.0, 128
        %6106 = vxpose.xlu0.b32.end [16/16] 0.0, 128
        %v6107 = vpop.trf.xlu0
        %v6108 = vpop.trf.xlu0
        %v6109 = vpop.trf.xlu0
        %v6110 = vpop.trf.xlu0
        %v6111 = vpop.trf.xlu0
        %v6112 = vpop.trf.xlu0
        %v6113 = vpop.trf.xlu0
        %v6114 = vpop.trf.xlu0
        %v6115 = vpop.trf.xlu0
        %v6116 = vpop.trf.xlu0
        %v6117 = vpop.trf.xlu0
        %v6118 = vpop.trf.xlu0
        %v6119 = vpop.trf.xlu0
        %v6120 = vpop.trf.xlu0
        %v6121 = vpop.trf.xlu0
        %v6122 = vpop.trf.xlu0
        %v6123 = vpack.c.bf16 %v6107, %v6107
        %v6125 = vlaneseq
        %v6126 = vshrl.u32 %v6125, 7
        %v6127 = vsub.s32 0, %v6126
        %v6128 = vrot.slane %v5082, %v6127
        %v6134 = vunpack.c.l.b16 %v5078
        %v6135 = vunpack.c.l.b16 %v5079
        %v6136 = vunpack.c.l.b16 %v5080
        %v6137 = vunpack.c.l.b16 %v5081
        %v6138 = vpack.c.b16 %v6135, %v6134
        %v6139 = vpack.c.b16 %v6137, %v6136
        %v6143 = vsel %vm1556, %v6123, 0
        %6145 = vmatprep.subr.bf16.mxu0 0
        %6146 = vmatpush1.bf16.msra.mxu0 %v6138
        %6147 = vmatprep.subr.bf16.mxu0 0
        %6148 = vmatpush1.bf16.msra.mxu0 %v6139
        %6149 = vmatprep.subr.bf16.mxu0 0
        %6150 = vmatpush1.bf16.msra.mxu0 0
        %6151 = vmatprep.subr.bf16.mxu0 0
        %6152 = vmatpush1.bf16.msra.mxu0 0
        %6153 = vmatprep.subr.bf16.mxu0 0
        %6154 = vmatpush1.bf16.msra.mxu0 0
        %6155 = vmatprep.subr.bf16.mxu0 0
        %6156 = vmatpush1.bf16.msra.mxu0 0
        %6157 = vmatprep.subr.bf16.mxu0 0
        %6158 = vmatpush1.bf16.msra.mxu0 0
        %6159 = vmatprep.subr.bf16.mxu0 0
        %6160 = vmatpush1.bf16.msra.mxu0 0
        %6161 = vmatprep.subr.bf16.mxu0 0
        %6162 = vmatpush1.bf16.msra.mxu0 0
        %6163 = vmatprep.subr.bf16.mxu0 0
        %6164 = vmatpush1.bf16.msra.mxu0 0
        %6165 = vmatprep.subr.bf16.mxu0 0
        %6166 = vmatpush1.bf16.msra.mxu0 0
        %6167 = vmatprep.subr.bf16.mxu0 0
        %6168 = vmatpush1.bf16.msra.mxu0 0
        %6169 = vmatprep.subr.bf16.mxu0 0
        %6170 = vmatpush1.bf16.msra.mxu0 0
        %6171 = vmatprep.subr.bf16.mxu0 0
        %6172 = vmatpush1.bf16.msra.mxu0 0
        %6173 = vmatprep.subr.bf16.mxu0 0
        %6174 = vmatpush1.bf16.msra.mxu0 0
        %6175 = vmatprep.subr.bf16.mxu0 0
        %6176 = vmatpush1.bf16.msra.mxu0 0
        %6177 = vmatprep.mubr.bf16.mxu0 0
        %6178 = vmatmul.mubr.bf16.gmra.mrb[0].mxu0 %v6143
        %v6179 = vpop.f32.mrb[0].mxu0
        %v6180 = vadd.f32 %v6128, %v6179
        %v6181 = vpop.f32.mrb[0].mxu0
        %v6182 = vpop.f32.mrb[0].mxu0
        %v6183 = vpop.f32.mrb[0].mxu0
        %6184 = vdwg.mxu0
        %v6185 = vadd.f32 %v5067, %v6180
        %v6186 = vld [vmem:[%s65] sm:$0x1]
        %v6187 = vld [vmem:[%s67] sm:$0x1]
        %v6188 = vsel %vm1556, %v6185, 0.0
        %6189 = vadd.xlane.f32.xlu0 %v6188
        %v6190 = vpop.xlane.xlu0 %6189
        %v6191 = vmul.f32 %v6190, %v2560
        %v6192 = vmul.f32 %v6185, %v6185
        %v6193 = vsel %vm1556, %v6192, 0.0
        %6194 = vadd.xlane.f32.xlu0 %v6193
        %v6195 = vpop.xlane.xlu0 %6194
        %v6196 = vmul.f32 %v6195, %v2560
        %v6197 = vmul.f32 %v6191, %v6191
        %v6198 = vsub.f32 %v6196, %v6197
        %v6199 = vsub.f32 %v6185, %v6191
        %v6200 = vadd.f32 %v6198, 1e-05
        %v6201 = vrsqrt.pop %v6200
        %v6202 = vmul.f32 %v6199, %v6201
        %v6204 = vlaneseq
        %v6205 = vshrl.u32 %v6204, 7
        %v6206 = vsub.s32 0, %v6205
        %v6207 = vrot.slane %v6186, %v6206
        %v6209 = vmul.f32 %v6202, %v6207
        %v6211 = vlaneseq
        %v6212 = vshrl.u32 %v6211, 7
        %v6213 = vsub.s32 0, %v6212
        %v6214 = vrot.slane %v6187, %v6213
        %v6216 = vadd.f32 %v6209, %v6214
        %v6217 = vld [vmem:[%s53] sm:$0xf]
        %v6218 = vld [vmem:[%s53 + $0x4] sm:$0xf]
        %v6219 = vld [vmem:[%s53 + $0x8] sm:$0xf]
        %v6220 = vld [vmem:[%s53 + $0xc] sm:$0xf]
        %v6221 = vld [vmem:[#allocation32] sm:$0x1]
        %v6222 = vld [vmem:[%s57] sm:$0xf]
        %v6223 = vld [vmem:[%s57 + $0x4] sm:$0xf]
        %v6224 = vld [vmem:[%s57 + $0x8] sm:$0xf]
        %v6225 = vld [vmem:[%s57 + $0xc] sm:$0xf]
        %v6226 = vld [vmem:[%s57 + $0x10] sm:$0xf]
        %v6227 = vld [vmem:[%s57 + $0x14] sm:$0xf]
        %v6228 = vld [vmem:[%s57 + $0x18] sm:$0xf]
        %v6229 = vld [vmem:[%s57 + $0x1c] sm:$0xf]
        %v6230 = vld [vmem:[#allocation34] sm:$0x1]
        %v6231 = vpack.c.bf16 %v6216, %v6216
        %v6233 = vlaneseq
        %v6234 = vshrl.u32 %v6233, 7
        %v6235 = vsub.s32 0, %v6234
        %v6236 = vrot.slane %v6221, %v6235
        %v6242 = vunpack.c.l.b16 %v6217
        %v6243 = vunpack.c.l.b16 %v6218
        %v6244 = vunpack.c.l.b16 %v6219
        %v6245 = vunpack.c.l.b16 %v6220
        %v6246 = vpack.c.b16 %v6243, %v6242
        %v6247 = vpack.c.b16 %v6245, %v6244
        %v6251 = vsel %vm1556, %v6231, 0
        %6253 = vmatprep.subr.bf16.mxu0 0
        %6254 = vmatpush1.bf16.msra.mxu0 %v6246
        %6255 = vmatprep.subr.bf16.mxu0 0
        %6256 = vmatpush1.bf16.msra.mxu0 %v6247
        %6257 = vmatprep.subr.bf16.mxu0 0
        %6258 = vmatpush1.bf16.msra.mxu0 0
        %6259 = vmatprep.subr.bf16.mxu0 0
        %6260 = vmatpush1.bf16.msra.mxu0 0
        %6261 = vmatprep.subr.bf16.mxu0 0
        %6262 = vmatpush1.bf16.msra.mxu0 0
        %6263 = vmatprep.subr.bf16.mxu0 0
        %6264 = vmatpush1.bf16.msra.mxu0 0
        %6265 = vmatprep.subr.bf16.mxu0 0
        %6266 = vmatpush1.bf16.msra.mxu0 0
        %6267 = vmatprep.subr.bf16.mxu0 0
        %6268 = vmatpush1.bf16.msra.mxu0 0
        %6269 = vmatprep.subr.bf16.mxu0 0
        %6270 = vmatpush1.bf16.msra.mxu0 0
        %6271 = vmatprep.subr.bf16.mxu0 0
        %6272 = vmatpush1.bf16.msra.mxu0 0
        %6273 = vmatprep.subr.bf16.mxu0 0
        %6274 = vmatpush1.bf16.msra.mxu0 0
        %6275 = vmatprep.subr.bf16.mxu0 0
        %6276 = vmatpush1.bf16.msra.mxu0 0
        %6277 = vmatprep.subr.bf16.mxu0 0
        %6278 = vmatpush1.bf16.msra.mxu0 0
        %6279 = vmatprep.subr.bf16.mxu0 0
        %6280 = vmatpush1.bf16.msra.mxu0 0
        %6281 = vmatprep.subr.bf16.mxu0 0
        %6282 = vmatpush1.bf16.msra.mxu0 0
        %6283 = vmatprep.subr.bf16.mxu0 0
        %6284 = vmatpush1.bf16.msra.mxu0 0
        %6285 = vmatprep.mubr.bf16.mxu0 0
        %6286 = vmatmul.mubr.bf16.gmra.mrb[0].mxu0 %v6251
        %v6287 = vpop.f32.mrb[0].mxu0
        %v6288 = vadd.f32 %v6236, %v6287
        %v6289 = vpop.f32.mrb[0].mxu0
        %v6290 = vpop.f32.mrb[0].mxu0
        %v6291 = vpop.f32.mrb[0].mxu0
        %6292 = vdwg.mxu0
        %v6293 = vmax.f32 %v6288, 0.0
        %v6294 = vpack.c.bf16 %v6293, %v6293
        %v6296 = vlaneseq
        %v6297 = vshrl.u32 %v6296, 7
        %v6298 = vsub.s32 0, %v6297
        %v6299 = vrot.slane %v6230, %v6298
        %v6309 = vunpack.c.l.b16 %v6222
        %v6310 = vunpack.c.l.b16 %v6223
        %v6311 = vunpack.c.l.b16 %v6224
        %v6312 = vunpack.c.l.b16 %v6225
        %v6313 = vunpack.c.l.b16 %v6226
        %v6314 = vunpack.c.l.b16 %v6227
        %v6315 = vunpack.c.l.b16 %v6228
        %v6316 = vunpack.c.l.b16 %v6229
        %v6317 = vpack.c.b16 %v6310, %v6309
        %v6318 = vpack.c.b16 %v6312, %v6311
        %v6319 = vpack.c.b16 %v6314, %v6313
        %v6320 = vpack.c.b16 %v6316, %v6315
        %v6326 = vsel %vm2695, %v6294, 0
        %6328 = vmatprep.subr.bf16.mxu0 0
        %6329 = vmatpush1.bf16.msra.mxu0 %v6317
        %6330 = vmatprep.subr.bf16.mxu0 0
        %6331 = vmatpush1.bf16.msra.mxu0 %v6318
        %6332 = vmatprep.subr.bf16.mxu0 0
        %6333 = vmatpush1.bf16.msra.mxu0 %v6319
        %6334 = vmatprep.subr.bf16.mxu0 0
        %6335 = vmatpush1.bf16.msra.mxu0 %v6320
        %6336 = vmatprep.subr.bf16.mxu0 0
        %6337 = vmatpush1.bf16.msra.mxu0 0
        %6338 = vmatprep.subr.bf16.mxu0 0
        %6339 = vmatpush1.bf16.msra.mxu0 0
        %6340 = vmatprep.subr.bf16.mxu0 0
        %6341 = vmatpush1.bf16.msra.mxu0 0
        %6342 = vmatprep.subr.bf16.mxu0 0
        %6343 = vmatpush1.bf16.msra.mxu0 0
        %6344 = vmatprep.subr.bf16.mxu0 0
        %6345 = vmatpush1.bf16.msra.mxu0 0
        %6346 = vmatprep.subr.bf16.mxu0 0
        %6347 = vmatpush1.bf16.msra.mxu0 0
        %6348 = vmatprep.subr.bf16.mxu0 0
        %6349 = vmatpush1.bf16.msra.mxu0 0
        %6350 = vmatprep.subr.bf16.mxu0 0
        %6351 = vmatpush1.bf16.msra.mxu0 0
        %6352 = vmatprep.subr.bf16.mxu0 0
        %6353 = vmatpush1.bf16.msra.mxu0 0
        %6354 = vmatprep.subr.bf16.mxu0 0
        %6355 = vmatpush1.bf16.msra.mxu0 0
        %6356 = vmatprep.subr.bf16.mxu0 0
        %6357 = vmatpush1.bf16.msra.mxu0 0
        %6358 = vmatprep.subr.bf16.mxu0 0
        %6359 = vmatpush1.bf16.msra.mxu0 0
        %6360 = vmatprep.mubr.bf16.mxu0 0
        %6361 = vmatmul.mubr.bf16.gmra.mrb[0].mxu0 %v6326
        %v6362 = vpop.f32.mrb[0].mxu0
        %v6363 = vadd.f32 %v6299, %v6362
        %v6364 = vpop.f32.mrb[0].mxu0
        %v6365 = vpop.f32.mrb[0].mxu0
        %v6366 = vpop.f32.mrb[0].mxu0
        %6367 = vdwg.mxu0
        %v6368 = vadd.f32 %v6216, %v6363
        %v6369 = vld [vmem:[%s69] sm:$0x1]
        %v6370 = vld [vmem:[%s71] sm:$0x1]
        %v6371 = vsel %vm1556, %v6368, 0.0
        %6372 = vadd.xlane.f32.xlu0 %v6371
        %v6373 = vpop.xlane.xlu0 %6372
        %v6374 = vmul.f32 %v6373, %v2560
        %v6375 = vmul.f32 %v6368, %v6368
        %v6376 = vsel %vm1556, %v6375, 0.0
        %6377 = vadd.xlane.f32.xlu0 %v6376
        %v6378 = vpop.xlane.xlu0 %6377
        %v6379 = vmul.f32 %v6378, %v2560
        %v6380 = vmul.f32 %v6374, %v6374
        %v6381 = vsub.f32 %v6379, %v6380
        %v6382 = vsub.f32 %v6368, %v6374
        %v6383 = vadd.f32 %v6381, 1e-05
        %v6384 = vrsqrt.pop %v6383
        %v6385 = vmul.f32 %v6382, %v6384
        %v6387 = vlaneseq
        %v6388 = vshrl.u32 %v6387, 7
        %v6389 = vsub.s32 0, %v6388
        %v6390 = vrot.slane %v6369, %v6389
        %v6392 = vmul.f32 %v6385, %v6390
        %v6394 = vlaneseq
        %v6395 = vshrl.u32 %v6394, 7
        %v6396 = vsub.s32 0, %v6395
        %v6397 = vrot.slane %v6370, %v6396
        %v6399 = vadd.f32 %v6392, %v6397
        %s6400 = scalar_lea.vmem %s33, 16
        %v6401 = vld [vmem:[%s6400] sm:$0xf]
        %v6402 = vld [vmem:[%s6400 + $0x4] sm:$0xf]
        %v6403 = vld [vmem:[%s6400 + $0x8] sm:$0xf]
        %v6404 = vld [vmem:[%s6400 + $0xc] sm:$0xf]
        %s6405 = scalar_lea.vmem [#allocation22], 1
        %v6406 = vld [vmem:[%s6405] sm:$0x1]
        %s6407 = scalar_lea.vmem %s37, 16
        %v6408 = vld [vmem:[%s6407] sm:$0xf]
        %v6409 = vld [vmem:[%s6407 + $0x4] sm:$0xf]
        %v6410 = vld [vmem:[%s6407 + $0x8] sm:$0xf]
        %v6411 = vld [vmem:[%s6407 + $0xc] sm:$0xf]
        %s6412 = scalar_lea.vmem [#allocation23], 1
        %v6413 = vld [vmem:[%s6412] sm:$0x1]
        %v6414 = vpack.c.bf16 %v6399, %v6399
        %v6416 = vlaneseq
        %v6417 = vshrl.u32 %v6416, 7
        %v6418 = vsub.s32 0, %v6417
        %v6419 = vrot.slane %v6406, %v6418
        %v6425 = vunpack.c.l.b16 %v6401
        %v6426 = vunpack.c.l.b16 %v6402
        %v6427 = vunpack.c.l.b16 %v6403
        %v6428 = vunpack.c.l.b16 %v6404
        %v6429 = vpack.c.b16 %v6426, %v6425
        %v6430 = vpack.c.b16 %v6428, %v6427
        %v6434 = vsel %vm1556, %v6414, 0
        %6436 = vmatprep.subr.bf16.mxu0 0
        %6437 = vmatpush1.bf16.msra.mxu0 %v6429
        %6438 = vmatprep.subr.bf16.mxu0 0
        %6439 = vmatpush1.bf16.msra.mxu0 %v6430
        %6440 = vmatprep.subr.bf16.mxu0 0
        %6441 = vmatpush1.bf16.msra.mxu0 0
        %6442 = vmatprep.subr.bf16.mxu0 0
        %6443 = vmatpush1.bf16.msra.mxu0 0
        %6444 = vmatprep.subr.bf16.mxu0 0
        %6445 = vmatpush1.bf16.msra.mxu0 0
        %6446 = vmatprep.subr.bf16.mxu0 0
        %6447 = vmatpush1.bf16.msra.mxu0 0
        %6448 = vmatprep.subr.bf16.mxu0 0
        %6449 = vmatpush1.bf16.msra.mxu0 0
        %6450 = vmatprep.subr.bf16.mxu0 0
        %6451 = vmatpush1.bf16.msra.mxu0 0
        %6452 = vmatprep.subr.bf16.mxu0 0
        %6453 = vmatpush1.bf16.msra.mxu0 0
        %6454 = vmatprep.subr.bf16.mxu0 0
        %6455 = vmatpush1.bf16.msra.mxu0 0
        %6456 = vmatprep.subr.bf16.mxu0 0
        %6457 = vmatpush1.bf16.msra.mxu0 0
        %6458 = vmatprep.subr.bf16.mxu0 0
        %6459 = vmatpush1.bf16.msra.mxu0 0
        %6460 = vmatprep.subr.bf16.mxu0 0
        %6461 = vmatpush1.bf16.msra.mxu0 0
        %6462 = vmatprep.subr.bf16.mxu0 0
        %6463 = vmatpush1.bf16.msra.mxu0 0
        %6464 = vmatprep.subr.bf16.mxu0 0
        %6465 = vmatpush1.bf16.msra.mxu0 0
        %6466 = vmatprep.subr.bf16.mxu0 0
        %6467 = vmatpush1.bf16.msra.mxu0 0
        %6468 = vmatprep.mubr.bf16.mxu0 0
        %6469 = vmatmul.mubr.bf16.gmra.mrb[0].mxu0 %v6434
        %v6470 = vpop.f32.mrb[0].mxu0
        %v6471 = vadd.f32 %v6419, %v6470
        %v6472 = vpop.f32.mrb[0].mxu0
        %v6473 = vpop.f32.mrb[0].mxu0
        %v6474 = vpop.f32.mrb[0].mxu0
        %6475 = vdwg.mxu0
        %6476 = vxpose.xlu0.b32.start [1/16] %v6471, 128
        %6477 = vxpose.xlu0.b32.cont [2/16] 0.0, 128
        %6478 = vxpose.xlu0.b32.cont [3/16] 0.0, 128
        %6479 = vxpose.xlu0.b32.cont [4/16] 0.0, 128
        %6480 = vxpose.xlu0.b32.cont [5/16] 0.0, 128
        %6481 = vxpose.xlu0.b32.cont [6/16] 0.0, 128
        %6482 = vxpose.xlu0.b32.cont [7/16] 0.0, 128
        %6483 = vxpose.xlu0.b32.cont [8/16] 0.0, 128
        %6484 = vxpose.xlu0.b32.cont [9/16] 0.0, 128
        %6485 = vxpose.xlu0.b32.cont [10/16] 0.0, 128
        %6486 = vxpose.xlu0.b32.cont [11/16] 0.0, 128
        %6487 = vxpose.xlu0.b32.cont [12/16] 0.0, 128
        %6488 = vxpose.xlu0.b32.cont [13/16] 0.0, 128
        %6489 = vxpose.xlu0.b32.cont [14/16] 0.0, 128
        %6490 = vxpose.xlu0.b32.cont [15/16] 0.0, 128
        %6491 = vxpose.xlu0.b32.end [16/16] 0.0, 128
        %v6492 = vpop.trf.xlu0
        %v6493 = vpop.trf.xlu0
        %v6494 = vpop.trf.xlu0
        %v6495 = vpop.trf.xlu0
        %v6496 = vpop.trf.xlu0
        %v6497 = vpop.trf.xlu0
        %v6498 = vpop.trf.xlu0
        %v6499 = vpop.trf.xlu0
        %v6500 = vpop.trf.xlu0
        %v6501 = vpop.trf.xlu0
        %v6502 = vpop.trf.xlu0
        %v6503 = vpop.trf.xlu0
        %v6504 = vpop.trf.xlu0
        %v6505 = vpop.trf.xlu0
        %v6506 = vpop.trf.xlu0
        %v6507 = vpop.trf.xlu0
        %6508 = vxpose.xlu0.b32.start [1/16] %v6492, 128
        %6509 = vxpose.xlu0.b32.cont [2/16] 0.0, 128
        %6510 = vxpose.xlu0.b32.cont [3/16] 0.0, 128
        %6511 = vxpose.xlu0.b32.cont [4/16] 0.0, 128
        %6512 = vxpose.xlu0.b32.cont [5/16] 0.0, 128
        %6513 = vxpose.xlu0.b32.cont [6/16] 0.0, 128
        %6514 = vxpose.xlu0.b32.cont [7/16] 0.0, 128
        %6515 = vxpose.xlu0.b32.cont [8/16] 0.0, 128
        %6516 = vxpose.xlu0.b32.cont [9/16] 0.0, 128
        %6517 = vxpose.xlu0.b32.cont [10/16] 0.0, 128
        %6518 = vxpose.xlu0.b32.cont [11/16] 0.0, 128
        %6519 = vxpose.xlu0.b32.cont [12/16] 0.0, 128
        %6520 = vxpose.xlu0.b32.cont [13/16] 0.0, 128
        %6521 = vxpose.xlu0.b32.cont [14/16] 0.0, 128
        %6522 = vxpose.xlu0.b32.cont [15/16] 0.0, 128
        %6523 = vxpose.xlu0.b32.end [16/16] 0.0, 128
        %v6524 = vpop.trf.xlu0
        %v6525 = vpop.trf.xlu0
        %v6526 = vpop.trf.xlu0
        %v6527 = vpop.trf.xlu0
        %v6528 = vpop.trf.xlu0
        %v6529 = vpop.trf.xlu0
        %v6530 = vpop.trf.xlu0
        %v6531 = vpop.trf.xlu0
        %v6532 = vpop.trf.xlu0
        %v6533 = vpop.trf.xlu0
        %v6534 = vpop.trf.xlu0
        %v6535 = vpop.trf.xlu0
        %v6536 = vpop.trf.xlu0
        %v6537 = vpop.trf.xlu0
        %v6538 = vpop.trf.xlu0
        %v6539 = vpop.trf.xlu0
        %6540 = vxpose.xlu0.b32.start [1/16] %v6493, 128
        %6541 = vxpose.xlu0.b32.cont [2/16] 0.0, 128
        %6542 = vxpose.xlu0.b32.cont [3/16] 0.0, 128
        %6543 = vxpose.xlu0.b32.cont [4/16] 0.0, 128
        %6544 = vxpose.xlu0.b32.cont [5/16] 0.0, 128
        %6545 = vxpose.xlu0.b32.cont [6/16] 0.0, 128
        %6546 = vxpose.xlu0.b32.cont [7/16] 0.0, 128
        %6547 = vxpose.xlu0.b32.cont [8/16] 0.0, 128
        %6548 = vxpose.xlu0.b32.cont [9/16] 0.0, 128
        %6549 = vxpose.xlu0.b32.cont [10/16] 0.0, 128
        %6550 = vxpose.xlu0.b32.cont [11/16] 0.0, 128
        %6551 = vxpose.xlu0.b32.cont [12/16] 0.0, 128
        %6552 = vxpose.xlu0.b32.cont [13/16] 0.0, 128
        %6553 = vxpose.xlu0.b32.cont [14/16] 0.0, 128
        %6554 = vxpose.xlu0.b32.cont [15/16] 0.0, 128
        %6555 = vxpose.xlu0.b32.end [16/16] 0.0, 128
        %v6556 = vpop.trf.xlu0
        %v6557 = vpop.trf.xlu0
        %v6558 = vpop.trf.xlu0
        %v6559 = vpop.trf.xlu0
        %v6560 = vpop.trf.xlu0
        %v6561 = vpop.trf.xlu0
        %v6562 = vpop.trf.xlu0
        %v6563 = vpop.trf.xlu0
        %v6564 = vpop.trf.xlu0
        %v6565 = vpop.trf.xlu0
        %v6566 = vpop.trf.xlu0
        %v6567 = vpop.trf.xlu0
        %v6568 = vpop.trf.xlu0
        %v6569 = vpop.trf.xlu0
        %v6570 = vpop.trf.xlu0
        %v6571 = vpop.trf.xlu0
        %6572 = vxpose.xlu0.b32.start [1/16] %v6494, 128
        %6573 = vxpose.xlu0.b32.cont [2/16] 0.0, 128
        %6574 = vxpose.xlu0.b32.cont [3/16] 0.0, 128
        %6575 = vxpose.xlu0.b32.cont [4/16] 0.0, 128
        %6576 = vxpose.xlu0.b32.cont [5/16] 0.0, 128
        %6577 = vxpose.xlu0.b32.cont [6/16] 0.0, 128
        %6578 = vxpose.xlu0.b32.cont [7/16] 0.0, 128
        %6579 = vxpose.xlu0.b32.cont [8/16] 0.0, 128
        %6580 = vxpose.xlu0.b32.cont [9/16] 0.0, 128
        %6581 = vxpose.xlu0.b32.cont [10/16] 0.0, 128
        %6582 = vxpose.xlu0.b32.cont [11/16] 0.0, 128
        %6583 = vxpose.xlu0.b32.cont [12/16] 0.0, 128
        %6584 = vxpose.xlu0.b32.cont [13/16] 0.0, 128
        %6585 = vxpose.xlu0.b32.cont [14/16] 0.0, 128
        %6586 = vxpose.xlu0.b32.cont [15/16] 0.0, 128
        %6587 = vxpose.xlu0.b32.end [16/16] 0.0, 128
        %v6588 = vpop.trf.xlu0
        %v6589 = vpop.trf.xlu0
        %v6590 = vpop.trf.xlu0
        %v6591 = vpop.trf.xlu0
        %v6592 = vpop.trf.xlu0
        %v6593 = vpop.trf.xlu0
        %v6594 = vpop.trf.xlu0
        %v6595 = vpop.trf.xlu0
        %v6596 = vpop.trf.xlu0
        %v6597 = vpop.trf.xlu0
        %v6598 = vpop.trf.xlu0
        %v6599 = vpop.trf.xlu0
        %v6600 = vpop.trf.xlu0
        %v6601 = vpop.trf.xlu0
        %v6602 = vpop.trf.xlu0
        %v6603 = vpop.trf.xlu0
        %6604 = vxpose.xlu0.b32.start [1/16] %v6495, 128
        %6605 = vxpose.xlu0.b32.cont [2/16] 0.0, 128
        %6606 = vxpose.xlu0.b32.cont [3/16] 0.0, 128
        %6607 = vxpose.xlu0.b32.cont [4/16] 0.0, 128
        %6608 = vxpose.xlu0.b32.cont [5/16] 0.0, 128
        %6609 = vxpose.xlu0.b32.cont [6/16] 0.0, 128
        %6610 = vxpose.xlu0.b32.cont [7/16] 0.0, 128
        %6611 = vxpose.xlu0.b32.cont [8/16] 0.0, 128
        %6612 = vxpose.xlu0.b32.cont [9/16] 0.0, 128
        %6613 = vxpose.xlu0.b32.cont [10/16] 0.0, 128
        %6614 = vxpose.xlu0.b32.cont [11/16] 0.0, 128
        %6615 = vxpose.xlu0.b32.cont [12/16] 0.0, 128
        %6616 = vxpose.xlu0.b32.cont [13/16] 0.0, 128
        %6617 = vxpose.xlu0.b32.cont [14/16] 0.0, 128
        %6618 = vxpose.xlu0.b32.cont [15/16] 0.0, 128
        %6619 = vxpose.xlu0.b32.end [16/16] 0.0, 128
        %v6620 = vpop.trf.xlu0
        %v6621 = vpop.trf.xlu0
        %v6622 = vpop.trf.xlu0
        %v6623 = vpop.trf.xlu0
        %v6624 = vpop.trf.xlu0
        %v6625 = vpop.trf.xlu0
        %v6626 = vpop.trf.xlu0
        %v6627 = vpop.trf.xlu0
        %v6628 = vpop.trf.xlu0
        %v6629 = vpop.trf.xlu0
        %v6630 = vpop.trf.xlu0
        %v6631 = vpop.trf.xlu0
        %v6632 = vpop.trf.xlu0
        %v6633 = vpop.trf.xlu0
        %v6634 = vpop.trf.xlu0
        %v6635 = vpop.trf.xlu0
        %6636 = vxpose.xlu0.b32.start [1/16] %v6500, 128
        %6637 = vxpose.xlu0.b32.cont [2/16] 0.0, 128
        %6638 = vxpose.xlu0.b32.cont [3/16] 0.0, 128
        %6639 = vxpose.xlu0.b32.cont [4/16] 0.0, 128
        %6640 = vxpose.xlu0.b32.cont [5/16] 0.0, 128
        %6641 = vxpose.xlu0.b32.cont [6/16] 0.0, 128
        %6642 = vxpose.xlu0.b32.cont [7/16] 0.0, 128
        %6643 = vxpose.xlu0.b32.cont [8/16] 0.0, 128
        %6644 = vxpose.xlu0.b32.cont [9/16] 0.0, 128
        %6645 = vxpose.xlu0.b32.cont [10/16] 0.0, 128
        %6646 = vxpose.xlu0.b32.cont [11/16] 0.0, 128
        %6647 = vxpose.xlu0.b32.cont [12/16] 0.0, 128
        %6648 = vxpose.xlu0.b32.cont [13/16] 0.0, 128
        %6649 = vxpose.xlu0.b32.cont [14/16] 0.0, 128
        %6650 = vxpose.xlu0.b32.cont [15/16] 0.0, 128
        %6651 = vxpose.xlu0.b32.end [16/16] 0.0, 128
        %v6652 = vpop.trf.xlu0
        %v6653 = vpop.trf.xlu0
        %v6654 = vpop.trf.xlu0
        %v6655 = vpop.trf.xlu0
        %v6656 = vpop.trf.xlu0
        %v6657 = vpop.trf.xlu0
        %v6658 = vpop.trf.xlu0
        %v6659 = vpop.trf.xlu0
        %v6660 = vpop.trf.xlu0
        %v6661 = vpop.trf.xlu0
        %v6662 = vpop.trf.xlu0
        %v6663 = vpop.trf.xlu0
        %v6664 = vpop.trf.xlu0
        %v6665 = vpop.trf.xlu0
        %v6666 = vpop.trf.xlu0
        %v6667 = vpop.trf.xlu0
        %6668 = vxpose.xlu0.b32.start [1/16] %v6501, 128
        %6669 = vxpose.xlu0.b32.cont [2/16] 0.0, 128
        %6670 = vxpose.xlu0.b32.cont [3/16] 0.0, 128
        %6671 = vxpose.xlu0.b32.cont [4/16] 0.0, 128
        %6672 = vxpose.xlu0.b32.cont [5/16] 0.0, 128
        %6673 = vxpose.xlu0.b32.cont [6/16] 0.0, 128
        %6674 = vxpose.xlu0.b32.cont [7/16] 0.0, 128
        %6675 = vxpose.xlu0.b32.cont [8/16] 0.0, 128
        %6676 = vxpose.xlu0.b32.cont [9/16] 0.0, 128
        %6677 = vxpose.xlu0.b32.cont [10/16] 0.0, 128
        %6678 = vxpose.xlu0.b32.cont [11/16] 0.0, 128
        %6679 = vxpose.xlu0.b32.cont [12/16] 0.0, 128
        %6680 = vxpose.xlu0.b32.cont [13/16] 0.0, 128
        %6681 = vxpose.xlu0.b32.cont [14/16] 0.0, 128
        %6682 = vxpose.xlu0.b32.cont [15/16] 0.0, 128
        %6683 = vxpose.xlu0.b32.end [16/16] 0.0, 128
        %v6684 = vpop.trf.xlu0
        %v6685 = vpop.trf.xlu0
        %v6686 = vpop.trf.xlu0
        %v6687 = vpop.trf.xlu0
        %v6688 = vpop.trf.xlu0
        %v6689 = vpop.trf.xlu0
        %v6690 = vpop.trf.xlu0
        %v6691 = vpop.trf.xlu0
        %v6692 = vpop.trf.xlu0
        %v6693 = vpop.trf.xlu0
        %v6694 = vpop.trf.xlu0
        %v6695 = vpop.trf.xlu0
        %v6696 = vpop.trf.xlu0
        %v6697 = vpop.trf.xlu0
        %v6698 = vpop.trf.xlu0
        %v6699 = vpop.trf.xlu0
        %6700 = vxpose.xlu0.b32.start [1/16] %v6502, 128
        %6701 = vxpose.xlu0.b32.cont [2/16] 0.0, 128
        %6702 = vxpose.xlu0.b32.cont [3/16] 0.0, 128
        %6703 = vxpose.xlu0.b32.cont [4/16] 0.0, 128
        %6704 = vxpose.xlu0.b32.cont [5/16] 0.0, 128
        %6705 = vxpose.xlu0.b32.cont [6/16] 0.0, 128
        %6706 = vxpose.xlu0.b32.cont [7/16] 0.0, 128
        %6707 = vxpose.xlu0.b32.cont [8/16] 0.0, 128
        %6708 = vxpose.xlu0.b32.cont [9/16] 0.0, 128
        %6709 = vxpose.xlu0.b32.cont [10/16] 0.0, 128
        %6710 = vxpose.xlu0.b32.cont [11/16] 0.0, 128
        %6711 = vxpose.xlu0.b32.cont [12/16] 0.0, 128
        %6712 = vxpose.xlu0.b32.cont [13/16] 0.0, 128
        %6713 = vxpose.xlu0.b32.cont [14/16] 0.0, 128
        %6714 = vxpose.xlu0.b32.cont [15/16] 0.0, 128
        %6715 = vxpose.xlu0.b32.end [16/16] 0.0, 128
        %v6716 = vpop.trf.xlu0
        %v6717 = vpop.trf.xlu0
        %v6718 = vpop.trf.xlu0
        %v6719 = vpop.trf.xlu0
        %v6720 = vpop.trf.xlu0
        %v6721 = vpop.trf.xlu0
        %v6722 = vpop.trf.xlu0
        %v6723 = vpop.trf.xlu0
        %v6724 = vpop.trf.xlu0
        %v6725 = vpop.trf.xlu0
        %v6726 = vpop.trf.xlu0
        %v6727 = vpop.trf.xlu0
        %v6728 = vpop.trf.xlu0
        %v6729 = vpop.trf.xlu0
        %v6730 = vpop.trf.xlu0
        %v6731 = vpop.trf.xlu0
        %6732 = vxpose.xlu0.b32.start [1/16] %v6503, 128
        %6733 = vxpose.xlu0.b32.cont [2/16] 0.0, 128
        %6734 = vxpose.xlu0.b32.cont [3/16] 0.0, 128
        %6735 = vxpose.xlu0.b32.cont [4/16] 0.0, 128
        %6736 = vxpose.xlu0.b32.cont [5/16] 0.0, 128
        %6737 = vxpose.xlu0.b32.cont [6/16] 0.0, 128
        %6738 = vxpose.xlu0.b32.cont [7/16] 0.0, 128
        %6739 = vxpose.xlu0.b32.cont [8/16] 0.0, 128
        %6740 = vxpose.xlu0.b32.cont [9/16] 0.0, 128
        %6741 = vxpose.xlu0.b32.cont [10/16] 0.0, 128
        %6742 = vxpose.xlu0.b32.cont [11/16] 0.0, 128
        %6743 = vxpose.xlu0.b32.cont [12/16] 0.0, 128
        %6744 = vxpose.xlu0.b32.cont [13/16] 0.0, 128
        %6745 = vxpose.xlu0.b32.cont [14/16] 0.0, 128
        %6746 = vxpose.xlu0.b32.cont [15/16] 0.0, 128
        %6747 = vxpose.xlu0.b32.end [16/16] 0.0, 128
        %v6748 = vpop.trf.xlu0
        %v6749 = vpop.trf.xlu0
        %v6750 = vpop.trf.xlu0
        %v6751 = vpop.trf.xlu0
        %v6752 = vpop.trf.xlu0
        %v6753 = vpop.trf.xlu0
        %v6754 = vpop.trf.xlu0
        %v6755 = vpop.trf.xlu0
        %v6756 = vpop.trf.xlu0
        %v6757 = vpop.trf.xlu0
        %v6758 = vpop.trf.xlu0
        %v6759 = vpop.trf.xlu0
        %v6760 = vpop.trf.xlu0
        %v6761 = vpop.trf.xlu0
        %v6762 = vpop.trf.xlu0
        %v6763 = vpop.trf.xlu0
        %v6764 = vpack.c.bf16 %v6524, %v6524
        %v6765 = vpack.c.bf16 %v6556, %v6556
        %v6766 = vpack.c.bf16 %v6588, %v6588
        %v6767 = vpack.c.bf16 %v6620, %v6620
        %v6768 = vpack.c.bf16 %v6496, %v6496
        %v6769 = vpack.c.bf16 %v6497, %v6497
        %v6770 = vpack.c.bf16 %v6498, %v6498
        %v6771 = vpack.c.bf16 %v6499, %v6499
        %v6773 = vsel %vm1896, %v6764, 0
        %v6776 = vsel %vm1900, %v6768, 0
        %6778 = vmatprep.subr.bf16.mxu0 0
        %6779 = vmatpush1.bf16.msra.mxu0 %v6776
        %6780 = vmatprep.subr.bf16.mxu0 0
        %6781 = vmatpush1.bf16.msra.mxu0 0
        %6782 = vmatprep.subr.bf16.mxu0 0
        %6783 = vmatpush1.bf16.msra.mxu0 0
        %6784 = vmatprep.subr.bf16.mxu0 0
        %6785 = vmatpush1.bf16.msra.mxu0 0
        %6786 = vmatprep.subr.bf16.mxu0 0
        %6787 = vmatpush1.bf16.msra.mxu0 0
        %6788 = vmatprep.subr.bf16.mxu0 0
        %6789 = vmatpush1.bf16.msra.mxu0 0
        %6790 = vmatprep.subr.bf16.mxu0 0
        %6791 = vmatpush1.bf16.msra.mxu0 0
        %6792 = vmatprep.subr.bf16.mxu0 0
        %6793 = vmatpush1.bf16.msra.mxu0 0
        %6794 = vmatprep.subr.bf16.mxu0 0
        %6795 = vmatpush1.bf16.msra.mxu0 0
        %6796 = vmatprep.subr.bf16.mxu0 0
        %6797 = vmatpush1.bf16.msra.mxu0 0
        %6798 = vmatprep.subr.bf16.mxu0 0
        %6799 = vmatpush1.bf16.msra.mxu0 0
        %6800 = vmatprep.subr.bf16.mxu0 0
        %6801 = vmatpush1.bf16.msra.mxu0 0
        %6802 = vmatprep.subr.bf16.mxu0 0
        %6803 = vmatpush1.bf16.msra.mxu0 0
        %6804 = vmatprep.subr.bf16.mxu0 0
        %6805 = vmatpush1.bf16.msra.mxu0 0
        %6806 = vmatprep.subr.bf16.mxu0 0
        %6807 = vmatpush1.bf16.msra.mxu0 0
        %6808 = vmatprep.subr.bf16.mxu0 0
        %6809 = vmatpush1.bf16.msra.mxu0 0
        %6810 = vmatprep.mubr.bf16.mxu0 0
        %6811 = vmatmul.mubr.bf16.gmra.mrb[0].mxu0 %v6773
        %v6812 = vpop.f32.mrb[0].mxu0
        %v6813 = vadd.f32 0.0, %v6812
        %v6814 = vpop.f32.mrb[0].mxu0
        %v6815 = vpop.f32.mrb[0].mxu0
        %v6816 = vpop.f32.mrb[0].mxu0
        %6817 = vdwg.mxu0
        %v6819 = vsel %vm1896, %v6765, 0
        %v6822 = vsel %vm1900, %v6769, 0
        %6824 = vmatprep.subr.bf16.mxu0 0
        %6825 = vmatpush1.bf16.msra.mxu0 %v6822
        %6826 = vmatprep.subr.bf16.mxu0 0
        %6827 = vmatpush1.bf16.msra.mxu0 0
        %6828 = vmatprep.subr.bf16.mxu0 0
        %6829 = vmatpush1.bf16.msra.mxu0 0
        %6830 = vmatprep.subr.bf16.mxu0 0
        %6831 = vmatpush1.bf16.msra.mxu0 0
        %6832 = vmatprep.subr.bf16.mxu0 0
        %6833 = vmatpush1.bf16.msra.mxu0 0
        %6834 = vmatprep.subr.bf16.mxu0 0
        %6835 = vmatpush1.bf16.msra.mxu0 0
        %6836 = vmatprep.subr.bf16.mxu0 0
        %6837 = vmatpush1.bf16.msra.mxu0 0
        %6838 = vmatprep.subr.bf16.mxu0 0
        %6839 = vmatpush1.bf16.msra.mxu0 0
        %6840 = vmatprep.subr.bf16.mxu0 0
        %6841 = vmatpush1.bf16.msra.mxu0 0
        %6842 = vmatprep.subr.bf16.mxu0 0
        %6843 = vmatpush1.bf16.msra.mxu0 0
        %6844 = vmatprep.subr.bf16.mxu0 0
        %6845 = vmatpush1.bf16.msra.mxu0 0
        %6846 = vmatprep.subr.bf16.mxu0 0
        %6847 = vmatpush1.bf16.msra.mxu0 0
        %6848 = vmatprep.subr.bf16.mxu0 0
        %6849 = vmatpush1.bf16.msra.mxu0 0
        %6850 = vmatprep.subr.bf16.mxu0 0
        %6851 = vmatpush1.bf16.msra.mxu0 0
        %6852 = vmatprep.subr.bf16.mxu0 0
        %6853 = vmatpush1.bf16.msra.mxu0 0
        %6854 = vmatprep.subr.bf16.mxu0 0
        %6855 = vmatpush1.bf16.msra.mxu0 0
        %6856 = vmatprep.mubr.bf16.mxu0 0
        %6857 = vmatmul.mubr.bf16.gmra.mrb[0].mxu0 %v6819
        %v6858 = vpop.f32.mrb[0].mxu0
        %v6859 = vadd.f32 0.0, %v6858
        %v6860 = vpop.f32.mrb[0].mxu0
        %v6861 = vpop.f32.mrb[0].mxu0
        %v6862 = vpop.f32.mrb[0].mxu0
        %6863 = vdwg.mxu0
        %v6865 = vsel %vm1896, %v6766, 0
        %v6868 = vsel %vm1900, %v6770, 0
        %6870 = vmatprep.subr.bf16.mxu0 0
        %6871 = vmatpush1.bf16.msra.mxu0 %v6868
        %6872 = vmatprep.subr.bf16.mxu0 0
        %6873 = vmatpush1.bf16.msra.mxu0 0
        %6874 = vmatprep.subr.bf16.mxu0 0
        %6875 = vmatpush1.bf16.msra.mxu0 0
        %6876 = vmatprep.subr.bf16.mxu0 0
        %6877 = vmatpush1.bf16.msra.mxu0 0
        %6878 = vmatprep.subr.bf16.mxu0 0
        %6879 = vmatpush1.bf16.msra.mxu0 0
        %6880 = vmatprep.subr.bf16.mxu0 0
        %6881 = vmatpush1.bf16.msra.mxu0 0
        %6882 = vmatprep.subr.bf16.mxu0 0
        %6883 = vmatpush1.bf16.msra.mxu0 0
        %6884 = vmatprep.subr.bf16.mxu0 0
        %6885 = vmatpush1.bf16.msra.mxu0 0
        %6886 = vmatprep.subr.bf16.mxu0 0
        %6887 = vmatpush1.bf16.msra.mxu0 0
        %6888 = vmatprep.subr.bf16.mxu0 0
        %6889 = vmatpush1.bf16.msra.mxu0 0
        %6890 = vmatprep.subr.bf16.mxu0 0
        %6891 = vmatpush1.bf16.msra.mxu0 0
        %6892 = vmatprep.subr.bf16.mxu0 0
        %6893 = vmatpush1.bf16.msra.mxu0 0
        %6894 = vmatprep.subr.bf16.mxu0 0
        %6895 = vmatpush1.bf16.msra.mxu0 0
        %6896 = vmatprep.subr.bf16.mxu0 0
        %6897 = vmatpush1.bf16.msra.mxu0 0
        %6898 = vmatprep.subr.bf16.mxu0 0
        %6899 = vmatpush1.bf16.msra.mxu0 0
        %6900 = vmatprep.subr.bf16.mxu0 0
        %6901 = vmatpush1.bf16.msra.mxu0 0
        %6902 = vmatprep.mubr.bf16.mxu0 0
        %6903 = vmatmul.mubr.bf16.gmra.mrb[0].mxu0 %v6865
        %v6904 = vpop.f32.mrb[0].mxu0
        %v6905 = vadd.f32 0.0, %v6904
        %v6906 = vpop.f32.mrb[0].mxu0
        %v6907 = vpop.f32.mrb[0].mxu0
        %v6908 = vpop.f32.mrb[0].mxu0
        %6909 = vdwg.mxu0
        %v6911 = vsel %vm1896, %v6767, 0
        %v6914 = vsel %vm1900, %v6771, 0
        %6916 = vmatprep.subr.bf16.mxu0 0
        %6917 = vmatpush1.bf16.msra.mxu0 %v6914
        %6918 = vmatprep.subr.bf16.mxu0 0
        %6919 = vmatpush1.bf16.msra.mxu0 0
        %6920 = vmatprep.subr.bf16.mxu0 0
        %6921 = vmatpush1.bf16.msra.mxu0 0
        %6922 = vmatprep.subr.bf16.mxu0 0
        %6923 = vmatpush1.bf16.msra.mxu0 0
        %6924 = vmatprep.subr.bf16.mxu0 0
        %6925 = vmatpush1.bf16.msra.mxu0 0
        %6926 = vmatprep.subr.bf16.mxu0 0
        %6927 = vmatpush1.bf16.msra.mxu0 0
        %6928 = vmatprep.subr.bf16.mxu0 0
        %6929 = vmatpush1.bf16.msra.mxu0 0
        %6930 = vmatprep.subr.bf16.mxu0 0
        %6931 = vmatpush1.bf16.msra.mxu0 0
        %6932 = vmatprep.subr.bf16.mxu0 0
        %6933 = vmatpush1.bf16.msra.mxu0 0
        %6934 = vmatprep.subr.bf16.mxu0 0
        %6935 = vmatpush1.bf16.msra.mxu0 0
        %6936 = vmatprep.subr.bf16.mxu0 0
        %6937 = vmatpush1.bf16.msra.mxu0 0
        %6938 = vmatprep.subr.bf16.mxu0 0
        %6939 = vmatpush1.bf16.msra.mxu0 0
        %6940 = vmatprep.subr.bf16.mxu0 0
        %6941 = vmatpush1.bf16.msra.mxu0 0
        %6942 = vmatprep.subr.bf16.mxu0 0
        %6943 = vmatpush1.bf16.msra.mxu0 0
        %6944 = vmatprep.subr.bf16.mxu0 0
        %6945 = vmatpush1.bf16.msra.mxu0 0
        %6946 = vmatprep.subr.bf16.mxu0 0
        %6947 = vmatpush1.bf16.msra.mxu0 0
        %6948 = vmatprep.mubr.bf16.mxu0 0
        %6949 = vmatmul.mubr.bf16.gmra.mrb[0].mxu0 %v6911
        %v6950 = vpop.f32.mrb[0].mxu0
        %v6951 = vadd.f32 0.0, %v6950
        %v6952 = vpop.f32.mrb[0].mxu0
        %v6953 = vpop.f32.mrb[0].mxu0
        %v6954 = vpop.f32.mrb[0].mxu0
        %6955 = vdwg.mxu0
        %v6956 = vmul.f32 %v6813, 0.35355338
        %v6957 = vmul.f32 %v6859, 0.35355338
        %v6958 = vmul.f32 %v6905, 0.35355338
        %v6959 = vmul.f32 %v6951, 0.35355338
        %v6960 = vadd.f32 %v6956, %v1524
        %v6961 = vadd.f32 %v6957, %v1524
        %v6962 = vadd.f32 %v6958, %v1524
        %v6963 = vadd.f32 %v6959, %v1524
        %v6964 = vsel %vm1896, %v6960, -inf
        %6965 = vmax.xlane.f32.xlu0 %v6964
        %v6966 = vpop.xlane.xlu0 %6965
        %v6967 = vsel %vm1896, %v6961, -inf
        %6968 = vmax.xlane.f32.xlu0 %v6967
        %v6969 = vpop.xlane.xlu0 %6968
        %v6970 = vsel %vm1896, %v6962, -inf
        %6971 = vmax.xlane.f32.xlu0 %v6970
        %v6972 = vpop.xlane.xlu0 %6971
        %v6973 = vsel %vm1896, %v6963, -inf
        %6974 = vmax.xlane.f32.xlu0 %v6973
        %v6975 = vpop.xlane.xlu0 %6974
        %v6976 = vsub.f32 %v6960, %v6966
        %v6977 = vsub.f32 %v6961, %v6969
        %v6978 = vsub.f32 %v6962, %v6972
        %v6979 = vsub.f32 %v6963, %v6975
        %v6980 = vmul.f32 %v6976, 1.442695
        %v6981 = vpow.pop %v6980
        %v6982 = vmul.f32 %v6977, 1.442695
        %v6983 = vpow.pop %v6982
        %v6984 = vmul.f32 %v6978, 1.442695
        %v6985 = vpow.pop %v6984
        %v6986 = vmul.f32 %v6979, 1.442695
        %v6987 = vpow.pop %v6986
        %v6988 = vsel %vm1896, %v6981, 0.0
        %6989 = vadd.xlane.f32.xlu0 %v6988
        %v6990 = vpop.xlane.xlu0 %6989
        %v6991 = vsel %vm1896, %v6983, 0.0
        %6992 = vadd.xlane.f32.xlu0 %v6991
        %v6993 = vpop.xlane.xlu0 %6992
        %v6994 = vsel %vm1896, %v6985, 0.0
        %6995 = vadd.xlane.f32.xlu0 %v6994
        %v6996 = vpop.xlane.xlu0 %6995
        %v6997 = vsel %vm1896, %v6987, 0.0
        %6998 = vadd.xlane.f32.xlu0 %v6997
        %v6999 = vpop.xlane.xlu0 %6998
        %v7000 = vrcp.pop %v6990
        %v7001 = vrcp.pop %v6993
        %v7002 = vrcp.pop %v6996
        %v7003 = vrcp.pop %v6999
        %v7004 = vmul.f32 %v6981, %v7000
        %v7005 = vmul.f32 %v6983, %v7001
        %v7006 = vmul.f32 %v6985, %v7002
        %v7007 = vmul.f32 %v6987, %v7003
        %v7008 = vpack.c.bf16 %v7004, %v7004
        %v7009 = vpack.c.bf16 %v7005, %v7005
        %v7010 = vpack.c.bf16 %v7006, %v7006
        %v7011 = vpack.c.bf16 %v7007, %v7007
        %v7012 = vpack.c.bf16 %v6652, %v6652
        %v7013 = vpack.c.bf16 %v6684, %v6684
        %v7014 = vpack.c.bf16 %v6716, %v6716
        %v7015 = vpack.c.bf16 %v6748, %v6748
        %v7017 = vsel %vm1896, %v7008, 0
        %v7020 = vsel %vm1900, %v7012, 0
        %7022 = vmatprep.subr.bf16.mxu0 0
        %7023 = vmatpush1.bf16.msra.mxu0 %v7020
        %7024 = vmatprep.subr.bf16.mxu0 0
        %7025 = vmatpush1.bf16.msra.mxu0 0
        %7026 = vmatprep.subr.bf16.mxu0 0
        %7027 = vmatpush1.bf16.msra.mxu0 0
        %7028 = vmatprep.subr.bf16.mxu0 0
        %7029 = vmatpush1.bf16.msra.mxu0 0
        %7030 = vmatprep.subr.bf16.mxu0 0
        %7031 = vmatpush1.bf16.msra.mxu0 0
        %7032 = vmatprep.subr.bf16.mxu0 0
        %7033 = vmatpush1.bf16.msra.mxu0 0
        %7034 = vmatprep.subr.bf16.mxu0 0
        %7035 = vmatpush1.bf16.msra.mxu0 0
        %7036 = vmatprep.subr.bf16.mxu0 0
        %7037 = vmatpush1.bf16.msra.mxu0 0
        %7038 = vmatprep.subr.bf16.mxu0 0
        %7039 = vmatpush1.bf16.msra.mxu0 0
        %7040 = vmatprep.subr.bf16.mxu0 0
        %7041 = vmatpush1.bf16.msra.mxu0 0
        %7042 = vmatprep.subr.bf16.mxu0 0
        %7043 = vmatpush1.bf16.msra.mxu0 0
        %7044 = vmatprep.subr.bf16.mxu0 0
        %7045 = vmatpush1.bf16.msra.mxu0 0
        %7046 = vmatprep.subr.bf16.mxu0 0
        %7047 = vmatpush1.bf16.msra.mxu0 0
        %7048 = vmatprep.subr.bf16.mxu0 0
        %7049 = vmatpush1.bf16.msra.mxu0 0
        %7050 = vmatprep.subr.bf16.mxu0 0
        %7051 = vmatpush1.bf16.msra.mxu0 0
        %7052 = vmatprep.subr.bf16.mxu0 0
        %7053 = vmatpush1.bf16.msra.mxu0 0
        %7054 = vmatprep.mubr.bf16.mxu0 0
        %7055 = vmatmul.mubr.bf16.gmra.mrb[0].mxu0 %v7017
        %v7056 = vpop.f32.mrb[0].mxu0
        %v7057 = vadd.f32 0.0, %v7056
        %v7058 = vpop.f32.mrb[0].mxu0
        %v7059 = vpop.f32.mrb[0].mxu0
        %v7060 = vpop.f32.mrb[0].mxu0
        %7061 = vdwg.mxu0
        %v7063 = vsel %vm1896, %v7009, 0
        %v7066 = vsel %vm1900, %v7013, 0
        %7068 = vmatprep.subr.bf16.mxu0 0
        %7069 = vmatpush1.bf16.msra.mxu0 %v7066
        %7070 = vmatprep.subr.bf16.mxu0 0
        %7071 = vmatpush1.bf16.msra.mxu0 0
        %7072 = vmatprep.subr.bf16.mxu0 0
        %7073 = vmatpush1.bf16.msra.mxu0 0
        %7074 = vmatprep.subr.bf16.mxu0 0
        %7075 = vmatpush1.bf16.msra.mxu0 0
        %7076 = vmatprep.subr.bf16.mxu0 0
        %7077 = vmatpush1.bf16.msra.mxu0 0
        %7078 = vmatprep.subr.bf16.mxu0 0
        %7079 = vmatpush1.bf16.msra.mxu0 0
        %7080 = vmatprep.subr.bf16.mxu0 0
        %7081 = vmatpush1.bf16.msra.mxu0 0
        %7082 = vmatprep.subr.bf16.mxu0 0
        %7083 = vmatpush1.bf16.msra.mxu0 0
        %7084 = vmatprep.subr.bf16.mxu0 0
        %7085 = vmatpush1.bf16.msra.mxu0 0
        %7086 = vmatprep.subr.bf16.mxu0 0
        %7087 = vmatpush1.bf16.msra.mxu0 0
        %7088 = vmatprep.subr.bf16.mxu0 0
        %7089 = vmatpush1.bf16.msra.mxu0 0
        %7090 = vmatprep.subr.bf16.mxu0 0
        %7091 = vmatpush1.bf16.msra.mxu0 0
        %7092 = vmatprep.subr.bf16.mxu0 0
        %7093 = vmatpush1.bf16.msra.mxu0 0
        %7094 = vmatprep.subr.bf16.mxu0 0
        %7095 = vmatpush1.bf16.msra.mxu0 0
        %7096 = vmatprep.subr.bf16.mxu0 0
        %7097 = vmatpush1.bf16.msra.mxu0 0
        %7098 = vmatprep.subr.bf16.mxu0 0
        %7099 = vmatpush1.bf16.msra.mxu0 0
        %7100 = vmatprep.mubr.bf16.mxu0 0
        %7101 = vmatmul.mubr.bf16.gmra.mrb[0].mxu0 %v7063
        %v7102 = vpop.f32.mrb[0].mxu0
        %v7103 = vadd.f32 0.0, %v7102
        %v7104 = vpop.f32.mrb[0].mxu0
        %v7105 = vpop.f32.mrb[0].mxu0
        %v7106 = vpop.f32.mrb[0].mxu0
        %7107 = vdwg.mxu0
        %v7109 = vsel %vm1896, %v7010, 0
        %v7112 = vsel %vm1900, %v7014, 0
        %7114 = vmatprep.subr.bf16.mxu0 0
        %7115 = vmatpush1.bf16.msra.mxu0 %v7112
        %7116 = vmatprep.subr.bf16.mxu0 0
        %7117 = vmatpush1.bf16.msra.mxu0 0
        %7118 = vmatprep.subr.bf16.mxu0 0
        %7119 = vmatpush1.bf16.msra.mxu0 0
        %7120 = vmatprep.subr.bf16.mxu0 0
        %7121 = vmatpush1.bf16.msra.mxu0 0
        %7122 = vmatprep.subr.bf16.mxu0 0
        %7123 = vmatpush1.bf16.msra.mxu0 0
        %7124 = vmatprep.subr.bf16.mxu0 0
        %7125 = vmatpush1.bf16.msra.mxu0 0
        %7126 = vmatprep.subr.bf16.mxu0 0
        %7127 = vmatpush1.bf16.msra.mxu0 0
        %7128 = vmatprep.subr.bf16.mxu0 0
        %7129 = vmatpush1.bf16.msra.mxu0 0
        %7130 = vmatprep.subr.bf16.mxu0 0
        %7131 = vmatpush1.bf16.msra.mxu0 0
        %7132 = vmatprep.subr.bf16.mxu0 0
        %7133 = vmatpush1.bf16.msra.mxu0 0
        %7134 = vmatprep.subr.bf16.mxu0 0
        %7135 = vmatpush1.bf16.msra.mxu0 0
        %7136 = vmatprep.subr.bf16.mxu0 0
        %7137 = vmatpush1.bf16.msra.mxu0 0
        %7138 = vmatprep.subr.bf16.mxu0 0
        %7139 = vmatpush1.bf16.msra.mxu0 0
        %7140 = vmatprep.subr.bf16.mxu0 0
        %7141 = vmatpush1.bf16.msra.mxu0 0
        %7142 = vmatprep.subr.bf16.mxu0 0
        %7143 = vmatpush1.bf16.msra.mxu0 0
        %7144 = vmatprep.subr.bf16.mxu0 0
        %7145 = vmatpush1.bf16.msra.mxu0 0
        %7146 = vmatprep.mubr.bf16.mxu0 0
        %7147 = vmatmul.mubr.bf16.gmra.mrb[0].mxu0 %v7109
        %v7148 = vpop.f32.mrb[0].mxu0
        %v7149 = vadd.f32 0.0, %v7148
        %v7150 = vpop.f32.mrb[0].mxu0
        %v7151 = vpop.f32.mrb[0].mxu0
        %v7152 = vpop.f32.mrb[0].mxu0
        %7153 = vdwg.mxu0
        %v7155 = vsel %vm1896, %v7011, 0
        %v7158 = vsel %vm1900, %v7015, 0
        %7160 = vmatprep.subr.bf16.mxu0 0
        %7161 = vmatpush1.bf16.msra.mxu0 %v7158
        %7162 = vmatprep.subr.bf16.mxu0 0
        %7163 = vmatpush1.bf16.msra.mxu0 0
        %7164 = vmatprep.subr.bf16.mxu0 0
        %7165 = vmatpush1.bf16.msra.mxu0 0
        %7166 = vmatprep.subr.bf16.mxu0 0
        %7167 = vmatpush1.bf16.msra.mxu0 0
        %7168 = vmatprep.subr.bf16.mxu0 0
        %7169 = vmatpush1.bf16.msra.mxu0 0
        %7170 = vmatprep.subr.bf16.mxu0 0
        %7171 = vmatpush1.bf16.msra.mxu0 0
        %7172 = vmatprep.subr.bf16.mxu0 0
        %7173 = vmatpush1.bf16.msra.mxu0 0
        %7174 = vmatprep.subr.bf16.mxu0 0
        %7175 = vmatpush1.bf16.msra.mxu0 0
        %7176 = vmatprep.subr.bf16.mxu0 0
        %7177 = vmatpush1.bf16.msra.mxu0 0
        %7178 = vmatprep.subr.bf16.mxu0 0
        %7179 = vmatpush1.bf16.msra.mxu0 0
        %7180 = vmatprep.subr.bf16.mxu0 0
        %7181 = vmatpush1.bf16.msra.mxu0 0
        %7182 = vmatprep.subr.bf16.mxu0 0
        %7183 = vmatpush1.bf16.msra.mxu0 0
        %7184 = vmatprep.subr.bf16.mxu0 0
        %7185 = vmatpush1.bf16.msra.mxu0 0
        %7186 = vmatprep.subr.bf16.mxu0 0
        %7187 = vmatpush1.bf16.msra.mxu0 0
        %7188 = vmatprep.subr.bf16.mxu0 0
        %7189 = vmatpush1.bf16.msra.mxu0 0
        %7190 = vmatprep.subr.bf16.mxu0 0
        %7191 = vmatpush1.bf16.msra.mxu0 0
        %7192 = vmatprep.mubr.bf16.mxu0 0
        %7193 = vmatmul.mubr.bf16.gmra.mrb[0].mxu0 %v7155
        %v7194 = vpop.f32.mrb[0].mxu0
        %v7195 = vadd.f32 0.0, %v7194
        %v7196 = vpop.f32.mrb[0].mxu0
        %v7197 = vpop.f32.mrb[0].mxu0
        %v7198 = vpop.f32.mrb[0].mxu0
        %7199 = vdwg.mxu0
        %7200 = vxpose.xlu0.b32.start [1/16] %v7057, 128
        %7201 = vxpose.xlu0.b32.cont [2/16] 0.0, 128
        %7202 = vxpose.xlu0.b32.cont [3/16] 0.0, 128
        %7203 = vxpose.xlu0.b32.cont [4/16] 0.0, 128
        %7204 = vxpose.xlu0.b32.cont [5/16] 0.0, 128
        %7205 = vxpose.xlu0.b32.cont [6/16] 0.0, 128
        %7206 = vxpose.xlu0.b32.cont [7/16] 0.0, 128
        %7207 = vxpose.xlu0.b32.cont [8/16] 0.0, 128
        %7208 = vxpose.xlu0.b32.cont [9/16] 0.0, 128
        %7209 = vxpose.xlu0.b32.cont [10/16] 0.0, 128
        %7210 = vxpose.xlu0.b32.cont [11/16] 0.0, 128
        %7211 = vxpose.xlu0.b32.cont [12/16] 0.0, 128
        %7212 = vxpose.xlu0.b32.cont [13/16] 0.0, 128
        %7213 = vxpose.xlu0.b32.cont [14/16] 0.0, 128
        %7214 = vxpose.xlu0.b32.cont [15/16] 0.0, 128
        %7215 = vxpose.xlu0.b32.end [16/16] 0.0, 128
        %v7216 = vpop.trf.xlu0
        %v7217 = vpop.trf.xlu0
        %v7218 = vpop.trf.xlu0
        %v7219 = vpop.trf.xlu0
        %v7220 = vpop.trf.xlu0
        %v7221 = vpop.trf.xlu0
        %v7222 = vpop.trf.xlu0
        %v7223 = vpop.trf.xlu0
        %v7224 = vpop.trf.xlu0
        %v7225 = vpop.trf.xlu0
        %v7226 = vpop.trf.xlu0
        %v7227 = vpop.trf.xlu0
        %v7228 = vpop.trf.xlu0
        %v7229 = vpop.trf.xlu0
        %v7230 = vpop.trf.xlu0
        %v7231 = vpop.trf.xlu0
        %7232 = vxpose.xlu0.b32.start [1/16] %v7103, 128
        %7233 = vxpose.xlu0.b32.cont [2/16] 0.0, 128
        %7234 = vxpose.xlu0.b32.cont [3/16] 0.0, 128
        %7235 = vxpose.xlu0.b32.cont [4/16] 0.0, 128
        %7236 = vxpose.xlu0.b32.cont [5/16] 0.0, 128
        %7237 = vxpose.xlu0.b32.cont [6/16] 0.0, 128
        %7238 = vxpose.xlu0.b32.cont [7/16] 0.0, 128
        %7239 = vxpose.xlu0.b32.cont [8/16] 0.0, 128
        %7240 = vxpose.xlu0.b32.cont [9/16] 0.0, 128
        %7241 = vxpose.xlu0.b32.cont [10/16] 0.0, 128
        %7242 = vxpose.xlu0.b32.cont [11/16] 0.0, 128
        %7243 = vxpose.xlu0.b32.cont [12/16] 0.0, 128
        %7244 = vxpose.xlu0.b32.cont [13/16] 0.0, 128
        %7245 = vxpose.xlu0.b32.cont [14/16] 0.0, 128
        %7246 = vxpose.xlu0.b32.cont [15/16] 0.0, 128
        %7247 = vxpose.xlu0.b32.end [16/16] 0.0, 128
        %v7248 = vpop.trf.xlu0
        %v7249 = vpop.trf.xlu0
        %v7250 = vpop.trf.xlu0
        %v7251 = vpop.trf.xlu0
        %v7252 = vpop.trf.xlu0
        %v7253 = vpop.trf.xlu0
        %v7254 = vpop.trf.xlu0
        %v7255 = vpop.trf.xlu0
        %v7256 = vpop.trf.xlu0
        %v7257 = vpop.trf.xlu0
        %v7258 = vpop.trf.xlu0
        %v7259 = vpop.trf.xlu0
        %v7260 = vpop.trf.xlu0
        %v7261 = vpop.trf.xlu0
        %v7262 = vpop.trf.xlu0
        %v7263 = vpop.trf.xlu0
        %7264 = vxpose.xlu0.b32.start [1/16] %v7149, 128
        %7265 = vxpose.xlu0.b32.cont [2/16] 0.0, 128
        %7266 = vxpose.xlu0.b32.cont [3/16] 0.0, 128
        %7267 = vxpose.xlu0.b32.cont [4/16] 0.0, 128
        %7268 = vxpose.xlu0.b32.cont [5/16] 0.0, 128
        %7269 = vxpose.xlu0.b32.cont [6/16] 0.0, 128
        %7270 = vxpose.xlu0.b32.cont [7/16] 0.0, 128
        %7271 = vxpose.xlu0.b32.cont [8/16] 0.0, 128
        %7272 = vxpose.xlu0.b32.cont [9/16] 0.0, 128
        %7273 = vxpose.xlu0.b32.cont [10/16] 0.0, 128
        %7274 = vxpose.xlu0.b32.cont [11/16] 0.0, 128
        %7275 = vxpose.xlu0.b32.cont [12/16] 0.0, 128
        %7276 = vxpose.xlu0.b32.cont [13/16] 0.0, 128
        %7277 = vxpose.xlu0.b32.cont [14/16] 0.0, 128
        %7278 = vxpose.xlu0.b32.cont [15/16] 0.0, 128
        %7279 = vxpose.xlu0.b32.end [16/16] 0.0, 128
        %v7280 = vpop.trf.xlu0
        %v7281 = vpop.trf.xlu0
        %v7282 = vpop.trf.xlu0
        %v7283 = vpop.trf.xlu0
        %v7284 = vpop.trf.xlu0
        %v7285 = vpop.trf.xlu0
        %v7286 = vpop.trf.xlu0
        %v7287 = vpop.trf.xlu0
        %v7288 = vpop.trf.xlu0
        %v7289 = vpop.trf.xlu0
        %v7290 = vpop.trf.xlu0
        %v7291 = vpop.trf.xlu0
        %v7292 = vpop.trf.xlu0
        %v7293 = vpop.trf.xlu0
        %v7294 = vpop.trf.xlu0
        %v7295 = vpop.trf.xlu0
        %7296 = vxpose.xlu0.b32.start [1/16] %v7195, 128
        %7297 = vxpose.xlu0.b32.cont [2/16] 0.0, 128
        %7298 = vxpose.xlu0.b32.cont [3/16] 0.0, 128
        %7299 = vxpose.xlu0.b32.cont [4/16] 0.0, 128
        %7300 = vxpose.xlu0.b32.cont [5/16] 0.0, 128
        %7301 = vxpose.xlu0.b32.cont [6/16] 0.0, 128
        %7302 = vxpose.xlu0.b32.cont [7/16] 0.0, 128
        %7303 = vxpose.xlu0.b32.cont [8/16] 0.0, 128
        %7304 = vxpose.xlu0.b32.cont [9/16] 0.0, 128
        %7305 = vxpose.xlu0.b32.cont [10/16] 0.0, 128
        %7306 = vxpose.xlu0.b32.cont [11/16] 0.0, 128
        %7307 = vxpose.xlu0.b32.cont [12/16] 0.0, 128
        %7308 = vxpose.xlu0.b32.cont [13/16] 0.0, 128
        %7309 = vxpose.xlu0.b32.cont [14/16] 0.0, 128
        %7310 = vxpose.xlu0.b32.cont [15/16] 0.0, 128
        %7311 = vxpose.xlu0.b32.end [16/16] 0.0, 128
        %v7312 = vpop.trf.xlu0
        %v7313 = vpop.trf.xlu0
        %v7314 = vpop.trf.xlu0
        %v7315 = vpop.trf.xlu0
        %v7316 = vpop.trf.xlu0
        %v7317 = vpop.trf.xlu0
        %v7318 = vpop.trf.xlu0
        %v7319 = vpop.trf.xlu0
        %v7320 = vpop.trf.xlu0
        %v7321 = vpop.trf.xlu0
        %v7322 = vpop.trf.xlu0
        %v7323 = vpop.trf.xlu0
        %v7324 = vpop.trf.xlu0
        %v7325 = vpop.trf.xlu0
        %v7326 = vpop.trf.xlu0
        %v7327 = vpop.trf.xlu0
        %7328 = vxpose.xlu0.b32.start [1/16] %v7216, 128
        %7329 = vxpose.xlu0.b32.cont [2/16] %v7248, 128
        %7330 = vxpose.xlu0.b32.cont [3/16] %v7280, 128
        %7331 = vxpose.xlu0.b32.cont [4/16] %v7312, 128
        %7332 = vxpose.xlu0.b32.cont [5/16] 0.0, 128
        %7333 = vxpose.xlu0.b32.cont [6/16] 0.0, 128
        %7334 = vxpose.xlu0.b32.cont [7/16] 0.0, 128
        %7335 = vxpose.xlu0.b32.cont [8/16] 0.0, 128
        %7336 = vxpose.xlu0.b32.cont [9/16] 0.0, 128
        %7337 = vxpose.xlu0.b32.cont [10/16] 0.0, 128
        %7338 = vxpose.xlu0.b32.cont [11/16] 0.0, 128
        %7339 = vxpose.xlu0.b32.cont [12/16] 0.0, 128
        %7340 = vxpose.xlu0.b32.cont [13/16] 0.0, 128
        %7341 = vxpose.xlu0.b32.cont [14/16] 0.0, 128
        %7342 = vxpose.xlu0.b32.cont [15/16] 0.0, 128
        %7343 = vxpose.xlu0.b32.end [16/16] 0.0, 128
        %v7344 = vpop.trf.xlu0
        %v7345 = vpop.trf.xlu0
        %v7346 = vpop.trf.xlu0
        %v7347 = vpop.trf.xlu0
        %v7348 = vpop.trf.xlu0
        %v7349 = vpop.trf.xlu0
        %v7350 = vpop.trf.xlu0
        %v7351 = vpop.trf.xlu0
        %v7352 = vpop.trf.xlu0
        %v7353 = vpop.trf.xlu0
        %v7354 = vpop.trf.xlu0
        %v7355 = vpop.trf.xlu0
        %v7356 = vpop.trf.xlu0
        %v7357 = vpop.trf.xlu0
        %v7358 = vpop.trf.xlu0
        %v7359 = vpop.trf.xlu0
        %v7360 = vpack.c.bf16 %v7344, %v7344
        %v7362 = vlaneseq
        %v7363 = vshrl.u32 %v7362, 7
        %v7364 = vsub.s32 0, %v7363
        %v7365 = vrot.slane %v6413, %v7364
        %v7371 = vunpack.c.l.b16 %v6408
        %v7372 = vunpack.c.l.b16 %v6409
        %v7373 = vunpack.c.l.b16 %v6410
        %v7374 = vunpack.c.l.b16 %v6411
        %v7375 = vpack.c.b16 %v7372, %v7371
        %v7376 = vpack.c.b16 %v7374, %v7373
        %v7380 = vsel %vm1556, %v7360, 0
        %7382 = vmatprep.subr.bf16.mxu0 0
        %7383 = vmatpush1.bf16.msra.mxu0 %v7375
        %7384 = vmatprep.subr.bf16.mxu0 0
        %7385 = vmatpush1.bf16.msra.mxu0 %v7376
        %7386 = vmatprep.subr.bf16.mxu0 0
        %7387 = vmatpush1.bf16.msra.mxu0 0
        %7388 = vmatprep.subr.bf16.mxu0 0
        %7389 = vmatpush1.bf16.msra.mxu0 0
        %7390 = vmatprep.subr.bf16.mxu0 0
        %7391 = vmatpush1.bf16.msra.mxu0 0
        %7392 = vmatprep.subr.bf16.mxu0 0
        %7393 = vmatpush1.bf16.msra.mxu0 0
        %7394 = vmatprep.subr.bf16.mxu0 0
        %7395 = vmatpush1.bf16.msra.mxu0 0
        %7396 = vmatprep.subr.bf16.mxu0 0
        %7397 = vmatpush1.bf16.msra.mxu0 0
        %7398 = vmatprep.subr.bf16.mxu0 0
        %7399 = vmatpush1.bf16.msra.mxu0 0
        %7400 = vmatprep.subr.bf16.mxu0 0
        %7401 = vmatpush1.bf16.msra.mxu0 0
        %7402 = vmatprep.subr.bf16.mxu0 0
        %7403 = vmatpush1.bf16.msra.mxu0 0
        %7404 = vmatprep.subr.bf16.mxu0 0
        %7405 = vmatpush1.bf16.msra.mxu0 0
        %7406 = vmatprep.subr.bf16.mxu0 0
        %7407 = vmatpush1.bf16.msra.mxu0 0
        %7408 = vmatprep.subr.bf16.mxu0 0
        %7409 = vmatpush1.bf16.msra.mxu0 0
        %7410 = vmatprep.subr.bf16.mxu0 0
        %7411 = vmatpush1.bf16.msra.mxu0 0
        %7412 = vmatprep.subr.bf16.mxu0 0
        %7413 = vmatpush1.bf16.msra.mxu0 0
        %7414 = vmatprep.mubr.bf16.mxu0 0
        %7415 = vmatmul.mubr.bf16.gmra.mrb[0].mxu0 %v7380
        %v7416 = vpop.f32.mrb[0].mxu0
        %v7417 = vadd.f32 %v7365, %v7416
        %v7418 = vpop.f32.mrb[0].mxu0
        %v7419 = vpop.f32.mrb[0].mxu0
        %v7420 = vpop.f32.mrb[0].mxu0
        %7421 = vdwg.mxu0
        %v7422 = vadd.f32 %v6399, %v7417
        %s7423 = scalar_lea.vmem [#allocation35], 1
        %v7424 = vld [vmem:[%s7423] sm:$0x1]
        %s7425 = scalar_lea.vmem %s63, 1
        %v7426 = vld [vmem:[%s7425] sm:$0x1]
        %v7427 = vsel %vm1556, %v7422, 0.0
        %7428 = vadd.xlane.f32.xlu0 %v7427
        %v7429 = vpop.xlane.xlu0 %7428
        %v7430 = vmul.f32 %v7429, %v2560
        %v7431 = vmul.f32 %v7422, %v7422
        %v7432 = vsel %vm1556, %v7431, 0.0
        %7433 = vadd.xlane.f32.xlu0 %v7432
        %v7434 = vpop.xlane.xlu0 %7433
        %v7435 = vmul.f32 %v7434, %v2560
        %v7436 = vmul.f32 %v7430, %v7430
        %v7437 = vsub.f32 %v7435, %v7436
        %v7438 = vsub.f32 %v7422, %v7430
        %v7439 = vadd.f32 %v7437, 1e-05
        %v7440 = vrsqrt.pop %v7439
        %v7441 = vmul.f32 %v7438, %v7440
        %v7443 = vlaneseq
        %v7444 = vshrl.u32 %v7443, 7
        %v7445 = vsub.s32 0, %v7444
        %v7446 = vrot.slane %v7424, %v7445
        %v7448 = vmul.f32 %v7441, %v7446
        %v7450 = vlaneseq
        %v7451 = vshrl.u32 %v7450, 7
        %v7452 = vsub.s32 0, %v7451
        %v7453 = vrot.slane %v7426, %v7452
        %v7455 = vadd.f32 %v7448, %v7453
        %s7456 = scalar_lea.vmem %s41, 16
        %v7457 = vld [vmem:[%s7456] sm:$0xf]
        %v7458 = vld [vmem:[%s7456 + $0x4] sm:$0xf]
        %v7459 = vld [vmem:[%s7456 + $0x8] sm:$0xf]
        %v7460 = vld [vmem:[%s7456 + $0xc] sm:$0xf]
        %s7461 = scalar_lea.vmem [#allocation25], 1
        %v7462 = vld [vmem:[%s7461] sm:$0x1]
        %s7463 = scalar_lea.vmem [#allocation26], 16
        %v7464 = vld [vmem:[%s7463] sm:$0xf]
        %v7465 = vld [vmem:[%s7463 + $0x4] sm:$0xf]
        %v7466 = vld [vmem:[%s7463 + $0x8] sm:$0xf]
        %v7467 = vld [vmem:[%s7463 + $0xc] sm:$0xf]
        %s7468 = scalar_lea.vmem [#allocation28], 1
        %v7469 = vld [vmem:[%s7468] sm:$0x1]
        %s7470 = scalar_lea.vmem [#allocation29], 16
        %v7471 = vld [vmem:[%s7470] sm:$0xf]
        %v7472 = vld [vmem:[%s7470 + $0x4] sm:$0xf]
        %v7473 = vld [vmem:[%s7470 + $0x8] sm:$0xf]
        %v7474 = vld [vmem:[%s7470 + $0xc] sm:$0xf]
        %s7475 = scalar_lea.vmem [#allocation31], 1
        %v7476 = vld [vmem:[%s7475] sm:$0x1]
        %v7477 = vpack.c.bf16 %v7455, %v7455
        %v7479 = vlaneseq
        %v7480 = vshrl.u32 %v7479, 7
        %v7481 = vsub.s32 0, %v7480
        %v7482 = vrot.slane %v7462, %v7481
        %v7488 = vunpack.c.l.b16 %v7457
        %v7489 = vunpack.c.l.b16 %v7458
        %v7490 = vunpack.c.l.b16 %v7459
        %v7491 = vunpack.c.l.b16 %v7460
        %v7492 = vpack.c.b16 %v7489, %v7488
        %v7493 = vpack.c.b16 %v7491, %v7490
        %v7497 = vsel %vm1556, %v7477, 0
        %7499 = vmatprep.subr.bf16.mxu0 0
        %7500 = vmatpush1.bf16.msra.mxu0 %v7492
        %7501 = vmatprep.subr.bf16.mxu0 0
        %7502 = vmatpush1.bf16.msra.mxu0 %v7493
        %7503 = vmatprep.subr.bf16.mxu0 0
        %7504 = vmatpush1.bf16.msra.mxu0 0
        %7505 = vmatprep.subr.bf16.mxu0 0
        %7506 = vmatpush1.bf16.msra.mxu0 0
        %7507 = vmatprep.subr.bf16.mxu0 0
        %7508 = vmatpush1.bf16.msra.mxu0 0
        %7509 = vmatprep.subr.bf16.mxu0 0
        %7510 = vmatpush1.bf16.msra.mxu0 0
        %7511 = vmatprep.subr.bf16.mxu0 0
        %7512 = vmatpush1.bf16.msra.mxu0 0
        %7513 = vmatprep.subr.bf16.mxu0 0
        %7514 = vmatpush1.bf16.msra.mxu0 0
        %7515 = vmatprep.subr.bf16.mxu0 0
        %7516 = vmatpush1.bf16.msra.mxu0 0
        %7517 = vmatprep.subr.bf16.mxu0 0
        %7518 = vmatpush1.bf16.msra.mxu0 0
        %7519 = vmatprep.subr.bf16.mxu0 0
        %7520 = vmatpush1.bf16.msra.mxu0 0
        %7521 = vmatprep.subr.bf16.mxu0 0
        %7522 = vmatpush1.bf16.msra.mxu0 0
        %7523 = vmatprep.subr.bf16.mxu0 0
        %7524 = vmatpush1.bf16.msra.mxu0 0
        %7525 = vmatprep.subr.bf16.mxu0 0
        %7526 = vmatpush1.bf16.msra.mxu0 0
        %7527 = vmatprep.subr.bf16.mxu0 0
        %7528 = vmatpush1.bf16.msra.mxu0 0
        %7529 = vmatprep.subr.bf16.mxu0 0
        %7530 = vmatpush1.bf16.msra.mxu0 0
        %7531 = vmatprep.mubr.bf16.mxu0 0
        %7532 = vmatmul.mubr.bf16.gmra.mrb[0].mxu0 %v7497
        %v7533 = vpop.f32.mrb[0].mxu0
        %v7534 = vadd.f32 %v7482, %v7533
        %v7535 = vpop.f32.mrb[0].mxu0
        %v7536 = vpop.f32.mrb[0].mxu0
        %v7537 = vpop.f32.mrb[0].mxu0
        %7538 = vdwg.mxu0
        %v7540 = vlaneseq
        %v7541 = vshrl.u32 %v7540, 7
        %v7542 = vsub.s32 0, %v7541
        %v7543 = vrot.slane %v7469, %v7542
        %v7549 = vunpack.c.l.b16 %v7464
        %v7550 = vunpack.c.l.b16 %v7465
        %v7551 = vunpack.c.l.b16 %v7466
        %v7552 = vunpack.c.l.b16 %v7467
        %v7553 = vpack.c.b16 %v7550, %v7549
        %v7554 = vpack.c.b16 %v7552, %v7551
        %7557 = vmatprep.subr.bf16.mxu0 0
        %7558 = vmatpush1.bf16.msra.mxu0 %v7553
        %7559 = vmatprep.subr.bf16.mxu0 0
        %7560 = vmatpush1.bf16.msra.mxu0 %v7554
        %7561 = vmatprep.subr.bf16.mxu0 0
        %7562 = vmatpush1.bf16.msra.mxu0 0
        %7563 = vmatprep.subr.bf16.mxu0 0
        %7564 = vmatpush1.bf16.msra.mxu0 0
        %7565 = vmatprep.subr.bf16.mxu0 0
        %7566 = vmatpush1.bf16.msra.mxu0 0
        %7567 = vmatprep.subr.bf16.mxu0 0
        %7568 = vmatpush1.bf16.msra.mxu0 0
        %7569 = vmatprep.subr.bf16.mxu0 0
        %7570 = vmatpush1.bf16.msra.mxu0 0
        %7571 = vmatprep.subr.bf16.mxu0 0
        %7572 = vmatpush1.bf16.msra.mxu0 0
        %7573 = vmatprep.subr.bf16.mxu0 0
        %7574 = vmatpush1.bf16.msra.mxu0 0
        %7575 = vmatprep.subr.bf16.mxu0 0
        %7576 = vmatpush1.bf16.msra.mxu0 0
        %7577 = vmatprep.subr.bf16.mxu0 0
        %7578 = vmatpush1.bf16.msra.mxu0 0
        %7579 = vmatprep.subr.bf16.mxu0 0
        %7580 = vmatpush1.bf16.msra.mxu0 0
        %7581 = vmatprep.subr.bf16.mxu0 0
        %7582 = vmatpush1.bf16.msra.mxu0 0
        %7583 = vmatprep.subr.bf16.mxu0 0
        %7584 = vmatpush1.bf16.msra.mxu0 0
        %7585 = vmatprep.subr.bf16.mxu0 0
        %7586 = vmatpush1.bf16.msra.mxu0 0
        %7587 = vmatprep.subr.bf16.mxu0 0
        %7588 = vmatpush1.bf16.msra.mxu0 0
        %7589 = vmatprep.mubr.bf16.mxu0 0
        %7590 = vmatmul.mubr.bf16.gmra.mrb[0].mxu0 %v5165
        %v7591 = vpop.f32.mrb[0].mxu0
        %v7592 = vadd.f32 %v7543, %v7591
        %v7593 = vpop.f32.mrb[0].mxu0
        %v7594 = vpop.f32.mrb[0].mxu0
        %v7595 = vpop.f32.mrb[0].mxu0
        %7596 = vdwg.mxu0
        %7597 = vxpose.xlu0.b32.start [1/16] %v7592, 128
        %7598 = vxpose.xlu0.b32.cont [2/16] 0.0, 128
        %7599 = vxpose.xlu0.b32.cont [3/16] 0.0, 128
        %7600 = vxpose.xlu0.b32.cont [4/16] 0.0, 128
        %7601 = vxpose.xlu0.b32.cont [5/16] 0.0, 128
        %7602 = vxpose.xlu0.b32.cont [6/16] 0.0, 128
        %7603 = vxpose.xlu0.b32.cont [7/16] 0.0, 128
        %7604 = vxpose.xlu0.b32.cont [8/16] 0.0, 128
        %7605 = vxpose.xlu0.b32.cont [9/16] 0.0, 128
        %7606 = vxpose.xlu0.b32.cont [10/16] 0.0, 128
        %7607 = vxpose.xlu0.b32.cont [11/16] 0.0, 128
        %7608 = vxpose.xlu0.b32.cont [12/16] 0.0, 128
        %7609 = vxpose.xlu0.b32.cont [13/16] 0.0, 128
        %7610 = vxpose.xlu0.b32.cont [14/16] 0.0, 128
        %7611 = vxpose.xlu0.b32.cont [15/16] 0.0, 128
        %7612 = vxpose.xlu0.b32.end [16/16] 0.0, 128
        %v7613 = vpop.trf.xlu0
        %v7614 = vpop.trf.xlu0
        %v7615 = vpop.trf.xlu0
        %v7616 = vpop.trf.xlu0
        %v7617 = vpop.trf.xlu0
        %v7618 = vpop.trf.xlu0
        %v7619 = vpop.trf.xlu0
        %v7620 = vpop.trf.xlu0
        %v7621 = vpop.trf.xlu0
        %v7622 = vpop.trf.xlu0
        %v7623 = vpop.trf.xlu0
        %v7624 = vpop.trf.xlu0
        %v7625 = vpop.trf.xlu0
        %v7626 = vpop.trf.xlu0
        %v7627 = vpop.trf.xlu0
        %v7628 = vpop.trf.xlu0
        %7629 = vxpose.xlu0.b32.start [1/16] %v7617, 128
        %7630 = vxpose.xlu0.b32.cont [2/16] 0.0, 128
        %7631 = vxpose.xlu0.b32.cont [3/16] 0.0, 128
        %7632 = vxpose.xlu0.b32.cont [4/16] 0.0, 128
        %7633 = vxpose.xlu0.b32.cont [5/16] 0.0, 128
        %7634 = vxpose.xlu0.b32.cont [6/16] 0.0, 128
        %7635 = vxpose.xlu0.b32.cont [7/16] 0.0, 128
        %7636 = vxpose.xlu0.b32.cont [8/16] 0.0, 128
        %7637 = vxpose.xlu0.b32.cont [9/16] 0.0, 128
        %7638 = vxpose.xlu0.b32.cont [10/16] 0.0, 128
        %7639 = vxpose.xlu0.b32.cont [11/16] 0.0, 128
        %7640 = vxpose.xlu0.b32.cont [12/16] 0.0, 128
        %7641 = vxpose.xlu0.b32.cont [13/16] 0.0, 128
        %7642 = vxpose.xlu0.b32.cont [14/16] 0.0, 128
        %7643 = vxpose.xlu0.b32.cont [15/16] 0.0, 128
        %7644 = vxpose.xlu0.b32.end [16/16] 0.0, 128
        %v7645 = vpop.trf.xlu0
        %v7646 = vpop.trf.xlu0
        %v7647 = vpop.trf.xlu0
        %v7648 = vpop.trf.xlu0
        %v7649 = vpop.trf.xlu0
        %v7650 = vpop.trf.xlu0
        %v7651 = vpop.trf.xlu0
        %v7652 = vpop.trf.xlu0
        %v7653 = vpop.trf.xlu0
        %v7654 = vpop.trf.xlu0
        %v7655 = vpop.trf.xlu0
        %v7656 = vpop.trf.xlu0
        %v7657 = vpop.trf.xlu0
        %v7658 = vpop.trf.xlu0
        %v7659 = vpop.trf.xlu0
        %v7660 = vpop.trf.xlu0
        %7661 = vxpose.xlu0.b32.start [1/16] %v7618, 128
        %7662 = vxpose.xlu0.b32.cont [2/16] 0.0, 128
        %7663 = vxpose.xlu0.b32.cont [3/16] 0.0, 128
        %7664 = vxpose.xlu0.b32.cont [4/16] 0.0, 128
        %7665 = vxpose.xlu0.b32.cont [5/16] 0.0, 128
        %7666 = vxpose.xlu0.b32.cont [6/16] 0.0, 128
        %7667 = vxpose.xlu0.b32.cont [7/16] 0.0, 128
        %7668 = vxpose.xlu0.b32.cont [8/16] 0.0, 128
        %7669 = vxpose.xlu0.b32.cont [9/16] 0.0, 128
        %7670 = vxpose.xlu0.b32.cont [10/16] 0.0, 128
        %7671 = vxpose.xlu0.b32.cont [11/16] 0.0, 128
        %7672 = vxpose.xlu0.b32.cont [12/16] 0.0, 128
        %7673 = vxpose.xlu0.b32.cont [13/16] 0.0, 128
        %7674 = vxpose.xlu0.b32.cont [14/16] 0.0, 128
        %7675 = vxpose.xlu0.b32.cont [15/16] 0.0, 128
        %7676 = vxpose.xlu0.b32.end [16/16] 0.0, 128
        %v7677 = vpop.trf.xlu0
        %v7678 = vpop.trf.xlu0
        %v7679 = vpop.trf.xlu0
        %v7680 = vpop.trf.xlu0
        %v7681 = vpop.trf.xlu0
        %v7682 = vpop.trf.xlu0
        %v7683 = vpop.trf.xlu0
        %v7684 = vpop.trf.xlu0
        %v7685 = vpop.trf.xlu0
        %v7686 = vpop.trf.xlu0
        %v7687 = vpop.trf.xlu0
        %v7688 = vpop.trf.xlu0
        %v7689 = vpop.trf.xlu0
        %v7690 = vpop.trf.xlu0
        %v7691 = vpop.trf.xlu0
        %v7692 = vpop.trf.xlu0
        %7693 = vxpose.xlu0.b32.start [1/16] %v7619, 128
        %7694 = vxpose.xlu0.b32.cont [2/16] 0.0, 128
        %7695 = vxpose.xlu0.b32.cont [3/16] 0.0, 128
        %7696 = vxpose.xlu0.b32.cont [4/16] 0.0, 128
        %7697 = vxpose.xlu0.b32.cont [5/16] 0.0, 128
        %7698 = vxpose.xlu0.b32.cont [6/16] 0.0, 128
        %7699 = vxpose.xlu0.b32.cont [7/16] 0.0, 128
        %7700 = vxpose.xlu0.b32.cont [8/16] 0.0, 128
        %7701 = vxpose.xlu0.b32.cont [9/16] 0.0, 128
        %7702 = vxpose.xlu0.b32.cont [10/16] 0.0, 128
        %7703 = vxpose.xlu0.b32.cont [11/16] 0.0, 128
        %7704 = vxpose.xlu0.b32.cont [12/16] 0.0, 128
        %7705 = vxpose.xlu0.b32.cont [13/16] 0.0, 128
        %7706 = vxpose.xlu0.b32.cont [14/16] 0.0, 128
        %7707 = vxpose.xlu0.b32.cont [15/16] 0.0, 128
        %7708 = vxpose.xlu0.b32.end [16/16] 0.0, 128
        %v7709 = vpop.trf.xlu0
        %v7710 = vpop.trf.xlu0
        %v7711 = vpop.trf.xlu0
        %v7712 = vpop.trf.xlu0
        %v7713 = vpop.trf.xlu0
        %v7714 = vpop.trf.xlu0
        %v7715 = vpop.trf.xlu0
        %v7716 = vpop.trf.xlu0
        %v7717 = vpop.trf.xlu0
        %v7718 = vpop.trf.xlu0
        %v7719 = vpop.trf.xlu0
        %v7720 = vpop.trf.xlu0
        %v7721 = vpop.trf.xlu0
        %v7722 = vpop.trf.xlu0
        %v7723 = vpop.trf.xlu0
        %v7724 = vpop.trf.xlu0
        %7725 = vxpose.xlu0.b32.start [1/16] %v7620, 128
        %7726 = vxpose.xlu0.b32.cont [2/16] 0.0, 128
        %7727 = vxpose.xlu0.b32.cont [3/16] 0.0, 128
        %7728 = vxpose.xlu0.b32.cont [4/16] 0.0, 128
        %7729 = vxpose.xlu0.b32.cont [5/16] 0.0, 128
        %7730 = vxpose.xlu0.b32.cont [6/16] 0.0, 128
        %7731 = vxpose.xlu0.b32.cont [7/16] 0.0, 128
        %7732 = vxpose.xlu0.b32.cont [8/16] 0.0, 128
        %7733 = vxpose.xlu0.b32.cont [9/16] 0.0, 128
        %7734 = vxpose.xlu0.b32.cont [10/16] 0.0, 128
        %7735 = vxpose.xlu0.b32.cont [11/16] 0.0, 128
        %7736 = vxpose.xlu0.b32.cont [12/16] 0.0, 128
        %7737 = vxpose.xlu0.b32.cont [13/16] 0.0, 128
        %7738 = vxpose.xlu0.b32.cont [14/16] 0.0, 128
        %7739 = vxpose.xlu0.b32.cont [15/16] 0.0, 128
        %7740 = vxpose.xlu0.b32.end [16/16] 0.0, 128
        %v7741 = vpop.trf.xlu0
        %v7742 = vpop.trf.xlu0
        %v7743 = vpop.trf.xlu0
        %v7744 = vpop.trf.xlu0
        %v7745 = vpop.trf.xlu0
        %v7746 = vpop.trf.xlu0
        %v7747 = vpop.trf.xlu0
        %v7748 = vpop.trf.xlu0
        %v7749 = vpop.trf.xlu0
        %v7750 = vpop.trf.xlu0
        %v7751 = vpop.trf.xlu0
        %v7752 = vpop.trf.xlu0
        %v7753 = vpop.trf.xlu0
        %v7754 = vpop.trf.xlu0
        %v7755 = vpop.trf.xlu0
        %v7756 = vpop.trf.xlu0
        %7757 = vxpose.xlu0.b32.start [1/16] %v7534, 128
        %7758 = vxpose.xlu0.b32.cont [2/16] 0.0, 128
        %7759 = vxpose.xlu0.b32.cont [3/16] 0.0, 128
        %7760 = vxpose.xlu0.b32.cont [4/16] 0.0, 128
        %7761 = vxpose.xlu0.b32.cont [5/16] 0.0, 128
        %7762 = vxpose.xlu0.b32.cont [6/16] 0.0, 128
        %7763 = vxpose.xlu0.b32.cont [7/16] 0.0, 128
        %7764 = vxpose.xlu0.b32.cont [8/16] 0.0, 128
        %7765 = vxpose.xlu0.b32.cont [9/16] 0.0, 128
        %7766 = vxpose.xlu0.b32.cont [10/16] 0.0, 128
        %7767 = vxpose.xlu0.b32.cont [11/16] 0.0, 128
        %7768 = vxpose.xlu0.b32.cont [12/16] 0.0, 128
        %7769 = vxpose.xlu0.b32.cont [13/16] 0.0, 128
        %7770 = vxpose.xlu0.b32.cont [14/16] 0.0, 128
        %7771 = vxpose.xlu0.b32.cont [15/16] 0.0, 128
        %7772 = vxpose.xlu0.b32.end [16/16] 0.0, 128
        %v7773 = vpop.trf.xlu0
        %v7774 = vpop.trf.xlu0
        %v7775 = vpop.trf.xlu0
        %v7776 = vpop.trf.xlu0
        %v7777 = vpop.trf.xlu0
        %v7778 = vpop.trf.xlu0
        %v7779 = vpop.trf.xlu0
        %v7780 = vpop.trf.xlu0
        %v7781 = vpop.trf.xlu0
        %v7782 = vpop.trf.xlu0
        %v7783 = vpop.trf.xlu0
        %v7784 = vpop.trf.xlu0
        %v7785 = vpop.trf.xlu0
        %v7786 = vpop.trf.xlu0
        %v7787 = vpop.trf.xlu0
        %v7788 = vpop.trf.xlu0
        %7789 = vxpose.xlu0.b32.start [1/16] %v7773, 128
        %7790 = vxpose.xlu0.b32.cont [2/16] 0.0, 128
        %7791 = vxpose.xlu0.b32.cont [3/16] 0.0, 128
        %7792 = vxpose.xlu0.b32.cont [4/16] 0.0, 128
        %7793 = vxpose.xlu0.b32.cont [5/16] 0.0, 128
        %7794 = vxpose.xlu0.b32.cont [6/16] 0.0, 128
        %7795 = vxpose.xlu0.b32.cont [7/16] 0.0, 128
        %7796 = vxpose.xlu0.b32.cont [8/16] 0.0, 128
        %7797 = vxpose.xlu0.b32.cont [9/16] 0.0, 128
        %7798 = vxpose.xlu0.b32.cont [10/16] 0.0, 128
        %7799 = vxpose.xlu0.b32.cont [11/16] 0.0, 128
        %7800 = vxpose.xlu0.b32.cont [12/16] 0.0, 128
        %7801 = vxpose.xlu0.b32.cont [13/16] 0.0, 128
        %7802 = vxpose.xlu0.b32.cont [14/16] 0.0, 128
        %7803 = vxpose.xlu0.b32.cont [15/16] 0.0, 128
        %7804 = vxpose.xlu0.b32.end [16/16] 0.0, 128
        %v7805 = vpop.trf.xlu0
        %v7806 = vpop.trf.xlu0
        %v7807 = vpop.trf.xlu0
        %v7808 = vpop.trf.xlu0
        %v7809 = vpop.trf.xlu0
        %v7810 = vpop.trf.xlu0
        %v7811 = vpop.trf.xlu0
        %v7812 = vpop.trf.xlu0
        %v7813 = vpop.trf.xlu0
        %v7814 = vpop.trf.xlu0
        %v7815 = vpop.trf.xlu0
        %v7816 = vpop.trf.xlu0
        %v7817 = vpop.trf.xlu0
        %v7818 = vpop.trf.xlu0
        %v7819 = vpop.trf.xlu0
        %v7820 = vpop.trf.xlu0
        %7821 = vxpose.xlu0.b32.start [1/16] %v7774, 128
        %7822 = vxpose.xlu0.b32.cont [2/16] 0.0, 128
        %7823 = vxpose.xlu0.b32.cont [3/16] 0.0, 128
        %7824 = vxpose.xlu0.b32.cont [4/16] 0.0, 128
        %7825 = vxpose.xlu0.b32.cont [5/16] 0.0, 128
        %7826 = vxpose.xlu0.b32.cont [6/16] 0.0, 128
        %7827 = vxpose.xlu0.b32.cont [7/16] 0.0, 128
        %7828 = vxpose.xlu0.b32.cont [8/16] 0.0, 128
        %7829 = vxpose.xlu0.b32.cont [9/16] 0.0, 128
        %7830 = vxpose.xlu0.b32.cont [10/16] 0.0, 128
        %7831 = vxpose.xlu0.b32.cont [11/16] 0.0, 128
        %7832 = vxpose.xlu0.b32.cont [12/16] 0.0, 128
        %7833 = vxpose.xlu0.b32.cont [13/16] 0.0, 128
        %7834 = vxpose.xlu0.b32.cont [14/16] 0.0, 128
        %7835 = vxpose.xlu0.b32.cont [15/16] 0.0, 128
        %7836 = vxpose.xlu0.b32.end [16/16] 0.0, 128
        %v7837 = vpop.trf.xlu0
        %v7838 = vpop.trf.xlu0
        %v7839 = vpop.trf.xlu0
        %v7840 = vpop.trf.xlu0
        %v7841 = vpop.trf.xlu0
        %v7842 = vpop.trf.xlu0
        %v7843 = vpop.trf.xlu0
        %v7844 = vpop.trf.xlu0
        %v7845 = vpop.trf.xlu0
        %v7846 = vpop.trf.xlu0
        %v7847 = vpop.trf.xlu0
        %v7848 = vpop.trf.xlu0
        %v7849 = vpop.trf.xlu0
        %v7850 = vpop.trf.xlu0
        %v7851 = vpop.trf.xlu0
        %v7852 = vpop.trf.xlu0
        %7853 = vxpose.xlu0.b32.start [1/16] %v7775, 128
        %7854 = vxpose.xlu0.b32.cont [2/16] 0.0, 128
        %7855 = vxpose.xlu0.b32.cont [3/16] 0.0, 128
        %7856 = vxpose.xlu0.b32.cont [4/16] 0.0, 128
        %7857 = vxpose.xlu0.b32.cont [5/16] 0.0, 128
        %7858 = vxpose.xlu0.b32.cont [6/16] 0.0, 128
        %7859 = vxpose.xlu0.b32.cont [7/16] 0.0, 128
        %7860 = vxpose.xlu0.b32.cont [8/16] 0.0, 128
        %7861 = vxpose.xlu0.b32.cont [9/16] 0.0, 128
        %7862 = vxpose.xlu0.b32.cont [10/16] 0.0, 128
        %7863 = vxpose.xlu0.b32.cont [11/16] 0.0, 128
        %7864 = vxpose.xlu0.b32.cont [12/16] 0.0, 128
        %7865 = vxpose.xlu0.b32.cont [13/16] 0.0, 128
        %7866 = vxpose.xlu0.b32.cont [14/16] 0.0, 128
        %7867 = vxpose.xlu0.b32.cont [15/16] 0.0, 128
        %7868 = vxpose.xlu0.b32.end [16/16] 0.0, 128
        %v7869 = vpop.trf.xlu0
        %v7870 = vpop.trf.xlu0
        %v7871 = vpop.trf.xlu0
        %v7872 = vpop.trf.xlu0
        %v7873 = vpop.trf.xlu0
        %v7874 = vpop.trf.xlu0
        %v7875 = vpop.trf.xlu0
        %v7876 = vpop.trf.xlu0
        %v7877 = vpop.trf.xlu0
        %v7878 = vpop.trf.xlu0
        %v7879 = vpop.trf.xlu0
        %v7880 = vpop.trf.xlu0
        %v7881 = vpop.trf.xlu0
        %v7882 = vpop.trf.xlu0
        %v7883 = vpop.trf.xlu0
        %v7884 = vpop.trf.xlu0
        %7885 = vxpose.xlu0.b32.start [1/16] %v7776, 128
        %7886 = vxpose.xlu0.b32.cont [2/16] 0.0, 128
        %7887 = vxpose.xlu0.b32.cont [3/16] 0.0, 128
        %7888 = vxpose.xlu0.b32.cont [4/16] 0.0, 128
        %7889 = vxpose.xlu0.b32.cont [5/16] 0.0, 128
        %7890 = vxpose.xlu0.b32.cont [6/16] 0.0, 128
        %7891 = vxpose.xlu0.b32.cont [7/16] 0.0, 128
        %7892 = vxpose.xlu0.b32.cont [8/16] 0.0, 128
        %7893 = vxpose.xlu0.b32.cont [9/16] 0.0, 128
        %7894 = vxpose.xlu0.b32.cont [10/16] 0.0, 128
        %7895 = vxpose.xlu0.b32.cont [11/16] 0.0, 128
        %7896 = vxpose.xlu0.b32.cont [12/16] 0.0, 128
        %7897 = vxpose.xlu0.b32.cont [13/16] 0.0, 128
        %7898 = vxpose.xlu0.b32.cont [14/16] 0.0, 128
        %7899 = vxpose.xlu0.b32.cont [15/16] 0.0, 128
        %7900 = vxpose.xlu0.b32.end [16/16] 0.0, 128
        %v7901 = vpop.trf.xlu0
        %v7902 = vpop.trf.xlu0
        %v7903 = vpop.trf.xlu0
        %v7904 = vpop.trf.xlu0
        %v7905 = vpop.trf.xlu0
        %v7906 = vpop.trf.xlu0
        %v7907 = vpop.trf.xlu0
        %v7908 = vpop.trf.xlu0
        %v7909 = vpop.trf.xlu0
        %v7910 = vpop.trf.xlu0
        %v7911 = vpop.trf.xlu0
        %v7912 = vpop.trf.xlu0
        %v7913 = vpop.trf.xlu0
        %v7914 = vpop.trf.xlu0
        %v7915 = vpop.trf.xlu0
        %v7916 = vpop.trf.xlu0
        %v7917 = vpack.c.bf16 %v7805, %v7805
        %v7918 = vpack.c.bf16 %v7837, %v7837
        %v7919 = vpack.c.bf16 %v7869, %v7869
        %v7920 = vpack.c.bf16 %v7901, %v7901
        %v7921 = vpack.c.bf16 %v7613, %v7613
        %v7922 = vpack.c.bf16 %v7614, %v7614
        %v7923 = vpack.c.bf16 %v7615, %v7615
        %v7924 = vpack.c.bf16 %v7616, %v7616
        %v7926 = vsel %vm1896, %v7917, 0
        %v7929 = vsel %vm1900, %v7921, 0
        %7931 = vmatprep.subr.bf16.mxu0 0
        %7932 = vmatpush1.bf16.msra.mxu0 %v7929
        %7933 = vmatprep.subr.bf16.mxu0 0
        %7934 = vmatpush1.bf16.msra.mxu0 0
        %7935 = vmatprep.subr.bf16.mxu0 0
        %7936 = vmatpush1.bf16.msra.mxu0 0
        %7937 = vmatprep.subr.bf16.mxu0 0
        %7938 = vmatpush1.bf16.msra.mxu0 0
        %7939 = vmatprep.subr.bf16.mxu0 0
        %7940 = vmatpush1.bf16.msra.mxu0 0
        %7941 = vmatprep.subr.bf16.mxu0 0
        %7942 = vmatpush1.bf16.msra.mxu0 0
        %7943 = vmatprep.subr.bf16.mxu0 0
        %7944 = vmatpush1.bf16.msra.mxu0 0
        %7945 = vmatprep.subr.bf16.mxu0 0
        %7946 = vmatpush1.bf16.msra.mxu0 0
        %7947 = vmatprep.subr.bf16.mxu0 0
        %7948 = vmatpush1.bf16.msra.mxu0 0
        %7949 = vmatprep.subr.bf16.mxu0 0
        %7950 = vmatpush1.bf16.msra.mxu0 0
        %7951 = vmatprep.subr.bf16.mxu0 0
        %7952 = vmatpush1.bf16.msra.mxu0 0
        %7953 = vmatprep.subr.bf16.mxu0 0
        %7954 = vmatpush1.bf16.msra.mxu0 0
        %7955 = vmatprep.subr.bf16.mxu0 0
        %7956 = vmatpush1.bf16.msra.mxu0 0
        %7957 = vmatprep.subr.bf16.mxu0 0
        %7958 = vmatpush1.bf16.msra.mxu0 0
        %7959 = vmatprep.subr.bf16.mxu0 0
        %7960 = vmatpush1.bf16.msra.mxu0 0
        %7961 = vmatprep.subr.bf16.mxu0 0
        %7962 = vmatpush1.bf16.msra.mxu0 0
        %7963 = vmatprep.mubr.bf16.mxu0 0
        %7964 = vmatmul.mubr.bf16.gmra.mrb[0].mxu0 %v7926
        %v7965 = vpop.f32.mrb[0].mxu0
        %v7966 = vadd.f32 0.0, %v7965
        %v7967 = vpop.f32.mrb[0].mxu0
        %v7968 = vpop.f32.mrb[0].mxu0
        %v7969 = vpop.f32.mrb[0].mxu0
        %7970 = vdwg.mxu0
        %v7972 = vsel %vm1896, %v7918, 0
        %v7975 = vsel %vm1900, %v7922, 0
        %7977 = vmatprep.subr.bf16.mxu0 0
        %7978 = vmatpush1.bf16.msra.mxu0 %v7975
        %7979 = vmatprep.subr.bf16.mxu0 0
        %7980 = vmatpush1.bf16.msra.mxu0 0
        %7981 = vmatprep.subr.bf16.mxu0 0
        %7982 = vmatpush1.bf16.msra.mxu0 0
        %7983 = vmatprep.subr.bf16.mxu0 0
        %7984 = vmatpush1.bf16.msra.mxu0 0
        %7985 = vmatprep.subr.bf16.mxu0 0
        %7986 = vmatpush1.bf16.msra.mxu0 0
        %7987 = vmatprep.subr.bf16.mxu0 0
        %7988 = vmatpush1.bf16.msra.mxu0 0
        %7989 = vmatprep.subr.bf16.mxu0 0
        %7990 = vmatpush1.bf16.msra.mxu0 0
        %7991 = vmatprep.subr.bf16.mxu0 0
        %7992 = vmatpush1.bf16.msra.mxu0 0
        %7993 = vmatprep.subr.bf16.mxu0 0
        %7994 = vmatpush1.bf16.msra.mxu0 0
        %7995 = vmatprep.subr.bf16.mxu0 0
        %7996 = vmatpush1.bf16.msra.mxu0 0
        %7997 = vmatprep.subr.bf16.mxu0 0
        %7998 = vmatpush1.bf16.msra.mxu0 0
        %7999 = vmatprep.subr.bf16.mxu0 0
        %8000 = vmatpush1.bf16.msra.mxu0 0
        %8001 = vmatprep.subr.bf16.mxu0 0
        %8002 = vmatpush1.bf16.msra.mxu0 0
        %8003 = vmatprep.subr.bf16.mxu0 0
        %8004 = vmatpush1.bf16.msra.mxu0 0
        %8005 = vmatprep.subr.bf16.mxu0 0
        %8006 = vmatpush1.bf16.msra.mxu0 0
        %8007 = vmatprep.subr.bf16.mxu0 0
        %8008 = vmatpush1.bf16.msra.mxu0 0
        %8009 = vmatprep.mubr.bf16.mxu0 0
        %8010 = vmatmul.mubr.bf16.gmra.mrb[0].mxu0 %v7972
        %v8011 = vpop.f32.mrb[0].mxu0
        %v8012 = vadd.f32 0.0, %v8011
        %v8013 = vpop.f32.mrb[0].mxu0
        %v8014 = vpop.f32.mrb[0].mxu0
        %v8015 = vpop.f32.mrb[0].mxu0
        %8016 = vdwg.mxu0
        %v8018 = vsel %vm1896, %v7919, 0
        %v8021 = vsel %vm1900, %v7923, 0
        %8023 = vmatprep.subr.bf16.mxu0 0
        %8024 = vmatpush1.bf16.msra.mxu0 %v8021
        %8025 = vmatprep.subr.bf16.mxu0 0
        %8026 = vmatpush1.bf16.msra.mxu0 0
        %8027 = vmatprep.subr.bf16.mxu0 0
        %8028 = vmatpush1.bf16.msra.mxu0 0
        %8029 = vmatprep.subr.bf16.mxu0 0
        %8030 = vmatpush1.bf16.msra.mxu0 0
        %8031 = vmatprep.subr.bf16.mxu0 0
        %8032 = vmatpush1.bf16.msra.mxu0 0
        %8033 = vmatprep.subr.bf16.mxu0 0
        %8034 = vmatpush1.bf16.msra.mxu0 0
        %8035 = vmatprep.subr.bf16.mxu0 0
        %8036 = vmatpush1.bf16.msra.mxu0 0
        %8037 = vmatprep.subr.bf16.mxu0 0
        %8038 = vmatpush1.bf16.msra.mxu0 0
        %8039 = vmatprep.subr.bf16.mxu0 0
        %8040 = vmatpush1.bf16.msra.mxu0 0
        %8041 = vmatprep.subr.bf16.mxu0 0
        %8042 = vmatpush1.bf16.msra.mxu0 0
        %8043 = vmatprep.subr.bf16.mxu0 0
        %8044 = vmatpush1.bf16.msra.mxu0 0
        %8045 = vmatprep.subr.bf16.mxu0 0
        %8046 = vmatpush1.bf16.msra.mxu0 0
        %8047 = vmatprep.subr.bf16.mxu0 0
        %8048 = vmatpush1.bf16.msra.mxu0 0
        %8049 = vmatprep.subr.bf16.mxu0 0
        %8050 = vmatpush1.bf16.msra.mxu0 0
        %8051 = vmatprep.subr.bf16.mxu0 0
        %8052 = vmatpush1.bf16.msra.mxu0 0
        %8053 = vmatprep.subr.bf16.mxu0 0
        %8054 = vmatpush1.bf16.msra.mxu0 0
        %8055 = vmatprep.mubr.bf16.mxu0 0
        %8056 = vmatmul.mubr.bf16.gmra.mrb[0].mxu0 %v8018
        %v8057 = vpop.f32.mrb[0].mxu0
        %v8058 = vadd.f32 0.0, %v8057
        %v8059 = vpop.f32.mrb[0].mxu0
        %v8060 = vpop.f32.mrb[0].mxu0
        %v8061 = vpop.f32.mrb[0].mxu0
        %8062 = vdwg.mxu0
        %v8064 = vsel %vm1896, %v7920, 0
        %v8067 = vsel %vm1900, %v7924, 0
        %8069 = vmatprep.subr.bf16.mxu0 0
        %8070 = vmatpush1.bf16.msra.mxu0 %v8067
        %8071 = vmatprep.subr.bf16.mxu0 0
        %8072 = vmatpush1.bf16.msra.mxu0 0
        %8073 = vmatprep.subr.bf16.mxu0 0
        %8074 = vmatpush1.bf16.msra.mxu0 0
        %8075 = vmatprep.subr.bf16.mxu0 0
        %8076 = vmatpush1.bf16.msra.mxu0 0
        %8077 = vmatprep.subr.bf16.mxu0 0
        %8078 = vmatpush1.bf16.msra.mxu0 0
        %8079 = vmatprep.subr.bf16.mxu0 0
        %8080 = vmatpush1.bf16.msra.mxu0 0
        %8081 = vmatprep.subr.bf16.mxu0 0
        %8082 = vmatpush1.bf16.msra.mxu0 0
        %8083 = vmatprep.subr.bf16.mxu0 0
        %8084 = vmatpush1.bf16.msra.mxu0 0
        %8085 = vmatprep.subr.bf16.mxu0 0
        %8086 = vmatpush1.bf16.msra.mxu0 0
        %8087 = vmatprep.subr.bf16.mxu0 0
        %8088 = vmatpush1.bf16.msra.mxu0 0
        %8089 = vmatprep.subr.bf16.mxu0 0
        %8090 = vmatpush1.bf16.msra.mxu0 0
        %8091 = vmatprep.subr.bf16.mxu0 0
        %8092 = vmatpush1.bf16.msra.mxu0 0
        %8093 = vmatprep.subr.bf16.mxu0 0
        %8094 = vmatpush1.bf16.msra.mxu0 0
        %8095 = vmatprep.subr.bf16.mxu0 0
        %8096 = vmatpush1.bf16.msra.mxu0 0
        %8097 = vmatprep.subr.bf16.mxu0 0
        %8098 = vmatpush1.bf16.msra.mxu0 0
        %8099 = vmatprep.subr.bf16.mxu0 0
        %8100 = vmatpush1.bf16.msra.mxu0 0
        %8101 = vmatprep.mubr.bf16.mxu0 0
        %8102 = vmatmul.mubr.bf16.gmra.mrb[0].mxu0 %v8064
        %v8103 = vpop.f32.mrb[0].mxu0
        %v8104 = vadd.f32 0.0, %v8103
        %v8105 = vpop.f32.mrb[0].mxu0
        %v8106 = vpop.f32.mrb[0].mxu0
        %v8107 = vpop.f32.mrb[0].mxu0
        %8108 = vdwg.mxu0
        %v8109 = vmul.f32 %v7966, 0.35355338
        %v8110 = vmul.f32 %v8012, 0.35355338
        %v8111 = vmul.f32 %v8058, 0.35355338
        %v8112 = vmul.f32 %v8104, 0.35355338
        %v8113 = vadd.f32 %v8109, %v2090
        %v8114 = vadd.f32 %v8110, %v2090
        %v8115 = vadd.f32 %v8111, %v2090
        %v8116 = vadd.f32 %v8112, %v2090
        %v8117 = vsel %vm1896, %v8113, -inf
        %8118 = vmax.xlane.f32.xlu0 %v8117
        %v8119 = vpop.xlane.xlu0 %8118
        %v8120 = vsel %vm1896, %v8114, -inf
        %8121 = vmax.xlane.f32.xlu0 %v8120
        %v8122 = vpop.xlane.xlu0 %8121
        %v8123 = vsel %vm1896, %v8115, -inf
        %8124 = vmax.xlane.f32.xlu0 %v8123
        %v8125 = vpop.xlane.xlu0 %8124
        %v8126 = vsel %vm1896, %v8116, -inf
        %8127 = vmax.xlane.f32.xlu0 %v8126
        %v8128 = vpop.xlane.xlu0 %8127
        %v8129 = vsub.f32 %v8113, %v8119
        %v8130 = vsub.f32 %v8114, %v8122
        %v8131 = vsub.f32 %v8115, %v8125
        %v8132 = vsub.f32 %v8116, %v8128
        %v8133 = vmul.f32 %v8129, 1.442695
        %v8134 = vpow.pop %v8133
        %v8135 = vmul.f32 %v8130, 1.442695
        %v8136 = vpow.pop %v8135
        %v8137 = vmul.f32 %v8131, 1.442695
        %v8138 = vpow.pop %v8137
        %v8139 = vmul.f32 %v8132, 1.442695
        %v8140 = vpow.pop %v8139
        %v8141 = vsel %vm1896, %v8134, 0.0
        %8142 = vadd.xlane.f32.xlu0 %v8141
        %v8143 = vpop.xlane.xlu0 %8142
        %v8144 = vsel %vm1896, %v8136, 0.0
        %8145 = vadd.xlane.f32.xlu0 %v8144
        %v8146 = vpop.xlane.xlu0 %8145
        %v8147 = vsel %vm1896, %v8138, 0.0
        %8148 = vadd.xlane.f32.xlu0 %v8147
        %v8149 = vpop.xlane.xlu0 %8148
        %v8150 = vsel %vm1896, %v8140, 0.0
        %8151 = vadd.xlane.f32.xlu0 %v8150
        %v8152 = vpop.xlane.xlu0 %8151
        %v8153 = vrcp.pop %v8143
        %v8154 = vrcp.pop %v8146
        %v8155 = vrcp.pop %v8149
        %v8156 = vrcp.pop %v8152
        %v8157 = vmul.f32 %v8134, %v8153
        %v8158 = vmul.f32 %v8136, %v8154
        %v8159 = vmul.f32 %v8138, %v8155
        %v8160 = vmul.f32 %v8140, %v8156
        %v8161 = vpack.c.bf16 %v8157, %v8157
        %v8162 = vpack.c.bf16 %v8158, %v8158
        %v8163 = vpack.c.bf16 %v8159, %v8159
        %v8164 = vpack.c.bf16 %v8160, %v8160
        %v8165 = vpack.c.bf16 %v7645, %v7645
        %v8166 = vpack.c.bf16 %v7677, %v7677
        %v8167 = vpack.c.bf16 %v7709, %v7709
        %v8168 = vpack.c.bf16 %v7741, %v7741
        %v8170 = vsel %vm1896, %v8161, 0
        %v8173 = vsel %vm1900, %v8165, 0
        %8175 = vmatprep.subr.bf16.mxu0 0
        %8176 = vmatpush1.bf16.msra.mxu0 %v8173
        %8177 = vmatprep.subr.bf16.mxu0 0
        %8178 = vmatpush1.bf16.msra.mxu0 0
        %8179 = vmatprep.subr.bf16.mxu0 0
        %8180 = vmatpush1.bf16.msra.mxu0 0
        %8181 = vmatprep.subr.bf16.mxu0 0
        %8182 = vmatpush1.bf16.msra.mxu0 0
        %8183 = vmatprep.subr.bf16.mxu0 0
        %8184 = vmatpush1.bf16.msra.mxu0 0
        %8185 = vmatprep.subr.bf16.mxu0 0
        %8186 = vmatpush1.bf16.msra.mxu0 0
        %8187 = vmatprep.subr.bf16.mxu0 0
        %8188 = vmatpush1.bf16.msra.mxu0 0
        %8189 = vmatprep.subr.bf16.mxu0 0
        %8190 = vmatpush1.bf16.msra.mxu0 0
        %8191 = vmatprep.subr.bf16.mxu0 0
        %8192 = vmatpush1.bf16.msra.mxu0 0
        %8193 = vmatprep.subr.bf16.mxu0 0
        %8194 = vmatpush1.bf16.msra.mxu0 0
        %8195 = vmatprep.subr.bf16.mxu0 0
        %8196 = vmatpush1.bf16.msra.mxu0 0
        %8197 = vmatprep.subr.bf16.mxu0 0
        %8198 = vmatpush1.bf16.msra.mxu0 0
        %8199 = vmatprep.subr.bf16.mxu0 0
        %8200 = vmatpush1.bf16.msra.mxu0 0
        %8201 = vmatprep.subr.bf16.mxu0 0
        %8202 = vmatpush1.bf16.msra.mxu0 0
        %8203 = vmatprep.subr.bf16.mxu0 0
        %8204 = vmatpush1.bf16.msra.mxu0 0
        %8205 = vmatprep.subr.bf16.mxu0 0
        %8206 = vmatpush1.bf16.msra.mxu0 0
        %8207 = vmatprep.mubr.bf16.mxu0 0
        %8208 = vmatmul.mubr.bf16.gmra.mrb[0].mxu0 %v8170
        %v8209 = vpop.f32.mrb[0].mxu0
        %v8210 = vadd.f32 0.0, %v8209
        %v8211 = vpop.f32.mrb[0].mxu0
        %v8212 = vpop.f32.mrb[0].mxu0
        %v8213 = vpop.f32.mrb[0].mxu0
        %8214 = vdwg.mxu0
        %v8216 = vsel %vm1896, %v8162, 0
        %v8219 = vsel %vm1900, %v8166, 0
        %8221 = vmatprep.subr.bf16.mxu0 0
        %8222 = vmatpush1.bf16.msra.mxu0 %v8219
        %8223 = vmatprep.subr.bf16.mxu0 0
        %8224 = vmatpush1.bf16.msra.mxu0 0
        %8225 = vmatprep.subr.bf16.mxu0 0
        %8226 = vmatpush1.bf16.msra.mxu0 0
        %8227 = vmatprep.subr.bf16.mxu0 0
        %8228 = vmatpush1.bf16.msra.mxu0 0
        %8229 = vmatprep.subr.bf16.mxu0 0
        %8230 = vmatpush1.bf16.msra.mxu0 0
        %8231 = vmatprep.subr.bf16.mxu0 0
        %8232 = vmatpush1.bf16.msra.mxu0 0
        %8233 = vmatprep.subr.bf16.mxu0 0
        %8234 = vmatpush1.bf16.msra.mxu0 0
        %8235 = vmatprep.subr.bf16.mxu0 0
        %8236 = vmatpush1.bf16.msra.mxu0 0
        %8237 = vmatprep.subr.bf16.mxu0 0
        %8238 = vmatpush1.bf16.msra.mxu0 0
        %8239 = vmatprep.subr.bf16.mxu0 0
        %8240 = vmatpush1.bf16.msra.mxu0 0
        %8241 = vmatprep.subr.bf16.mxu0 0
        %8242 = vmatpush1.bf16.msra.mxu0 0
        %8243 = vmatprep.subr.bf16.mxu0 0
        %8244 = vmatpush1.bf16.msra.mxu0 0
        %8245 = vmatprep.subr.bf16.mxu0 0
        %8246 = vmatpush1.bf16.msra.mxu0 0
        %8247 = vmatprep.subr.bf16.mxu0 0
        %8248 = vmatpush1.bf16.msra.mxu0 0
        %8249 = vmatprep.subr.bf16.mxu0 0
        %8250 = vmatpush1.bf16.msra.mxu0 0
        %8251 = vmatprep.subr.bf16.mxu0 0
        %8252 = vmatpush1.bf16.msra.mxu0 0
        %8253 = vmatprep.mubr.bf16.mxu0 0
        %8254 = vmatmul.mubr.bf16.gmra.mrb[0].mxu0 %v8216
        %v8255 = vpop.f32.mrb[0].mxu0
        %v8256 = vadd.f32 0.0, %v8255
        %v8257 = vpop.f32.mrb[0].mxu0
        %v8258 = vpop.f32.mrb[0].mxu0
        %v8259 = vpop.f32.mrb[0].mxu0
        %8260 = vdwg.mxu0
        %v8262 = vsel %vm1896, %v8163, 0
        %v8265 = vsel %vm1900, %v8167, 0
        %8267 = vmatprep.subr.bf16.mxu0 0
        %8268 = vmatpush1.bf16.msra.mxu0 %v8265
        %8269 = vmatprep.subr.bf16.mxu0 0
        %8270 = vmatpush1.bf16.msra.mxu0 0
        %8271 = vmatprep.subr.bf16.mxu0 0
        %8272 = vmatpush1.bf16.msra.mxu0 0
        %8273 = vmatprep.subr.bf16.mxu0 0
        %8274 = vmatpush1.bf16.msra.mxu0 0
        %8275 = vmatprep.subr.bf16.mxu0 0
        %8276 = vmatpush1.bf16.msra.mxu0 0
        %8277 = vmatprep.subr.bf16.mxu0 0
        %8278 = vmatpush1.bf16.msra.mxu0 0
        %8279 = vmatprep.subr.bf16.mxu0 0
        %8280 = vmatpush1.bf16.msra.mxu0 0
        %8281 = vmatprep.subr.bf16.mxu0 0
        %8282 = vmatpush1.bf16.msra.mxu0 0
        %8283 = vmatprep.subr.bf16.mxu0 0
        %8284 = vmatpush1.bf16.msra.mxu0 0
        %8285 = vmatprep.subr.bf16.mxu0 0
        %8286 = vmatpush1.bf16.msra.mxu0 0
        %8287 = vmatprep.subr.bf16.mxu0 0
        %8288 = vmatpush1.bf16.msra.mxu0 0
        %8289 = vmatprep.subr.bf16.mxu0 0
        %8290 = vmatpush1.bf16.msra.mxu0 0
        %8291 = vmatprep.subr.bf16.mxu0 0
        %8292 = vmatpush1.bf16.msra.mxu0 0
        %8293 = vmatprep.subr.bf16.mxu0 0
        %8294 = vmatpush1.bf16.msra.mxu0 0
        %8295 = vmatprep.subr.bf16.mxu0 0
        %8296 = vmatpush1.bf16.msra.mxu0 0
        %8297 = vmatprep.subr.bf16.mxu0 0
        %8298 = vmatpush1.bf16.msra.mxu0 0
        %8299 = vmatprep.mubr.bf16.mxu0 0
        %8300 = vmatmul.mubr.bf16.gmra.mrb[0].mxu0 %v8262
        %v8301 = vpop.f32.mrb[0].mxu0
        %v8302 = vadd.f32 0.0, %v8301
        %v8303 = vpop.f32.mrb[0].mxu0
        %v8304 = vpop.f32.mrb[0].mxu0
        %v8305 = vpop.f32.mrb[0].mxu0
        %8306 = vdwg.mxu0
        %v8308 = vsel %vm1896, %v8164, 0
        %v8311 = vsel %vm1900, %v8168, 0
        %8313 = vmatprep.subr.bf16.mxu0 0
        %8314 = vmatpush1.bf16.msra.mxu0 %v8311
        %8315 = vmatprep.subr.bf16.mxu0 0
        %8316 = vmatpush1.bf16.msra.mxu0 0
        %8317 = vmatprep.subr.bf16.mxu0 0
        %8318 = vmatpush1.bf16.msra.mxu0 0
        %8319 = vmatprep.subr.bf16.mxu0 0
        %8320 = vmatpush1.bf16.msra.mxu0 0
        %8321 = vmatprep.subr.bf16.mxu0 0
        %8322 = vmatpush1.bf16.msra.mxu0 0
        %8323 = vmatprep.subr.bf16.mxu0 0
        %8324 = vmatpush1.bf16.msra.mxu0 0
        %8325 = vmatprep.subr.bf16.mxu0 0
        %8326 = vmatpush1.bf16.msra.mxu0 0
        %8327 = vmatprep.subr.bf16.mxu0 0
        %8328 = vmatpush1.bf16.msra.mxu0 0
        %8329 = vmatprep.subr.bf16.mxu0 0
        %8330 = vmatpush1.bf16.msra.mxu0 0
        %8331 = vmatprep.subr.bf16.mxu0 0
        %8332 = vmatpush1.bf16.msra.mxu0 0
        %8333 = vmatprep.subr.bf16.mxu0 0
        %8334 = vmatpush1.bf16.msra.mxu0 0
        %8335 = vmatprep.subr.bf16.mxu0 0
        %8336 = vmatpush1.bf16.msra.mxu0 0
        %8337 = vmatprep.subr.bf16.mxu0 0
        %8338 = vmatpush1.bf16.msra.mxu0 0
        %8339 = vmatprep.subr.bf16.mxu0 0
        %8340 = vmatpush1.bf16.msra.mxu0 0
        %8341 = vmatprep.subr.bf16.mxu0 0
        %8342 = vmatpush1.bf16.msra.mxu0 0
        %8343 = vmatprep.subr.bf16.mxu0 0
        %8344 = vmatpush1.bf16.msra.mxu0 0
        %8345 = vmatprep.mubr.bf16.mxu0 0
        %8346 = vmatmul.mubr.bf16.gmra.mrb[0].mxu0 %v8308
        %v8347 = vpop.f32.mrb[0].mxu0
        %v8348 = vadd.f32 0.0, %v8347
        %v8349 = vpop.f32.mrb[0].mxu0
        %v8350 = vpop.f32.mrb[0].mxu0
        %v8351 = vpop.f32.mrb[0].mxu0
        %8352 = vdwg.mxu0
        %8353 = vxpose.xlu0.b32.start [1/16] %v8210, 128
        %8354 = vxpose.xlu0.b32.cont [2/16] 0.0, 128
        %8355 = vxpose.xlu0.b32.cont [3/16] 0.0, 128
        %8356 = vxpose.xlu0.b32.cont [4/16] 0.0, 128
        %8357 = vxpose.xlu0.b32.cont [5/16] 0.0, 128
        %8358 = vxpose.xlu0.b32.cont [6/16] 0.0, 128
        %8359 = vxpose.xlu0.b32.cont [7/16] 0.0, 128
        %8360 = vxpose.xlu0.b32.cont [8/16] 0.0, 128
        %8361 = vxpose.xlu0.b32.cont [9/16] 0.0, 128
        %8362 = vxpose.xlu0.b32.cont [10/16] 0.0, 128
        %8363 = vxpose.xlu0.b32.cont [11/16] 0.0, 128
        %8364 = vxpose.xlu0.b32.cont [12/16] 0.0, 128
        %8365 = vxpose.xlu0.b32.cont [13/16] 0.0, 128
        %8366 = vxpose.xlu0.b32.cont [14/16] 0.0, 128
        %8367 = vxpose.xlu0.b32.cont [15/16] 0.0, 128
        %8368 = vxpose.xlu0.b32.end [16/16] 0.0, 128
        %v8369 = vpop.trf.xlu0
        %v8370 = vpop.trf.xlu0
        %v8371 = vpop.trf.xlu0
        %v8372 = vpop.trf.xlu0
        %v8373 = vpop.trf.xlu0
        %v8374 = vpop.trf.xlu0
        %v8375 = vpop.trf.xlu0
        %v8376 = vpop.trf.xlu0
        %v8377 = vpop.trf.xlu0
        %v8378 = vpop.trf.xlu0
        %v8379 = vpop.trf.xlu0
        %v8380 = vpop.trf.xlu0
        %v8381 = vpop.trf.xlu0
        %v8382 = vpop.trf.xlu0
        %v8383 = vpop.trf.xlu0
        %v8384 = vpop.trf.xlu0
        %8385 = vxpose.xlu0.b32.start [1/16] %v8256, 128
        %8386 = vxpose.xlu0.b32.cont [2/16] 0.0, 128
        %8387 = vxpose.xlu0.b32.cont [3/16] 0.0, 128
        %8388 = vxpose.xlu0.b32.cont [4/16] 0.0, 128
        %8389 = vxpose.xlu0.b32.cont [5/16] 0.0, 128
        %8390 = vxpose.xlu0.b32.cont [6/16] 0.0, 128
        %8391 = vxpose.xlu0.b32.cont [7/16] 0.0, 128
        %8392 = vxpose.xlu0.b32.cont [8/16] 0.0, 128
        %8393 = vxpose.xlu0.b32.cont [9/16] 0.0, 128
        %8394 = vxpose.xlu0.b32.cont [10/16] 0.0, 128
        %8395 = vxpose.xlu0.b32.cont [11/16] 0.0, 128
        %8396 = vxpose.xlu0.b32.cont [12/16] 0.0, 128
        %8397 = vxpose.xlu0.b32.cont [13/16] 0.0, 128
        %8398 = vxpose.xlu0.b32.cont [14/16] 0.0, 128
        %8399 = vxpose.xlu0.b32.cont [15/16] 0.0, 128
        %8400 = vxpose.xlu0.b32.end [16/16] 0.0, 128
        %v8401 = vpop.trf.xlu0
        %v8402 = vpop.trf.xlu0
        %v8403 = vpop.trf.xlu0
        %v8404 = vpop.trf.xlu0
        %v8405 = vpop.trf.xlu0
        %v8406 = vpop.trf.xlu0
        %v8407 = vpop.trf.xlu0
        %v8408 = vpop.trf.xlu0
        %v8409 = vpop.trf.xlu0
        %v8410 = vpop.trf.xlu0
        %v8411 = vpop.trf.xlu0
        %v8412 = vpop.trf.xlu0
        %v8413 = vpop.trf.xlu0
        %v8414 = vpop.trf.xlu0
        %v8415 = vpop.trf.xlu0
        %v8416 = vpop.trf.xlu0
        %8417 = vxpose.xlu0.b32.start [1/16] %v8302, 128
        %8418 = vxpose.xlu0.b32.cont [2/16] 0.0, 128
        %8419 = vxpose.xlu0.b32.cont [3/16] 0.0, 128
        %8420 = vxpose.xlu0.b32.cont [4/16] 0.0, 128
        %8421 = vxpose.xlu0.b32.cont [5/16] 0.0, 128
        %8422 = vxpose.xlu0.b32.cont [6/16] 0.0, 128
        %8423 = vxpose.xlu0.b32.cont [7/16] 0.0, 128
        %8424 = vxpose.xlu0.b32.cont [8/16] 0.0, 128
        %8425 = vxpose.xlu0.b32.cont [9/16] 0.0, 128
        %8426 = vxpose.xlu0.b32.cont [10/16] 0.0, 128
        %8427 = vxpose.xlu0.b32.cont [11/16] 0.0, 128
        %8428 = vxpose.xlu0.b32.cont [12/16] 0.0, 128
        %8429 = vxpose.xlu0.b32.cont [13/16] 0.0, 128
        %8430 = vxpose.xlu0.b32.cont [14/16] 0.0, 128
        %8431 = vxpose.xlu0.b32.cont [15/16] 0.0, 128
        %8432 = vxpose.xlu0.b32.end [16/16] 0.0, 128
        %v8433 = vpop.trf.xlu0
        %v8434 = vpop.trf.xlu0
        %v8435 = vpop.trf.xlu0
        %v8436 = vpop.trf.xlu0
        %v8437 = vpop.trf.xlu0
        %v8438 = vpop.trf.xlu0
        %v8439 = vpop.trf.xlu0
        %v8440 = vpop.trf.xlu0
        %v8441 = vpop.trf.xlu0
        %v8442 = vpop.trf.xlu0
        %v8443 = vpop.trf.xlu0
        %v8444 = vpop.trf.xlu0
        %v8445 = vpop.trf.xlu0
        %v8446 = vpop.trf.xlu0
        %v8447 = vpop.trf.xlu0
        %v8448 = vpop.trf.xlu0
        %8449 = vxpose.xlu0.b32.start [1/16] %v8348, 128
        %8450 = vxpose.xlu0.b32.cont [2/16] 0.0, 128
        %8451 = vxpose.xlu0.b32.cont [3/16] 0.0, 128
        %8452 = vxpose.xlu0.b32.cont [4/16] 0.0, 128
        %8453 = vxpose.xlu0.b32.cont [5/16] 0.0, 128
        %8454 = vxpose.xlu0.b32.cont [6/16] 0.0, 128
        %8455 = vxpose.xlu0.b32.cont [7/16] 0.0, 128
        %8456 = vxpose.xlu0.b32.cont [8/16] 0.0, 128
        %8457 = vxpose.xlu0.b32.cont [9/16] 0.0, 128
        %8458 = vxpose.xlu0.b32.cont [10/16] 0.0, 128
        %8459 = vxpose.xlu0.b32.cont [11/16] 0.0, 128
        %8460 = vxpose.xlu0.b32.cont [12/16] 0.0, 128
        %8461 = vxpose.xlu0.b32.cont [13/16] 0.0, 128
        %8462 = vxpose.xlu0.b32.cont [14/16] 0.0, 128
        %8463 = vxpose.xlu0.b32.cont [15/16] 0.0, 128
        %8464 = vxpose.xlu0.b32.end [16/16] 0.0, 128
        %v8465 = vpop.trf.xlu0
        %v8466 = vpop.trf.xlu0
        %v8467 = vpop.trf.xlu0
        %v8468 = vpop.trf.xlu0
        %v8469 = vpop.trf.xlu0
        %v8470 = vpop.trf.xlu0
        %v8471 = vpop.trf.xlu0
        %v8472 = vpop.trf.xlu0
        %v8473 = vpop.trf.xlu0
        %v8474 = vpop.trf.xlu0
        %v8475 = vpop.trf.xlu0
        %v8476 = vpop.trf.xlu0
        %v8477 = vpop.trf.xlu0
        %v8478 = vpop.trf.xlu0
        %v8479 = vpop.trf.xlu0
        %v8480 = vpop.trf.xlu0
        %8481 = vxpose.xlu0.b32.start [1/16] %v8369, 128
        %8482 = vxpose.xlu0.b32.cont [2/16] %v8401, 128
        %8483 = vxpose.xlu0.b32.cont [3/16] %v8433, 128
        %8484 = vxpose.xlu0.b32.cont [4/16] %v8465, 128
        %8485 = vxpose.xlu0.b32.cont [5/16] 0.0, 128
        %8486 = vxpose.xlu0.b32.cont [6/16] 0.0, 128
        %8487 = vxpose.xlu0.b32.cont [7/16] 0.0, 128
        %8488 = vxpose.xlu0.b32.cont [8/16] 0.0, 128
        %8489 = vxpose.xlu0.b32.cont [9/16] 0.0, 128
        %8490 = vxpose.xlu0.b32.cont [10/16] 0.0, 128
        %8491 = vxpose.xlu0.b32.cont [11/16] 0.0, 128
        %8492 = vxpose.xlu0.b32.cont [12/16] 0.0, 128
        %8493 = vxpose.xlu0.b32.cont [13/16] 0.0, 128
        %8494 = vxpose.xlu0.b32.cont [14/16] 0.0, 128
        %8495 = vxpose.xlu0.b32.cont [15/16] 0.0, 128
        %8496 = vxpose.xlu0.b32.end [16/16] 0.0, 128
        %v8497 = vpop.trf.xlu0
        %v8498 = vpop.trf.xlu0
        %v8499 = vpop.trf.xlu0
        %v8500 = vpop.trf.xlu0
        %v8501 = vpop.trf.xlu0
        %v8502 = vpop.trf.xlu0
        %v8503 = vpop.trf.xlu0
        %v8504 = vpop.trf.xlu0
        %v8505 = vpop.trf.xlu0
        %v8506 = vpop.trf.xlu0
        %v8507 = vpop.trf.xlu0
        %v8508 = vpop.trf.xlu0
        %v8509 = vpop.trf.xlu0
        %v8510 = vpop.trf.xlu0
        %v8511 = vpop.trf.xlu0
        %v8512 = vpop.trf.xlu0
        %v8513 = vpack.c.bf16 %v8497, %v8497
        %v8515 = vlaneseq
        %v8516 = vshrl.u32 %v8515, 7
        %v8517 = vsub.s32 0, %v8516
        %v8518 = vrot.slane %v7476, %v8517
        %v8524 = vunpack.c.l.b16 %v7471
        %v8525 = vunpack.c.l.b16 %v7472
        %v8526 = vunpack.c.l.b16 %v7473
        %v8527 = vunpack.c.l.b16 %v7474
        %v8528 = vpack.c.b16 %v8525, %v8524
        %v8529 = vpack.c.b16 %v8527, %v8526
        %v8533 = vsel %vm1556, %v8513, 0
        %8535 = vmatprep.subr.bf16.mxu0 0
        %8536 = vmatpush1.bf16.msra.mxu0 %v8528
        %8537 = vmatprep.subr.bf16.mxu0 0
        %8538 = vmatpush1.bf16.msra.mxu0 %v8529
        %8539 = vmatprep.subr.bf16.mxu0 0
        %8540 = vmatpush1.bf16.msra.mxu0 0
        %8541 = vmatprep.subr.bf16.mxu0 0
        %8542 = vmatpush1.bf16.msra.mxu0 0
        %8543 = vmatprep.subr.bf16.mxu0 0
        %8544 = vmatpush1.bf16.msra.mxu0 0
        %8545 = vmatprep.subr.bf16.mxu0 0
        %8546 = vmatpush1.bf16.msra.mxu0 0
        %8547 = vmatprep.subr.bf16.mxu0 0
        %8548 = vmatpush1.bf16.msra.mxu0 0
        %8549 = vmatprep.subr.bf16.mxu0 0
        %8550 = vmatpush1.bf16.msra.mxu0 0
        %8551 = vmatprep.subr.bf16.mxu0 0
        %8552 = vmatpush1.bf16.msra.mxu0 0
        %8553 = vmatprep.subr.bf16.mxu0 0
        %8554 = vmatpush1.bf16.msra.mxu0 0
        %8555 = vmatprep.subr.bf16.mxu0 0
        %8556 = vmatpush1.bf16.msra.mxu0 0
        %8557 = vmatprep.subr.bf16.mxu0 0
        %8558 = vmatpush1.bf16.msra.mxu0 0
        %8559 = vmatprep.subr.bf16.mxu0 0
        %8560 = vmatpush1.bf16.msra.mxu0 0
        %8561 = vmatprep.subr.bf16.mxu0 0
        %8562 = vmatpush1.bf16.msra.mxu0 0
        %8563 = vmatprep.subr.bf16.mxu0 0
        %8564 = vmatpush1.bf16.msra.mxu0 0
        %8565 = vmatprep.subr.bf16.mxu0 0
        %8566 = vmatpush1.bf16.msra.mxu0 0
        %8567 = vmatprep.mubr.bf16.mxu0 0
        %8568 = vmatmul.mubr.bf16.gmra.mrb[0].mxu0 %v8533
        %v8569 = vpop.f32.mrb[0].mxu0
        %v8570 = vadd.f32 %v8518, %v8569
        %v8571 = vpop.f32.mrb[0].mxu0
        %v8572 = vpop.f32.mrb[0].mxu0
        %v8573 = vpop.f32.mrb[0].mxu0
        %8574 = vdwg.mxu0
        %v8575 = vadd.f32 %v7455, %v8570
        %s8576 = scalar_lea.vmem %s65, 1
        %v8577 = vld [vmem:[%s8576] sm:$0x1]
        %s8578 = scalar_lea.vmem %s67, 1
        %v8579 = vld [vmem:[%s8578] sm:$0x1]
        %v8580 = vsel %vm1556, %v8575, 0.0
        %8581 = vadd.xlane.f32.xlu0 %v8580
        %v8582 = vpop.xlane.xlu0 %8581
        %v8583 = vmul.f32 %v8582, %v2560
        %v8584 = vmul.f32 %v8575, %v8575
        %v8585 = vsel %vm1556, %v8584, 0.0
        %8586 = vadd.xlane.f32.xlu0 %v8585
        %v8587 = vpop.xlane.xlu0 %8586
        %v8588 = vmul.f32 %v8587, %v2560
        %v8589 = vmul.f32 %v8583, %v8583
        %v8590 = vsub.f32 %v8588, %v8589
        %v8591 = vsub.f32 %v8575, %v8583
        %v8592 = vadd.f32 %v8590, 1e-05
        %v8593 = vrsqrt.pop %v8592
        %v8594 = vmul.f32 %v8591, %v8593
        %v8596 = vlaneseq
        %v8597 = vshrl.u32 %v8596, 7
        %v8598 = vsub.s32 0, %v8597
        %v8599 = vrot.slane %v8577, %v8598
        %v8601 = vmul.f32 %v8594, %v8599
        %v8603 = vlaneseq
        %v8604 = vshrl.u32 %v8603, 7
        %v8605 = vsub.s32 0, %v8604
        %v8606 = vrot.slane %v8579, %v8605
        %v8608 = vadd.f32 %v8601, %v8606
        %s8609 = scalar_lea.vmem %s53, 16
        %v8610 = vld [vmem:[%s8609] sm:$0xf]
        %v8611 = vld [vmem:[%s8609 + $0x4] sm:$0xf]
        %v8612 = vld [vmem:[%s8609 + $0x8] sm:$0xf]
        %v8613 = vld [vmem:[%s8609 + $0xc] sm:$0xf]
        %s8614 = scalar_lea.vmem [#allocation32], 1
        %v8615 = vld [vmem:[%s8614] sm:$0x1]
        %s8616 = scalar_lea.vmem %s57, 32
        %v8617 = vld [vmem:[%s8616] sm:$0xf]
        %v8618 = vld [vmem:[%s8616 + $0x4] sm:$0xf]
        %v8619 = vld [vmem:[%s8616 + $0x8] sm:$0xf]
        %v8620 = vld [vmem:[%s8616 + $0xc] sm:$0xf]
        %v8621 = vld [vmem:[%s8616 + $0x10] sm:$0xf]
        %v8622 = vld [vmem:[%s8616 + $0x14] sm:$0xf]
        %v8623 = vld [vmem:[%s8616 + $0x18] sm:$0xf]
        %v8624 = vld [vmem:[%s8616 + $0x1c] sm:$0xf]
        %s8625 = scalar_lea.vmem [#allocation34], 1
        %v8626 = vld [vmem:[%s8625] sm:$0x1]
        %v8627 = vpack.c.bf16 %v8608, %v8608
        %v8629 = vlaneseq
        %v8630 = vshrl.u32 %v8629, 7
        %v8631 = vsub.s32 0, %v8630
        %v8632 = vrot.slane %v8615, %v8631
        %v8638 = vunpack.c.l.b16 %v8610
        %v8639 = vunpack.c.l.b16 %v8611
        %v8640 = vunpack.c.l.b16 %v8612
        %v8641 = vunpack.c.l.b16 %v8613
        %v8642 = vpack.c.b16 %v8639, %v8638
        %v8643 = vpack.c.b16 %v8641, %v8640
        %v8647 = vsel %vm1556, %v8627, 0
        %8649 = vmatprep.subr.bf16.mxu0 0
        %8650 = vmatpush1.bf16.msra.mxu0 %v8642
        %8651 = vmatprep.subr.bf16.mxu0 0
        %8652 = vmatpush1.bf16.msra.mxu0 %v8643
        %8653 = vmatprep.subr.bf16.mxu0 0
        %8654 = vmatpush1.bf16.msra.mxu0 0
        %8655 = vmatprep.subr.bf16.mxu0 0
        %8656 = vmatpush1.bf16.msra.mxu0 0
        %8657 = vmatprep.subr.bf16.mxu0 0
        %8658 = vmatpush1.bf16.msra.mxu0 0
        %8659 = vmatprep.subr.bf16.mxu0 0
        %8660 = vmatpush1.bf16.msra.mxu0 0
        %8661 = vmatprep.subr.bf16.mxu0 0
        %8662 = vmatpush1.bf16.msra.mxu0 0
        %8663 = vmatprep.subr.bf16.mxu0 0
        %8664 = vmatpush1.bf16.msra.mxu0 0
        %8665 = vmatprep.subr.bf16.mxu0 0
        %8666 = vmatpush1.bf16.msra.mxu0 0
        %8667 = vmatprep.subr.bf16.mxu0 0
        %8668 = vmatpush1.bf16.msra.mxu0 0
        %8669 = vmatprep.subr.bf16.mxu0 0
        %8670 = vmatpush1.bf16.msra.mxu0 0
        %8671 = vmatprep.subr.bf16.mxu0 0
        %8672 = vmatpush1.bf16.msra.mxu0 0
        %8673 = vmatprep.subr.bf16.mxu0 0
        %8674 = vmatpush1.bf16.msra.mxu0 0
        %8675 = vmatprep.subr.bf16.mxu0 0
        %8676 = vmatpush1.bf16.msra.mxu0 0
        %8677 = vmatprep.subr.bf16.mxu0 0
        %8678 = vmatpush1.bf16.msra.mxu0 0
        %8679 = vmatprep.subr.bf16.mxu0 0
        %8680 = vmatpush1.bf16.msra.mxu0 0
        %8681 = vmatprep.mubr.bf16.mxu0 0
        %8682 = vmatmul.mubr.bf16.gmra.mrb[0].mxu0 %v8647
        %v8683 = vpop.f32.mrb[0].mxu0
        %v8684 = vadd.f32 %v8632, %v8683
        %v8685 = vpop.f32.mrb[0].mxu0
        %v8686 = vpop.f32.mrb[0].mxu0
        %v8687 = vpop.f32.mrb[0].mxu0
        %8688 = vdwg.mxu0
        %v8689 = vmax.f32 %v8684, 0.0
        %v8690 = vpack.c.bf16 %v8689, %v8689
        %v8692 = vlaneseq
        %v8693 = vshrl.u32 %v8692, 7
        %v8694 = vsub.s32 0, %v8693
        %v8695 = vrot.slane %v8626, %v8694
        %v8705 = vunpack.c.l.b16 %v8617
        %v8706 = vunpack.c.l.b16 %v8618
        %v8707 = vunpack.c.l.b16 %v8619
        %v8708 = vunpack.c.l.b16 %v8620
        %v8709 = vunpack.c.l.b16 %v8621
        %v8710 = vunpack.c.l.b16 %v8622
        %v8711 = vunpack.c.l.b16 %v8623
        %v8712 = vunpack.c.l.b16 %v8624
        %v8713 = vpack.c.b16 %v8706, %v8705
        %v8714 = vpack.c.b16 %v8708, %v8707
        %v8715 = vpack.c.b16 %v8710, %v8709
        %v8716 = vpack.c.b16 %v8712, %v8711
        %v8722 = vsel %vm2695, %v8690, 0
        %8724 = vmatprep.subr.bf16.mxu0 0
        %8725 = vmatpush1.bf16.msra.mxu0 %v8713
        %8726 = vmatprep.subr.bf16.mxu0 0
        %8727 = vmatpush1.bf16.msra.mxu0 %v8714
        %8728 = vmatprep.subr.bf16.mxu0 0
        %8729 = vmatpush1.bf16.msra.mxu0 %v8715
        %8730 = vmatprep.subr.bf16.mxu0 0
        %8731 = vmatpush1.bf16.msra.mxu0 %v8716
        %8732 = vmatprep.subr.bf16.mxu0 0
        %8733 = vmatpush1.bf16.msra.mxu0 0
        %8734 = vmatprep.subr.bf16.mxu0 0
        %8735 = vmatpush1.bf16.msra.mxu0 0
        %8736 = vmatprep.subr.bf16.mxu0 0
        %8737 = vmatpush1.bf16.msra.mxu0 0
        %8738 = vmatprep.subr.bf16.mxu0 0
        %8739 = vmatpush1.bf16.msra.mxu0 0
        %8740 = vmatprep.subr.bf16.mxu0 0
        %8741 = vmatpush1.bf16.msra.mxu0 0
        %8742 = vmatprep.subr.bf16.mxu0 0
        %8743 = vmatpush1.bf16.msra.mxu0 0
        %8744 = vmatprep.subr.bf16.mxu0 0
        %8745 = vmatpush1.bf16.msra.mxu0 0
        %8746 = vmatprep.subr.bf16.mxu0 0
        %8747 = vmatpush1.bf16.msra.mxu0 0
        %8748 = vmatprep.subr.bf16.mxu0 0
        %8749 = vmatpush1.bf16.msra.mxu0 0
        %8750 = vmatprep.subr.bf16.mxu0 0
        %8751 = vmatpush1.bf16.msra.mxu0 0
        %8752 = vmatprep.subr.bf16.mxu0 0
        %8753 = vmatpush1.bf16.msra.mxu0 0
        %8754 = vmatprep.subr.bf16.mxu0 0
        %8755 = vmatpush1.bf16.msra.mxu0 0
        %8756 = vmatprep.mubr.bf16.mxu0 0
        %8757 = vmatmul.mubr.bf16.gmra.mrb[0].mxu0 %v8722
        %v8758 = vpop.f32.mrb[0].mxu0
        %v8759 = vadd.f32 %v8695, %v8758
        %v8760 = vpop.f32.mrb[0].mxu0
        %v8761 = vpop.f32.mrb[0].mxu0
        %v8762 = vpop.f32.mrb[0].mxu0
        %8763 = vdwg.mxu0
        %v8764 = vadd.f32 %v8608, %v8759
        %s8765 = scalar_lea.vmem %s69, 1
        %v8766 = vld [vmem:[%s8765] sm:$0x1]
        %s8767 = scalar_lea.vmem %s71, 1
        %v8768 = vld [vmem:[%s8767] sm:$0x1]
        %v8769 = vsel %vm1556, %v8764, 0.0
        %8770 = vadd.xlane.f32.xlu0 %v8769
        %v8771 = vpop.xlane.xlu0 %8770
        %v8772 = vmul.f32 %v8771, %v2560
        %v8773 = vmul.f32 %v8764, %v8764
        %v8774 = vsel %vm1556, %v8773, 0.0
        %8775 = vadd.xlane.f32.xlu0 %v8774
        %v8776 = vpop.xlane.xlu0 %8775
        %v8777 = vmul.f32 %v8776, %v2560
        %v8778 = vmul.f32 %v8772, %v8772
        %v8779 = vsub.f32 %v8777, %v8778
        %v8780 = vsub.f32 %v8764, %v8772
        %v8781 = vadd.f32 %v8779, 1e-05
        %v8782 = vrsqrt.pop %v8781
        %v8783 = vmul.f32 %v8780, %v8782
        %v8785 = vlaneseq
        %v8786 = vshrl.u32 %v8785, 7
        %v8787 = vsub.s32 0, %v8786
        %v8788 = vrot.slane %v8766, %v8787
        %v8790 = vmul.f32 %v8783, %v8788
        %v8792 = vlaneseq
        %v8793 = vshrl.u32 %v8792, 7
        %v8794 = vsub.s32 0, %v8793
        %v8795 = vrot.slane %v8768, %v8794
        %v8797 = vadd.f32 %v8790, %v8795
        %v8798 = vpack.c.bf16 %v8797, %v8797
        %v8799 = vld [vmem:[%s73] sm:$0xf]
        %v8800 = vld [vmem:[%s73 + $0x4] sm:$0xf]
        %v8801 = vld [vmem:[%s73 + $0x8] sm:$0xf]
        %v8802 = vld [vmem:[%s73 + $0xc] sm:$0xf]
        %v8803 = vld [vmem:[%s75] sm:$0x1]
        %v8805 = vlaneseq
        %v8806 = vshrl.u32 %v8805, 7
        %v8807 = vsub.s32 0, %v8806
        %v8808 = vrot.slane %v8803, %v8807
        %v8814 = vunpack.c.l.b16 %v8799
        %v8815 = vunpack.c.l.b16 %v8800
        %v8816 = vunpack.c.l.b16 %v8801
        %v8817 = vunpack.c.l.b16 %v8802
        %v8818 = vpack.c.b16 %v8815, %v8814
        %v8819 = vpack.c.b16 %v8817, %v8816
        %v8823 = vsel %vm1556, %v8798, 0
        %8825 = vmatprep.subr.bf16.mxu0 0
        %8826 = vmatpush1.bf16.msra.mxu0 %v8818
        %8827 = vmatprep.subr.bf16.mxu0 0
        %8828 = vmatpush1.bf16.msra.mxu0 %v8819
        %8829 = vmatprep.subr.bf16.mxu0 0
        %8830 = vmatpush1.bf16.msra.mxu0 0
        %8831 = vmatprep.subr.bf16.mxu0 0
        %8832 = vmatpush1.bf16.msra.mxu0 0
        %8833 = vmatprep.subr.bf16.mxu0 0
        %8834 = vmatpush1.bf16.msra.mxu0 0
        %8835 = vmatprep.subr.bf16.mxu0 0
        %8836 = vmatpush1.bf16.msra.mxu0 0
        %8837 = vmatprep.subr.bf16.mxu0 0
        %8838 = vmatpush1.bf16.msra.mxu0 0
        %8839 = vmatprep.subr.bf16.mxu0 0
        %8840 = vmatpush1.bf16.msra.mxu0 0
        %8841 = vmatprep.subr.bf16.mxu0 0
        %8842 = vmatpush1.bf16.msra.mxu0 0
        %8843 = vmatprep.subr.bf16.mxu0 0
        %8844 = vmatpush1.bf16.msra.mxu0 0
        %8845 = vmatprep.subr.bf16.mxu0 0
        %8846 = vmatpush1.bf16.msra.mxu0 0
        %8847 = vmatprep.subr.bf16.mxu0 0
        %8848 = vmatpush1.bf16.msra.mxu0 0
        %8849 = vmatprep.subr.bf16.mxu0 0
        %8850 = vmatpush1.bf16.msra.mxu0 0
        %8851 = vmatprep.subr.bf16.mxu0 0
        %8852 = vmatpush1.bf16.msra.mxu0 0
        %8853 = vmatprep.subr.bf16.mxu0 0
        %8854 = vmatpush1.bf16.msra.mxu0 0
        %8855 = vmatprep.subr.bf16.mxu0 0
        %8856 = vmatpush1.bf16.msra.mxu0 0
        %8857 = vmatprep.mubr.bf16.mxu0 0
        %8858 = vmatmul.mubr.bf16.gmra.mrb[0].mxu0 %v8823
        %v8859 = vpop.f32.mrb[0].mxu0
        %v8860 = vadd.f32 %v8808, %v8859
        %v8861 = vpop.f32.mrb[0].mxu0
        %v8862 = vpop.f32.mrb[0].mxu0
        %v8863 = vpop.f32.mrb[0].mxu0
        %8864 = vdwg.mxu0
        %8865 = vst [vmem:[%s1513] sm:$0xff] %v8860
        %s8866 = sand.u32 %s928, 1
        %s8867 = scalar_lea.sflag [#allocation4], %s8866
        %s8868 = sand.u32 %s928, 1
        %s8869 = smul.addr %s8868, 8
        %s8870 = scalar_lea.vmem [#allocation37], %s8869
        // Predicated region
        $region261: #{tpu_custom_call.1} parent=171 // pred_check
          %p8871 = pneg %p938
        $region262: #{tpu_custom_call.1} parent=171 // pred_check_branch
          %8873 = sbr.rel (%p8871) target = $region264
        $region263: #{tpu_custom_call.1} parent=171 // pred_region
          %s8875 = ssub.s32 128, 128
          %8876 = vsyncadd %s8867, %s8875
          %s8877 = smul.addr %s107, 128
          %s8878 = scalar_lea.hbm %s77, %s8877
          %s8880 = sshll.u32 %s8870, 4
          %s8881 = int_to_ptr.vmem [resolvable:$true] %s8880
          %8883 = dma.vmem_to_hbm [thread:$0]  %s8881, 128, %s8878, %s8867
        $region264: #{tpu_custom_call.1} parent=171 // pred_fallthru
          _
      $region172: #{tpu_custom_call.1} parent=5 // pred_fallthru
        _
      %p8884 = scmp.le.s32.totalorder 2, %s102
      // Predicated region
      $region265: #{tpu_custom_call.1} parent=5 // pred_check
        %p8885 = pneg %p8884
      $region266: #{tpu_custom_call.1} parent=5 // pred_check_branch
        %8887 = sbr.rel (%p8885) target = $region268
      $region267: #{tpu_custom_call.1} parent=5 // pred_region
        %s8888 = ssub.s32 %s102, 2
        // Predicated region
        $region269: #{tpu_custom_call.1} parent=267 // pred_check
          %p8889 = pneg %p944
        $region270: #{tpu_custom_call.1} parent=267 // pred_check_branch
          %8891 = sbr.rel (%p8889) target = $region272
        $region271: #{tpu_custom_call.1} parent=267 // pred_region
          %s8892 = sand.u32 %s929, 1
          %s8893 = scalar_lea.sflag [#allocation4], %s8892
          %s8894 = sand.u32 %s929, 1
          %s8895 = smul.addr %s8894, 8
          %s8896 = scalar_lea.vmem [#allocation37], %s8895
          %8897 = dma.done %s8893, 128
        $region272: #{tpu_custom_call.1} parent=267 // pred_fallthru
          _
      $region268: #{tpu_custom_call.1} parent=5 // pred_fallthru
        _
    $region6: #{tpu_custom_call.1} parent=1 // loop_footer
      %s106 = sadd.s32 1, %s102
    $region7: #{tpu_custom_call.1} parent=1 // loop_footer_branch
      %101 = sbr.rel target = $region3
    $region8: #{tpu_custom_call.1} parent=1 // loop_exit
      _
    %8898 = vsyncpa [#allocation3], 1
    %s8899 = scalar_lea.sflag [#allocation3], 1
    %8900 = vsyncpa %s8899, 1
    %8901 = vsyncpa [#allocation6], 1
    %s8902 = scalar_lea.sflag [#allocation6], 1
    %8903 = vsyncpa %s8902, 1
    %8904 = vsyncpa [#allocation9], 1
    %8905 = vsyncpa [#allocation12], 1
    %8906 = vsyncpa [#allocation15], 1
    %8907 = vsyncpa [#allocation18], 1
    %8908 = vsyncpa [#allocation21], 1
    %8909 = vsyncpa [#allocation24], 1
    %8910 = vsyncpa [#allocation27], 1
    %8911 = vsyncpa [#allocation30], 1
    %8912 = vsyncpa [#allocation33], 1
    %8913 = vsyncpa [#allocation36], 1
    %8914 = vsyncpa [#allocation4], 1
    %s8915 = scalar_lea.sflag [#allocation4], 1
    %8916 = vsyncpa %s8915, 1

</llo_original>
